<compile_context>
chip_gen: v6e
topology: v6e:2x2x1
jax: 0.10.0
libtpu: 0.0.40
codegen_flags: <defaults>
</compile_context>

<pallas_src>
import functools

import jax
import jax.numpy as jnp
from jax import lax
from jax.experimental import pallas as pl
from jax.experimental.pallas import tpu as pltpu

C = 256            # feature channels inside the decoder
CQK = C // 4       # 64, q/k projection channels
CQKV = CQK + C     # 320, fused q/k + v projection output rows
NUM_OA = 4         # number of OA layers
OUT_C = 3          # xyz output channels
D_PRIOR = 3        # sphere prior (args.prior.startswith('sphere') -> d = 3)


def _leaky_relu(x, slope=0.2):
    return jnp.where(x >= 0, x, slope * x)


# -----------------------------------------------------------------------------
# Fused per-batch decoder kernel
# -----------------------------------------------------------------------------
def _decoder_kernel(fbias_ref, prior_ref, wmp_ref,
                    wqkv_ref, bqkv_ref, wt_ref, bt_ref,
                    w1_ref, b1_ref, w2_ref, b2_ref,
                    o_ref, *, exp_bf16):
    f32 = jnp.float32
    bf16 = jnp.bfloat16

    prior = prior_ref[...]                                             # (3, N) f32

    # mlp: Conv1d(F+3, 256, 1) on cat([feature tiled over N, prior], dim=1).
    # Feature branch (constant over N) + conv bias arrive pre-folded in fbias.
    x = (jnp.dot(wmp_ref[...], prior, preferred_element_type=f32)
         + fbias_ref[...])                                             # (256, N) f32
    x_b = x.astype(bf16)                                               # hoisted bf16 copy

    y1 = None                                                          # head conv1 accumulator
    for l in range(NUM_OA):                                            # static unroll
        # ---- fused q/k + v projection: one (320,256)@(256,N) MXU matmul ----
        qkv = (jnp.dot(wqkv_ref[l], x_b, preferred_element_type=f32)
               + bqkv_ref[l])                                          # (320, N)
        qk = qkv[:CQK, :]                                              # (64, N)
        v = qkv[CQK:, :]                                               # (256, N)

        # energy[i, j] = sum_c qk[c, i] * qk[c, j]  == bmm(q.permute(0,2,1), k)
        # ((0,),(0,)) contraction lowers as trans_a on the MXU (no relayout).
        qk_b = qk.astype(bf16)
        energy = lax.dot_general(qk_b, qk_b, (((0,), (0,)), ((), ())),
                                 preferred_element_type=f32)           # (N, N) f32

        # ---- row softmax (over k index) with zero (N,N) elementwise passes --
        e_max = jnp.max(energy, axis=-1, keepdims=True)                # (N, 1)
        if exp_bf16:
            # bf16 EUP exp on v6e/v7x; result is bf16 which is exactly what the
            # following MXU matmuls need (no extra cast pass).
            p_b = jnp.exp((energy - e_max).astype(bf16))               # (N, N) bf16
            rowsum = jnp.sum(p_b, axis=-1, keepdims=True, dtype=f32)   # (N, 1) f32
        else:
            p = jnp.exp(energy - e_max)                                # (N, N) f32
            rowsum = jnp.sum(p, axis=-1, keepdims=True)                # (N, 1) f32
            p_b = p.astype(bf16)
        inv_rowsum = pl.reciprocal(rowsum, approx=False)               # (N, 1)
        inv_rowsum_r = inv_rowsum.reshape(1, -1)                       # (1, N)

        # attention.sum(dim=1) in torch == column sums of the normalized attn:
        # colsum[j] = sum_i p[i,j] * inv_rowsum[i]  -> a (1,N)@(N,N) MXU matmul
        # instead of an N^2 cross-sublane (XLU) reduction.
        colsum = jnp.dot(inv_rowsum_r.astype(bf16), p_b,
                         preferred_element_type=f32)                   # (1, N)

        # Fold the softmax row normalization into v (256xN work, not NxN):
        # x_r[:, j] = sum_i v[:, i] * inv_rowsum[i] * p[i, j]
        v_scaled = (v * inv_rowsum_r).astype(bf16)                     # (256, N)
        x_r = jnp.dot(v_scaled, p_b, preferred_element_type=f32)       # (256, N)
        # Applying /(1e-9 + colsum) to the (256,N) result is an exact rewrite
        # of dividing the (N,N) attention matrix by its column sums.
        x_r = x_r * pl.reciprocal(1e-9 + colsum, approx=False)

        # trans_conv + BatchNorm(eval, folded) + LeakyReLU(0.2), residual add.
        t = (jnp.dot(wt_ref[l], (x - x_r).astype(bf16),
                     preferred_element_type=f32) + bt_ref[l])          # (256, N)
        x = x + _leaky_relu(t)
        x_b = x.astype(bf16)             # reused by the head chunk AND next layer

        # Head conv1 (1024->256, bias-free, BN folded) as an accumulating
        # per-layer (256,256)@(256,N) matmul; the 1024-channel concat is never
        # materialized.
        part = jnp.dot(w1_ref[l], x_b, preferred_element_type=f32)
        y1 = part if y1 is None else y1 + part

    y1 = _leaky_relu(y1 + b1_ref[...])                                 # (256, N)
    y2 = (jnp.dot(w2_ref[...], y1.astype(bf16), preferred_element_type=f32)
          + b2_ref[...])                                               # (3, N)
    o_ref[...] = jnp.tanh(y2)


# -----------------------------------------------------------------------------
# Wrapper: full forward pass
# -----------------------------------------------------------------------------
def _vmem_limit_bytes(N):
    """Scoped-VMEM request sized from N (weights x2 + (N,N) temps + activations)."""
    weight_bytes = NUM_OA * (CQKV * C + 2 * C * C) * 2 + (64 << 10)   # bf16 weights + biases
    nn_bytes = 14 * N * N                                             # f32 energy + bf16 p (+ slack)
    act_bytes = 12 * C * N * 4                                        # live (256,N) f32 activations
    est = int(1.25 * (2 * weight_bytes + nn_bytes + act_bytes))
    # Floor keeps small-N runs comfortable; ceiling = v7x physical VMEM (64 MiB).
    return int(min(max(est, 16 << 20), 64 << 20))


def _softmax_exp_bf16():
    """bf16 EUP exp is a win on v6e/v7x; v5e and older have no bf16 VPU/EUP."""
    try:
        kind = jax.devices()[0].device_kind.lower()
    except Exception:
        return False
    if "tpu" not in kind:
        return False
    return not any(tag in kind for tag in ("v2", "v3", "v4", "v5"))


def multishape_oa_decoder(feature, prior, params, *, exp_bf16=None):
    """feature: (B, 1, F) f32, prior: (B, 3, N) f32 -> points (B, N, 3) f32."""
    B, _, F = feature.shape
    _, DP, N = prior.shape
    if exp_bf16 is None:
        exp_bf16 = _softmax_exp_bf16()

    # Feature branch of the mlp is constant over N: fold it (plus the mlp bias)
    # into a per-batch (256,1) bias so the repeat/concat input never exists.
    fbias = (jnp.einsum("of,bf->bo", params["mlp_w_feat"],
                        feature[:, 0, :])[..., None]
             + params["mlp_b"][None])                                  # (B, 256, 1)

    kernel = functools.partial(_decoder_kernel, exp_bf16=bool(exp_bf16))

    out = pl.pallas_call(
        kernel,
        out_shape=jax.ShapeDtypeStruct((B, OUT_C, N), jnp.float32),
        grid=(B,),
        in_specs=[
            pl.BlockSpec((None, C, 1), lambda i: (i, 0, 0)),           # fbias (per batch)
            pl.BlockSpec((None, DP, N), lambda i: (i, 0, 0)),          # prior (per batch)
            pl.BlockSpec((C, DP), lambda i: (0, 0)),                   # mlp prior-weights
            pl.BlockSpec((NUM_OA, CQKV, C), lambda i: (0, 0, 0)),      # fused q/k+v weights
            pl.BlockSpec((NUM_OA, CQKV, 1), lambda i: (0, 0, 0)),      # fused q/k+v bias
            pl.BlockSpec((NUM_OA, C, C), lambda i: (0, 0, 0)),         # trans_conv (BN folded)
            pl.BlockSpec((NUM_OA, C, 1), lambda i: (0, 0, 0)),         # trans bias (BN folded)
            pl.BlockSpec((NUM_OA, C, C), lambda i: (0, 0, 0)),         # head conv1 chunks
            pl.BlockSpec((C, 1), lambda i: (0, 0)),                    # head conv1 bias (BN)
            pl.BlockSpec((OUT_C, C), lambda i: (0, 0)),                # head conv2 (BN folded)
            pl.BlockSpec((OUT_C, 1), lambda i: (0, 0)),                # head conv2 bias
        ],
        out_specs=pl.BlockSpec((None, OUT_C, N), lambda i: (i, 0, 0)),
        compiler_params=pltpu.CompilerParams(
            dimension_semantics=("parallel",),
            vmem_limit_bytes=_vmem_limit_bytes(N)),
    )(fbias, prior, params["mlp_w_prior"],
      params["wqkv"], params["bqkv"], params["wt"], params["bt"],
      params["w1"], params["b1"], params["w2"], params["b2"])

    return jnp.transpose(out, (0, 2, 1))                               # (B, N, 3)


# -----------------------------------------------------------------------------
# Pure-JAX f32 reference on the same folded parameters (for validation)
# -----------------------------------------------------------------------------
def multishape_oa_decoder_ref(feature, prior, params):
    f32 = jnp.float32
    fbias = (jnp.einsum("of,bf->bo", params["mlp_w_feat"],
                        feature[:, 0, :])[..., None]
             + params["mlp_b"][None])
    x = jnp.einsum("od,bdn->bon", params["mlp_w_prior"], prior) + fbias
    wqkv = params["wqkv"].astype(f32)
    wt = params["wt"].astype(f32)
    w1 = params["w1"].astype(f32)
    w2 = params["w2"].astype(f32)
    y1 = 0.0
    for l in range(NUM_OA):
        qkv = jnp.einsum("oc,bcn->bon", wqkv[l], x) + params["bqkv"][l][None]
        qk, v = qkv[:, :CQK], qkv[:, CQK:]
        energy = jnp.einsum("bci,bcj->bij", qk, qk)
        attn = jax.nn.softmax(energy, axis=-1)
        attn = attn / (1e-9 + jnp.sum(attn, axis=1, keepdims=True))
        x_r = jnp.einsum("bci,bij->bcj", v, attn)
        t = jnp.einsum("oc,bcn->bon", wt[l], x - x_r) + params["bt"][l][None]
        x = x + _leaky_relu(t)
        y1 = y1 + jnp.einsum("oc,bcn->bon", w1[l], x)
    y1 = _leaky_relu(y1 + params["b1"][None])
    y2 = jnp.einsum("oc,bcn->bon", w2, y1) + params["b2"][None]
    return jnp.transpose(jnp.tanh(y2), (0, 2, 1))


# -----------------------------------------------------------------------------
# Deterministic synthetic parameters (BatchNorm folded offline, weights bf16)
# -----------------------------------------------------------------------------
def init_params(key, feat_dims=8):
    keys = iter(jax.random.split(key, 96))

    def nxt():
        return next(keys)

    def w(shape, scale=0.05):
        return (scale * jax.random.normal(nxt(), shape)).astype(jnp.float32)

    def bn(c):
        gamma = 1.0 + 0.1 * jax.random.normal(nxt(), (c, 1))
        beta = 0.1 * jax.random.normal(nxt(), (c, 1))
        mean = 0.1 * jax.random.normal(nxt(), (c, 1))
        var = 1.0 + 0.1 * jnp.abs(jax.random.normal(nxt(), (c, 1)))
        eps = 1e-5
        scale = gamma / jnp.sqrt(var + eps)
        bias = beta - mean * scale
        return scale.astype(jnp.float32), bias.astype(jnp.float32)

    bf16 = jnp.bfloat16

    # mlp = Conv1d(feat_dims + 3, 256, 1); split into feature / prior parts.
    mlp_w = w((C, feat_dims + D_PRIOR))
    mlp_b = w((C, 1))

    # Four OA layers; q/k (shared weights+bias) and v stacked into one fused
    # (320, 256) projection; after_norm BatchNorm folded into trans_conv.
    wqkv_l, bqkv_l, wt_l, bt_l = [], [], [], []
    for _ in range(NUM_OA):
        wqk = w((CQK, C))
        bqk = w((CQK, 1))
        wv = w((C, C))
        bv = w((C, 1))
        wqkv_l.append(jnp.concatenate([wqk, wv], axis=0))              # (320, 256)
        bqkv_l.append(jnp.concatenate([bqk, bv], axis=0))              # (320, 1)
        wt = w((C, C))
        bt = w((C, 1))
        s, b = bn(C)
        wt_l.append(s * wt)
        bt_l.append(s * bt + b)

    # Head: Conv1d(1024,256,bias=False)+BN(256)+LeakyReLU, Conv1d(256,3)+BN(3)+Tanh.
    dc1_w = w((C, NUM_OA * C))
    s1, b1 = bn(C)
    dc1_w = s1 * dc1_w
    w1 = jnp.stack([dc1_w[:, l * C:(l + 1) * C] for l in range(NUM_OA)])

    dc2_w = w((OUT_C, C))
    dc2_b = w((OUT_C, 1))
    s2, b2 = bn(OUT_C)

    return dict(
        mlp_w_feat=mlp_w[:, :feat_dims],
        mlp_w_prior=mlp_w[:, feat_dims:],
        mlp_b=mlp_b,
        wqkv=jnp.stack(wqkv_l).astype(bf16),
        bqkv=jnp.stack(bqkv_l),
        wt=jnp.stack(wt_l).astype(bf16),
        bt=jnp.stack(bt_l),
        w1=w1.astype(bf16),
        b1=b1,
        w2=(s2 * dc2_w).astype(bf16),
        b2=s2 * dc2_b + b2,
    )


if __name__ == "__main__":
    key = jax.random.PRNGKey(0)
    pkey, fkey, prkey = jax.random.split(key, 3)

    B, N, F = 2, 128, 8
    params = init_params(pkey, feat_dims=F)
    feature = jax.random.normal(fkey, (B, 1, F), dtype=jnp.float32)     # (B, 1, feat_dims)
    prior = jax.random.normal(prkey, (B, D_PRIOR, N), dtype=jnp.float32)

    points = jax.jit(multishape_oa_decoder)(feature, prior, params)
    points = jax.block_until_ready(points)
    assert points.shape == (B, N, OUT_C), points.shape
    assert bool(jnp.all(jnp.isfinite(points)))

    # Loose tolerance: bf16 weights / attention path vs f32 reference.
    ref = multishape_oa_decoder_ref(feature, prior, params)
    err = float(jnp.max(jnp.abs(points - ref)))
    assert err < 5e-2, f"max abs diff vs f32 reference: {err}"

    print("KERNEL_OK")
</pallas_src>

<mosaic_0001>
module attributes {stable_mosaic.version = 11 : i64} {
  func.func @_decoder_kernel(%arg0: i32, %arg1: memref<1x256x1xf32, #tpu.memory_space<vmem>>, %arg2: memref<1x3x128xf32, #tpu.memory_space<vmem>>, %arg3: memref<256x3xf32, #tpu.memory_space<vmem>>, %arg4: memref<4x320x256xbf16, #tpu.memory_space<vmem>>, %arg5: memref<4x320x1xf32, #tpu.memory_space<vmem>>, %arg6: memref<4x256x256xbf16, #tpu.memory_space<vmem>>, %arg7: memref<4x256x1xf32, #tpu.memory_space<vmem>>, %arg8: memref<4x256x256xbf16, #tpu.memory_space<vmem>>, %arg9: memref<256x1xf32, #tpu.memory_space<vmem>>, %arg10: memref<3x256xbf16, #tpu.memory_space<vmem>>, %arg11: memref<3x1xf32, #tpu.memory_space<vmem>>, %arg12: memref<1x3x128xf32, #tpu.memory_space<vmem>>) attributes {dimension_semantics = [#tpu.dimension_semantics<parallel>], iteration_bounds = array<i64: 2>, scalar_prefetch = 0 : i64, scratch_operands = 0 : i64, tpu.core_type = #tpu.core_type<tc>, window_params = [{transform_indices = @transform_0, window_bounds = array<i64: 1, 256, 1>}, {transform_indices = @transform_1, window_bounds = array<i64: 1, 3, 128>}, {pipeline_mode = #tpu.pipeline_mode<synchronous>, transform_indices = @transform_2, window_bounds = array<i64: 256, 3>}, {pipeline_mode = #tpu.pipeline_mode<synchronous>, transform_indices = @transform_3, window_bounds = array<i64: 4, 320, 256>}, {pipeline_mode = #tpu.pipeline_mode<synchronous>, transform_indices = @transform_4, window_bounds = array<i64: 4, 320, 1>}, {pipeline_mode = #tpu.pipeline_mode<synchronous>, transform_indices = @transform_5, window_bounds = array<i64: 4, 256, 256>}, {pipeline_mode = #tpu.pipeline_mode<synchronous>, transform_indices = @transform_6, window_bounds = array<i64: 4, 256, 1>}, {pipeline_mode = #tpu.pipeline_mode<synchronous>, transform_indices = @transform_7, window_bounds = array<i64: 4, 256, 256>}, {pipeline_mode = #tpu.pipeline_mode<synchronous>, transform_indices = @transform_8, window_bounds = array<i64: 256, 1>}, {pipeline_mode = #tpu.pipeline_mode<synchronous>, transform_indices = @transform_9, window_bounds = array<i64: 3, 256>}, {pipeline_mode = #tpu.pipeline_mode<synchronous>, transform_indices = @transform_10, window_bounds = array<i64: 3, 1>}, {transform_indices = @transform_11, window_bounds = array<i64: 1, 3, 128>}]} {
    %c0 = arith.constant 0 : index
    %c0_0 = arith.constant 0 : index
    %c0_1 = arith.constant 0 : index
    %0 = vector.load %arg2[%c0, %c0_0, %c0_1] : memref<1x3x128xf32, #tpu.memory_space<vmem>>, vector<1x3x128xf32>
    %1 = vector.shape_cast %0 : vector<1x3x128xf32> to vector<3x128xf32>
    %c0_2 = arith.constant 0 : index
    %c0_3 = arith.constant 0 : index
    %2 = vector.load %arg3[%c0_2, %c0_3] : memref<256x3xf32, #tpu.memory_space<vmem>>, vector<256x3xf32>
    %cst = arith.constant dense<0.000000e+00> : vector<256x128xf32>
    %3 = tpu.matmul %2, %1, %cst {dimension_numbers = #tpu.dot_dimension_numbers<[1], [0], [0], [1], [0, 0, 1, 1], [], []>} : vector<256x3xf32>, vector<3x128xf32>, vector<256x128xf32> -> vector<256x128xf32>
    %c0_4 = arith.constant 0 : index
    %c0_5 = arith.constant 0 : index
    %c0_6 = arith.constant 0 : index
    %4 = vector.load %arg1[%c0_4, %c0_5, %c0_6] : memref<1x256x1xf32, #tpu.memory_space<vmem>>, vector<1x256x1xf32>
    %5 = vector.shape_cast %4 : vector<1x256x1xf32> to vector<256x1xf32>
    %6 = vector.broadcast %5 : vector<256x1xf32> to vector<256x128xf32>
    %7 = arith.addf %3, %6 : vector<256x128xf32>
    %8 = arith.truncf %7 : vector<256x128xf32> to vector<256x128xbf16>
    %c0_7 = arith.constant 0 : index
    %c0_8 = arith.constant 0 : index
    %c0_9 = arith.constant 0 : index
    %9 = vector.load %arg4[%c0_7, %c0_8, %c0_9] : memref<4x320x256xbf16, #tpu.memory_space<vmem>>, vector<1x320x256xbf16>
    %10 = vector.shape_cast %9 : vector<1x320x256xbf16> to vector<320x256xbf16>
    %cst_10 = arith.constant dense<0.000000e+00> : vector<320x128xf32>
    %11 = tpu.matmul %10, %8, %cst_10 {dimension_numbers = #tpu.dot_dimension_numbers<[1], [0], [0], [1], [0, 0, 1, 1], [], []>} : vector<320x256xbf16>, vector<256x128xbf16>, vector<320x128xf32> -> vector<320x128xf32>
    %c0_11 = arith.constant 0 : index
    %c0_12 = arith.constant 0 : index
    %c0_13 = arith.constant 0 : index
    %12 = vector.load %arg5[%c0_11, %c0_12, %c0_13] : memref<4x320x1xf32, #tpu.memory_space<vmem>>, vector<1x320x1xf32>
    %13 = vector.shape_cast %12 : vector<1x320x1xf32> to vector<320x1xf32>
    %14 = vector.broadcast %13 : vector<320x1xf32> to vector<320x128xf32>
    %15 = arith.addf %11, %14 : vector<320x128xf32>
    %16 = vector.extract_strided_slice %15 {offsets = [0, 0], sizes = [64, 128], strides = [1, 1]} : vector<320x128xf32> to vector<64x128xf32>
    %17 = vector.extract_strided_slice %15 {offsets = [64, 0], sizes = [256, 128], strides = [1, 1]} : vector<320x128xf32> to vector<256x128xf32>
    %18 = arith.truncf %16 : vector<64x128xf32> to vector<64x128xbf16>
    %cst_14 = arith.constant dense<0.000000e+00> : vector<128x128xf32>
    %19 = tpu.matmul %18, %18, %cst_14 {dimension_numbers = #tpu.dot_dimension_numbers<[0], [0], [1], [1], [0, 1, 1, 1], [], []>} : vector<64x128xbf16>, vector<64x128xbf16>, vector<128x128xf32> -> vector<128x128xf32>
    %cst_15 = arith.constant dense<0xFF800000> : vector<128xf32>
    %20 = vector.multi_reduction <maximumf>, %19, %cst_15 [1] : vector<128x128xf32> to vector<128xf32>
    %21 = vector.shape_cast %20 : vector<128xf32> to vector<128x1xf32>
    %22 = vector.broadcast %21 : vector<128x1xf32> to vector<128x128xf32>
    %23 = arith.subf %19, %22 : vector<128x128xf32>
    %24 = math.exp %23 : vector<128x128xf32>
    %cst_16 = arith.constant dense<0.000000e+00> : vector<128xf32>
    %25 = vector.multi_reduction <add>, %24, %cst_16 [1] : vector<128x128xf32> to vector<128xf32>
    %26 = vector.shape_cast %25 : vector<128xf32> to vector<128x1xf32>
    %27 = arith.truncf %24 : vector<128x128xf32> to vector<128x128xbf16>
    %28 = tpu.reciprocal %26 : vector<128x1xf32> -> vector<128x1xf32>
    %29 = vector.shape_cast %28 : vector<128x1xf32> to vector<1x128xf32>
    %30 = arith.truncf %29 : vector<1x128xf32> to vector<1x128xbf16>
    %cst_17 = arith.constant dense<0.000000e+00> : vector<1x128xf32>
    %31 = tpu.matmul %30, %27, %cst_17 {dimension_numbers = #tpu.dot_dimension_numbers<[1], [0], [0], [1], [0, 0, 1, 1], [], []>} : vector<1x128xbf16>, vector<128x128xbf16>, vector<1x128xf32> -> vector<1x128xf32>
    %32 = vector.broadcast %29 : vector<1x128xf32> to vector<256x128xf32>
    %33 = arith.mulf %17, %32 : vector<256x128xf32>
    %34 = arith.truncf %33 : vector<256x128xf32> to vector<256x128xbf16>
    %cst_18 = arith.constant dense<0.000000e+00> : vector<256x128xf32>
    %35 = tpu.matmul %34, %27, %cst_18 {dimension_numbers = #tpu.dot_dimension_numbers<[1], [0], [0], [1], [0, 0, 1, 1], [], []>} : vector<256x128xbf16>, vector<128x128xbf16>, vector<256x128xf32> -> vector<256x128xf32>
    %cst_19 = arith.constant 9.99999971E-10 : f32
    %36 = vector.broadcast %cst_19 : f32 to vector<1x128xf32>
    %37 = arith.addf %36, %31 : vector<1x128xf32>
    %38 = tpu.reciprocal %37 : vector<1x128xf32> -> vector<1x128xf32>
    %39 = vector.broadcast %38 : vector<1x128xf32> to vector<256x128xf32>
    %40 = arith.mulf %35, %39 : vector<256x128xf32>
    %c0_20 = arith.constant 0 : index
    %c0_21 = arith.constant 0 : index
    %c0_22 = arith.constant 0 : index
    %41 = vector.load %arg6[%c0_20, %c0_21, %c0_22] : memref<4x256x256xbf16, #tpu.memory_space<vmem>>, vector<1x256x256xbf16>
    %42 = vector.shape_cast %41 : vector<1x256x256xbf16> to vector<256x256xbf16>
    %43 = arith.subf %7, %40 : vector<256x128xf32>
    %44 = arith.truncf %43 : vector<256x128xf32> to vector<256x128xbf16>
    %cst_23 = arith.constant dense<0.000000e+00> : vector<256x128xf32>
    %45 = tpu.matmul %42, %44, %cst_23 {dimension_numbers = #tpu.dot_dimension_numbers<[1], [0], [0], [1], [0, 0, 1, 1], [], []>} : vector<256x256xbf16>, vector<256x128xbf16>, vector<256x128xf32> -> vector<256x128xf32>
    %c0_24 = arith.constant 0 : index
    %c0_25 = arith.constant 0 : index
    %c0_26 = arith.constant 0 : index
    %46 = vector.load %arg7[%c0_24, %c0_25, %c0_26] : memref<4x256x1xf32, #tpu.memory_space<vmem>>, vector<1x256x1xf32>
    %47 = vector.shape_cast %46 : vector<1x256x1xf32> to vector<256x1xf32>
    %48 = vector.broadcast %47 : vector<256x1xf32> to vector<256x128xf32>
    %49 = arith.addf %45, %48 : vector<256x128xf32>
    %cst_27 = arith.constant 0.000000e+00 : f32
    %50 = vector.broadcast %cst_27 : f32 to vector<256x128xf32>
    %51 = arith.cmpf oge, %49, %50 : vector<256x128xf32>
    %cst_28 = arith.constant 2.000000e-01 : f32
    %52 = vector.broadcast %cst_28 : f32 to vector<256x128xf32>
    %53 = arith.mulf %52, %49 : vector<256x128xf32>
    %54 = arith.select %51, %49, %53 : vector<256x128xi1>, vector<256x128xf32>
    %55 = arith.addf %7, %54 : vector<256x128xf32>
    %56 = arith.truncf %55 : vector<256x128xf32> to vector<256x128xbf16>
    %c0_29 = arith.constant 0 : index
    %c0_30 = arith.constant 0 : index
    %c0_31 = arith.constant 0 : index
    %57 = vector.load %arg8[%c0_29, %c0_30, %c0_31] : memref<4x256x256xbf16, #tpu.memory_space<vmem>>, vector<1x256x256xbf16>
    %58 = vector.shape_cast %57 : vector<1x256x256xbf16> to vector<256x256xbf16>
    %cst_32 = arith.constant dense<0.000000e+00> : vector<256x128xf32>
    %59 = tpu.matmul %58, %56, %cst_32 {dimension_numbers = #tpu.dot_dimension_numbers<[1], [0], [0], [1], [0, 0, 1, 1], [], []>} : vector<256x256xbf16>, vector<256x128xbf16>, vector<256x128xf32> -> vector<256x128xf32>
    %c1 = arith.constant 1 : index
    %c0_33 = arith.constant 0 : index
    %c0_34 = arith.constant 0 : index
    %60 = vector.load %arg4[%c1, %c0_33, %c0_34] : memref<4x320x256xbf16, #tpu.memory_space<vmem>>, vector<1x320x256xbf16>
    %61 = vector.shape_cast %60 : vector<1x320x256xbf16> to vector<320x256xbf16>
    %cst_35 = arith.constant dense<0.000000e+00> : vector<320x128xf32>
    %62 = tpu.matmul %61, %56, %cst_35 {dimension_numbers = #tpu.dot_dimension_numbers<[1], [0], [0], [1], [0, 0, 1, 1], [], []>} : vector<320x256xbf16>, vector<256x128xbf16>, vector<320x128xf32> -> vector<320x128xf32>
    %c1_36 = arith.constant 1 : index
    %c0_37 = arith.constant 0 : index
    %c0_38 = arith.constant 0 : index
    %63 = vector.load %arg5[%c1_36, %c0_37, %c0_38] : memref<4x320x1xf32, #tpu.memory_space<vmem>>, vector<1x320x1xf32>
    %64 = vector.shape_cast %63 : vector<1x320x1xf32> to vector<320x1xf32>
    %65 = vector.broadcast %64 : vector<320x1xf32> to vector<320x128xf32>
    %66 = arith.addf %62, %65 : vector<320x128xf32>
    %67 = vector.extract_strided_slice %66 {offsets = [0, 0], sizes = [64, 128], strides = [1, 1]} : vector<320x128xf32> to vector<64x128xf32>
    %68 = vector.extract_strided_slice %66 {offsets = [64, 0], sizes = [256, 128], strides = [1, 1]} : vector<320x128xf32> to vector<256x128xf32>
    %69 = arith.truncf %67 : vector<64x128xf32> to vector<64x128xbf16>
    %cst_39 = arith.constant dense<0.000000e+00> : vector<128x128xf32>
    %70 = tpu.matmul %69, %69, %cst_39 {dimension_numbers = #tpu.dot_dimension_numbers<[0], [0], [1], [1], [0, 1, 1, 1], [], []>} : vector<64x128xbf16>, vector<64x128xbf16>, vector<128x128xf32> -> vector<128x128xf32>
    %cst_40 = arith.constant dense<0xFF800000> : vector<128xf32>
    %71 = vector.multi_reduction <maximumf>, %70, %cst_40 [1] : vector<128x128xf32> to vector<128xf32>
    %72 = vector.shape_cast %71 : vector<128xf32> to vector<128x1xf32>
    %73 = vector.broadcast %72 : vector<128x1xf32> to vector<128x128xf32>
    %74 = arith.subf %70, %73 : vector<128x128xf32>
    %75 = math.exp %74 : vector<128x128xf32>
    %cst_41 = arith.constant dense<0.000000e+00> : vector<128xf32>
    %76 = vector.multi_reduction <add>, %75, %cst_41 [1] : vector<128x128xf32> to vector<128xf32>
    %77 = vector.shape_cast %76 : vector<128xf32> to vector<128x1xf32>
    %78 = arith.truncf %75 : vector<128x128xf32> to vector<128x128xbf16>
    %79 = tpu.reciprocal %77 : vector<128x1xf32> -> vector<128x1xf32>
    %80 = vector.shape_cast %79 : vector<128x1xf32> to vector<1x128xf32>
    %81 = arith.truncf %80 : vector<1x128xf32> to vector<1x128xbf16>
    %cst_42 = arith.constant dense<0.000000e+00> : vector<1x128xf32>
    %82 = tpu.matmul %81, %78, %cst_42 {dimension_numbers = #tpu.dot_dimension_numbers<[1], [0], [0], [1], [0, 0, 1, 1], [], []>} : vector<1x128xbf16>, vector<128x128xbf16>, vector<1x128xf32> -> vector<1x128xf32>
    %83 = vector.broadcast %80 : vector<1x128xf32> to vector<256x128xf32>
    %84 = arith.mulf %68, %83 : vector<256x128xf32>
    %85 = arith.truncf %84 : vector<256x128xf32> to vector<256x128xbf16>
    %cst_43 = arith.constant dense<0.000000e+00> : vector<256x128xf32>
    %86 = tpu.matmul %85, %78, %cst_43 {dimension_numbers = #tpu.dot_dimension_numbers<[1], [0], [0], [1], [0, 0, 1, 1], [], []>} : vector<256x128xbf16>, vector<128x128xbf16>, vector<256x128xf32> -> vector<256x128xf32>
    %cst_44 = arith.constant 9.99999971E-10 : f32
    %87 = vector.broadcast %cst_44 : f32 to vector<1x128xf32>
    %88 = arith.addf %87, %82 : vector<1x128xf32>
    %89 = tpu.reciprocal %88 : vector<1x128xf32> -> vector<1x128xf32>
    %90 = vector.broadcast %89 : vector<1x128xf32> to vector<256x128xf32>
    %91 = arith.mulf %86, %90 : vector<256x128xf32>
    %c1_45 = arith.constant 1 : index
    %c0_46 = arith.constant 0 : index
    %c0_47 = arith.constant 0 : index
    %92 = vector.load %arg6[%c1_45, %c0_46, %c0_47] : memref<4x256x256xbf16, #tpu.memory_space<vmem>>, vector<1x256x256xbf16>
    %93 = vector.shape_cast %92 : vector<1x256x256xbf16> to vector<256x256xbf16>
    %94 = arith.subf %55, %91 : vector<256x128xf32>
    %95 = arith.truncf %94 : vector<256x128xf32> to vector<256x128xbf16>
    %cst_48 = arith.constant dense<0.000000e+00> : vector<256x128xf32>
    %96 = tpu.matmul %93, %95, %cst_48 {dimension_numbers = #tpu.dot_dimension_numbers<[1], [0], [0], [1], [0, 0, 1, 1], [], []>} : vector<256x256xbf16>, vector<256x128xbf16>, vector<256x128xf32> -> vector<256x128xf32>
    %c1_49 = arith.constant 1 : index
    %c0_50 = arith.constant 0 : index
    %c0_51 = arith.constant 0 : index
    %97 = vector.load %arg7[%c1_49, %c0_50, %c0_51] : memref<4x256x1xf32, #tpu.memory_space<vmem>>, vector<1x256x1xf32>
    %98 = vector.shape_cast %97 : vector<1x256x1xf32> to vector<256x1xf32>
    %99 = vector.broadcast %98 : vector<256x1xf32> to vector<256x128xf32>
    %100 = arith.addf %96, %99 : vector<256x128xf32>
    %cst_52 = arith.constant 0.000000e+00 : f32
    %101 = vector.broadcast %cst_52 : f32 to vector<256x128xf32>
    %102 = arith.cmpf oge, %100, %101 : vector<256x128xf32>
    %cst_53 = arith.constant 2.000000e-01 : f32
    %103 = vector.broadcast %cst_53 : f32 to vector<256x128xf32>
    %104 = arith.mulf %103, %100 : vector<256x128xf32>
    %105 = arith.select %102, %100, %104 : vector<256x128xi1>, vector<256x128xf32>
    %106 = arith.addf %55, %105 : vector<256x128xf32>
    %107 = arith.truncf %106 : vector<256x128xf32> to vector<256x128xbf16>
    %c1_54 = arith.constant 1 : index
    %c0_55 = arith.constant 0 : index
    %c0_56 = arith.constant 0 : index
    %108 = vector.load %arg8[%c1_54, %c0_55, %c0_56] : memref<4x256x256xbf16, #tpu.memory_space<vmem>>, vector<1x256x256xbf16>
    %109 = vector.shape_cast %108 : vector<1x256x256xbf16> to vector<256x256xbf16>
    %cst_57 = arith.constant dense<0.000000e+00> : vector<256x128xf32>
    %110 = tpu.matmul %109, %107, %cst_57 {dimension_numbers = #tpu.dot_dimension_numbers<[1], [0], [0], [1], [0, 0, 1, 1], [], []>} : vector<256x256xbf16>, vector<256x128xbf16>, vector<256x128xf32> -> vector<256x128xf32>
    %111 = arith.addf %59, %110 : vector<256x128xf32>
    %c2 = arith.constant 2 : index
    %c0_58 = arith.constant 0 : index
    %c0_59 = arith.constant 0 : index
    %112 = vector.load %arg4[%c2, %c0_58, %c0_59] : memref<4x320x256xbf16, #tpu.memory_space<vmem>>, vector<1x320x256xbf16>
    %113 = vector.shape_cast %112 : vector<1x320x256xbf16> to vector<320x256xbf16>
    %cst_60 = arith.constant dense<0.000000e+00> : vector<320x128xf32>
    %114 = tpu.matmul %113, %107, %cst_60 {dimension_numbers = #tpu.dot_dimension_numbers<[1], [0], [0], [1], [0, 0, 1, 1], [], []>} : vector<320x256xbf16>, vector<256x128xbf16>, vector<320x128xf32> -> vector<320x128xf32>
    %c2_61 = arith.constant 2 : index
    %c0_62 = arith.constant 0 : index
    %c0_63 = arith.constant 0 : index
    %115 = vector.load %arg5[%c2_61, %c0_62, %c0_63] : memref<4x320x1xf32, #tpu.memory_space<vmem>>, vector<1x320x1xf32>
    %116 = vector.shape_cast %115 : vector<1x320x1xf32> to vector<320x1xf32>
    %117 = vector.broadcast %116 : vector<320x1xf32> to vector<320x128xf32>
    %118 = arith.addf %114, %117 : vector<320x128xf32>
    %119 = vector.extract_strided_slice %118 {offsets = [0, 0], sizes = [64, 128], strides = [1, 1]} : vector<320x128xf32> to vector<64x128xf32>
    %120 = vector.extract_strided_slice %118 {offsets = [64, 0], sizes = [256, 128], strides = [1, 1]} : vector<320x128xf32> to vector<256x128xf32>
    %121 = arith.truncf %119 : vector<64x128xf32> to vector<64x128xbf16>
    %cst_64 = arith.constant dense<0.000000e+00> : vector<128x128xf32>
    %122 = tpu.matmul %121, %121, %cst_64 {dimension_numbers = #tpu.dot_dimension_numbers<[0], [0], [1], [1], [0, 1, 1, 1], [], []>} : vector<64x128xbf16>, vector<64x128xbf16>, vector<128x128xf32> -> vector<128x128xf32>
    %cst_65 = arith.constant dense<0xFF800000> : vector<128xf32>
    %123 = vector.multi_reduction <maximumf>, %122, %cst_65 [1] : vector<128x128xf32> to vector<128xf32>
    %124 = vector.shape_cast %123 : vector<128xf32> to vector<128x1xf32>
    %125 = vector.broadcast %124 : vector<128x1xf32> to vector<128x128xf32>
    %126 = arith.subf %122, %125 : vector<128x128xf32>
    %127 = math.exp %126 : vector<128x128xf32>
    %cst_66 = arith.constant dense<0.000000e+00> : vector<128xf32>
    %128 = vector.multi_reduction <add>, %127, %cst_66 [1] : vector<128x128xf32> to vector<128xf32>
    %129 = vector.shape_cast %128 : vector<128xf32> to vector<128x1xf32>
    %130 = arith.truncf %127 : vector<128x128xf32> to vector<128x128xbf16>
    %131 = tpu.reciprocal %129 : vector<128x1xf32> -> vector<128x1xf32>
    %132 = vector.shape_cast %131 : vector<128x1xf32> to vector<1x128xf32>
    %133 = arith.truncf %132 : vector<1x128xf32> to vector<1x128xbf16>
    %cst_67 = arith.constant dense<0.000000e+00> : vector<1x128xf32>
    %134 = tpu.matmul %133, %130, %cst_67 {dimension_numbers = #tpu.dot_dimension_numbers<[1], [0], [0], [1], [0, 0, 1, 1], [], []>} : vector<1x128xbf16>, vector<128x128xbf16>, vector<1x128xf32> -> vector<1x128xf32>
    %135 = vector.broadcast %132 : vector<1x128xf32> to vector<256x128xf32>
    %136 = arith.mulf %120, %135 : vector<256x128xf32>
    %137 = arith.truncf %136 : vector<256x128xf32> to vector<256x128xbf16>
    %cst_68 = arith.constant dense<0.000000e+00> : vector<256x128xf32>
    %138 = tpu.matmul %137, %130, %cst_68 {dimension_numbers = #tpu.dot_dimension_numbers<[1], [0], [0], [1], [0, 0, 1, 1], [], []>} : vector<256x128xbf16>, vector<128x128xbf16>, vector<256x128xf32> -> vector<256x128xf32>
    %cst_69 = arith.constant 9.99999971E-10 : f32
    %139 = vector.broadcast %cst_69 : f32 to vector<1x128xf32>
    %140 = arith.addf %139, %134 : vector<1x128xf32>
    %141 = tpu.reciprocal %140 : vector<1x128xf32> -> vector<1x128xf32>
    %142 = vector.broadcast %141 : vector<1x128xf32> to vector<256x128xf32>
    %143 = arith.mulf %138, %142 : vector<256x128xf32>
    %c2_70 = arith.constant 2 : index
    %c0_71 = arith.constant 0 : index
    %c0_72 = arith.constant 0 : index
    %144 = vector.load %arg6[%c2_70, %c0_71, %c0_72] : memref<4x256x256xbf16, #tpu.memory_space<vmem>>, vector<1x256x256xbf16>
    %145 = vector.shape_cast %144 : vector<1x256x256xbf16> to vector<256x256xbf16>
    %146 = arith.subf %106, %143 : vector<256x128xf32>
    %147 = arith.truncf %146 : vector<256x128xf32> to vector<256x128xbf16>
    %cst_73 = arith.constant dense<0.000000e+00> : vector<256x128xf32>
    %148 = tpu.matmul %145, %147, %cst_73 {dimension_numbers = #tpu.dot_dimension_numbers<[1], [0], [0], [1], [0, 0, 1, 1], [], []>} : vector<256x256xbf16>, vector<256x128xbf16>, vector<256x128xf32> -> vector<256x128xf32>
    %c2_74 = arith.constant 2 : index
    %c0_75 = arith.constant 0 : index
    %c0_76 = arith.constant 0 : index
    %149 = vector.load %arg7[%c2_74, %c0_75, %c0_76] : memref<4x256x1xf32, #tpu.memory_space<vmem>>, vector<1x256x1xf32>
    %150 = vector.shape_cast %149 : vector<1x256x1xf32> to vector<256x1xf32>
    %151 = vector.broadcast %150 : vector<256x1xf32> to vector<256x128xf32>
    %152 = arith.addf %148, %151 : vector<256x128xf32>
    %cst_77 = arith.constant 0.000000e+00 : f32
    %153 = vector.broadcast %cst_77 : f32 to vector<256x128xf32>
    %154 = arith.cmpf oge, %152, %153 : vector<256x128xf32>
    %cst_78 = arith.constant 2.000000e-01 : f32
    %155 = vector.broadcast %cst_78 : f32 to vector<256x128xf32>
    %156 = arith.mulf %155, %152 : vector<256x128xf32>
    %157 = arith.select %154, %152, %156 : vector<256x128xi1>, vector<256x128xf32>
    %158 = arith.addf %106, %157 : vector<256x128xf32>
    %159 = arith.truncf %158 : vector<256x128xf32> to vector<256x128xbf16>
    %c2_79 = arith.constant 2 : index
    %c0_80 = arith.constant 0 : index
    %c0_81 = arith.constant 0 : index
    %160 = vector.load %arg8[%c2_79, %c0_80, %c0_81] : memref<4x256x256xbf16, #tpu.memory_space<vmem>>, vector<1x256x256xbf16>
    %161 = vector.shape_cast %160 : vector<1x256x256xbf16> to vector<256x256xbf16>
    %cst_82 = arith.constant dense<0.000000e+00> : vector<256x128xf32>
    %162 = tpu.matmul %161, %159, %cst_82 {dimension_numbers = #tpu.dot_dimension_numbers<[1], [0], [0], [1], [0, 0, 1, 1], [], []>} : vector<256x256xbf16>, vector<256x128xbf16>, vector<256x128xf32> -> vector<256x128xf32>
    %163 = arith.addf %111, %162 : vector<256x128xf32>
    %c3 = arith.constant 3 : index
    %c0_83 = arith.constant 0 : index
    %c0_84 = arith.constant 0 : index
    %164 = vector.load %arg4[%c3, %c0_83, %c0_84] : memref<4x320x256xbf16, #tpu.memory_space<vmem>>, vector<1x320x256xbf16>
    %165 = vector.shape_cast %164 : vector<1x320x256xbf16> to vector<320x256xbf16>
    %cst_85 = arith.constant dense<0.000000e+00> : vector<320x128xf32>
    %166 = tpu.matmul %165, %159, %cst_85 {dimension_numbers = #tpu.dot_dimension_numbers<[1], [0], [0], [1], [0, 0, 1, 1], [], []>} : vector<320x256xbf16>, vector<256x128xbf16>, vector<320x128xf32> -> vector<320x128xf32>
    %c3_86 = arith.constant 3 : index
    %c0_87 = arith.constant 0 : index
    %c0_88 = arith.constant 0 : index
    %167 = vector.load %arg5[%c3_86, %c0_87, %c0_88] : memref<4x320x1xf32, #tpu.memory_space<vmem>>, vector<1x320x1xf32>
    %168 = vector.shape_cast %167 : vector<1x320x1xf32> to vector<320x1xf32>
    %169 = vector.broadcast %168 : vector<320x1xf32> to vector<320x128xf32>
    %170 = arith.addf %166, %169 : vector<320x128xf32>
    %171 = vector.extract_strided_slice %170 {offsets = [0, 0], sizes = [64, 128], strides = [1, 1]} : vector<320x128xf32> to vector<64x128xf32>
    %172 = vector.extract_strided_slice %170 {offsets = [64, 0], sizes = [256, 128], strides = [1, 1]} : vector<320x128xf32> to vector<256x128xf32>
    %173 = arith.truncf %171 : vector<64x128xf32> to vector<64x128xbf16>
    %cst_89 = arith.constant dense<0.000000e+00> : vector<128x128xf32>
    %174 = tpu.matmul %173, %173, %cst_89 {dimension_numbers = #tpu.dot_dimension_numbers<[0], [0], [1], [1], [0, 1, 1, 1], [], []>} : vector<64x128xbf16>, vector<64x128xbf16>, vector<128x128xf32> -> vector<128x128xf32>
    %cst_90 = arith.constant dense<0xFF800000> : vector<128xf32>
    %175 = vector.multi_reduction <maximumf>, %174, %cst_90 [1] : vector<128x128xf32> to vector<128xf32>
    %176 = vector.shape_cast %175 : vector<128xf32> to vector<128x1xf32>
    %177 = vector.broadcast %176 : vector<128x1xf32> to vector<128x128xf32>
    %178 = arith.subf %174, %177 : vector<128x128xf32>
    %179 = math.exp %178 : vector<128x128xf32>
    %cst_91 = arith.constant dense<0.000000e+00> : vector<128xf32>
    %180 = vector.multi_reduction <add>, %179, %cst_91 [1] : vector<128x128xf32> to vector<128xf32>
    %181 = vector.shape_cast %180 : vector<128xf32> to vector<128x1xf32>
    %182 = arith.truncf %179 : vector<128x128xf32> to vector<128x128xbf16>
    %183 = tpu.reciprocal %181 : vector<128x1xf32> -> vector<128x1xf32>
    %184 = vector.shape_cast %183 : vector<128x1xf32> to vector<1x128xf32>
    %185 = arith.truncf %184 : vector<1x128xf32> to vector<1x128xbf16>
    %cst_92 = arith.constant dense<0.000000e+00> : vector<1x128xf32>
    %186 = tpu.matmul %185, %182, %cst_92 {dimension_numbers = #tpu.dot_dimension_numbers<[1], [0], [0], [1], [0, 0, 1, 1], [], []>} : vector<1x128xbf16>, vector<128x128xbf16>, vector<1x128xf32> -> vector<1x128xf32>
    %187 = vector.broadcast %184 : vector<1x128xf32> to vector<256x128xf32>
    %188 = arith.mulf %172, %187 : vector<256x128xf32>
    %189 = arith.truncf %188 : vector<256x128xf32> to vector<256x128xbf16>
    %cst_93 = arith.constant dense<0.000000e+00> : vector<256x128xf32>
    %190 = tpu.matmul %189, %182, %cst_93 {dimension_numbers = #tpu.dot_dimension_numbers<[1], [0], [0], [1], [0, 0, 1, 1], [], []>} : vector<256x128xbf16>, vector<128x128xbf16>, vector<256x128xf32> -> vector<256x128xf32>
    %cst_94 = arith.constant 9.99999971E-10 : f32
    %191 = vector.broadcast %cst_94 : f32 to vector<1x128xf32>
    %192 = arith.addf %191, %186 : vector<1x128xf32>
    %193 = tpu.reciprocal %192 : vector<1x128xf32> -> vector<1x128xf32>
    %194 = vector.broadcast %193 : vector<1x128xf32> to vector<256x128xf32>
    %195 = arith.mulf %190, %194 : vector<256x128xf32>
    %c3_95 = arith.constant 3 : index
    %c0_96 = arith.constant 0 : index
    %c0_97 = arith.constant 0 : index
    %196 = vector.load %arg6[%c3_95, %c0_96, %c0_97] : memref<4x256x256xbf16, #tpu.memory_space<vmem>>, vector<1x256x256xbf16>
    %197 = vector.shape_cast %196 : vector<1x256x256xbf16> to vector<256x256xbf16>
    %198 = arith.subf %158, %195 : vector<256x128xf32>
    %199 = arith.truncf %198 : vector<256x128xf32> to vector<256x128xbf16>
    %cst_98 = arith.constant dense<0.000000e+00> : vector<256x128xf32>
    %200 = tpu.matmul %197, %199, %cst_98 {dimension_numbers = #tpu.dot_dimension_numbers<[1], [0], [0], [1], [0, 0, 1, 1], [], []>} : vector<256x256xbf16>, vector<256x128xbf16>, vector<256x128xf32> -> vector<256x128xf32>
    %c3_99 = arith.constant 3 : index
    %c0_100 = arith.constant 0 : index
    %c0_101 = arith.constant 0 : index
    %201 = vector.load %arg7[%c3_99, %c0_100, %c0_101] : memref<4x256x1xf32, #tpu.memory_space<vmem>>, vector<1x256x1xf32>
    %202 = vector.shape_cast %201 : vector<1x256x1xf32> to vector<256x1xf32>
    %203 = vector.broadcast %202 : vector<256x1xf32> to vector<256x128xf32>
    %204 = arith.addf %200, %203 : vector<256x128xf32>
    %cst_102 = arith.constant 0.000000e+00 : f32
    %205 = vector.broadcast %cst_102 : f32 to vector<256x128xf32>
    %206 = arith.cmpf oge, %204, %205 : vector<256x128xf32>
    %cst_103 = arith.constant 2.000000e-01 : f32
    %207 = vector.broadcast %cst_103 : f32 to vector<256x128xf32>
    %208 = arith.mulf %207, %204 : vector<256x128xf32>
    %209 = arith.select %206, %204, %208 : vector<256x128xi1>, vector<256x128xf32>
    %210 = arith.addf %158, %209 : vector<256x128xf32>
    %211 = arith.truncf %210 : vector<256x128xf32> to vector<256x128xbf16>
    %c3_104 = arith.constant 3 : index
    %c0_105 = arith.constant 0 : index
    %c0_106 = arith.constant 0 : index
    %212 = vector.load %arg8[%c3_104, %c0_105, %c0_106] : memref<4x256x256xbf16, #tpu.memory_space<vmem>>, vector<1x256x256xbf16>
    %213 = vector.shape_cast %212 : vector<1x256x256xbf16> to vector<256x256xbf16>
    %cst_107 = arith.constant dense<0.000000e+00> : vector<256x128xf32>
    %214 = tpu.matmul %213, %211, %cst_107 {dimension_numbers = #tpu.dot_dimension_numbers<[1], [0], [0], [1], [0, 0, 1, 1], [], []>} : vector<256x256xbf16>, vector<256x128xbf16>, vector<256x128xf32> -> vector<256x128xf32>
    %215 = arith.addf %163, %214 : vector<256x128xf32>
    %c0_108 = arith.constant 0 : index
    %c0_109 = arith.constant 0 : index
    %216 = vector.load %arg9[%c0_108, %c0_109] : memref<256x1xf32, #tpu.memory_space<vmem>>, vector<256x1xf32>
    %217 = vector.broadcast %216 : vector<256x1xf32> to vector<256x128xf32>
    %218 = arith.addf %215, %217 : vector<256x128xf32>
    %cst_110 = arith.constant 0.000000e+00 : f32
    %219 = vector.broadcast %cst_110 : f32 to vector<256x128xf32>
    %220 = arith.cmpf oge, %218, %219 : vector<256x128xf32>
    %cst_111 = arith.constant 2.000000e-01 : f32
    %221 = vector.broadcast %cst_111 : f32 to vector<256x128xf32>
    %222 = arith.mulf %221, %218 : vector<256x128xf32>
    %223 = arith.select %220, %218, %222 : vector<256x128xi1>, vector<256x128xf32>
    %c0_112 = arith.constant 0 : index
    %c0_113 = arith.constant 0 : index
    %224 = vector.load %arg10[%c0_112, %c0_113] : memref<3x256xbf16, #tpu.memory_space<vmem>>, vector<3x256xbf16>
    %225 = arith.truncf %223 : vector<256x128xf32> to vector<256x128xbf16>
    %cst_114 = arith.constant dense<0.000000e+00> : vector<3x128xf32>
    %226 = tpu.matmul %224, %225, %cst_114 {dimension_numbers = #tpu.dot_dimension_numbers<[1], [0], [0], [1], [0, 0, 1, 1], [], []>} : vector<3x256xbf16>, vector<256x128xbf16>, vector<3x128xf32> -> vector<3x128xf32>
    %c0_115 = arith.constant 0 : index
    %c0_116 = arith.constant 0 : index
    %227 = vector.load %arg11[%c0_115, %c0_116] : memref<3x1xf32, #tpu.memory_space<vmem>>, vector<3x1xf32>
    %228 = vector.broadcast %227 : vector<3x1xf32> to vector<3x128xf32>
    %229 = arith.addf %226, %228 : vector<3x128xf32>
    %230 = math.tanh %229 : vector<3x128xf32>
    %c0_117 = arith.constant 0 : index
    %c0_118 = arith.constant 0 : index
    %c0_119 = arith.constant 0 : index
    %231 = vector.load %arg12[%c0_117, %c0_118, %c0_119] : memref<1x3x128xf32, #tpu.memory_space<vmem>>, vector<1x3x128xf32>
    %232 = vector.shape_cast %231 : vector<1x3x128xf32> to vector<3x128xf32>
    %233 = vector.shape_cast %230 : vector<3x128xf32> to vector<1x3x128xf32>
    tpu.vector_store %arg12[%c0_117, %c0_118, %c0_119], %233 {strides = array<i32>} : memref<1x3x128xf32, #tpu.memory_space<vmem>>, vector<1x3x128xf32>,
    return
  }
  func.func @transform_0(%arg0: i32) -> (i32, i32, i32) {
    %c0_i32 = arith.constant 0 : i32
    %c0_i32_0 = arith.constant 0 : i32
    %c0_i32_1 = arith.constant 0 : i32
    return %arg0, %c0_i32, %c0_i32_0 : i32, i32, i32
  }
  func.func @transform_1(%arg0: i32) -> (i32, i32, i32) {
    %c0_i32 = arith.constant 0 : i32
    %c0_i32_0 = arith.constant 0 : i32
    %c0_i32_1 = arith.constant 0 : i32
    return %arg0, %c0_i32, %c0_i32_0 : i32, i32, i32
  }
  func.func @transform_2(%arg0: i32) -> (i32, i32) {
    %c0_i32 = arith.constant 0 : i32
    %c0_i32_0 = arith.constant 0 : i32
    %c0_i32_1 = arith.constant 0 : i32
    return %c0_i32, %c0_i32_0 : i32, i32
  }
  func.func @transform_3(%arg0: i32) -> (i32, i32, i32) {
    %c0_i32 = arith.constant 0 : i32
    %c0_i32_0 = arith.constant 0 : i32
    %c0_i32_1 = arith.constant 0 : i32
    %c0_i32_2 = arith.constant 0 : i32
    return %c0_i32, %c0_i32_0, %c0_i32_1 : i32, i32, i32
  }
  func.func @transform_4(%arg0: i32) -> (i32, i32, i32) {
    %c0_i32 = arith.constant 0 : i32
    %c0_i32_0 = arith.constant 0 : i32
    %c0_i32_1 = arith.constant 0 : i32
    %c0_i32_2 = arith.constant 0 : i32
    return %c0_i32, %c0_i32_0, %c0_i32_1 : i32, i32, i32
  }
  func.func @transform_5(%arg0: i32) -> (i32, i32, i32) {
    %c0_i32 = arith.constant 0 : i32
    %c0_i32_0 = arith.constant 0 : i32
    %c0_i32_1 = arith.constant 0 : i32
    %c0_i32_2 = arith.constant 0 : i32
    return %c0_i32, %c0_i32_0, %c0_i32_1 : i32, i32, i32
  }
  func.func @transform_6(%arg0: i32) -> (i32, i32, i32) {
    %c0_i32 = arith.constant 0 : i32
    %c0_i32_0 = arith.constant 0 : i32
    %c0_i32_1 = arith.constant 0 : i32
    %c0_i32_2 = arith.constant 0 : i32
    return %c0_i32, %c0_i32_0, %c0_i32_1 : i32, i32, i32
  }
  func.func @transform_7(%arg0: i32) -> (i32, i32, i32) {
    %c0_i32 = arith.constant 0 : i32
    %c0_i32_0 = arith.constant 0 : i32
    %c0_i32_1 = arith.constant 0 : i32
    %c0_i32_2 = arith.constant 0 : i32
    return %c0_i32, %c0_i32_0, %c0_i32_1 : i32, i32, i32
  }
  func.func @transform_8(%arg0: i32) -> (i32, i32) {
    %c0_i32 = arith.constant 0 : i32
    %c0_i32_0 = arith.constant 0 : i32
    %c0_i32_1 = arith.constant 0 : i32
    return %c0_i32, %c0_i32_0 : i32, i32
  }
  func.func @transform_9(%arg0: i32) -> (i32, i32) {
    %c0_i32 = arith.constant 0 : i32
    %c0_i32_0 = arith.constant 0 : i32
    %c0_i32_1 = arith.constant 0 : i32
    return %c0_i32, %c0_i32_0 : i32, i32
  }
  func.func @transform_10(%arg0: i32) -> (i32, i32) {
    %c0_i32 = arith.constant 0 : i32
    %c0_i32_0 = arith.constant 0 : i32
    %c0_i32_1 = arith.constant 0 : i32
    return %c0_i32, %c0_i32_0 : i32, i32
  }
  func.func @transform_11(%arg0: i32) -> (i32, i32, i32) {
    %c0_i32 = arith.constant 0 : i32
    %c0_i32_0 = arith.constant 0 : i32
    %c0_i32_1 = arith.constant 0 : i32
    return %arg0, %c0_i32, %c0_i32_0 : i32, i32, i32
  }
}

</mosaic_0001>

<llo_original>
// kernel: multishape_oa_decoder.1
$region0: #{multishape_oa_decoder.1}
  #allocation0 [shape = 'u32[]', space=smem, size = 0x4, offset = 0x4, fixed_abs, tag = 'smem constant byte address 0x4 - core index']
  #allocation1 [shape = 'u32[144,128]{1,0:T(1,128)}', space=vmem, size = 0x12000, scoped, tag = 'internal scratch']
  %s0 = inlined_call_operand.vmem [shape: f32[2,256,1], index: 0, kind: input, shape index: {}]
  %s1 = inlined_call_operand.vmem [shape: f32[2,3,128], index: 1, kind: input, shape index: {}]
  %s2 = inlined_call_operand.vmem [shape: f32[256,3], index: 2, kind: input, shape index: {}]
  %s3 = inlined_call_operand.vmem [shape: bf16[4,320,256], index: 3, kind: input, shape index: {}]
  %s4 = inlined_call_operand.vmem [shape: f32[4,320,1], index: 4, kind: input, shape index: {}]
  %s5 = inlined_call_operand.vmem [shape: bf16[4,256,256], index: 5, kind: input, shape index: {}]
  %s6 = inlined_call_operand.vmem [shape: f32[4,256,1], index: 6, kind: input, shape index: {}]
  %s7 = inlined_call_operand.vmem [shape: bf16[4,256,256], index: 7, kind: input, shape index: {}]
  %s8 = inlined_call_operand.vmem [shape: f32[256,1], index: 8, kind: input, shape index: {}]
  %s9 = inlined_call_operand.vmem [shape: bf16[3,256], index: 9, kind: input, shape index: {}]
  %s10 = inlined_call_operand.vmem [shape: f32[3,1], index: 10, kind: input, shape index: {}]
  %s11 = inlined_call_operand.vmem [shape: f32[2,3,128], index: 11, kind: output, shape index: {}]
  %s12 = sld [smem:[#allocation0]]
  $region77: #{multishape_oa_decoder.1} parent=0
    _
  %s14 = ssub.s32 1, %s12
  %s15 = scalar_select 0, %s14, %s12
  loop: start=0, step=1, limit=4
  $region2: #{multishape_oa_decoder.1} parent=0 // loop_pre_header
    _
  $region3: #{multishape_oa_decoder.1} parent=0 // loop_header
    %s17 = sphi 0, %s21
    %p18 = scmp.ge.s32.totalorder %s17, 4
    %s27 = sphi 0, %s29
    %s30 = sphi 0, %s27
    %s31 = sphi 0, %s30
    %s47 = sphi 0, %s31
    %s53 = sphi 0, %s55
    %s56 = sphi 0, %s53
    %s57 = sphi 0, %s56
    %s73 = sphi 0, %s57
    %s77 = sphi 0, %s77
    %s79 = sphi 0, %s77
    %s80 = sphi 0, %s79
    %s94 = sphi 0, %s80
    %s98 = sphi 0, %s98
    %s100 = sphi 0, %s98
    %s101 = sphi 0, %s100
    %s115 = sphi 0, %s101
    %s119 = sphi 0, %s119
    %s121 = sphi 0, %s119
    %s122 = sphi 0, %s121
    %s136 = sphi 0, %s122
    %s140 = sphi 0, %s140
    %s142 = sphi 0, %s140
    %s143 = sphi 0, %s142
    %s157 = sphi 0, %s143
    %s161 = sphi 0, %s161
    %s163 = sphi 0, %s161
    %s164 = sphi 0, %s163
    %s178 = sphi 0, %s164
    %s182 = sphi 0, %s182
    %s184 = sphi 0, %s182
    %s185 = sphi 0, %s184
    %s199 = sphi 0, %s185
    %s203 = sphi 0, %s203
    %s205 = sphi 0, %s203
    %s206 = sphi 0, %s205
    %s220 = sphi 0, %s206
    %s224 = sphi 0, %s224
    %s226 = sphi 0, %s224
    %s227 = sphi 0, %s226
    %s241 = sphi 0, %s227
    %s245 = sphi 0, %s245
    %s247 = sphi 0, %s245
    %s248 = sphi 0, %s247
    %s262 = sphi 0, %s248
    %s268 = sphi 0, %s270
    %s271 = sphi 0, %s268
    %s272 = sphi 0, %s271
    %s288 = sphi 0, %s272
  $region4: #{multishape_oa_decoder.1} parent=0 // loop_header_branch
    %20 = sbr.rel (%p18) target = $region8
  $region5: #{multishape_oa_decoder.1} parent=0 // loop_body
    %s22 = ssub.s32 %s17, 1
    %s23 = ssub.s32 %s17, 2
    %s24 = sadd.s32 %s17, 1
    %s25 = ssub.s32 %s17, %s24
    %p26 = scmp.eq.s32.totalorder %s25, 0
    %s28 = sadd.s32 %s27, 1
    %s29 = scalar_select %p26, %s27, %s28
    %p32 = pneg %p26
    %p33 = scmp.eq.s32.totalorder %s17, 1
    %p34 = por %p32, %p33
    %p35 = scmp.ne.s32.totalorder %s27, %s30
    %p36 = scmp.eq.s32.totalorder %s17, 0
    %p37 = por %p35, %p36
    %p38 = scmp.ne.s32.totalorder %s27, %s30
    %p39 = scmp.eq.s32.totalorder %s22, 1
    %p40 = por %p38, %p39
    %p41 = scmp.ne.s32.totalorder %s30, %s31
    %p42 = scmp.eq.s32.totalorder %s22, 0
    %p43 = por %p41, %p42
    %p44 = scmp.ne.s32.totalorder %s30, %s31
    %p45 = scmp.eq.s32.totalorder %s23, 1
    %p46 = por %p44, %p45
    %p48 = scmp.ne.s32.totalorder %s31, %s47
    %p49 = scmp.eq.s32.totalorder %s23, 0
    %p50 = por %p48, %p49
    %s51 = ssub.s32 %s17, %s24
    %p52 = scmp.eq.s32.totalorder %s51, 0
    %s54 = sadd.s32 %s53, 1
    %s55 = scalar_select %p52, %s53, %s54
    %p58 = pneg %p52
    %p59 = scmp.eq.s32.totalorder %s17, 1
    %p60 = por %p58, %p59
    %p61 = scmp.ne.s32.totalorder %s53, %s56
    %p62 = scmp.eq.s32.totalorder %s17, 0
    %p63 = por %p61, %p62
    %p64 = scmp.ne.s32.totalorder %s53, %s56
    %p65 = scmp.eq.s32.totalorder %s22, 1
    %p66 = por %p64, %p65
    %p67 = scmp.ne.s32.totalorder %s56, %s57
    %p68 = scmp.eq.s32.totalorder %s22, 0
    %p69 = por %p67, %p68
    %p70 = scmp.ne.s32.totalorder %s56, %s57
    %p71 = scmp.eq.s32.totalorder %s23, 1
    %p72 = por %p70, %p71
    %p74 = scmp.ne.s32.totalorder %s57, %s73
    %p75 = scmp.eq.s32.totalorder %s23, 0
    %p76 = por %p74, %p75
    %s78 = sadd.s32 %s77, 1
    %p81 = scmp.eq.s32.totalorder %s17, 1
    %p82 = scmp.ne.s32.totalorder %s77, %s79
    %p83 = scmp.eq.s32.totalorder %s17, 0
    %p84 = por %p82, %p83
    %p85 = scmp.ne.s32.totalorder %s77, %s79
    %p86 = scmp.eq.s32.totalorder %s22, 1
    %p87 = por %p85, %p86
    %p88 = scmp.ne.s32.totalorder %s79, %s80
    %p89 = scmp.eq.s32.totalorder %s22, 0
    %p90 = por %p88, %p89
    %p91 = scmp.ne.s32.totalorder %s79, %s80
    %p92 = scmp.eq.s32.totalorder %s23, 1
    %p93 = por %p91, %p92
    %p95 = scmp.ne.s32.totalorder %s80, %s94
    %p96 = scmp.eq.s32.totalorder %s23, 0
    %p97 = por %p95, %p96
    %s99 = sadd.s32 %s98, 1
    %p102 = scmp.eq.s32.totalorder %s17, 1
    %p103 = scmp.ne.s32.totalorder %s98, %s100
    %p104 = scmp.eq.s32.totalorder %s17, 0
    %p105 = por %p103, %p104
    %p106 = scmp.ne.s32.totalorder %s98, %s100
    %p107 = scmp.eq.s32.totalorder %s22, 1
    %p108 = por %p106, %p107
    %p109 = scmp.ne.s32.totalorder %s100, %s101
    %p110 = scmp.eq.s32.totalorder %s22, 0
    %p111 = por %p109, %p110
    %p112 = scmp.ne.s32.totalorder %s100, %s101
    %p113 = scmp.eq.s32.totalorder %s23, 1
    %p114 = por %p112, %p113
    %p116 = scmp.ne.s32.totalorder %s101, %s115
    %p117 = scmp.eq.s32.totalorder %s23, 0
    %p118 = por %p116, %p117
    %s120 = sadd.s32 %s119, 1
    %p123 = scmp.eq.s32.totalorder %s17, 1
    %p124 = scmp.ne.s32.totalorder %s119, %s121
    %p125 = scmp.eq.s32.totalorder %s17, 0
    %p126 = por %p124, %p125
    %p127 = scmp.ne.s32.totalorder %s119, %s121
    %p128 = scmp.eq.s32.totalorder %s22, 1
    %p129 = por %p127, %p128
    %p130 = scmp.ne.s32.totalorder %s121, %s122
    %p131 = scmp.eq.s32.totalorder %s22, 0
    %p132 = por %p130, %p131
    %p133 = scmp.ne.s32.totalorder %s121, %s122
    %p134 = scmp.eq.s32.totalorder %s23, 1
    %p135 = por %p133, %p134
    %p137 = scmp.ne.s32.totalorder %s122, %s136
    %p138 = scmp.eq.s32.totalorder %s23, 0
    %p139 = por %p137, %p138
    %s141 = sadd.s32 %s140, 1
    %p144 = scmp.eq.s32.totalorder %s17, 1
    %p145 = scmp.ne.s32.totalorder %s140, %s142
    %p146 = scmp.eq.s32.totalorder %s17, 0
    %p147 = por %p145, %p146
    %p148 = scmp.ne.s32.totalorder %s140, %s142
    %p149 = scmp.eq.s32.totalorder %s22, 1
    %p150 = por %p148, %p149
    %p151 = scmp.ne.s32.totalorder %s142, %s143
    %p152 = scmp.eq.s32.totalorder %s22, 0
    %p153 = por %p151, %p152
    %p154 = scmp.ne.s32.totalorder %s142, %s143
    %p155 = scmp.eq.s32.totalorder %s23, 1
    %p156 = por %p154, %p155
    %p158 = scmp.ne.s32.totalorder %s143, %s157
    %p159 = scmp.eq.s32.totalorder %s23, 0
    %p160 = por %p158, %p159
    %s162 = sadd.s32 %s161, 1
    %p165 = scmp.eq.s32.totalorder %s17, 1
    %p166 = scmp.ne.s32.totalorder %s161, %s163
    %p167 = scmp.eq.s32.totalorder %s17, 0
    %p168 = por %p166, %p167
    %p169 = scmp.ne.s32.totalorder %s161, %s163
    %p170 = scmp.eq.s32.totalorder %s22, 1
    %p171 = por %p169, %p170
    %p172 = scmp.ne.s32.totalorder %s163, %s164
    %p173 = scmp.eq.s32.totalorder %s22, 0
    %p174 = por %p172, %p173
    %p175 = scmp.ne.s32.totalorder %s163, %s164
    %p176 = scmp.eq.s32.totalorder %s23, 1
    %p177 = por %p175, %p176
    %p179 = scmp.ne.s32.totalorder %s164, %s178
    %p180 = scmp.eq.s32.totalorder %s23, 0
    %p181 = por %p179, %p180
    %s183 = sadd.s32 %s182, 1
    %p186 = scmp.eq.s32.totalorder %s17, 1
    %p187 = scmp.ne.s32.totalorder %s182, %s184
    %p188 = scmp.eq.s32.totalorder %s17, 0
    %p189 = por %p187, %p188
    %p190 = scmp.ne.s32.totalorder %s182, %s184
    %p191 = scmp.eq.s32.totalorder %s22, 1
    %p192 = por %p190, %p191
    %p193 = scmp.ne.s32.totalorder %s184, %s185
    %p194 = scmp.eq.s32.totalorder %s22, 0
    %p195 = por %p193, %p194
    %p196 = scmp.ne.s32.totalorder %s184, %s185
    %p197 = scmp.eq.s32.totalorder %s23, 1
    %p198 = por %p196, %p197
    %p200 = scmp.ne.s32.totalorder %s185, %s199
    %p201 = scmp.eq.s32.totalorder %s23, 0
    %p202 = por %p200, %p201
    %s204 = sadd.s32 %s203, 1
    %p207 = scmp.eq.s32.totalorder %s17, 1
    %p208 = scmp.ne.s32.totalorder %s203, %s205
    %p209 = scmp.eq.s32.totalorder %s17, 0
    %p210 = por %p208, %p209
    %p211 = scmp.ne.s32.totalorder %s203, %s205
    %p212 = scmp.eq.s32.totalorder %s22, 1
    %p213 = por %p211, %p212
    %p214 = scmp.ne.s32.totalorder %s205, %s206
    %p215 = scmp.eq.s32.totalorder %s22, 0
    %p216 = por %p214, %p215
    %p217 = scmp.ne.s32.totalorder %s205, %s206
    %p218 = scmp.eq.s32.totalorder %s23, 1
    %p219 = por %p217, %p218
    %p221 = scmp.ne.s32.totalorder %s206, %s220
    %p222 = scmp.eq.s32.totalorder %s23, 0
    %p223 = por %p221, %p222
    %s225 = sadd.s32 %s224, 1
    %p228 = scmp.eq.s32.totalorder %s17, 1
    %p229 = scmp.ne.s32.totalorder %s224, %s226
    %p230 = scmp.eq.s32.totalorder %s17, 0
    %p231 = por %p229, %p230
    %p232 = scmp.ne.s32.totalorder %s224, %s226
    %p233 = scmp.eq.s32.totalorder %s22, 1
    %p234 = por %p232, %p233
    %p235 = scmp.ne.s32.totalorder %s226, %s227
    %p236 = scmp.eq.s32.totalorder %s22, 0
    %p237 = por %p235, %p236
    %p238 = scmp.ne.s32.totalorder %s226, %s227
    %p239 = scmp.eq.s32.totalorder %s23, 1
    %p240 = por %p238, %p239
    %p242 = scmp.ne.s32.totalorder %s227, %s241
    %p243 = scmp.eq.s32.totalorder %s23, 0
    %p244 = por %p242, %p243
    %s246 = sadd.s32 %s245, 1
    %p249 = scmp.eq.s32.totalorder %s17, 1
    %p250 = scmp.ne.s32.totalorder %s245, %s247
    %p251 = scmp.eq.s32.totalorder %s17, 0
    %p252 = por %p250, %p251
    %p253 = scmp.ne.s32.totalorder %s245, %s247
    %p254 = scmp.eq.s32.totalorder %s22, 1
    %p255 = por %p253, %p254
    %p256 = scmp.ne.s32.totalorder %s247, %s248
    %p257 = scmp.eq.s32.totalorder %s22, 0
    %p258 = por %p256, %p257
    %p259 = scmp.ne.s32.totalorder %s247, %s248
    %p260 = scmp.eq.s32.totalorder %s23, 1
    %p261 = por %p259, %p260
    %p263 = scmp.ne.s32.totalorder %s248, %s262
    %p264 = scmp.eq.s32.totalorder %s23, 0
    %p265 = por %p263, %p264
    %s266 = ssub.s32 %s17, %s24
    %p267 = scmp.eq.s32.totalorder %s266, 0
    %s269 = sadd.s32 %s268, 1
    %s270 = scalar_select %p267, %s268, %s269
    %p273 = pneg %p267
    %p274 = scmp.eq.s32.totalorder %s17, 1
    %p275 = por %p273, %p274
    %p276 = scmp.ne.s32.totalorder %s268, %s271
    %p277 = scmp.eq.s32.totalorder %s17, 0
    %p278 = por %p276, %p277
    %p279 = scmp.ne.s32.totalorder %s268, %s271
    %p280 = scmp.eq.s32.totalorder %s22, 1
    %p281 = por %p279, %p280
    %p282 = scmp.ne.s32.totalorder %s271, %s272
    %p283 = scmp.eq.s32.totalorder %s22, 0
    %p284 = por %p282, %p283
    %p285 = scmp.ne.s32.totalorder %s271, %s272
    %p286 = scmp.eq.s32.totalorder %s23, 1
    %p287 = por %p285, %p286
    %p289 = scmp.ne.s32.totalorder %s272, %s288
    %p290 = scmp.eq.s32.totalorder %s23, 0
    %p291 = por %p289, %p290
    %p292 = scmp.le.s32.totalorder 1, %s17
    %p293 = scmp.lt.s32.totalorder %s17, 3
    %p294 = pnand %p292, %p293
    %p295 = pneg %p294
    // Predicated region
    $region9: #{multishape_oa_decoder.1} parent=5 // pred_check
      _
    $region10: #{multishape_oa_decoder.1} parent=5 // pred_check_branch
      %297 = sbr.rel (%p294) target = $region12
    $region11: #{multishape_oa_decoder.1} parent=5 // pred_region
      %s298 = ssub.s32 %s17, 1
      // Predicated region
      $region13: #{multishape_oa_decoder.1} parent=11 // pred_check
        %p299 = pneg %p90
      $region14: #{multishape_oa_decoder.1} parent=11 // pred_check_branch
        %301 = sbr.rel (%p299) target = $region16
      $region15: #{multishape_oa_decoder.1} parent=11 // pred_region
        _
      $region16: #{multishape_oa_decoder.1} parent=11 // pred_fallthru
        _
      // Predicated region
      $region17: #{multishape_oa_decoder.1} parent=11 // pred_check
        %p302 = pneg %p111
      $region18: #{multishape_oa_decoder.1} parent=11 // pred_check_branch
        %304 = sbr.rel (%p302) target = $region20
      $region19: #{multishape_oa_decoder.1} parent=11 // pred_region
        _
      $region20: #{multishape_oa_decoder.1} parent=11 // pred_fallthru
        _
      // Predicated region
      $region21: #{multishape_oa_decoder.1} parent=11 // pred_check
        %p305 = pneg %p132
      $region22: #{multishape_oa_decoder.1} parent=11 // pred_check_branch
        %307 = sbr.rel (%p305) target = $region24
      $region23: #{multishape_oa_decoder.1} parent=11 // pred_region
        _
      $region24: #{multishape_oa_decoder.1} parent=11 // pred_fallthru
        _
      // Predicated region
      $region25: #{multishape_oa_decoder.1} parent=11 // pred_check
        %p308 = pneg %p153
      $region26: #{multishape_oa_decoder.1} parent=11 // pred_check_branch
        %310 = sbr.rel (%p308) target = $region28
      $region27: #{multishape_oa_decoder.1} parent=11 // pred_region
        _
      $region28: #{multishape_oa_decoder.1} parent=11 // pred_fallthru
        _
      // Predicated region
      $region29: #{multishape_oa_decoder.1} parent=11 // pred_check
        %p311 = pneg %p174
      $region30: #{multishape_oa_decoder.1} parent=11 // pred_check_branch
        %313 = sbr.rel (%p311) target = $region32
      $region31: #{multishape_oa_decoder.1} parent=11 // pred_region
        _
      $region32: #{multishape_oa_decoder.1} parent=11 // pred_fallthru
        _
      // Predicated region
      $region33: #{multishape_oa_decoder.1} parent=11 // pred_check
        %p314 = pneg %p195
      $region34: #{multishape_oa_decoder.1} parent=11 // pred_check_branch
        %316 = sbr.rel (%p314) target = $region36
      $region35: #{multishape_oa_decoder.1} parent=11 // pred_region
        _
      $region36: #{multishape_oa_decoder.1} parent=11 // pred_fallthru
        _
      // Predicated region
      $region37: #{multishape_oa_decoder.1} parent=11 // pred_check
        %p317 = pneg %p216
      $region38: #{multishape_oa_decoder.1} parent=11 // pred_check_branch
        %319 = sbr.rel (%p317) target = $region40
      $region39: #{multishape_oa_decoder.1} parent=11 // pred_region
        _
      $region40: #{multishape_oa_decoder.1} parent=11 // pred_fallthru
        _
      // Predicated region
      $region41: #{multishape_oa_decoder.1} parent=11 // pred_check
        %p320 = pneg %p237
      $region42: #{multishape_oa_decoder.1} parent=11 // pred_check_branch
        %322 = sbr.rel (%p320) target = $region44
      $region43: #{multishape_oa_decoder.1} parent=11 // pred_region
        _
      $region44: #{multishape_oa_decoder.1} parent=11 // pred_fallthru
        _
      // Predicated region
      $region45: #{multishape_oa_decoder.1} parent=11 // pred_check
        %p323 = pneg %p258
      $region46: #{multishape_oa_decoder.1} parent=11 // pred_check_branch
        %325 = sbr.rel (%p323) target = $region48
      $region47: #{multishape_oa_decoder.1} parent=11 // pred_region
        _
      $region48: #{multishape_oa_decoder.1} parent=11 // pred_fallthru
        _
    $region12: #{multishape_oa_decoder.1} parent=5 // pred_fallthru
      _
    %p326 = scmp.lt.s32.totalorder %s17, 2
    // Predicated region
    $region49: #{multishape_oa_decoder.1} parent=5 // pred_check
      %p327 = pneg %p326
    $region50: #{multishape_oa_decoder.1} parent=5 // pred_check_branch
      %329 = sbr.rel (%p327) target = $region52
    $region51: #{multishape_oa_decoder.1} parent=5 // pred_region
      // Predicated region
      $region53: #{multishape_oa_decoder.1} parent=51 // pred_check
        %p330 = pneg %p37
      $region54: #{multishape_oa_decoder.1} parent=51 // pred_check_branch
        %332 = sbr.rel (%p330) target = $region56
      $region55: #{multishape_oa_decoder.1} parent=51 // pred_region
        %p333 = scmp.lt.s32.totalorder %s17, 1
        %s334 = scalar_select %p333, %s17, 1
        %s335 = smul.addr %s334, 32
        %s336 = smul.addr %s335, 8
        %s337 = scalar_lea.vmem %s0, %s336
      $region56: #{multishape_oa_decoder.1} parent=51 // pred_fallthru
        _
      // Predicated region
      $region57: #{multishape_oa_decoder.1} parent=51 // pred_check
        %p338 = pneg %p63
      $region58: #{multishape_oa_decoder.1} parent=51 // pred_check_branch
        %340 = sbr.rel (%p338) target = $region60
      $region59: #{multishape_oa_decoder.1} parent=51 // pred_region
        %p341 = scmp.lt.s32.totalorder %s17, 1
        %s342 = scalar_select %p341, %s17, 1
        %s343 = smul.addr %s342, 4
        %s344 = scalar_lea.vmem %s1, %s343
      $region60: #{multishape_oa_decoder.1} parent=51 // pred_fallthru
        _
    $region52: #{multishape_oa_decoder.1} parent=5 // pred_fallthru
      _
    %p345 = scmp.le.s32.totalorder 1, %s17
    %p346 = scmp.lt.s32.totalorder %s17, 3
    %p347 = pnand %p345, %p346
    %p348 = pneg %p347
    // Predicated region
    $region61: #{multishape_oa_decoder.1} parent=5 // pred_check
      _
    $region62: #{multishape_oa_decoder.1} parent=5 // pred_check_branch
      %350 = sbr.rel (%p347) target = $region64
    $region63: #{multishape_oa_decoder.1} parent=5 // pred_region
      %s351 = ssub.s32 %s17, 1
      %p352 = scmp.lt.s32.totalorder %s22, 1
      %s353 = scalar_select %p352, %s22, 1
      %s354 = smul.addr %s353, 32
      %s355 = smul.addr %s354, 8
      %s356 = scalar_lea.vmem %s0, %s355
      %p357 = pneg %p43
      %p358 = pneg %p40
      %p359 = scmp.lt.s32.totalorder %s22, 1
      %s360 = scalar_select %p359, %s22, 1
      %s361 = smul.addr %s360, 4
      %s362 = scalar_lea.vmem %s1, %s361
      %p363 = pneg %p69
      %p364 = pneg %p66
      %p365 = pneg %p90
      %p366 = pneg %p87
      %p367 = pneg %p111
      %p368 = pneg %p108
      %p369 = pneg %p132
      %p370 = pneg %p129
      %p371 = pneg %p153
      %p372 = pneg %p150
      %p373 = pneg %p174
      %p374 = pneg %p171
      %p375 = pneg %p195
      %p376 = pneg %p192
      %p377 = pneg %p216
      %p378 = pneg %p213
      %p379 = pneg %p237
      %p380 = pneg %p234
      %p381 = pneg %p258
      %p382 = pneg %p255
      %p383 = pneg %p284
      %p384 = pneg %p281
      %p385 = scmp.lt.s32.totalorder %s22, 1
      %s386 = scalar_select %p385, %s22, 1
      %s387 = smul.addr %s386, 4
      %s388 = scalar_lea.vmem %s11, %s387
      %p389 = scmp.lt.s32.totalorder %s22, 1
      %s390 = scalar_select %p389, %s22, 1
      %s391 = smul.addr %s390, 32
      %s392 = smul.addr %s391, 8
      %s393 = scalar_lea.vmem %s0, %s392
      %p394 = scmp.lt.s32.totalorder %s22, 1
      %s395 = scalar_select %p394, %s22, 1
      %s396 = smul.addr %s395, 4
      %s397 = scalar_lea.vmem %s1, %s396
      %p398 = scmp.lt.s32.totalorder %s22, 1
      %s399 = scalar_select %p398, %s22, 1
      %s400 = smul.addr %s399, 4
      %s401 = scalar_lea.vmem %s11, %s400
      %v403 = vld [vmem:[%s397] sm:$0x7]
      %v404 = vld [vmem:[%s2] sm:$0xff]
      %v405 = vld [vmem:[%s2 + $0x8] sm:$0xff]
      %v406 = vld [vmem:[%s2 + $0x10] sm:$0xff]
      %v407 = vld [vmem:[%s2 + $0x18] sm:$0xff]
      %v408 = vld [vmem:[%s2 + $0x20] sm:$0xff]
      %v409 = vld [vmem:[%s2 + $0x28] sm:$0xff]
      %v410 = vld [vmem:[%s2 + $0x30] sm:$0xff]
      %v411 = vld [vmem:[%s2 + $0x38] sm:$0xff]
      %v412 = vld [vmem:[%s2 + $0x40] sm:$0xff]
      %v413 = vld [vmem:[%s2 + $0x48] sm:$0xff]
      %v414 = vld [vmem:[%s2 + $0x50] sm:$0xff]
      %v415 = vld [vmem:[%s2 + $0x58] sm:$0xff]
      %v416 = vld [vmem:[%s2 + $0x60] sm:$0xff]
      %v417 = vld [vmem:[%s2 + $0x68] sm:$0xff]
      %v418 = vld [vmem:[%s2 + $0x70] sm:$0xff]
      %v419 = vld [vmem:[%s2 + $0x78] sm:$0xff]
      %v420 = vld [vmem:[%s2 + $0x80] sm:$0xff]
      %v421 = vld [vmem:[%s2 + $0x88] sm:$0xff]
      %v422 = vld [vmem:[%s2 + $0x90] sm:$0xff]
      %v423 = vld [vmem:[%s2 + $0x98] sm:$0xff]
      %v424 = vld [vmem:[%s2 + $0xa0] sm:$0xff]
      %v425 = vld [vmem:[%s2 + $0xa8] sm:$0xff]
      %v426 = vld [vmem:[%s2 + $0xb0] sm:$0xff]
      %v427 = vld [vmem:[%s2 + $0xb8] sm:$0xff]
      %v428 = vld [vmem:[%s2 + $0xc0] sm:$0xff]
      %v429 = vld [vmem:[%s2 + $0xc8] sm:$0xff]
      %v430 = vld [vmem:[%s2 + $0xd0] sm:$0xff]
      %v431 = vld [vmem:[%s2 + $0xd8] sm:$0xff]
      %v432 = vld [vmem:[%s2 + $0xe0] sm:$0xff]
      %v433 = vld [vmem:[%s2 + $0xe8] sm:$0xff]
      %v434 = vld [vmem:[%s2 + $0xf0] sm:$0xff]
      %v435 = vld [vmem:[%s2 + $0xf8] sm:$0xff]
      %v436 = vld [vmem:[%s393] sm:$0xff]
      %v437 = vld [vmem:[%s393 + $0x8] sm:$0xff]
      %v438 = vld [vmem:[%s393 + $0x10] sm:$0xff]
      %v439 = vld [vmem:[%s393 + $0x18] sm:$0xff]
      %v440 = vld [vmem:[%s393 + $0x20] sm:$0xff]
      %v441 = vld [vmem:[%s393 + $0x28] sm:$0xff]
      %v442 = vld [vmem:[%s393 + $0x30] sm:$0xff]
      %v443 = vld [vmem:[%s393 + $0x38] sm:$0xff]
      %v444 = vld [vmem:[%s393 + $0x40] sm:$0xff]
      %v445 = vld [vmem:[%s393 + $0x48] sm:$0xff]
      %v446 = vld [vmem:[%s393 + $0x50] sm:$0xff]
      %v447 = vld [vmem:[%s393 + $0x58] sm:$0xff]
      %v448 = vld [vmem:[%s393 + $0x60] sm:$0xff]
      %v449 = vld [vmem:[%s393 + $0x68] sm:$0xff]
      %v450 = vld [vmem:[%s393 + $0x70] sm:$0xff]
      %v451 = vld [vmem:[%s393 + $0x78] sm:$0xff]
      %v452 = vld [vmem:[%s393 + $0x80] sm:$0xff]
      %v453 = vld [vmem:[%s393 + $0x88] sm:$0xff]
      %v454 = vld [vmem:[%s393 + $0x90] sm:$0xff]
      %v455 = vld [vmem:[%s393 + $0x98] sm:$0xff]
      %v456 = vld [vmem:[%s393 + $0xa0] sm:$0xff]
      %v457 = vld [vmem:[%s393 + $0xa8] sm:$0xff]
      %v458 = vld [vmem:[%s393 + $0xb0] sm:$0xff]
      %v459 = vld [vmem:[%s393 + $0xb8] sm:$0xff]
      %v460 = vld [vmem:[%s393 + $0xc0] sm:$0xff]
      %v461 = vld [vmem:[%s393 + $0xc8] sm:$0xff]
      %v462 = vld [vmem:[%s393 + $0xd0] sm:$0xff]
      %v463 = vld [vmem:[%s393 + $0xd8] sm:$0xff]
      %v464 = vld [vmem:[%s393 + $0xe0] sm:$0xff]
      %v465 = vld [vmem:[%s393 + $0xe8] sm:$0xff]
      %v466 = vld [vmem:[%s393 + $0xf0] sm:$0xff]
      %v467 = vld [vmem:[%s393 + $0xf8] sm:$0xff]
      %469 = vset.pattern.permute.xlu0 0
      %470 = vperm.xlu0 %469, %v436
      %v471 = vpop.permute.xlu0 %470
      %474 = vset.pattern.permute.xlu0 0
      %475 = vperm.xlu0 %474, %v437
      %v476 = vpop.permute.xlu0 %475
      %479 = vset.pattern.permute.xlu0 0
      %480 = vperm.xlu0 %479, %v438
      %v481 = vpop.permute.xlu0 %480
      %484 = vset.pattern.permute.xlu0 0
      %485 = vperm.xlu0 %484, %v439
      %v486 = vpop.permute.xlu0 %485
      %489 = vset.pattern.permute.xlu0 0
      %490 = vperm.xlu0 %489, %v440
      %v491 = vpop.permute.xlu0 %490
      %494 = vset.pattern.permute.xlu0 0
      %495 = vperm.xlu0 %494, %v441
      %v496 = vpop.permute.xlu0 %495
      %499 = vset.pattern.permute.xlu0 0
      %500 = vperm.xlu0 %499, %v442
      %v501 = vpop.permute.xlu0 %500
      %504 = vset.pattern.permute.xlu0 0
      %505 = vperm.xlu0 %504, %v443
      %v506 = vpop.permute.xlu0 %505
      %509 = vset.pattern.permute.xlu0 0
      %510 = vperm.xlu0 %509, %v444
      %v511 = vpop.permute.xlu0 %510
      %514 = vset.pattern.permute.xlu0 0
      %515 = vperm.xlu0 %514, %v445
      %v516 = vpop.permute.xlu0 %515
      %519 = vset.pattern.permute.xlu0 0
      %520 = vperm.xlu0 %519, %v446
      %v521 = vpop.permute.xlu0 %520
      %524 = vset.pattern.permute.xlu0 0
      %525 = vperm.xlu0 %524, %v447
      %v526 = vpop.permute.xlu0 %525
      %529 = vset.pattern.permute.xlu0 0
      %530 = vperm.xlu0 %529, %v448
      %v531 = vpop.permute.xlu0 %530
      %534 = vset.pattern.permute.xlu0 0
      %535 = vperm.xlu0 %534, %v449
      %v536 = vpop.permute.xlu0 %535
      %539 = vset.pattern.permute.xlu0 0
      %540 = vperm.xlu0 %539, %v450
      %v541 = vpop.permute.xlu0 %540
      %544 = vset.pattern.permute.xlu0 0
      %545 = vperm.xlu0 %544, %v451
      %v546 = vpop.permute.xlu0 %545
      %549 = vset.pattern.permute.xlu0 0
      %550 = vperm.xlu0 %549, %v452
      %v551 = vpop.permute.xlu0 %550
      %554 = vset.pattern.permute.xlu0 0
      %555 = vperm.xlu0 %554, %v453
      %v556 = vpop.permute.xlu0 %555
      %559 = vset.pattern.permute.xlu0 0
      %560 = vperm.xlu0 %559, %v454
      %v561 = vpop.permute.xlu0 %560
      %564 = vset.pattern.permute.xlu0 0
      %565 = vperm.xlu0 %564, %v455
      %v566 = vpop.permute.xlu0 %565
      %569 = vset.pattern.permute.xlu0 0
      %570 = vperm.xlu0 %569, %v456
      %v571 = vpop.permute.xlu0 %570
      %574 = vset.pattern.permute.xlu0 0
      %575 = vperm.xlu0 %574, %v457
      %v576 = vpop.permute.xlu0 %575
      %579 = vset.pattern.permute.xlu0 0
      %580 = vperm.xlu0 %579, %v458
      %v581 = vpop.permute.xlu0 %580
      %584 = vset.pattern.permute.xlu0 0
      %585 = vperm.xlu0 %584, %v459
      %v586 = vpop.permute.xlu0 %585
      %589 = vset.pattern.permute.xlu0 0
      %590 = vperm.xlu0 %589, %v460
      %v591 = vpop.permute.xlu0 %590
      %594 = vset.pattern.permute.xlu0 0
      %595 = vperm.xlu0 %594, %v461
      %v596 = vpop.permute.xlu0 %595
      %599 = vset.pattern.permute.xlu0 0
      %600 = vperm.xlu0 %599, %v462
      %v601 = vpop.permute.xlu0 %600
      %604 = vset.pattern.permute.xlu0 0
      %605 = vperm.xlu0 %604, %v463
      %v606 = vpop.permute.xlu0 %605
      %609 = vset.pattern.permute.xlu0 0
      %610 = vperm.xlu0 %609, %v464
      %v611 = vpop.permute.xlu0 %610
      %614 = vset.pattern.permute.xlu0 0
      %615 = vperm.xlu0 %614, %v465
      %v616 = vpop.permute.xlu0 %615
      %619 = vset.pattern.permute.xlu0 0
      %620 = vperm.xlu0 %619, %v466
      %v621 = vpop.permute.xlu0 %620
      %624 = vset.pattern.permute.xlu0 0
      %625 = vperm.xlu0 %624, %v467
      %v626 = vpop.permute.xlu0 %625
      %vm628 = vcmask 23552
      %v630 = vsel %vm628, %v404, 0
      %v633 = vsel %vm628, %v405, 0
      %v636 = vsel %vm628, %v406, 0
      %v639 = vsel %vm628, %v407, 0
      %v642 = vsel %vm628, %v408, 0
      %v645 = vsel %vm628, %v409, 0
      %v648 = vsel %vm628, %v410, 0
      %v651 = vsel %vm628, %v411, 0
      %v654 = vsel %vm628, %v412, 0
      %v657 = vsel %vm628, %v413, 0
      %v660 = vsel %vm628, %v414, 0
      %v663 = vsel %vm628, %v415, 0
      %v666 = vsel %vm628, %v416, 0
      %v669 = vsel %vm628, %v417, 0
      %v672 = vsel %vm628, %v418, 0
      %v675 = vsel %vm628, %v419, 0
      %v678 = vsel %vm628, %v420, 0
      %v681 = vsel %vm628, %v421, 0
      %v684 = vsel %vm628, %v422, 0
      %v687 = vsel %vm628, %v423, 0
      %v690 = vsel %vm628, %v424, 0
      %v693 = vsel %vm628, %v425, 0
      %v696 = vsel %vm628, %v426, 0
      %v699 = vsel %vm628, %v427, 0
      %v702 = vsel %vm628, %v428, 0
      %v705 = vsel %vm628, %v429, 0
      %v708 = vsel %vm628, %v430, 0
      %v711 = vsel %vm628, %v431, 0
      %v714 = vsel %vm628, %v432, 0
      %v717 = vsel %vm628, %v433, 0
      %v720 = vsel %vm628, %v434, 0
      %v723 = vsel %vm628, %v435, 0
      %vm725 = vcmask 1042432
      %v727 = vsel %vm725, %v403, 0
      %729 = vmatprep.subr.mxu0 0.0
      %730 = vmatpush1.msra.mxu0 0.0
      %731 = vmatprep.subr.mxu0 0.0
      %732 = vmatpush1.msra.mxu0 0.0
      %733 = vmatprep.subr.mxu0 0.0
      %734 = vmatpush1.msra.mxu0 0.0
      %735 = vmatprep.subr.mxu0 0.0
      %736 = vmatpush1.msra.mxu0 0.0
      %737 = vmatprep.subr.mxu0 0.0
      %738 = vmatpush1.msra.mxu0 0.0
      %739 = vmatprep.subr.mxu0 0.0
      %740 = vmatpush1.msra.mxu0 0.0
      %741 = vmatprep.subr.mxu0 0.0
      %742 = vmatpush1.msra.mxu0 0.0
      %743 = vmatprep.subr.mxu0 0.0
      %744 = vmatpush1.msra.mxu0 0.0
      %745 = vmatprep.subr.mxu0 0.0
      %746 = vmatpush1.msra.mxu0 0.0
      %747 = vmatprep.subr.mxu0 0.0
      %748 = vmatpush1.msra.mxu0 0.0
      %749 = vmatprep.subr.mxu0 0.0
      %750 = vmatpush1.msra.mxu0 0.0
      %751 = vmatprep.subr.mxu0 0.0
      %752 = vmatpush1.msra.mxu0 0.0
      %753 = vmatprep.subr.mxu0 0.0
      %754 = vmatpush1.msra.mxu0 0.0
      %755 = vmatprep.subr.mxu0 0.0
      %756 = vmatpush1.msra.mxu0 0.0
      %757 = vmatprep.subr.mxu0 0.0
      %758 = vmatpush1.msra.mxu0 0.0
      %759 = vmatprep.subr.mxu0 0.0
      %760 = vmatpush1.msra.mxu0 %v727
      %761 = vmatprep.subr.mxu0 0.0
      %762 = vmatpush2.msra.mxu0 0.0
      %763 = vmatprep.subr.mxu0 0.0
      %764 = vmatpush2.msra.mxu0 0.0
      %765 = vmatprep.subr.mxu0 0.0
      %766 = vmatpush2.msra.mxu0 0.0
      %767 = vmatprep.subr.mxu0 0.0
      %768 = vmatpush2.msra.mxu0 0.0
      %769 = vmatprep.subr.mxu0 0.0
      %770 = vmatpush2.msra.mxu0 0.0
      %771 = vmatprep.subr.mxu0 0.0
      %772 = vmatpush2.msra.mxu0 0.0
      %773 = vmatprep.subr.mxu0 0.0
      %774 = vmatpush2.msra.mxu0 0.0
      %775 = vmatprep.subr.mxu0 0.0
      %776 = vmatpush2.msra.mxu0 0.0
      %777 = vmatprep.subr.mxu0 0.0
      %778 = vmatpush2.msra.mxu0 0.0
      %779 = vmatprep.subr.mxu0 0.0
      %780 = vmatpush2.msra.mxu0 0.0
      %781 = vmatprep.subr.mxu0 0.0
      %782 = vmatpush2.msra.mxu0 0.0
      %783 = vmatprep.subr.mxu0 0.0
      %784 = vmatpush2.msra.mxu0 0.0
      %785 = vmatprep.subr.mxu0 0.0
      %786 = vmatpush2.msra.mxu0 0.0
      %787 = vmatprep.subr.mxu0 0.0
      %788 = vmatpush2.msra.mxu0 0.0
      %789 = vmatprep.subr.mxu0 0.0
      %790 = vmatpush2.msra.mxu0 0.0
      %791 = vmatprep.subr.mxu0 0.0
      %792 = vmatpush2.msra.mxu0 0.0
      %793 = vmatprep.mubr.f32.mxu0 0.0
      %794 = vmatmul.mubr.f32.gmra.mxu0 %v630
      %v795 = vpop.f32.mrf.mxu0
      %v796 = vadd.f32 %v471, %v795
      %v797 = vpop.f32.mrf.mxu0
      %798 = vmatprep.mubr.f32.mxu0 0.0
      %799 = vmatmul.mubr.f32.gmra.mxu0 %v633
      %v800 = vpop.f32.mrf.mxu0
      %v801 = vadd.f32 %v476, %v800
      %v802 = vpop.f32.mrf.mxu0
      %803 = vmatprep.mubr.f32.mxu0 0.0
      %804 = vmatmul.mubr.f32.gmra.mxu0 %v636
      %v805 = vpop.f32.mrf.mxu0
      %v806 = vadd.f32 %v481, %v805
      %v807 = vpop.f32.mrf.mxu0
      %808 = vmatprep.mubr.f32.mxu0 0.0
      %809 = vmatmul.mubr.f32.gmra.mxu0 %v639
      %v810 = vpop.f32.mrf.mxu0
      %v811 = vadd.f32 %v486, %v810
      %v812 = vpop.f32.mrf.mxu0
      %813 = vmatprep.mubr.f32.mxu0 0.0
      %814 = vmatmul.mubr.f32.gmra.mxu0 %v642
      %v815 = vpop.f32.mrf.mxu0
      %v816 = vadd.f32 %v491, %v815
      %v817 = vpop.f32.mrf.mxu0
      %818 = vmatprep.mubr.f32.mxu0 0.0
      %819 = vmatmul.mubr.f32.gmra.mxu0 %v645
      %v820 = vpop.f32.mrf.mxu0
      %v821 = vadd.f32 %v496, %v820
      %v822 = vpop.f32.mrf.mxu0
      %823 = vmatprep.mubr.f32.mxu0 0.0
      %824 = vmatmul.mubr.f32.gmra.mxu0 %v648
      %v825 = vpop.f32.mrf.mxu0
      %v826 = vadd.f32 %v501, %v825
      %v827 = vpop.f32.mrf.mxu0
      %828 = vmatprep.mubr.f32.mxu0 0.0
      %829 = vmatmul.mubr.f32.gmra.mxu0 %v651
      %v830 = vpop.f32.mrf.mxu0
      %v831 = vadd.f32 %v506, %v830
      %v832 = vpop.f32.mrf.mxu0
      %833 = vmatprep.mubr.f32.mxu0 0.0
      %834 = vmatmul.mubr.f32.gmra.mxu0 %v654
      %v835 = vpop.f32.mrf.mxu0
      %v836 = vadd.f32 %v511, %v835
      %v837 = vpop.f32.mrf.mxu0
      %838 = vmatprep.mubr.f32.mxu0 0.0
      %839 = vmatmul.mubr.f32.gmra.mxu0 %v657
      %v840 = vpop.f32.mrf.mxu0
      %v841 = vadd.f32 %v516, %v840
      %v842 = vpop.f32.mrf.mxu0
      %843 = vmatprep.mubr.f32.mxu0 0.0
      %844 = vmatmul.mubr.f32.gmra.mxu0 %v660
      %v845 = vpop.f32.mrf.mxu0
      %v846 = vadd.f32 %v521, %v845
      %v847 = vpop.f32.mrf.mxu0
      %848 = vmatprep.mubr.f32.mxu0 0.0
      %849 = vmatmul.mubr.f32.gmra.mxu0 %v663
      %v850 = vpop.f32.mrf.mxu0
      %v851 = vadd.f32 %v526, %v850
      %v852 = vpop.f32.mrf.mxu0
      %853 = vmatprep.mubr.f32.mxu0 0.0
      %854 = vmatmul.mubr.f32.gmra.mxu0 %v666
      %v855 = vpop.f32.mrf.mxu0
      %v856 = vadd.f32 %v531, %v855
      %v857 = vpop.f32.mrf.mxu0
      %858 = vmatprep.mubr.f32.mxu0 0.0
      %859 = vmatmul.mubr.f32.gmra.mxu0 %v669
      %v860 = vpop.f32.mrf.mxu0
      %v861 = vadd.f32 %v536, %v860
      %v862 = vpop.f32.mrf.mxu0
      %863 = vmatprep.mubr.f32.mxu0 0.0
      %864 = vmatmul.mubr.f32.gmra.mxu0 %v672
      %v865 = vpop.f32.mrf.mxu0
      %v866 = vadd.f32 %v541, %v865
      %v867 = vpop.f32.mrf.mxu0
      %868 = vmatprep.mubr.f32.mxu0 0.0
      %869 = vmatmul.mubr.f32.gmra.mxu0 %v675
      %v870 = vpop.f32.mrf.mxu0
      %v871 = vadd.f32 %v546, %v870
      %v872 = vpop.f32.mrf.mxu0
      %873 = vmatprep.mubr.f32.mxu0 0.0
      %874 = vmatmul.mubr.f32.gmra.mxu0 %v678
      %v875 = vpop.f32.mrf.mxu0
      %v876 = vadd.f32 %v551, %v875
      %v877 = vpop.f32.mrf.mxu0
      %878 = vmatprep.mubr.f32.mxu0 0.0
      %879 = vmatmul.mubr.f32.gmra.mxu0 %v681
      %v880 = vpop.f32.mrf.mxu0
      %v881 = vadd.f32 %v556, %v880
      %v882 = vpop.f32.mrf.mxu0
      %883 = vmatprep.mubr.f32.mxu0 0.0
      %884 = vmatmul.mubr.f32.gmra.mxu0 %v684
      %v885 = vpop.f32.mrf.mxu0
      %v886 = vadd.f32 %v561, %v885
      %v887 = vpop.f32.mrf.mxu0
      %888 = vmatprep.mubr.f32.mxu0 0.0
      %889 = vmatmul.mubr.f32.gmra.mxu0 %v687
      %v890 = vpop.f32.mrf.mxu0
      %v891 = vadd.f32 %v566, %v890
      %v892 = vpop.f32.mrf.mxu0
      %893 = vmatprep.mubr.f32.mxu0 0.0
      %894 = vmatmul.mubr.f32.gmra.mxu0 %v690
      %v895 = vpop.f32.mrf.mxu0
      %v896 = vadd.f32 %v571, %v895
      %v897 = vpop.f32.mrf.mxu0
      %898 = vmatprep.mubr.f32.mxu0 0.0
      %899 = vmatmul.mubr.f32.gmra.mxu0 %v693
      %v900 = vpop.f32.mrf.mxu0
      %v901 = vadd.f32 %v576, %v900
      %v902 = vpop.f32.mrf.mxu0
      %903 = vmatprep.mubr.f32.mxu0 0.0
      %904 = vmatmul.mubr.f32.gmra.mxu0 %v696
      %v905 = vpop.f32.mrf.mxu0
      %v906 = vadd.f32 %v581, %v905
      %v907 = vpop.f32.mrf.mxu0
      %908 = vmatprep.mubr.f32.mxu0 0.0
      %909 = vmatmul.mubr.f32.gmra.mxu0 %v699
      %v910 = vpop.f32.mrf.mxu0
      %v911 = vadd.f32 %v586, %v910
      %v912 = vpop.f32.mrf.mxu0
      %913 = vmatprep.mubr.f32.mxu0 0.0
      %914 = vmatmul.mubr.f32.gmra.mxu0 %v702
      %v915 = vpop.f32.mrf.mxu0
      %v916 = vadd.f32 %v591, %v915
      %v917 = vpop.f32.mrf.mxu0
      %918 = vmatprep.mubr.f32.mxu0 0.0
      %919 = vmatmul.mubr.f32.gmra.mxu0 %v705
      %v920 = vpop.f32.mrf.mxu0
      %v921 = vadd.f32 %v596, %v920
      %v922 = vpop.f32.mrf.mxu0
      %923 = vmatprep.mubr.f32.mxu0 0.0
      %924 = vmatmul.mubr.f32.gmra.mxu0 %v708
      %v925 = vpop.f32.mrf.mxu0
      %v926 = vadd.f32 %v601, %v925
      %v927 = vpop.f32.mrf.mxu0
      %928 = vmatprep.mubr.f32.mxu0 0.0
      %929 = vmatmul.mubr.f32.gmra.mxu0 %v711
      %v930 = vpop.f32.mrf.mxu0
      %v931 = vadd.f32 %v606, %v930
      %v932 = vpop.f32.mrf.mxu0
      %933 = vmatprep.mubr.f32.mxu0 0.0
      %934 = vmatmul.mubr.f32.gmra.mxu0 %v714
      %v935 = vpop.f32.mrf.mxu0
      %v936 = vadd.f32 %v611, %v935
      %v937 = vpop.f32.mrf.mxu0
      %938 = vmatprep.mubr.f32.mxu0 0.0
      %939 = vmatmul.mubr.f32.gmra.mxu0 %v717
      %v940 = vpop.f32.mrf.mxu0
      %v941 = vadd.f32 %v616, %v940
      %v942 = vpop.f32.mrf.mxu0
      %943 = vmatprep.mubr.f32.mxu0 0.0
      %944 = vmatmul.mubr.f32.gmra.mxu0 %v720
      %v945 = vpop.f32.mrf.mxu0
      %v946 = vadd.f32 %v621, %v945
      %v947 = vpop.f32.mrf.mxu0
      %948 = vmatprep.mubr.f32.mxu0 0.0
      %949 = vmatmul.mubr.f32.gmra.mxu0 %v723
      %v950 = vpop.f32.mrf.mxu0
      %v951 = vadd.f32 %v626, %v950
      %v952 = vpop.f32.mrf.mxu0
      %953 = vdwg.mxu0
      %v954 = vpack.c.bf16 %v801, %v796
      %v955 = vpack.c.bf16 %v811, %v806
      %v956 = vpack.c.bf16 %v821, %v816
      %v957 = vpack.c.bf16 %v831, %v826
      %v958 = vpack.c.bf16 %v841, %v836
      %v959 = vpack.c.bf16 %v851, %v846
      %v960 = vpack.c.bf16 %v861, %v856
      %v961 = vpack.c.bf16 %v871, %v866
      %v962 = vpack.c.bf16 %v881, %v876
      %v963 = vpack.c.bf16 %v891, %v886
      %v964 = vpack.c.bf16 %v901, %v896
      %v965 = vpack.c.bf16 %v911, %v906
      %v966 = vpack.c.bf16 %v921, %v916
      %v967 = vpack.c.bf16 %v931, %v926
      %v968 = vpack.c.bf16 %v941, %v936
      %v969 = vpack.c.bf16 %v951, %v946
      %v970 = vld [vmem:[%s3] sm:$0xff]
      %v971 = vld [vmem:[%s3 + $0x8] sm:$0xff]
      %v972 = vld [vmem:[%s3 + $0x10] sm:$0xff]
      %v973 = vld [vmem:[%s3 + $0x18] sm:$0xff]
      %v974 = vld [vmem:[%s3 + $0x20] sm:$0xff]
      %v975 = vld [vmem:[%s3 + $0x28] sm:$0xff]
      %v976 = vld [vmem:[%s3 + $0x30] sm:$0xff]
      %v977 = vld [vmem:[%s3 + $0x38] sm:$0xff]
      %v978 = vld [vmem:[%s3 + $0x40] sm:$0xff]
      %v979 = vld [vmem:[%s3 + $0x48] sm:$0xff]
      %v980 = vld [vmem:[%s3 + $0x50] sm:$0xff]
      %v981 = vld [vmem:[%s3 + $0x58] sm:$0xff]
      %v982 = vld [vmem:[%s3 + $0x60] sm:$0xff]
      %v983 = vld [vmem:[%s3 + $0x68] sm:$0xff]
      %v984 = vld [vmem:[%s3 + $0x70] sm:$0xff]
      %v985 = vld [vmem:[%s3 + $0x78] sm:$0xff]
      %v986 = vld [vmem:[%s3 + $0x80] sm:$0xff]
      %v987 = vld [vmem:[%s3 + $0x88] sm:$0xff]
      %v988 = vld [vmem:[%s3 + $0x90] sm:$0xff]
      %v989 = vld [vmem:[%s3 + $0x98] sm:$0xff]
      %v990 = vld [vmem:[%s3 + $0xa0] sm:$0xff]
      %v991 = vld [vmem:[%s3 + $0xa8] sm:$0xff]
      %v992 = vld [vmem:[%s3 + $0xb0] sm:$0xff]
      %v993 = vld [vmem:[%s3 + $0xb8] sm:$0xff]
      %v994 = vld [vmem:[%s3 + $0xc0] sm:$0xff]
      %v995 = vld [vmem:[%s3 + $0xc8] sm:$0xff]
      %v996 = vld [vmem:[%s3 + $0xd0] sm:$0xff]
      %v997 = vld [vmem:[%s3 + $0xd8] sm:$0xff]
      %v998 = vld [vmem:[%s3 + $0xe0] sm:$0xff]
      %v999 = vld [vmem:[%s3 + $0xe8] sm:$0xff]
      %v1000 = vld [vmem:[%s3 + $0xf0] sm:$0xff]
      %v1001 = vld [vmem:[%s3 + $0xf8] sm:$0xff]
      %v1002 = vld [vmem:[%s3 + $0x100] sm:$0xff]
      %v1003 = vld [vmem:[%s3 + $0x108] sm:$0xff]
      %v1004 = vld [vmem:[%s3 + $0x110] sm:$0xff]
      %v1005 = vld [vmem:[%s3 + $0x118] sm:$0xff]
      %v1006 = vld [vmem:[%s3 + $0x120] sm:$0xff]
      %v1007 = vld [vmem:[%s3 + $0x128] sm:$0xff]
      %v1008 = vld [vmem:[%s3 + $0x130] sm:$0xff]
      %v1009 = vld [vmem:[%s3 + $0x138] sm:$0xff]
      %v1010 = vld [vmem:[%s4] sm:$0xff]
      %v1011 = vld [vmem:[%s4 + $0x8] sm:$0xff]
      %v1012 = vld [vmem:[%s4 + $0x10] sm:$0xff]
      %v1013 = vld [vmem:[%s4 + $0x18] sm:$0xff]
      %v1014 = vld [vmem:[%s4 + $0x20] sm:$0xff]
      %v1015 = vld [vmem:[%s4 + $0x28] sm:$0xff]
      %v1016 = vld [vmem:[%s4 + $0x30] sm:$0xff]
      %v1017 = vld [vmem:[%s4 + $0x38] sm:$0xff]
      %v1018 = vld [vmem:[%s4 + $0x40] sm:$0xff]
      %v1019 = vld [vmem:[%s4 + $0x48] sm:$0xff]
      %v1020 = vld [vmem:[%s4 + $0x50] sm:$0xff]
      %v1021 = vld [vmem:[%s4 + $0x58] sm:$0xff]
      %v1022 = vld [vmem:[%s4 + $0x60] sm:$0xff]
      %v1023 = vld [vmem:[%s4 + $0x68] sm:$0xff]
      %v1024 = vld [vmem:[%s4 + $0x70] sm:$0xff]
      %v1025 = vld [vmem:[%s4 + $0x78] sm:$0xff]
      %v1026 = vld [vmem:[%s4 + $0x80] sm:$0xff]
      %v1027 = vld [vmem:[%s4 + $0x88] sm:$0xff]
      %v1028 = vld [vmem:[%s4 + $0x90] sm:$0xff]
      %v1029 = vld [vmem:[%s4 + $0x98] sm:$0xff]
      %v1030 = vld [vmem:[%s4 + $0xa0] sm:$0xff]
      %v1031 = vld [vmem:[%s4 + $0xa8] sm:$0xff]
      %v1032 = vld [vmem:[%s4 + $0xb0] sm:$0xff]
      %v1033 = vld [vmem:[%s4 + $0xb8] sm:$0xff]
      %v1034 = vld [vmem:[%s4 + $0xc0] sm:$0xff]
      %v1035 = vld [vmem:[%s4 + $0xc8] sm:$0xff]
      %v1036 = vld [vmem:[%s4 + $0xd0] sm:$0xff]
      %v1037 = vld [vmem:[%s4 + $0xd8] sm:$0xff]
      %v1038 = vld [vmem:[%s4 + $0xe0] sm:$0xff]
      %v1039 = vld [vmem:[%s4 + $0xe8] sm:$0xff]
      %v1040 = vld [vmem:[%s4 + $0xf0] sm:$0xff]
      %v1041 = vld [vmem:[%s4 + $0xf8] sm:$0xff]
      %v1042 = vld [vmem:[%s4 + $0x100] sm:$0xff]
      %v1043 = vld [vmem:[%s4 + $0x108] sm:$0xff]
      %v1044 = vld [vmem:[%s4 + $0x110] sm:$0xff]
      %v1045 = vld [vmem:[%s4 + $0x118] sm:$0xff]
      %v1046 = vld [vmem:[%s4 + $0x120] sm:$0xff]
      %v1047 = vld [vmem:[%s4 + $0x128] sm:$0xff]
      %v1048 = vld [vmem:[%s4 + $0x130] sm:$0xff]
      %v1049 = vld [vmem:[%s4 + $0x138] sm:$0xff]
      %1051 = vset.pattern.permute.xlu0 0
      %1052 = vperm.xlu0 %1051, %v1010
      %v1053 = vpop.permute.xlu0 %1052
      %1056 = vset.pattern.permute.xlu0 0
      %1057 = vperm.xlu0 %1056, %v1011
      %v1058 = vpop.permute.xlu0 %1057
      %1061 = vset.pattern.permute.xlu0 0
      %1062 = vperm.xlu0 %1061, %v1012
      %v1063 = vpop.permute.xlu0 %1062
      %1066 = vset.pattern.permute.xlu0 0
      %1067 = vperm.xlu0 %1066, %v1013
      %v1068 = vpop.permute.xlu0 %1067
      %1071 = vset.pattern.permute.xlu0 0
      %1072 = vperm.xlu0 %1071, %v1014
      %v1073 = vpop.permute.xlu0 %1072
      %1076 = vset.pattern.permute.xlu0 0
      %1077 = vperm.xlu0 %1076, %v1015
      %v1078 = vpop.permute.xlu0 %1077
      %1081 = vset.pattern.permute.xlu0 0
      %1082 = vperm.xlu0 %1081, %v1016
      %v1083 = vpop.permute.xlu0 %1082
      %1086 = vset.pattern.permute.xlu0 0
      %1087 = vperm.xlu0 %1086, %v1017
      %v1088 = vpop.permute.xlu0 %1087
      %1091 = vset.pattern.permute.xlu0 0
      %1092 = vperm.xlu0 %1091, %v1018
      %v1093 = vpop.permute.xlu0 %1092
      %1096 = vset.pattern.permute.xlu0 0
      %1097 = vperm.xlu0 %1096, %v1019
      %v1098 = vpop.permute.xlu0 %1097
      %1101 = vset.pattern.permute.xlu0 0
      %1102 = vperm.xlu0 %1101, %v1020
      %v1103 = vpop.permute.xlu0 %1102
      %1106 = vset.pattern.permute.xlu0 0
      %1107 = vperm.xlu0 %1106, %v1021
      %v1108 = vpop.permute.xlu0 %1107
      %1111 = vset.pattern.permute.xlu0 0
      %1112 = vperm.xlu0 %1111, %v1022
      %v1113 = vpop.permute.xlu0 %1112
      %1116 = vset.pattern.permute.xlu0 0
      %1117 = vperm.xlu0 %1116, %v1023
      %v1118 = vpop.permute.xlu0 %1117
      %1121 = vset.pattern.permute.xlu0 0
      %1122 = vperm.xlu0 %1121, %v1024
      %v1123 = vpop.permute.xlu0 %1122
      %1126 = vset.pattern.permute.xlu0 0
      %1127 = vperm.xlu0 %1126, %v1025
      %v1128 = vpop.permute.xlu0 %1127
      %1131 = vset.pattern.permute.xlu0 0
      %1132 = vperm.xlu0 %1131, %v1026
      %v1133 = vpop.permute.xlu0 %1132
      %1136 = vset.pattern.permute.xlu0 0
      %1137 = vperm.xlu0 %1136, %v1027
      %v1138 = vpop.permute.xlu0 %1137
      %1141 = vset.pattern.permute.xlu0 0
      %1142 = vperm.xlu0 %1141, %v1028
      %v1143 = vpop.permute.xlu0 %1142
      %1146 = vset.pattern.permute.xlu0 0
      %1147 = vperm.xlu0 %1146, %v1029
      %v1148 = vpop.permute.xlu0 %1147
      %1151 = vset.pattern.permute.xlu0 0
      %1152 = vperm.xlu0 %1151, %v1030
      %v1153 = vpop.permute.xlu0 %1152
      %1156 = vset.pattern.permute.xlu0 0
      %1157 = vperm.xlu0 %1156, %v1031
      %v1158 = vpop.permute.xlu0 %1157
      %1161 = vset.pattern.permute.xlu0 0
      %1162 = vperm.xlu0 %1161, %v1032
      %v1163 = vpop.permute.xlu0 %1162
      %1166 = vset.pattern.permute.xlu0 0
      %1167 = vperm.xlu0 %1166, %v1033
      %v1168 = vpop.permute.xlu0 %1167
      %1171 = vset.pattern.permute.xlu0 0
      %1172 = vperm.xlu0 %1171, %v1034
      %v1173 = vpop.permute.xlu0 %1172
      %1176 = vset.pattern.permute.xlu0 0
      %1177 = vperm.xlu0 %1176, %v1035
      %v1178 = vpop.permute.xlu0 %1177
      %1181 = vset.pattern.permute.xlu0 0
      %1182 = vperm.xlu0 %1181, %v1036
      %v1183 = vpop.permute.xlu0 %1182
      %1186 = vset.pattern.permute.xlu0 0
      %1187 = vperm.xlu0 %1186, %v1037
      %v1188 = vpop.permute.xlu0 %1187
      %1191 = vset.pattern.permute.xlu0 0
      %1192 = vperm.xlu0 %1191, %v1038
      %v1193 = vpop.permute.xlu0 %1192
      %1196 = vset.pattern.permute.xlu0 0
      %1197 = vperm.xlu0 %1196, %v1039
      %v1198 = vpop.permute.xlu0 %1197
      %1201 = vset.pattern.permute.xlu0 0
      %1202 = vperm.xlu0 %1201, %v1040
      %v1203 = vpop.permute.xlu0 %1202
      %1206 = vset.pattern.permute.xlu0 0
      %1207 = vperm.xlu0 %1206, %v1041
      %v1208 = vpop.permute.xlu0 %1207
      %1211 = vset.pattern.permute.xlu0 0
      %1212 = vperm.xlu0 %1211, %v1042
      %v1213 = vpop.permute.xlu0 %1212
      %1216 = vset.pattern.permute.xlu0 0
      %1217 = vperm.xlu0 %1216, %v1043
      %v1218 = vpop.permute.xlu0 %1217
      %1221 = vset.pattern.permute.xlu0 0
      %1222 = vperm.xlu0 %1221, %v1044
      %v1223 = vpop.permute.xlu0 %1222
      %1226 = vset.pattern.permute.xlu0 0
      %1227 = vperm.xlu0 %1226, %v1045
      %v1228 = vpop.permute.xlu0 %1227
      %1231 = vset.pattern.permute.xlu0 0
      %1232 = vperm.xlu0 %1231, %v1046
      %v1233 = vpop.permute.xlu0 %1232
      %1236 = vset.pattern.permute.xlu0 0
      %1237 = vperm.xlu0 %1236, %v1047
      %v1238 = vpop.permute.xlu0 %1237
      %1241 = vset.pattern.permute.xlu0 0
      %1242 = vperm.xlu0 %1241, %v1048
      %v1243 = vpop.permute.xlu0 %1242
      %1246 = vset.pattern.permute.xlu0 0
      %1247 = vperm.xlu0 %1246, %v1049
      %v1248 = vpop.permute.xlu0 %1247
      %v1290 = vunpack.c.l.b16 %v970
      %v1291 = vunpack.c.h.b16 %v970
      %v1292 = vunpack.c.l.b16 %v971
      %v1293 = vunpack.c.h.b16 %v971
      %v1294 = vunpack.c.l.b16 %v972
      %v1295 = vunpack.c.h.b16 %v972
      %v1296 = vunpack.c.l.b16 %v973
      %v1297 = vunpack.c.h.b16 %v973
      %v1298 = vunpack.c.l.b16 %v974
      %v1299 = vunpack.c.h.b16 %v974
      %v1300 = vunpack.c.l.b16 %v975
      %v1301 = vunpack.c.h.b16 %v975
      %v1302 = vunpack.c.l.b16 %v976
      %v1303 = vunpack.c.h.b16 %v976
      %v1304 = vunpack.c.l.b16 %v977
      %v1305 = vunpack.c.h.b16 %v977
      %v1306 = vunpack.c.l.b16 %v978
      %v1307 = vunpack.c.h.b16 %v978
      %v1308 = vunpack.c.l.b16 %v979
      %v1309 = vunpack.c.h.b16 %v979
      %v1310 = vunpack.c.l.b16 %v980
      %v1311 = vunpack.c.h.b16 %v980
      %v1312 = vunpack.c.l.b16 %v981
      %v1313 = vunpack.c.h.b16 %v981
      %v1314 = vunpack.c.l.b16 %v982
      %v1315 = vunpack.c.h.b16 %v982
      %v1316 = vunpack.c.l.b16 %v983
      %v1317 = vunpack.c.h.b16 %v983
      %v1318 = vunpack.c.l.b16 %v984
      %v1319 = vunpack.c.h.b16 %v984
      %v1320 = vunpack.c.l.b16 %v985
      %v1321 = vunpack.c.h.b16 %v985
      %v1322 = vunpack.c.l.b16 %v986
      %v1323 = vunpack.c.h.b16 %v986
      %v1324 = vunpack.c.l.b16 %v987
      %v1325 = vunpack.c.h.b16 %v987
      %v1326 = vunpack.c.l.b16 %v988
      %v1327 = vunpack.c.h.b16 %v988
      %v1328 = vunpack.c.l.b16 %v989
      %v1329 = vunpack.c.h.b16 %v989
      %v1330 = vunpack.c.l.b16 %v990
      %v1331 = vunpack.c.h.b16 %v990
      %v1332 = vunpack.c.l.b16 %v991
      %v1333 = vunpack.c.h.b16 %v991
      %v1334 = vunpack.c.l.b16 %v992
      %v1335 = vunpack.c.h.b16 %v992
      %v1336 = vunpack.c.l.b16 %v993
      %v1337 = vunpack.c.h.b16 %v993
      %v1338 = vunpack.c.l.b16 %v994
      %v1339 = vunpack.c.h.b16 %v994
      %v1340 = vunpack.c.l.b16 %v995
      %v1341 = vunpack.c.h.b16 %v995
      %v1342 = vunpack.c.l.b16 %v996
      %v1343 = vunpack.c.h.b16 %v996
      %v1344 = vunpack.c.l.b16 %v997
      %v1345 = vunpack.c.h.b16 %v997
      %v1346 = vunpack.c.l.b16 %v998
      %v1347 = vunpack.c.h.b16 %v998
      %v1348 = vunpack.c.l.b16 %v999
      %v1349 = vunpack.c.h.b16 %v999
      %v1350 = vunpack.c.l.b16 %v1000
      %v1351 = vunpack.c.h.b16 %v1000
      %v1352 = vunpack.c.l.b16 %v1001
      %v1353 = vunpack.c.h.b16 %v1001
      %v1354 = vunpack.c.l.b16 %v1002
      %v1355 = vunpack.c.h.b16 %v1002
      %v1356 = vunpack.c.l.b16 %v1003
      %v1357 = vunpack.c.h.b16 %v1003
      %v1358 = vunpack.c.l.b16 %v1004
      %v1359 = vunpack.c.h.b16 %v1004
      %v1360 = vunpack.c.l.b16 %v1005
      %v1361 = vunpack.c.h.b16 %v1005
      %v1362 = vunpack.c.l.b16 %v1006
      %v1363 = vunpack.c.h.b16 %v1006
      %v1364 = vunpack.c.l.b16 %v1007
      %v1365 = vunpack.c.h.b16 %v1007
      %v1366 = vunpack.c.l.b16 %v1008
      %v1367 = vunpack.c.h.b16 %v1008
      %v1368 = vunpack.c.l.b16 %v1009
      %v1369 = vunpack.c.h.b16 %v1009
      %v1370 = vpack.c.b16 %v1292, %v1290
      %v1371 = vpack.c.b16 %v1293, %v1291
      %v1372 = vpack.c.b16 %v1296, %v1294
      %v1373 = vpack.c.b16 %v1297, %v1295
      %v1374 = vpack.c.b16 %v1300, %v1298
      %v1375 = vpack.c.b16 %v1301, %v1299
      %v1376 = vpack.c.b16 %v1304, %v1302
      %v1377 = vpack.c.b16 %v1305, %v1303
      %v1378 = vpack.c.b16 %v1308, %v1306
      %v1379 = vpack.c.b16 %v1309, %v1307
      %v1380 = vpack.c.b16 %v1312, %v1310
      %v1381 = vpack.c.b16 %v1313, %v1311
      %v1382 = vpack.c.b16 %v1316, %v1314
      %v1383 = vpack.c.b16 %v1317, %v1315
      %v1384 = vpack.c.b16 %v1320, %v1318
      %v1385 = vpack.c.b16 %v1321, %v1319
      %v1386 = vpack.c.b16 %v1324, %v1322
      %v1387 = vpack.c.b16 %v1325, %v1323
      %v1388 = vpack.c.b16 %v1328, %v1326
      %v1389 = vpack.c.b16 %v1329, %v1327
      %v1390 = vpack.c.b16 %v1332, %v1330
      %v1391 = vpack.c.b16 %v1333, %v1331
      %v1392 = vpack.c.b16 %v1336, %v1334
      %v1393 = vpack.c.b16 %v1337, %v1335
      %v1394 = vpack.c.b16 %v1340, %v1338
      %v1395 = vpack.c.b16 %v1341, %v1339
      %v1396 = vpack.c.b16 %v1344, %v1342
      %v1397 = vpack.c.b16 %v1345, %v1343
      %v1398 = vpack.c.b16 %v1348, %v1346
      %v1399 = vpack.c.b16 %v1349, %v1347
      %v1400 = vpack.c.b16 %v1352, %v1350
      %v1401 = vpack.c.b16 %v1353, %v1351
      %v1402 = vpack.c.b16 %v1356, %v1354
      %v1403 = vpack.c.b16 %v1357, %v1355
      %v1404 = vpack.c.b16 %v1360, %v1358
      %v1405 = vpack.c.b16 %v1361, %v1359
      %v1406 = vpack.c.b16 %v1364, %v1362
      %v1407 = vpack.c.b16 %v1365, %v1363
      %v1408 = vpack.c.b16 %v1368, %v1366
      %v1409 = vpack.c.b16 %v1369, %v1367
      %1450 = vmatprep.subr.bf16.mxu0 0
      %1451 = vmatpush1.bf16.msra.mxu0 %v961
      %1452 = vmatprep.subr.bf16.mxu0 0
      %1453 = vmatpush1.bf16.msra.mxu0 %v960
      %1454 = vmatprep.subr.bf16.mxu0 0
      %1455 = vmatpush1.bf16.msra.mxu0 %v959
      %1456 = vmatprep.subr.bf16.mxu0 0
      %1457 = vmatpush1.bf16.msra.mxu0 %v958
      %1458 = vmatprep.subr.bf16.mxu0 0
      %1459 = vmatpush1.bf16.msra.mxu0 %v957
      %1460 = vmatprep.subr.bf16.mxu0 0
      %1461 = vmatpush1.bf16.msra.mxu0 %v956
      %1462 = vmatprep.subr.bf16.mxu0 0
      %1463 = vmatpush1.bf16.msra.mxu0 %v955
      %1464 = vmatprep.subr.bf16.mxu0 0
      %1465 = vmatpush1.bf16.msra.mxu0 %v954
      %1466 = vmatprep.subr.bf16.mxu0 0
      %1467 = vmatpush2.bf16.msra.mxu0 %v969
      %1468 = vmatprep.subr.bf16.mxu0 0
      %1469 = vmatpush2.bf16.msra.mxu0 %v968
      %1470 = vmatprep.subr.bf16.mxu0 0
      %1471 = vmatpush2.bf16.msra.mxu0 %v967
      %1472 = vmatprep.subr.bf16.mxu0 0
      %1473 = vmatpush2.bf16.msra.mxu0 %v966
      %1474 = vmatprep.subr.bf16.mxu0 0
      %1475 = vmatpush2.bf16.msra.mxu0 %v965
      %1476 = vmatprep.subr.bf16.mxu0 0
      %1477 = vmatpush2.bf16.msra.mxu0 %v964
      %1478 = vmatprep.subr.bf16.mxu0 0
      %1479 = vmatpush2.bf16.msra.mxu0 %v963
      %1480 = vmatprep.subr.bf16.mxu0 0
      %1481 = vmatpush2.bf16.msra.mxu0 %v962
      %1482 = vmatprep.mubr.bf16.mxu0 %v1371
      %1483 = vmatmul.mubr.bf16.gmra.mxu0 %v1370
      %v1484 = vpop.f32.mrf.mxu0
      %v1485 = vadd.f32 %v1053, %v1484
      %v1486 = vpop.f32.mrf.mxu0
      %v1487 = vpop.f32.mrf.mxu0
      %v1488 = vadd.f32 %v1058, %v1487
      %v1489 = vpop.f32.mrf.mxu0
      %1490 = vmatprep.mubr.bf16.mxu0 %v1373
      %1491 = vmatmul.mubr.bf16.gmra.mxu0 %v1372
      %v1492 = vpop.f32.mrf.mxu0
      %v1493 = vadd.f32 %v1063, %v1492
      %v1494 = vpop.f32.mrf.mxu0
      %v1495 = vpop.f32.mrf.mxu0
      %v1496 = vadd.f32 %v1068, %v1495
      %v1497 = vpop.f32.mrf.mxu0
      %1498 = vmatprep.mubr.bf16.mxu0 %v1375
      %1499 = vmatmul.mubr.bf16.gmra.mxu0 %v1374
      %v1500 = vpop.f32.mrf.mxu0
      %v1501 = vadd.f32 %v1073, %v1500
      %v1502 = vpop.f32.mrf.mxu0
      %v1503 = vpop.f32.mrf.mxu0
      %v1504 = vadd.f32 %v1078, %v1503
      %v1505 = vpop.f32.mrf.mxu0
      %1506 = vmatprep.mubr.bf16.mxu0 %v1377
      %1507 = vmatmul.mubr.bf16.gmra.mxu0 %v1376
      %v1508 = vpop.f32.mrf.mxu0
      %v1509 = vadd.f32 %v1083, %v1508
      %v1510 = vpop.f32.mrf.mxu0
      %v1511 = vpop.f32.mrf.mxu0
      %v1512 = vadd.f32 %v1088, %v1511
      %v1513 = vpop.f32.mrf.mxu0
      %1514 = vmatprep.mubr.bf16.mxu0 %v1379
      %1515 = vmatmul.mubr.bf16.gmra.mxu0 %v1378
      %v1516 = vpop.f32.mrf.mxu0
      %v1517 = vadd.f32 %v1093, %v1516
      %v1518 = vpop.f32.mrf.mxu0
      %v1519 = vpop.f32.mrf.mxu0
      %v1520 = vadd.f32 %v1098, %v1519
      %v1521 = vpop.f32.mrf.mxu0
      %1522 = vmatprep.mubr.bf16.mxu0 %v1381
      %1523 = vmatmul.mubr.bf16.gmra.mxu0 %v1380
      %v1524 = vpop.f32.mrf.mxu0
      %v1525 = vadd.f32 %v1103, %v1524
      %v1526 = vpop.f32.mrf.mxu0
      %v1527 = vpop.f32.mrf.mxu0
      %v1528 = vadd.f32 %v1108, %v1527
      %v1529 = vpop.f32.mrf.mxu0
      %1530 = vmatprep.mubr.bf16.mxu0 %v1383
      %1531 = vmatmul.mubr.bf16.gmra.mxu0 %v1382
      %v1532 = vpop.f32.mrf.mxu0
      %v1533 = vadd.f32 %v1113, %v1532
      %v1534 = vpop.f32.mrf.mxu0
      %v1535 = vpop.f32.mrf.mxu0
      %v1536 = vadd.f32 %v1118, %v1535
      %v1537 = vpop.f32.mrf.mxu0
      %1538 = vmatprep.mubr.bf16.mxu0 %v1385
      %1539 = vmatmul.mubr.bf16.gmra.mxu0 %v1384
      %v1540 = vpop.f32.mrf.mxu0
      %v1541 = vadd.f32 %v1123, %v1540
      %v1542 = vpop.f32.mrf.mxu0
      %v1543 = vpop.f32.mrf.mxu0
      %v1544 = vadd.f32 %v1128, %v1543
      %v1545 = vpop.f32.mrf.mxu0
      %1546 = vmatprep.mubr.bf16.mxu0 %v1387
      %1547 = vmatmul.mubr.bf16.gmra.mxu0 %v1386
      %v1548 = vpop.f32.mrf.mxu0
      %v1549 = vadd.f32 %v1133, %v1548
      %v1550 = vpop.f32.mrf.mxu0
      %v1551 = vpop.f32.mrf.mxu0
      %v1552 = vadd.f32 %v1138, %v1551
      %v1553 = vpop.f32.mrf.mxu0
      %1554 = vmatprep.mubr.bf16.mxu0 %v1389
      %1555 = vmatmul.mubr.bf16.gmra.mxu0 %v1388
      %v1556 = vpop.f32.mrf.mxu0
      %v1557 = vadd.f32 %v1143, %v1556
      %v1558 = vpop.f32.mrf.mxu0
      %v1559 = vpop.f32.mrf.mxu0
      %v1560 = vadd.f32 %v1148, %v1559
      %v1561 = vpop.f32.mrf.mxu0
      %1562 = vmatprep.mubr.bf16.mxu0 %v1391
      %1563 = vmatmul.mubr.bf16.gmra.mxu0 %v1390
      %v1564 = vpop.f32.mrf.mxu0
      %v1565 = vadd.f32 %v1153, %v1564
      %v1566 = vpop.f32.mrf.mxu0
      %v1567 = vpop.f32.mrf.mxu0
      %v1568 = vadd.f32 %v1158, %v1567
      %v1569 = vpop.f32.mrf.mxu0
      %1570 = vmatprep.mubr.bf16.mxu0 %v1393
      %1571 = vmatmul.mubr.bf16.gmra.mxu0 %v1392
      %v1572 = vpop.f32.mrf.mxu0
      %v1573 = vadd.f32 %v1163, %v1572
      %v1574 = vpop.f32.mrf.mxu0
      %v1575 = vpop.f32.mrf.mxu0
      %v1576 = vadd.f32 %v1168, %v1575
      %v1577 = vpop.f32.mrf.mxu0
      %1578 = vmatprep.mubr.bf16.mxu0 %v1395
      %1579 = vmatmul.mubr.bf16.gmra.mxu0 %v1394
      %v1580 = vpop.f32.mrf.mxu0
      %v1581 = vadd.f32 %v1173, %v1580
      %v1582 = vpop.f32.mrf.mxu0
      %v1583 = vpop.f32.mrf.mxu0
      %v1584 = vadd.f32 %v1178, %v1583
      %v1585 = vpop.f32.mrf.mxu0
      %1586 = vmatprep.mubr.bf16.mxu0 %v1397
      %1587 = vmatmul.mubr.bf16.gmra.mxu0 %v1396
      %v1588 = vpop.f32.mrf.mxu0
      %v1589 = vadd.f32 %v1183, %v1588
      %v1590 = vpop.f32.mrf.mxu0
      %v1591 = vpop.f32.mrf.mxu0
      %v1592 = vadd.f32 %v1188, %v1591
      %v1593 = vpop.f32.mrf.mxu0
      %1594 = vmatprep.mubr.bf16.mxu0 %v1399
      %1595 = vmatmul.mubr.bf16.gmra.mxu0 %v1398
      %v1596 = vpop.f32.mrf.mxu0
      %v1597 = vadd.f32 %v1193, %v1596
      %v1598 = vpop.f32.mrf.mxu0
      %v1599 = vpop.f32.mrf.mxu0
      %v1600 = vadd.f32 %v1198, %v1599
      %v1601 = vpop.f32.mrf.mxu0
      %1602 = vmatprep.mubr.bf16.mxu0 %v1401
      %1603 = vmatmul.mubr.bf16.gmra.mxu0 %v1400
      %v1604 = vpop.f32.mrf.mxu0
      %v1605 = vadd.f32 %v1203, %v1604
      %v1606 = vpop.f32.mrf.mxu0
      %v1607 = vpop.f32.mrf.mxu0
      %v1608 = vadd.f32 %v1208, %v1607
      %v1609 = vpop.f32.mrf.mxu0
      %1610 = vmatprep.mubr.bf16.mxu0 %v1403
      %1611 = vmatmul.mubr.bf16.gmra.mxu0 %v1402
      %v1612 = vpop.f32.mrf.mxu0
      %v1613 = vadd.f32 %v1213, %v1612
      %v1614 = vpop.f32.mrf.mxu0
      %v1615 = vpop.f32.mrf.mxu0
      %v1616 = vadd.f32 %v1218, %v1615
      %v1617 = vpop.f32.mrf.mxu0
      %1618 = vmatprep.mubr.bf16.mxu0 %v1405
      %1619 = vmatmul.mubr.bf16.gmra.mxu0 %v1404
      %v1620 = vpop.f32.mrf.mxu0
      %v1621 = vadd.f32 %v1223, %v1620
      %v1622 = vpop.f32.mrf.mxu0
      %v1623 = vpop.f32.mrf.mxu0
      %v1624 = vadd.f32 %v1228, %v1623
      %v1625 = vpop.f32.mrf.mxu0
      %1626 = vmatprep.mubr.bf16.mxu0 %v1407
      %1627 = vmatmul.mubr.bf16.gmra.mxu0 %v1406
      %v1628 = vpop.f32.mrf.mxu0
      %v1629 = vadd.f32 %v1233, %v1628
      %v1630 = vpop.f32.mrf.mxu0
      %v1631 = vpop.f32.mrf.mxu0
      %v1632 = vadd.f32 %v1238, %v1631
      %v1633 = vpop.f32.mrf.mxu0
      %1634 = vmatprep.mubr.bf16.mxu0 %v1409
      %1635 = vmatmul.mubr.bf16.gmra.mxu0 %v1408
      %v1636 = vpop.f32.mrf.mxu0
      %v1637 = vadd.f32 %v1243, %v1636
      %v1638 = vpop.f32.mrf.mxu0
      %v1639 = vpop.f32.mrf.mxu0
      %v1640 = vadd.f32 %v1248, %v1639
      %v1641 = vpop.f32.mrf.mxu0
      %1642 = vdwg.mxu0
      %v1643 = vpack.c.bf16 %v1488, %v1485
      %v1644 = vpack.c.bf16 %v1496, %v1493
      %v1645 = vpack.c.bf16 %v1504, %v1501
      %v1646 = vpack.c.bf16 %v1512, %v1509
      %1647 = vxpose.xlu0.c.b16.start [1/8] %v1643, 128
      %1648 = vxpose.xlu0.c.b16.cont [2/8] %v1644, 128
      %1649 = vxpose.xlu0.c.b16.cont [3/8] %v1645, 128
      %1650 = vxpose.xlu0.c.b16.cont [4/8] %v1646, 128
      %1651 = vxpose.xlu0.c.b16.cont [5/8] 0, 128
      %1652 = vxpose.xlu0.c.b16.cont [6/8] 0, 128
      %1653 = vxpose.xlu0.c.b16.cont [7/8] 0, 128
      %1654 = vxpose.xlu0.c.b16.end [8/8] 0, 128
      %v1655 = vpop.trf.xlu0
      %v1656 = vpop.trf.xlu0
      %v1657 = vpop.trf.xlu0
      %v1658 = vpop.trf.xlu0
      %v1659 = vpop.trf.xlu0
      %v1660 = vpop.trf.xlu0
      %v1661 = vpop.trf.xlu0
      %v1662 = vpop.trf.xlu0
      %vm1663 = vcmask 523264
      %v1665 = vsel %vm1663, %v1655, 0
      %v1668 = vsel %vm1663, %v1656, 0
      %v1671 = vsel %vm1663, %v1657, 0
      %v1674 = vsel %vm1663, %v1658, 0
      %v1677 = vsel %vm1663, %v1659, 0
      %v1680 = vsel %vm1663, %v1660, 0
      %v1683 = vsel %vm1663, %v1661, 0
      %v1686 = vsel %vm1663, %v1662, 0
      %1688 = vmatprep.subr.bf16.mxu0 0
      %1689 = vmatpush1.bf16.msra.mxu0 0
      %1690 = vmatprep.subr.bf16.mxu0 0
      %1691 = vmatpush1.bf16.msra.mxu0 0
      %1692 = vmatprep.subr.bf16.mxu0 0
      %1693 = vmatpush1.bf16.msra.mxu0 0
      %1694 = vmatprep.subr.bf16.mxu0 0
      %1695 = vmatpush1.bf16.msra.mxu0 0
      %1696 = vmatprep.subr.bf16.mxu0 0
      %1697 = vmatpush1.bf16.msra.mxu0 %v1646
      %1698 = vmatprep.subr.bf16.mxu0 0
      %1699 = vmatpush1.bf16.msra.mxu0 %v1645
      %1700 = vmatprep.subr.bf16.mxu0 0
      %1701 = vmatpush1.bf16.msra.mxu0 %v1644
      %1702 = vmatprep.subr.bf16.mxu0 0
      %1703 = vmatpush1.bf16.msra.mxu0 %v1643
      %1704 = vmatprep.subr.bf16.mxu0 0
      %1705 = vmatpush2.bf16.msra.mxu0 0
      %1706 = vmatprep.subr.bf16.mxu0 0
      %1707 = vmatpush2.bf16.msra.mxu0 0
      %1708 = vmatprep.subr.bf16.mxu0 0
      %1709 = vmatpush2.bf16.msra.mxu0 0
      %1710 = vmatprep.subr.bf16.mxu0 0
      %1711 = vmatpush2.bf16.msra.mxu0 0
      %1712 = vmatprep.subr.bf16.mxu0 0
      %1713 = vmatpush2.bf16.msra.mxu0 0
      %1714 = vmatprep.subr.bf16.mxu0 0
      %1715 = vmatpush2.bf16.msra.mxu0 0
      %1716 = vmatprep.subr.bf16.mxu0 0
      %1717 = vmatpush2.bf16.msra.mxu0 0
      %1718 = vmatprep.subr.bf16.mxu0 0
      %1719 = vmatpush2.bf16.msra.mxu0 0
      %1720 = vmatprep.mubr.bf16.mxu0 0
      %1721 = vmatmul.mubr.bf16.gmra.mxu0 %v1665
      %v1722 = vpop.f32.mrf.mxu0
      %v1723 = vadd.f32 0.0, %v1722
      %v1724 = vpop.f32.mrf.mxu0
      %v1725 = vpop.f32.mrf.mxu0
      %v1726 = vadd.f32 0.0, %v1725
      %v1727 = vpop.f32.mrf.mxu0
      %1728 = vmatprep.mubr.bf16.mxu0 0
      %1729 = vmatmul.mubr.bf16.gmra.mxu0 %v1668
      %v1730 = vpop.f32.mrf.mxu0
      %v1731 = vadd.f32 0.0, %v1730
      %v1732 = vpop.f32.mrf.mxu0
      %v1733 = vpop.f32.mrf.mxu0
      %v1734 = vadd.f32 0.0, %v1733
      %v1735 = vpop.f32.mrf.mxu0
      %1736 = vmatprep.mubr.bf16.mxu0 0
      %1737 = vmatmul.mubr.bf16.gmra.mxu0 %v1671
      %v1738 = vpop.f32.mrf.mxu0
      %v1739 = vadd.f32 0.0, %v1738
      %v1740 = vpop.f32.mrf.mxu0
      %v1741 = vpop.f32.mrf.mxu0
      %v1742 = vadd.f32 0.0, %v1741
      %v1743 = vpop.f32.mrf.mxu0
      %1744 = vmatprep.mubr.bf16.mxu0 0
      %1745 = vmatmul.mubr.bf16.gmra.mxu0 %v1674
      %v1746 = vpop.f32.mrf.mxu0
      %v1747 = vadd.f32 0.0, %v1746
      %v1748 = vpop.f32.mrf.mxu0
      %v1749 = vpop.f32.mrf.mxu0
      %v1750 = vadd.f32 0.0, %v1749
      %v1751 = vpop.f32.mrf.mxu0
      %1752 = vmatprep.mubr.bf16.mxu0 0
      %1753 = vmatmul.mubr.bf16.gmra.mxu0 %v1677
      %v1754 = vpop.f32.mrf.mxu0
      %v1755 = vadd.f32 0.0, %v1754
      %v1756 = vpop.f32.mrf.mxu0
      %v1757 = vpop.f32.mrf.mxu0
      %v1758 = vadd.f32 0.0, %v1757
      %v1759 = vpop.f32.mrf.mxu0
      %1760 = vmatprep.mubr.bf16.mxu0 0
      %1761 = vmatmul.mubr.bf16.gmra.mxu0 %v1680
      %v1762 = vpop.f32.mrf.mxu0
      %v1763 = vadd.f32 0.0, %v1762
      %v1764 = vpop.f32.mrf.mxu0
      %v1765 = vpop.f32.mrf.mxu0
      %v1766 = vadd.f32 0.0, %v1765
      %v1767 = vpop.f32.mrf.mxu0
      %1768 = vmatprep.mubr.bf16.mxu0 0
      %1769 = vmatmul.mubr.bf16.gmra.mxu0 %v1683
      %v1770 = vpop.f32.mrf.mxu0
      %v1771 = vadd.f32 0.0, %v1770
      %v1772 = vpop.f32.mrf.mxu0
      %v1773 = vpop.f32.mrf.mxu0
      %v1774 = vadd.f32 0.0, %v1773
      %v1775 = vpop.f32.mrf.mxu0
      %1776 = vmatprep.mubr.bf16.mxu0 0
      %1777 = vmatmul.mubr.bf16.gmra.mxu0 %v1686
      %v1778 = vpop.f32.mrf.mxu0
      %v1779 = vadd.f32 0.0, %v1778
      %v1780 = vpop.f32.mrf.mxu0
      %v1781 = vpop.f32.mrf.mxu0
      %v1782 = vadd.f32 0.0, %v1781
      %v1783 = vpop.f32.mrf.mxu0
      %1784 = vdwg.mxu0
      %1785 = vmax.xlane.f32.xlu0 %v1723
      %v1786 = vpop.xlane.xlu0 %1785
      %1787 = vmax.xlane.f32.xlu0 %v1726
      %v1788 = vpop.xlane.xlu0 %1787
      %1789 = vmax.xlane.f32.xlu0 %v1731
      %v1790 = vpop.xlane.xlu0 %1789
      %1791 = vmax.xlane.f32.xlu0 %v1734
      %v1792 = vpop.xlane.xlu0 %1791
      %1793 = vmax.xlane.f32.xlu0 %v1739
      %v1794 = vpop.xlane.xlu0 %1793
      %1795 = vmax.xlane.f32.xlu0 %v1742
      %v1796 = vpop.xlane.xlu0 %1795
      %1797 = vmax.xlane.f32.xlu0 %v1747
      %v1798 = vpop.xlane.xlu0 %1797
      %1799 = vmax.xlane.f32.xlu0 %v1750
      %v1800 = vpop.xlane.xlu0 %1799
      %1801 = vmax.xlane.f32.xlu0 %v1755
      %v1802 = vpop.xlane.xlu0 %1801
      %1803 = vmax.xlane.f32.xlu0 %v1758
      %v1804 = vpop.xlane.xlu0 %1803
      %1805 = vmax.xlane.f32.xlu0 %v1763
      %v1806 = vpop.xlane.xlu0 %1805
      %1807 = vmax.xlane.f32.xlu0 %v1766
      %v1808 = vpop.xlane.xlu0 %1807
      %1809 = vmax.xlane.f32.xlu0 %v1771
      %v1810 = vpop.xlane.xlu0 %1809
      %1811 = vmax.xlane.f32.xlu0 %v1774
      %v1812 = vpop.xlane.xlu0 %1811
      %1813 = vmax.xlane.f32.xlu0 %v1779
      %v1814 = vpop.xlane.xlu0 %1813
      %1815 = vmax.xlane.f32.xlu0 %v1782
      %v1816 = vpop.xlane.xlu0 %1815
      %v1817 = vsub.f32 %v1723, %v1786
      %v1818 = vsub.f32 %v1726, %v1788
      %v1819 = vsub.f32 %v1731, %v1790
      %v1820 = vsub.f32 %v1734, %v1792
      %v1821 = vsub.f32 %v1739, %v1794
      %v1822 = vsub.f32 %v1742, %v1796
      %v1823 = vsub.f32 %v1747, %v1798
      %v1824 = vsub.f32 %v1750, %v1800
      %v1825 = vsub.f32 %v1755, %v1802
      %v1826 = vsub.f32 %v1758, %v1804
      %v1827 = vsub.f32 %v1763, %v1806
      %v1828 = vsub.f32 %v1766, %v1808
      %v1829 = vsub.f32 %v1771, %v1810
      %v1830 = vsub.f32 %v1774, %v1812
      %v1831 = vsub.f32 %v1779, %v1814
      %v1832 = vsub.f32 %v1782, %v1816
      %v1833 = vmul.f32 %v1817, 1.442695
      %v1834 = vpow.pop %v1833
      %v1835 = vmul.f32 %v1818, 1.442695
      %v1836 = vpow.pop %v1835
      %v1837 = vmul.f32 %v1819, 1.442695
      %v1838 = vpow.pop %v1837
      %v1839 = vmul.f32 %v1820, 1.442695
      %v1840 = vpow.pop %v1839
      %v1841 = vmul.f32 %v1821, 1.442695
      %v1842 = vpow.pop %v1841
      %v1843 = vmul.f32 %v1822, 1.442695
      %v1844 = vpow.pop %v1843
      %v1845 = vmul.f32 %v1823, 1.442695
      %v1846 = vpow.pop %v1845
      %v1847 = vmul.f32 %v1824, 1.442695
      %v1848 = vpow.pop %v1847
      %v1849 = vmul.f32 %v1825, 1.442695
      %v1850 = vpow.pop %v1849
      %v1851 = vmul.f32 %v1826, 1.442695
      %v1852 = vpow.pop %v1851
      %v1853 = vmul.f32 %v1827, 1.442695
      %v1854 = vpow.pop %v1853
      %v1855 = vmul.f32 %v1828, 1.442695
      %v1856 = vpow.pop %v1855
      %v1857 = vmul.f32 %v1829, 1.442695
      %v1858 = vpow.pop %v1857
      %v1859 = vmul.f32 %v1830, 1.442695
      %v1860 = vpow.pop %v1859
      %v1861 = vmul.f32 %v1831, 1.442695
      %v1862 = vpow.pop %v1861
      %v1863 = vmul.f32 %v1832, 1.442695
      %v1864 = vpow.pop %v1863
      %1865 = vadd.xlane.f32.xlu0 %v1834
      %v1866 = vpop.xlane.xlu0 %1865
      %1867 = vadd.xlane.f32.xlu0 %v1836
      %v1868 = vpop.xlane.xlu0 %1867
      %1869 = vadd.xlane.f32.xlu0 %v1838
      %v1870 = vpop.xlane.xlu0 %1869
      %1871 = vadd.xlane.f32.xlu0 %v1840
      %v1872 = vpop.xlane.xlu0 %1871
      %1873 = vadd.xlane.f32.xlu0 %v1842
      %v1874 = vpop.xlane.xlu0 %1873
      %1875 = vadd.xlane.f32.xlu0 %v1844
      %v1876 = vpop.xlane.xlu0 %1875
      %1877 = vadd.xlane.f32.xlu0 %v1846
      %v1878 = vpop.xlane.xlu0 %1877
      %1879 = vadd.xlane.f32.xlu0 %v1848
      %v1880 = vpop.xlane.xlu0 %1879
      %1881 = vadd.xlane.f32.xlu0 %v1850
      %v1882 = vpop.xlane.xlu0 %1881
      %1883 = vadd.xlane.f32.xlu0 %v1852
      %v1884 = vpop.xlane.xlu0 %1883
      %1885 = vadd.xlane.f32.xlu0 %v1854
      %v1886 = vpop.xlane.xlu0 %1885
      %1887 = vadd.xlane.f32.xlu0 %v1856
      %v1888 = vpop.xlane.xlu0 %1887
      %1889 = vadd.xlane.f32.xlu0 %v1858
      %v1890 = vpop.xlane.xlu0 %1889
      %1891 = vadd.xlane.f32.xlu0 %v1860
      %v1892 = vpop.xlane.xlu0 %1891
      %1893 = vadd.xlane.f32.xlu0 %v1862
      %v1894 = vpop.xlane.xlu0 %1893
      %1895 = vadd.xlane.f32.xlu0 %v1864
      %v1896 = vpop.xlane.xlu0 %1895
      %v1897 = vpack.c.bf16 %v1836, %v1834
      %v1898 = vpack.c.bf16 %v1840, %v1838
      %v1899 = vpack.c.bf16 %v1844, %v1842
      %v1900 = vpack.c.bf16 %v1848, %v1846
      %v1901 = vpack.c.bf16 %v1852, %v1850
      %v1902 = vpack.c.bf16 %v1856, %v1854
      %v1903 = vpack.c.bf16 %v1860, %v1858
      %v1904 = vpack.c.bf16 %v1864, %v1862
      %v1905 = vrcp.pop %v1866
      %v1906 = vrcp.pop %v1868
      %v1907 = vrcp.pop %v1870
      %v1908 = vrcp.pop %v1872
      %v1909 = vrcp.pop %v1874
      %v1910 = vrcp.pop %v1876
      %v1911 = vrcp.pop %v1878
      %v1912 = vrcp.pop %v1880
      %v1913 = vrcp.pop %v1882
      %v1914 = vrcp.pop %v1884
      %v1915 = vrcp.pop %v1886
      %v1916 = vrcp.pop %v1888
      %v1917 = vrcp.pop %v1890
      %v1918 = vrcp.pop %v1892
      %v1919 = vrcp.pop %v1894
      %v1920 = vrcp.pop %v1896
      %v1921 = vpack.c.bf16 %v1906, %v1905
      %v1922 = vpack.c.bf16 %v1908, %v1907
      %v1923 = vpack.c.bf16 %v1910, %v1909
      %v1924 = vpack.c.bf16 %v1912, %v1911
      %v1925 = vpack.c.bf16 %v1914, %v1913
      %v1926 = vpack.c.bf16 %v1916, %v1915
      %v1927 = vpack.c.bf16 %v1918, %v1917
      %v1928 = vpack.c.bf16 %v1920, %v1919
      %v1945 = vlaneseq
      %v1946 = vand.u32 %v1945, 127
      %v1947 = vlaneseq
      %v1948 = vshrl.u32 %v1947, 7
      %v1949 = vsub.s32 %v1946, %v1948
      %v1950 = vrot.slane %v1905, %v1949
      %v1951 = vadd.s32 %v1946, 4294967288
      %v1952 = vlaneseq
      %v1953 = vshrl.u32 %v1952, 7
      %v1954 = vsub.s32 %v1951, %v1953
      %v1955 = vrot.slane %v1906, %v1954
      %vm1956 = vcmask 130112
      %v1957 = vsel %vm1956, %v1955, %v1950
      %v1958 = vadd.s32 %v1946, 4294967280
      %v1959 = vlaneseq
      %v1960 = vshrl.u32 %v1959, 7
      %v1961 = vsub.s32 %v1958, %v1960
      %v1962 = vrot.slane %v1907, %v1961
      %vm1963 = vcmask 195712
      %v1964 = vsel %vm1963, %v1962, %v1957
      %v1965 = vadd.s32 %v1946, 4294967272
      %v1966 = vlaneseq
      %v1967 = vshrl.u32 %v1966, 7
      %v1968 = vsub.s32 %v1965, %v1967
      %v1969 = vrot.slane %v1908, %v1968
      %vm1970 = vcmask 261312
      %v1971 = vsel %vm1970, %v1969, %v1964
      %v1972 = vadd.s32 %v1946, 4294967264
      %v1973 = vlaneseq
      %v1974 = vshrl.u32 %v1973, 7
      %v1975 = vsub.s32 %v1972, %v1974
      %v1976 = vrot.slane %v1909, %v1975
      %vm1977 = vcmask 326912
      %v1978 = vsel %vm1977, %v1976, %v1971
      %v1979 = vadd.s32 %v1946, 4294967256
      %v1980 = vlaneseq
      %v1981 = vshrl.u32 %v1980, 7
      %v1982 = vsub.s32 %v1979, %v1981
      %v1983 = vrot.slane %v1910, %v1982
      %vm1984 = vcmask 392512
      %v1985 = vsel %vm1984, %v1983, %v1978
      %v1986 = vadd.s32 %v1946, 4294967248
      %v1987 = vlaneseq
      %v1988 = vshrl.u32 %v1987, 7
      %v1989 = vsub.s32 %v1986, %v1988
      %v1990 = vrot.slane %v1911, %v1989
      %vm1991 = vcmask 458112
      %v1992 = vsel %vm1991, %v1990, %v1985
      %v1993 = vadd.s32 %v1946, 4294967240
      %v1994 = vlaneseq
      %v1995 = vshrl.u32 %v1994, 7
      %v1996 = vsub.s32 %v1993, %v1995
      %v1997 = vrot.slane %v1912, %v1996
      %vm1998 = vcmask 523712
      %v1999 = vsel %vm1998, %v1997, %v1992
      %v2000 = vadd.s32 %v1946, 4294967232
      %v2001 = vlaneseq
      %v2002 = vshrl.u32 %v2001, 7
      %v2003 = vsub.s32 %v2000, %v2002
      %v2004 = vrot.slane %v1913, %v2003
      %vm2005 = vcmask 589312
      %v2006 = vsel %vm2005, %v2004, %v1999
      %v2007 = vadd.s32 %v1946, 4294967224
      %v2008 = vlaneseq
      %v2009 = vshrl.u32 %v2008, 7
      %v2010 = vsub.s32 %v2007, %v2009
      %v2011 = vrot.slane %v1914, %v2010
      %vm2012 = vcmask 654912
      %v2013 = vsel %vm2012, %v2011, %v2006
      %v2014 = vadd.s32 %v1946, 4294967216
      %v2015 = vlaneseq
      %v2016 = vshrl.u32 %v2015, 7
      %v2017 = vsub.s32 %v2014, %v2016
      %v2018 = vrot.slane %v1915, %v2017
      %vm2019 = vcmask 720512
      %v2020 = vsel %vm2019, %v2018, %v2013
      %v2021 = vadd.s32 %v1946, 4294967208
      %v2022 = vlaneseq
      %v2023 = vshrl.u32 %v2022, 7
      %v2024 = vsub.s32 %v2021, %v2023
      %v2025 = vrot.slane %v1916, %v2024
      %vm2026 = vcmask 786112
      %v2027 = vsel %vm2026, %v2025, %v2020
      %v2028 = vadd.s32 %v1946, 4294967200
      %v2029 = vlaneseq
      %v2030 = vshrl.u32 %v2029, 7
      %v2031 = vsub.s32 %v2028, %v2030
      %v2032 = vrot.slane %v1917, %v2031
      %vm2033 = vcmask 851712
      %v2034 = vsel %vm2033, %v2032, %v2027
      %v2035 = vadd.s32 %v1946, 4294967192
      %v2036 = vlaneseq
      %v2037 = vshrl.u32 %v2036, 7
      %v2038 = vsub.s32 %v2035, %v2037
      %v2039 = vrot.slane %v1918, %v2038
      %vm2040 = vcmask 917312
      %v2041 = vsel %vm2040, %v2039, %v2034
      %v2042 = vadd.s32 %v1946, 4294967184
      %v2043 = vlaneseq
      %v2044 = vshrl.u32 %v2043, 7
      %v2045 = vsub.s32 %v2042, %v2044
      %v2046 = vrot.slane %v1919, %v2045
      %vm2047 = vcmask 982912
      %v2048 = vsel %vm2047, %v2046, %v2041
      %v2049 = vadd.s32 %v1946, 4294967176
      %v2050 = vlaneseq
      %v2051 = vshrl.u32 %v2050, 7
      %v2052 = vsub.s32 %v2049, %v2051
      %v2053 = vrot.slane %v1920, %v2052
      %vm2054 = vcmask 1048512
      %v2055 = vsel %vm2054, %v2053, %v2048
      %vm2056 = vcmask 1042434
      %v2057 = vsel %vm2056, %v2055, %v2055
      %vm2058 = vcmask 1043459
      %v2059 = vsel %vm2058, %v2055, %v2057
      %vm2060 = vcmask 1044484
      %v2061 = vsel %vm2060, %v2055, %v2059
      %vm2062 = vcmask 1045509
      %v2063 = vsel %vm2062, %v2055, %v2061
      %vm2064 = vcmask 1046534
      %v2065 = vsel %vm2064, %v2055, %v2063
      %vm2066 = vcmask 1047559
      %v2067 = vsel %vm2066, %v2055, %v2065
      %v2069 = vmul.f32 %v1517, %v2067
      %v2070 = vmul.f32 %v1520, %v2067
      %v2071 = vmul.f32 %v1525, %v2067
      %v2072 = vmul.f32 %v1528, %v2067
      %v2073 = vmul.f32 %v1533, %v2067
      %v2074 = vmul.f32 %v1536, %v2067
      %v2075 = vmul.f32 %v1541, %v2067
      %v2076 = vmul.f32 %v1544, %v2067
      %v2077 = vmul.f32 %v1549, %v2067
      %v2078 = vmul.f32 %v1552, %v2067
      %v2079 = vmul.f32 %v1557, %v2067
      %v2080 = vmul.f32 %v1560, %v2067
      %v2081 = vmul.f32 %v1565, %v2067
      %v2082 = vmul.f32 %v1568, %v2067
      %v2083 = vmul.f32 %v1573, %v2067
      %v2084 = vmul.f32 %v1576, %v2067
      %v2085 = vmul.f32 %v1581, %v2067
      %v2086 = vmul.f32 %v1584, %v2067
      %v2087 = vmul.f32 %v1589, %v2067
      %v2088 = vmul.f32 %v1592, %v2067
      %v2089 = vmul.f32 %v1597, %v2067
      %v2090 = vmul.f32 %v1600, %v2067
      %v2091 = vmul.f32 %v1605, %v2067
      %v2092 = vmul.f32 %v1608, %v2067
      %v2093 = vmul.f32 %v1613, %v2067
      %v2094 = vmul.f32 %v1616, %v2067
      %v2095 = vmul.f32 %v1621, %v2067
      %v2096 = vmul.f32 %v1624, %v2067
      %v2097 = vmul.f32 %v1629, %v2067
      %v2098 = vmul.f32 %v1632, %v2067
      %v2099 = vmul.f32 %v1637, %v2067
      %v2100 = vmul.f32 %v1640, %v2067
      %v2101 = vpack.c.bf16 %v2070, %v2069
      %v2102 = vpack.c.bf16 %v2072, %v2071
      %v2103 = vpack.c.bf16 %v2074, %v2073
      %v2104 = vpack.c.bf16 %v2076, %v2075
      %v2105 = vpack.c.bf16 %v2078, %v2077
      %v2106 = vpack.c.bf16 %v2080, %v2079
      %v2107 = vpack.c.bf16 %v2082, %v2081
      %v2108 = vpack.c.bf16 %v2084, %v2083
      %v2109 = vpack.c.bf16 %v2086, %v2085
      %v2110 = vpack.c.bf16 %v2088, %v2087
      %v2111 = vpack.c.bf16 %v2090, %v2089
      %v2112 = vpack.c.bf16 %v2092, %v2091
      %v2113 = vpack.c.bf16 %v2094, %v2093
      %v2114 = vpack.c.bf16 %v2096, %v2095
      %v2115 = vpack.c.bf16 %v2098, %v2097
      %v2116 = vpack.c.bf16 %v2100, %v2099
      %2117 = vmatprep.subr.bf16.mxu0 0
      %2118 = vmatpush1.bf16.msra.mxu0 %v1904
      %2119 = vmatprep.subr.bf16.mxu0 0
      %2120 = vmatpush1.bf16.msra.mxu0 %v1903
      %2121 = vmatprep.subr.bf16.mxu0 0
      %2122 = vmatpush1.bf16.msra.mxu0 %v1902
      %2123 = vmatprep.subr.bf16.mxu0 0
      %2124 = vmatpush1.bf16.msra.mxu0 %v1901
      %2125 = vmatprep.subr.bf16.mxu0 0
      %2126 = vmatpush1.bf16.msra.mxu0 %v1900
      %2127 = vmatprep.subr.bf16.mxu0 0
      %2128 = vmatpush1.bf16.msra.mxu0 %v1899
      %2129 = vmatprep.subr.bf16.mxu0 0
      %2130 = vmatpush1.bf16.msra.mxu0 %v1898
      %2131 = vmatprep.subr.bf16.mxu0 0
      %2132 = vmatpush1.bf16.msra.mxu0 %v1897
      %2133 = vmatprep.subr.bf16.mxu0 0
      %2134 = vmatpush2.bf16.msra.mxu0 0
      %2135 = vmatprep.subr.bf16.mxu0 0
      %2136 = vmatpush2.bf16.msra.mxu0 0
      %2137 = vmatprep.subr.bf16.mxu0 0
      %2138 = vmatpush2.bf16.msra.mxu0 0
      %2139 = vmatprep.subr.bf16.mxu0 0
      %2140 = vmatpush2.bf16.msra.mxu0 0
      %2141 = vmatprep.subr.bf16.mxu0 0
      %2142 = vmatpush2.bf16.msra.mxu0 0
      %2143 = vmatprep.subr.bf16.mxu0 0
      %2144 = vmatpush2.bf16.msra.mxu0 0
      %2145 = vmatprep.subr.bf16.mxu0 0
      %2146 = vmatpush2.bf16.msra.mxu0 0
      %2147 = vmatprep.subr.bf16.mxu0 0
      %2148 = vmatpush2.bf16.msra.mxu0 0
      %2149 = vmatprep.mubr.bf16.mxu0 0
      %2150 = vmatmul.mubr.bf16.gmra.mxu0 %v2101
      %v2151 = vpop.f32.mrf.mxu0
      %v2152 = vadd.f32 0.0, %v2151
      %v2153 = vpop.f32.mrf.mxu0
      %v2154 = vpop.f32.mrf.mxu0
      %v2155 = vadd.f32 0.0, %v2154
      %v2156 = vpop.f32.mrf.mxu0
      %2157 = vmatprep.mubr.bf16.mxu0 0
      %2158 = vmatmul.mubr.bf16.gmra.mxu0 %v2102
      %v2159 = vpop.f32.mrf.mxu0
      %v2160 = vadd.f32 0.0, %v2159
      %v2161 = vpop.f32.mrf.mxu0
      %v2162 = vpop.f32.mrf.mxu0
      %v2163 = vadd.f32 0.0, %v2162
      %v2164 = vpop.f32.mrf.mxu0
      %2165 = vmatprep.mubr.bf16.mxu0 0
      %2166 = vmatmul.mubr.bf16.gmra.mxu0 %v2103
      %v2167 = vpop.f32.mrf.mxu0
      %v2168 = vadd.f32 0.0, %v2167
      %v2169 = vpop.f32.mrf.mxu0
      %v2170 = vpop.f32.mrf.mxu0
      %v2171 = vadd.f32 0.0, %v2170
      %v2172 = vpop.f32.mrf.mxu0
      %2173 = vmatprep.mubr.bf16.mxu0 0
      %2174 = vmatmul.mubr.bf16.gmra.mxu0 %v2104
      %v2175 = vpop.f32.mrf.mxu0
      %v2176 = vadd.f32 0.0, %v2175
      %v2177 = vpop.f32.mrf.mxu0
      %v2178 = vpop.f32.mrf.mxu0
      %v2179 = vadd.f32 0.0, %v2178
      %v2180 = vpop.f32.mrf.mxu0
      %2181 = vmatprep.mubr.bf16.mxu0 0
      %2182 = vmatmul.mubr.bf16.gmra.mxu0 %v2105
      %v2183 = vpop.f32.mrf.mxu0
      %v2184 = vadd.f32 0.0, %v2183
      %v2185 = vpop.f32.mrf.mxu0
      %v2186 = vpop.f32.mrf.mxu0
      %v2187 = vadd.f32 0.0, %v2186
      %v2188 = vpop.f32.mrf.mxu0
      %2189 = vmatprep.mubr.bf16.mxu0 0
      %2190 = vmatmul.mubr.bf16.gmra.mxu0 %v2106
      %v2191 = vpop.f32.mrf.mxu0
      %v2192 = vadd.f32 0.0, %v2191
      %v2193 = vpop.f32.mrf.mxu0
      %v2194 = vpop.f32.mrf.mxu0
      %v2195 = vadd.f32 0.0, %v2194
      %v2196 = vpop.f32.mrf.mxu0
      %2197 = vmatprep.mubr.bf16.mxu0 0
      %2198 = vmatmul.mubr.bf16.gmra.mxu0 %v2107
      %v2199 = vpop.f32.mrf.mxu0
      %v2200 = vadd.f32 0.0, %v2199
      %v2201 = vpop.f32.mrf.mxu0
      %v2202 = vpop.f32.mrf.mxu0
      %v2203 = vadd.f32 0.0, %v2202
      %v2204 = vpop.f32.mrf.mxu0
      %2205 = vmatprep.mubr.bf16.mxu0 0
      %2206 = vmatmul.mubr.bf16.gmra.mxu0 %v2108
      %v2207 = vpop.f32.mrf.mxu0
      %v2208 = vadd.f32 0.0, %v2207
      %v2209 = vpop.f32.mrf.mxu0
      %v2210 = vpop.f32.mrf.mxu0
      %v2211 = vadd.f32 0.0, %v2210
      %v2212 = vpop.f32.mrf.mxu0
      %2213 = vmatprep.mubr.bf16.mxu0 0
      %2214 = vmatmul.mubr.bf16.gmra.mxu0 %v2109
      %v2215 = vpop.f32.mrf.mxu0
      %v2216 = vadd.f32 0.0, %v2215
      %v2217 = vpop.f32.mrf.mxu0
      %v2218 = vpop.f32.mrf.mxu0
      %v2219 = vadd.f32 0.0, %v2218
      %v2220 = vpop.f32.mrf.mxu0
      %2221 = vmatprep.mubr.bf16.mxu0 0
      %2222 = vmatmul.mubr.bf16.gmra.mxu0 %v2110
      %v2223 = vpop.f32.mrf.mxu0
      %v2224 = vadd.f32 0.0, %v2223
      %v2225 = vpop.f32.mrf.mxu0
      %v2226 = vpop.f32.mrf.mxu0
      %v2227 = vadd.f32 0.0, %v2226
      %v2228 = vpop.f32.mrf.mxu0
      %2229 = vmatprep.mubr.bf16.mxu0 0
      %2230 = vmatmul.mubr.bf16.gmra.mxu0 %v2111
      %v2231 = vpop.f32.mrf.mxu0
      %v2232 = vadd.f32 0.0, %v2231
      %v2233 = vpop.f32.mrf.mxu0
      %v2234 = vpop.f32.mrf.mxu0
      %v2235 = vadd.f32 0.0, %v2234
      %v2236 = vpop.f32.mrf.mxu0
      %2237 = vmatprep.mubr.bf16.mxu0 0
      %2238 = vmatmul.mubr.bf16.gmra.mxu0 %v2112
      %v2239 = vpop.f32.mrf.mxu0
      %v2240 = vadd.f32 0.0, %v2239
      %v2241 = vpop.f32.mrf.mxu0
      %v2242 = vpop.f32.mrf.mxu0
      %v2243 = vadd.f32 0.0, %v2242
      %v2244 = vpop.f32.mrf.mxu0
      %2245 = vmatprep.mubr.bf16.mxu0 0
      %2246 = vmatmul.mubr.bf16.gmra.mxu0 %v2113
      %v2247 = vpop.f32.mrf.mxu0
      %v2248 = vadd.f32 0.0, %v2247
      %v2249 = vpop.f32.mrf.mxu0
      %v2250 = vpop.f32.mrf.mxu0
      %v2251 = vadd.f32 0.0, %v2250
      %v2252 = vpop.f32.mrf.mxu0
      %2253 = vmatprep.mubr.bf16.mxu0 0
      %2254 = vmatmul.mubr.bf16.gmra.mxu0 %v2114
      %v2255 = vpop.f32.mrf.mxu0
      %v2256 = vadd.f32 0.0, %v2255
      %v2257 = vpop.f32.mrf.mxu0
      %v2258 = vpop.f32.mrf.mxu0
      %v2259 = vadd.f32 0.0, %v2258
      %v2260 = vpop.f32.mrf.mxu0
      %2261 = vmatprep.mubr.bf16.mxu0 0
      %2262 = vmatmul.mubr.bf16.gmra.mxu0 %v2115
      %v2263 = vpop.f32.mrf.mxu0
      %v2264 = vadd.f32 0.0, %v2263
      %v2265 = vpop.f32.mrf.mxu0
      %v2266 = vpop.f32.mrf.mxu0
      %v2267 = vadd.f32 0.0, %v2266
      %v2268 = vpop.f32.mrf.mxu0
      %2269 = vmatprep.mubr.bf16.mxu0 0
      %2270 = vmatmul.mubr.bf16.gmra.mxu0 %v2116
      %v2271 = vpop.f32.mrf.mxu0
      %v2272 = vadd.f32 0.0, %v2271
      %v2273 = vpop.f32.mrf.mxu0
      %v2274 = vpop.f32.mrf.mxu0
      %v2275 = vadd.f32 0.0, %v2274
      %v2276 = vpop.f32.mrf.mxu0
      %2277 = vdwg.mxu0
      %v2286 = vunpack.c.l.b16 %v1921
      %v2287 = vunpack.c.h.b16 %v1921
      %v2288 = vunpack.c.l.b16 %v1922
      %v2289 = vunpack.c.h.b16 %v1922
      %v2290 = vunpack.c.l.b16 %v1923
      %v2291 = vunpack.c.h.b16 %v1923
      %v2292 = vunpack.c.l.b16 %v1924
      %v2293 = vunpack.c.h.b16 %v1924
      %v2294 = vunpack.c.l.b16 %v1925
      %v2295 = vunpack.c.h.b16 %v1925
      %v2296 = vunpack.c.l.b16 %v1926
      %v2297 = vunpack.c.h.b16 %v1926
      %v2298 = vunpack.c.l.b16 %v1927
      %v2299 = vunpack.c.h.b16 %v1927
      %v2300 = vunpack.c.l.b16 %v1928
      %v2301 = vunpack.c.h.b16 %v1928
      %v2302 = vlaneseq
      %v2303 = vshrl.u32 %v2302, 7
      %v2304 = vsub.s32 %v1946, %v2303
      %v2305 = vrot.slane %v2286, %v2304
      %v2306 = vlaneseq
      %v2307 = vshrl.u32 %v2306, 7
      %v2308 = vsub.s32 %v1951, %v2307
      %v2309 = vrot.slane %v2287, %v2308
      %v2310 = vsel %vm1956, %v2309, %v2305
      %v2311 = vlaneseq
      %v2312 = vshrl.u32 %v2311, 7
      %v2313 = vsub.s32 %v1958, %v2312
      %v2314 = vrot.slane %v2288, %v2313
      %v2315 = vsel %vm1963, %v2314, %v2310
      %v2316 = vlaneseq
      %v2317 = vshrl.u32 %v2316, 7
      %v2318 = vsub.s32 %v1965, %v2317
      %v2319 = vrot.slane %v2289, %v2318
      %v2320 = vsel %vm1970, %v2319, %v2315
      %v2321 = vlaneseq
      %v2322 = vshrl.u32 %v2321, 7
      %v2323 = vsub.s32 %v1972, %v2322
      %v2324 = vrot.slane %v2290, %v2323
      %v2325 = vsel %vm1977, %v2324, %v2320
      %v2326 = vlaneseq
      %v2327 = vshrl.u32 %v2326, 7
      %v2328 = vsub.s32 %v1979, %v2327
      %v2329 = vrot.slane %v2291, %v2328
      %v2330 = vsel %vm1984, %v2329, %v2325
      %v2331 = vlaneseq
      %v2332 = vshrl.u32 %v2331, 7
      %v2333 = vsub.s32 %v1986, %v2332
      %v2334 = vrot.slane %v2292, %v2333
      %v2335 = vsel %vm1991, %v2334, %v2330
      %v2336 = vlaneseq
      %v2337 = vshrl.u32 %v2336, 7
      %v2338 = vsub.s32 %v1993, %v2337
      %v2339 = vrot.slane %v2293, %v2338
      %v2340 = vsel %vm1998, %v2339, %v2335
      %v2341 = vlaneseq
      %v2342 = vshrl.u32 %v2341, 7
      %v2343 = vsub.s32 %v2000, %v2342
      %v2344 = vrot.slane %v2294, %v2343
      %v2345 = vsel %vm2005, %v2344, %v2340
      %v2346 = vlaneseq
      %v2347 = vshrl.u32 %v2346, 7
      %v2348 = vsub.s32 %v2007, %v2347
      %v2349 = vrot.slane %v2295, %v2348
      %v2350 = vsel %vm2012, %v2349, %v2345
      %v2351 = vlaneseq
      %v2352 = vshrl.u32 %v2351, 7
      %v2353 = vsub.s32 %v2014, %v2352
      %v2354 = vrot.slane %v2296, %v2353
      %v2355 = vsel %vm2019, %v2354, %v2350
      %v2356 = vlaneseq
      %v2357 = vshrl.u32 %v2356, 7
      %v2358 = vsub.s32 %v2021, %v2357
      %v2359 = vrot.slane %v2297, %v2358
      %v2360 = vsel %vm2026, %v2359, %v2355
      %v2361 = vlaneseq
      %v2362 = vshrl.u32 %v2361, 7
      %v2363 = vsub.s32 %v2028, %v2362
      %v2364 = vrot.slane %v2298, %v2363
      %v2365 = vsel %vm2033, %v2364, %v2360
      %v2366 = vlaneseq
      %v2367 = vshrl.u32 %v2366, 7
      %v2368 = vsub.s32 %v2035, %v2367
      %v2369 = vrot.slane %v2299, %v2368
      %v2370 = vsel %vm2040, %v2369, %v2365
      %v2371 = vlaneseq
      %v2372 = vshrl.u32 %v2371, 7
      %v2373 = vsub.s32 %v2042, %v2372
      %v2374 = vrot.slane %v2300, %v2373
      %v2375 = vsel %vm2047, %v2374, %v2370
      %v2376 = vlaneseq
      %v2377 = vshrl.u32 %v2376, 7
      %v2378 = vsub.s32 %v2049, %v2377
      %v2379 = vrot.slane %v2301, %v2378
      %v2380 = vsel %vm2054, %v2379, %v2375
      %v2381 = vpack.c.b16 %v2380, %v2380
      %2383 = vmatprep.subr.bf16.mxu0 0
      %2384 = vmatpush1.bf16.msra.mxu0 %v1904
      %2385 = vmatprep.subr.bf16.mxu0 0
      %2386 = vmatpush1.bf16.msra.mxu0 %v1903
      %2387 = vmatprep.subr.bf16.mxu0 0
      %2388 = vmatpush1.bf16.msra.mxu0 %v1902
      %2389 = vmatprep.subr.bf16.mxu0 0
      %2390 = vmatpush1.bf16.msra.mxu0 %v1901
      %2391 = vmatprep.subr.bf16.mxu0 0
      %2392 = vmatpush1.bf16.msra.mxu0 %v1900
      %2393 = vmatprep.subr.bf16.mxu0 0
      %2394 = vmatpush1.bf16.msra.mxu0 %v1899
      %2395 = vmatprep.subr.bf16.mxu0 0
      %2396 = vmatpush1.bf16.msra.mxu0 %v1898
      %2397 = vmatprep.subr.bf16.mxu0 0
      %2398 = vmatpush1.bf16.msra.mxu0 %v1897
      %2399 = vmatprep.subr.bf16.mxu0 0
      %2400 = vmatpush2.bf16.msra.mxu0 0
      %2401 = vmatprep.subr.bf16.mxu0 0
      %2402 = vmatpush2.bf16.msra.mxu0 0
      %2403 = vmatprep.subr.bf16.mxu0 0
      %2404 = vmatpush2.bf16.msra.mxu0 0
      %2405 = vmatprep.subr.bf16.mxu0 0
      %2406 = vmatpush2.bf16.msra.mxu0 0
      %2407 = vmatprep.subr.bf16.mxu0 0
      %2408 = vmatpush2.bf16.msra.mxu0 0
      %2409 = vmatprep.subr.bf16.mxu0 0
      %2410 = vmatpush2.bf16.msra.mxu0 0
      %2411 = vmatprep.subr.bf16.mxu0 0
      %2412 = vmatpush2.bf16.msra.mxu0 0
      %2413 = vmatprep.subr.bf16.mxu0 0
      %2414 = vmatpush2.bf16.msra.mxu0 0
      %2415 = vmatprep.mubr.bf16.mxu0 0
      %2416 = vmatmul.mubr.bf16.gmra.mxu0 %v2381
      %v2417 = vpop.f32.mrf.mxu0
      %v2418 = vadd.f32 1e-09, %v2417
      %v2419 = vpop.f32.mrf.mxu0
      %v2420 = vpop.f32.mrf.mxu0
      %v2421 = vpop.f32.mrf.mxu0
      %2422 = vdwg.mxu0
      %v2423 = vrcp.pop %v2418
      %v2424 = vlaneseq
      %v2425 = vshrl.u32 %v2424, 7
      %v2426 = vsub.s32 0, %v2425
      %v2427 = vrot.slane %v2423, %v2426
      %v2428 = vmul.f32 %v2152, %v2427
      %v2429 = vmul.f32 %v2155, %v2427
      %v2430 = vmul.f32 %v2160, %v2427
      %v2431 = vmul.f32 %v2163, %v2427
      %v2432 = vmul.f32 %v2168, %v2427
      %v2433 = vmul.f32 %v2171, %v2427
      %v2434 = vmul.f32 %v2176, %v2427
      %v2435 = vmul.f32 %v2179, %v2427
      %v2436 = vmul.f32 %v2184, %v2427
      %v2437 = vmul.f32 %v2187, %v2427
      %v2438 = vmul.f32 %v2192, %v2427
      %v2439 = vmul.f32 %v2195, %v2427
      %v2440 = vmul.f32 %v2200, %v2427
      %v2441 = vmul.f32 %v2203, %v2427
      %v2442 = vmul.f32 %v2208, %v2427
      %v2443 = vmul.f32 %v2211, %v2427
      %v2444 = vmul.f32 %v2216, %v2427
      %v2445 = vmul.f32 %v2219, %v2427
      %v2446 = vmul.f32 %v2224, %v2427
      %v2447 = vmul.f32 %v2227, %v2427
      %v2448 = vmul.f32 %v2232, %v2427
      %v2449 = vmul.f32 %v2235, %v2427
      %v2450 = vmul.f32 %v2240, %v2427
      %v2451 = vmul.f32 %v2243, %v2427
      %v2452 = vmul.f32 %v2248, %v2427
      %v2453 = vmul.f32 %v2251, %v2427
      %v2454 = vmul.f32 %v2256, %v2427
      %v2455 = vmul.f32 %v2259, %v2427
      %v2456 = vmul.f32 %v2264, %v2427
      %v2457 = vmul.f32 %v2267, %v2427
      %v2458 = vmul.f32 %v2272, %v2427
      %v2459 = vmul.f32 %v2275, %v2427
      %v2460 = vld [vmem:[%s5] sm:$0xff]
      %v2461 = vld [vmem:[%s5 + $0x8] sm:$0xff]
      %v2462 = vld [vmem:[%s5 + $0x10] sm:$0xff]
      %v2463 = vld [vmem:[%s5 + $0x18] sm:$0xff]
      %v2464 = vld [vmem:[%s5 + $0x20] sm:$0xff]
      %v2465 = vld [vmem:[%s5 + $0x28] sm:$0xff]
      %v2466 = vld [vmem:[%s5 + $0x30] sm:$0xff]
      %v2467 = vld [vmem:[%s5 + $0x38] sm:$0xff]
      %v2468 = vld [vmem:[%s5 + $0x40] sm:$0xff]
      %v2469 = vld [vmem:[%s5 + $0x48] sm:$0xff]
      %v2470 = vld [vmem:[%s5 + $0x50] sm:$0xff]
      %v2471 = vld [vmem:[%s5 + $0x58] sm:$0xff]
      %v2472 = vld [vmem:[%s5 + $0x60] sm:$0xff]
      %v2473 = vld [vmem:[%s5 + $0x68] sm:$0xff]
      %v2474 = vld [vmem:[%s5 + $0x70] sm:$0xff]
      %v2475 = vld [vmem:[%s5 + $0x78] sm:$0xff]
      %v2476 = vld [vmem:[%s5 + $0x80] sm:$0xff]
      %v2477 = vld [vmem:[%s5 + $0x88] sm:$0xff]
      %v2478 = vld [vmem:[%s5 + $0x90] sm:$0xff]
      %v2479 = vld [vmem:[%s5 + $0x98] sm:$0xff]
      %v2480 = vld [vmem:[%s5 + $0xa0] sm:$0xff]
      %v2481 = vld [vmem:[%s5 + $0xa8] sm:$0xff]
      %v2482 = vld [vmem:[%s5 + $0xb0] sm:$0xff]
      %v2483 = vld [vmem:[%s5 + $0xb8] sm:$0xff]
      %v2484 = vld [vmem:[%s5 + $0xc0] sm:$0xff]
      %v2485 = vld [vmem:[%s5 + $0xc8] sm:$0xff]
      %v2486 = vld [vmem:[%s5 + $0xd0] sm:$0xff]
      %v2487 = vld [vmem:[%s5 + $0xd8] sm:$0xff]
      %v2488 = vld [vmem:[%s5 + $0xe0] sm:$0xff]
      %v2489 = vld [vmem:[%s5 + $0xe8] sm:$0xff]
      %v2490 = vld [vmem:[%s5 + $0xf0] sm:$0xff]
      %v2491 = vld [vmem:[%s5 + $0xf8] sm:$0xff]
      %v2492 = vsub.f32 %v796, %v2428
      %v2493 = vsub.f32 %v801, %v2429
      %v2494 = vsub.f32 %v806, %v2430
      %v2495 = vsub.f32 %v811, %v2431
      %v2496 = vsub.f32 %v816, %v2432
      %v2497 = vsub.f32 %v821, %v2433
      %v2498 = vsub.f32 %v826, %v2434
      %v2499 = vsub.f32 %v831, %v2435
      %v2500 = vsub.f32 %v836, %v2436
      %v2501 = vsub.f32 %v841, %v2437
      %v2502 = vsub.f32 %v846, %v2438
      %v2503 = vsub.f32 %v851, %v2439
      %v2504 = vsub.f32 %v856, %v2440
      %v2505 = vsub.f32 %v861, %v2441
      %v2506 = vsub.f32 %v866, %v2442
      %v2507 = vsub.f32 %v871, %v2443
      %v2508 = vsub.f32 %v876, %v2444
      %v2509 = vsub.f32 %v881, %v2445
      %v2510 = vsub.f32 %v886, %v2446
      %v2511 = vsub.f32 %v891, %v2447
      %v2512 = vsub.f32 %v896, %v2448
      %v2513 = vsub.f32 %v901, %v2449
      %v2514 = vsub.f32 %v906, %v2450
      %v2515 = vsub.f32 %v911, %v2451
      %v2516 = vsub.f32 %v916, %v2452
      %v2517 = vsub.f32 %v921, %v2453
      %v2518 = vsub.f32 %v926, %v2454
      %v2519 = vsub.f32 %v931, %v2455
      %v2520 = vsub.f32 %v936, %v2456
      %v2521 = vsub.f32 %v941, %v2457
      %v2522 = vsub.f32 %v946, %v2458
      %v2523 = vsub.f32 %v951, %v2459
      %v2524 = vpack.c.bf16 %v2493, %v2492
      %v2525 = vpack.c.bf16 %v2495, %v2494
      %v2526 = vpack.c.bf16 %v2497, %v2496
      %v2527 = vpack.c.bf16 %v2499, %v2498
      %v2528 = vpack.c.bf16 %v2501, %v2500
      %v2529 = vpack.c.bf16 %v2503, %v2502
      %v2530 = vpack.c.bf16 %v2505, %v2504
      %v2531 = vpack.c.bf16 %v2507, %v2506
      %v2532 = vpack.c.bf16 %v2509, %v2508
      %v2533 = vpack.c.bf16 %v2511, %v2510
      %v2534 = vpack.c.bf16 %v2513, %v2512
      %v2535 = vpack.c.bf16 %v2515, %v2514
      %v2536 = vpack.c.bf16 %v2517, %v2516
      %v2537 = vpack.c.bf16 %v2519, %v2518
      %v2538 = vpack.c.bf16 %v2521, %v2520
      %v2539 = vpack.c.bf16 %v2523, %v2522
      %v2540 = vld [vmem:[%s6] sm:$0xff]
      %v2541 = vld [vmem:[%s6 + $0x8] sm:$0xff]
      %v2542 = vld [vmem:[%s6 + $0x10] sm:$0xff]
      %v2543 = vld [vmem:[%s6 + $0x18] sm:$0xff]
      %v2544 = vld [vmem:[%s6 + $0x20] sm:$0xff]
      %v2545 = vld [vmem:[%s6 + $0x28] sm:$0xff]
      %v2546 = vld [vmem:[%s6 + $0x30] sm:$0xff]
      %v2547 = vld [vmem:[%s6 + $0x38] sm:$0xff]
      %v2548 = vld [vmem:[%s6 + $0x40] sm:$0xff]
      %v2549 = vld [vmem:[%s6 + $0x48] sm:$0xff]
      %v2550 = vld [vmem:[%s6 + $0x50] sm:$0xff]
      %v2551 = vld [vmem:[%s6 + $0x58] sm:$0xff]
      %v2552 = vld [vmem:[%s6 + $0x60] sm:$0xff]
      %v2553 = vld [vmem:[%s6 + $0x68] sm:$0xff]
      %v2554 = vld [vmem:[%s6 + $0x70] sm:$0xff]
      %v2555 = vld [vmem:[%s6 + $0x78] sm:$0xff]
      %v2556 = vld [vmem:[%s6 + $0x80] sm:$0xff]
      %v2557 = vld [vmem:[%s6 + $0x88] sm:$0xff]
      %v2558 = vld [vmem:[%s6 + $0x90] sm:$0xff]
      %v2559 = vld [vmem:[%s6 + $0x98] sm:$0xff]
      %v2560 = vld [vmem:[%s6 + $0xa0] sm:$0xff]
      %v2561 = vld [vmem:[%s6 + $0xa8] sm:$0xff]
      %v2562 = vld [vmem:[%s6 + $0xb0] sm:$0xff]
      %v2563 = vld [vmem:[%s6 + $0xb8] sm:$0xff]
      %v2564 = vld [vmem:[%s6 + $0xc0] sm:$0xff]
      %v2565 = vld [vmem:[%s6 + $0xc8] sm:$0xff]
      %v2566 = vld [vmem:[%s6 + $0xd0] sm:$0xff]
      %v2567 = vld [vmem:[%s6 + $0xd8] sm:$0xff]
      %v2568 = vld [vmem:[%s6 + $0xe0] sm:$0xff]
      %v2569 = vld [vmem:[%s6 + $0xe8] sm:$0xff]
      %v2570 = vld [vmem:[%s6 + $0xf0] sm:$0xff]
      %v2571 = vld [vmem:[%s6 + $0xf8] sm:$0xff]
      %2573 = vset.pattern.permute.xlu0 0
      %2574 = vperm.xlu0 %2573, %v2540
      %v2575 = vpop.permute.xlu0 %2574
      %2578 = vset.pattern.permute.xlu0 0
      %2579 = vperm.xlu0 %2578, %v2541
      %v2580 = vpop.permute.xlu0 %2579
      %2583 = vset.pattern.permute.xlu0 0
      %2584 = vperm.xlu0 %2583, %v2542
      %v2585 = vpop.permute.xlu0 %2584
      %2588 = vset.pattern.permute.xlu0 0
      %2589 = vperm.xlu0 %2588, %v2543
      %v2590 = vpop.permute.xlu0 %2589
      %2593 = vset.pattern.permute.xlu0 0
      %2594 = vperm.xlu0 %2593, %v2544
      %v2595 = vpop.permute.xlu0 %2594
      %2598 = vset.pattern.permute.xlu0 0
      %2599 = vperm.xlu0 %2598, %v2545
      %v2600 = vpop.permute.xlu0 %2599
      %2603 = vset.pattern.permute.xlu0 0
      %2604 = vperm.xlu0 %2603, %v2546
      %v2605 = vpop.permute.xlu0 %2604
      %2608 = vset.pattern.permute.xlu0 0
      %2609 = vperm.xlu0 %2608, %v2547
      %v2610 = vpop.permute.xlu0 %2609
      %2613 = vset.pattern.permute.xlu0 0
      %2614 = vperm.xlu0 %2613, %v2548
      %v2615 = vpop.permute.xlu0 %2614
      %2618 = vset.pattern.permute.xlu0 0
      %2619 = vperm.xlu0 %2618, %v2549
      %v2620 = vpop.permute.xlu0 %2619
      %2623 = vset.pattern.permute.xlu0 0
      %2624 = vperm.xlu0 %2623, %v2550
      %v2625 = vpop.permute.xlu0 %2624
      %2628 = vset.pattern.permute.xlu0 0
      %2629 = vperm.xlu0 %2628, %v2551
      %v2630 = vpop.permute.xlu0 %2629
      %2633 = vset.pattern.permute.xlu0 0
      %2634 = vperm.xlu0 %2633, %v2552
      %v2635 = vpop.permute.xlu0 %2634
      %2638 = vset.pattern.permute.xlu0 0
      %2639 = vperm.xlu0 %2638, %v2553
      %v2640 = vpop.permute.xlu0 %2639
      %2643 = vset.pattern.permute.xlu0 0
      %2644 = vperm.xlu0 %2643, %v2554
      %v2645 = vpop.permute.xlu0 %2644
      %2648 = vset.pattern.permute.xlu0 0
      %2649 = vperm.xlu0 %2648, %v2555
      %v2650 = vpop.permute.xlu0 %2649
      %2653 = vset.pattern.permute.xlu0 0
      %2654 = vperm.xlu0 %2653, %v2556
      %v2655 = vpop.permute.xlu0 %2654
      %2658 = vset.pattern.permute.xlu0 0
      %2659 = vperm.xlu0 %2658, %v2557
      %v2660 = vpop.permute.xlu0 %2659
      %2663 = vset.pattern.permute.xlu0 0
      %2664 = vperm.xlu0 %2663, %v2558
      %v2665 = vpop.permute.xlu0 %2664
      %2668 = vset.pattern.permute.xlu0 0
      %2669 = vperm.xlu0 %2668, %v2559
      %v2670 = vpop.permute.xlu0 %2669
      %2673 = vset.pattern.permute.xlu0 0
      %2674 = vperm.xlu0 %2673, %v2560
      %v2675 = vpop.permute.xlu0 %2674
      %2678 = vset.pattern.permute.xlu0 0
      %2679 = vperm.xlu0 %2678, %v2561
      %v2680 = vpop.permute.xlu0 %2679
      %2683 = vset.pattern.permute.xlu0 0
      %2684 = vperm.xlu0 %2683, %v2562
      %v2685 = vpop.permute.xlu0 %2684
      %2688 = vset.pattern.permute.xlu0 0
      %2689 = vperm.xlu0 %2688, %v2563
      %v2690 = vpop.permute.xlu0 %2689
      %2693 = vset.pattern.permute.xlu0 0
      %2694 = vperm.xlu0 %2693, %v2564
      %v2695 = vpop.permute.xlu0 %2694
      %2698 = vset.pattern.permute.xlu0 0
      %2699 = vperm.xlu0 %2698, %v2565
      %v2700 = vpop.permute.xlu0 %2699
      %2703 = vset.pattern.permute.xlu0 0
      %2704 = vperm.xlu0 %2703, %v2566
      %v2705 = vpop.permute.xlu0 %2704
      %2708 = vset.pattern.permute.xlu0 0
      %2709 = vperm.xlu0 %2708, %v2567
      %v2710 = vpop.permute.xlu0 %2709
      %2713 = vset.pattern.permute.xlu0 0
      %2714 = vperm.xlu0 %2713, %v2568
      %v2715 = vpop.permute.xlu0 %2714
      %2718 = vset.pattern.permute.xlu0 0
      %2719 = vperm.xlu0 %2718, %v2569
      %v2720 = vpop.permute.xlu0 %2719
      %2723 = vset.pattern.permute.xlu0 0
      %2724 = vperm.xlu0 %2723, %v2570
      %v2725 = vpop.permute.xlu0 %2724
      %2728 = vset.pattern.permute.xlu0 0
      %2729 = vperm.xlu0 %2728, %v2571
      %v2730 = vpop.permute.xlu0 %2729
      %v2764 = vunpack.c.l.b16 %v2460
      %v2765 = vunpack.c.h.b16 %v2460
      %v2766 = vunpack.c.l.b16 %v2461
      %v2767 = vunpack.c.h.b16 %v2461
      %v2768 = vunpack.c.l.b16 %v2462
      %v2769 = vunpack.c.h.b16 %v2462
      %v2770 = vunpack.c.l.b16 %v2463
      %v2771 = vunpack.c.h.b16 %v2463
      %v2772 = vunpack.c.l.b16 %v2464
      %v2773 = vunpack.c.h.b16 %v2464
      %v2774 = vunpack.c.l.b16 %v2465
      %v2775 = vunpack.c.h.b16 %v2465
      %v2776 = vunpack.c.l.b16 %v2466
      %v2777 = vunpack.c.h.b16 %v2466
      %v2778 = vunpack.c.l.b16 %v2467
      %v2779 = vunpack.c.h.b16 %v2467
      %v2780 = vunpack.c.l.b16 %v2468
      %v2781 = vunpack.c.h.b16 %v2468
      %v2782 = vunpack.c.l.b16 %v2469
      %v2783 = vunpack.c.h.b16 %v2469
      %v2784 = vunpack.c.l.b16 %v2470
      %v2785 = vunpack.c.h.b16 %v2470
      %v2786 = vunpack.c.l.b16 %v2471
      %v2787 = vunpack.c.h.b16 %v2471
      %v2788 = vunpack.c.l.b16 %v2472
      %v2789 = vunpack.c.h.b16 %v2472
      %v2790 = vunpack.c.l.b16 %v2473
      %v2791 = vunpack.c.h.b16 %v2473
      %v2792 = vunpack.c.l.b16 %v2474
      %v2793 = vunpack.c.h.b16 %v2474
      %v2794 = vunpack.c.l.b16 %v2475
      %v2795 = vunpack.c.h.b16 %v2475
      %v2796 = vunpack.c.l.b16 %v2476
      %v2797 = vunpack.c.h.b16 %v2476
      %v2798 = vunpack.c.l.b16 %v2477
      %v2799 = vunpack.c.h.b16 %v2477
      %v2800 = vunpack.c.l.b16 %v2478
      %v2801 = vunpack.c.h.b16 %v2478
      %v2802 = vunpack.c.l.b16 %v2479
      %v2803 = vunpack.c.h.b16 %v2479
      %v2804 = vunpack.c.l.b16 %v2480
      %v2805 = vunpack.c.h.b16 %v2480
      %v2806 = vunpack.c.l.b16 %v2481
      %v2807 = vunpack.c.h.b16 %v2481
      %v2808 = vunpack.c.l.b16 %v2482
      %v2809 = vunpack.c.h.b16 %v2482
      %v2810 = vunpack.c.l.b16 %v2483
      %v2811 = vunpack.c.h.b16 %v2483
      %v2812 = vunpack.c.l.b16 %v2484
      %v2813 = vunpack.c.h.b16 %v2484
      %v2814 = vunpack.c.l.b16 %v2485
      %v2815 = vunpack.c.h.b16 %v2485
      %v2816 = vunpack.c.l.b16 %v2486
      %v2817 = vunpack.c.h.b16 %v2486
      %v2818 = vunpack.c.l.b16 %v2487
      %v2819 = vunpack.c.h.b16 %v2487
      %v2820 = vunpack.c.l.b16 %v2488
      %v2821 = vunpack.c.h.b16 %v2488
      %v2822 = vunpack.c.l.b16 %v2489
      %v2823 = vunpack.c.h.b16 %v2489
      %v2824 = vunpack.c.l.b16 %v2490
      %v2825 = vunpack.c.h.b16 %v2490
      %v2826 = vunpack.c.l.b16 %v2491
      %v2827 = vunpack.c.h.b16 %v2491
      %v2828 = vpack.c.b16 %v2766, %v2764
      %v2829 = vpack.c.b16 %v2767, %v2765
      %v2830 = vpack.c.b16 %v2770, %v2768
      %v2831 = vpack.c.b16 %v2771, %v2769
      %v2832 = vpack.c.b16 %v2774, %v2772
      %v2833 = vpack.c.b16 %v2775, %v2773
      %v2834 = vpack.c.b16 %v2778, %v2776
      %v2835 = vpack.c.b16 %v2779, %v2777
      %v2836 = vpack.c.b16 %v2782, %v2780
      %v2837 = vpack.c.b16 %v2783, %v2781
      %v2838 = vpack.c.b16 %v2786, %v2784
      %v2839 = vpack.c.b16 %v2787, %v2785
      %v2840 = vpack.c.b16 %v2790, %v2788
      %v2841 = vpack.c.b16 %v2791, %v2789
      %v2842 = vpack.c.b16 %v2794, %v2792
      %v2843 = vpack.c.b16 %v2795, %v2793
      %v2844 = vpack.c.b16 %v2798, %v2796
      %v2845 = vpack.c.b16 %v2799, %v2797
      %v2846 = vpack.c.b16 %v2802, %v2800
      %v2847 = vpack.c.b16 %v2803, %v2801
      %v2848 = vpack.c.b16 %v2806, %v2804
      %v2849 = vpack.c.b16 %v2807, %v2805
      %v2850 = vpack.c.b16 %v2810, %v2808
      %v2851 = vpack.c.b16 %v2811, %v2809
      %v2852 = vpack.c.b16 %v2814, %v2812
      %v2853 = vpack.c.b16 %v2815, %v2813
      %v2854 = vpack.c.b16 %v2818, %v2816
      %v2855 = vpack.c.b16 %v2819, %v2817
      %v2856 = vpack.c.b16 %v2822, %v2820
      %v2857 = vpack.c.b16 %v2823, %v2821
      %v2858 = vpack.c.b16 %v2826, %v2824
      %v2859 = vpack.c.b16 %v2827, %v2825
      %2892 = vmatprep.subr.bf16.mxu0 0
      %2893 = vmatpush1.bf16.msra.mxu0 %v2531
      %2894 = vmatprep.subr.bf16.mxu0 0
      %2895 = vmatpush1.bf16.msra.mxu0 %v2530
      %2896 = vmatprep.subr.bf16.mxu0 0
      %2897 = vmatpush1.bf16.msra.mxu0 %v2529
      %2898 = vmatprep.subr.bf16.mxu0 0
      %2899 = vmatpush1.bf16.msra.mxu0 %v2528
      %2900 = vmatprep.subr.bf16.mxu0 0
      %2901 = vmatpush1.bf16.msra.mxu0 %v2527
      %2902 = vmatprep.subr.bf16.mxu0 0
      %2903 = vmatpush1.bf16.msra.mxu0 %v2526
      %2904 = vmatprep.subr.bf16.mxu0 0
      %2905 = vmatpush1.bf16.msra.mxu0 %v2525
      %2906 = vmatprep.subr.bf16.mxu0 0
      %2907 = vmatpush1.bf16.msra.mxu0 %v2524
      %2908 = vmatprep.subr.bf16.mxu0 0
      %2909 = vmatpush2.bf16.msra.mxu0 %v2539
      %2910 = vmatprep.subr.bf16.mxu0 0
      %2911 = vmatpush2.bf16.msra.mxu0 %v2538
      %2912 = vmatprep.subr.bf16.mxu0 0
      %2913 = vmatpush2.bf16.msra.mxu0 %v2537
      %2914 = vmatprep.subr.bf16.mxu0 0
      %2915 = vmatpush2.bf16.msra.mxu0 %v2536
      %2916 = vmatprep.subr.bf16.mxu0 0
      %2917 = vmatpush2.bf16.msra.mxu0 %v2535
      %2918 = vmatprep.subr.bf16.mxu0 0
      %2919 = vmatpush2.bf16.msra.mxu0 %v2534
      %2920 = vmatprep.subr.bf16.mxu0 0
      %2921 = vmatpush2.bf16.msra.mxu0 %v2533
      %2922 = vmatprep.subr.bf16.mxu0 0
      %2923 = vmatpush2.bf16.msra.mxu0 %v2532
      %2924 = vmatprep.mubr.bf16.mxu0 %v2829
      %2925 = vmatmul.mubr.bf16.gmra.mxu0 %v2828
      %v2926 = vpop.f32.mrf.mxu0
      %v2927 = vadd.f32 %v2575, %v2926
      %v2928 = vpop.f32.mrf.mxu0
      %v2929 = vpop.f32.mrf.mxu0
      %v2930 = vadd.f32 %v2580, %v2929
      %v2931 = vpop.f32.mrf.mxu0
      %2932 = vmatprep.mubr.bf16.mxu0 %v2831
      %2933 = vmatmul.mubr.bf16.gmra.mxu0 %v2830
      %v2934 = vpop.f32.mrf.mxu0
      %v2935 = vadd.f32 %v2585, %v2934
      %v2936 = vpop.f32.mrf.mxu0
      %v2937 = vpop.f32.mrf.mxu0
      %v2938 = vadd.f32 %v2590, %v2937
      %v2939 = vpop.f32.mrf.mxu0
      %2940 = vmatprep.mubr.bf16.mxu0 %v2833
      %2941 = vmatmul.mubr.bf16.gmra.mxu0 %v2832
      %v2942 = vpop.f32.mrf.mxu0
      %v2943 = vadd.f32 %v2595, %v2942
      %v2944 = vpop.f32.mrf.mxu0
      %v2945 = vpop.f32.mrf.mxu0
      %v2946 = vadd.f32 %v2600, %v2945
      %v2947 = vpop.f32.mrf.mxu0
      %2948 = vmatprep.mubr.bf16.mxu0 %v2835
      %2949 = vmatmul.mubr.bf16.gmra.mxu0 %v2834
      %v2950 = vpop.f32.mrf.mxu0
      %v2951 = vadd.f32 %v2605, %v2950
      %v2952 = vpop.f32.mrf.mxu0
      %v2953 = vpop.f32.mrf.mxu0
      %v2954 = vadd.f32 %v2610, %v2953
      %v2955 = vpop.f32.mrf.mxu0
      %2956 = vmatprep.mubr.bf16.mxu0 %v2837
      %2957 = vmatmul.mubr.bf16.gmra.mxu0 %v2836
      %v2958 = vpop.f32.mrf.mxu0
      %v2959 = vadd.f32 %v2615, %v2958
      %v2960 = vpop.f32.mrf.mxu0
      %v2961 = vpop.f32.mrf.mxu0
      %v2962 = vadd.f32 %v2620, %v2961
      %v2963 = vpop.f32.mrf.mxu0
      %2964 = vmatprep.mubr.bf16.mxu0 %v2839
      %2965 = vmatmul.mubr.bf16.gmra.mxu0 %v2838
      %v2966 = vpop.f32.mrf.mxu0
      %v2967 = vadd.f32 %v2625, %v2966
      %v2968 = vpop.f32.mrf.mxu0
      %v2969 = vpop.f32.mrf.mxu0
      %v2970 = vadd.f32 %v2630, %v2969
      %v2971 = vpop.f32.mrf.mxu0
      %2972 = vmatprep.mubr.bf16.mxu0 %v2841
      %2973 = vmatmul.mubr.bf16.gmra.mxu0 %v2840
      %v2974 = vpop.f32.mrf.mxu0
      %v2975 = vadd.f32 %v2635, %v2974
      %v2976 = vpop.f32.mrf.mxu0
      %v2977 = vpop.f32.mrf.mxu0
      %v2978 = vadd.f32 %v2640, %v2977
      %v2979 = vpop.f32.mrf.mxu0
      %2980 = vmatprep.mubr.bf16.mxu0 %v2843
      %2981 = vmatmul.mubr.bf16.gmra.mxu0 %v2842
      %v2982 = vpop.f32.mrf.mxu0
      %v2983 = vadd.f32 %v2645, %v2982
      %v2984 = vpop.f32.mrf.mxu0
      %v2985 = vpop.f32.mrf.mxu0
      %v2986 = vadd.f32 %v2650, %v2985
      %v2987 = vpop.f32.mrf.mxu0
      %2988 = vmatprep.mubr.bf16.mxu0 %v2845
      %2989 = vmatmul.mubr.bf16.gmra.mxu0 %v2844
      %v2990 = vpop.f32.mrf.mxu0
      %v2991 = vadd.f32 %v2655, %v2990
      %v2992 = vpop.f32.mrf.mxu0
      %v2993 = vpop.f32.mrf.mxu0
      %v2994 = vadd.f32 %v2660, %v2993
      %v2995 = vpop.f32.mrf.mxu0
      %2996 = vmatprep.mubr.bf16.mxu0 %v2847
      %2997 = vmatmul.mubr.bf16.gmra.mxu0 %v2846
      %v2998 = vpop.f32.mrf.mxu0
      %v2999 = vadd.f32 %v2665, %v2998
      %v3000 = vpop.f32.mrf.mxu0
      %v3001 = vpop.f32.mrf.mxu0
      %v3002 = vadd.f32 %v2670, %v3001
      %v3003 = vpop.f32.mrf.mxu0
      %3004 = vmatprep.mubr.bf16.mxu0 %v2849
      %3005 = vmatmul.mubr.bf16.gmra.mxu0 %v2848
      %v3006 = vpop.f32.mrf.mxu0
      %v3007 = vadd.f32 %v2675, %v3006
      %v3008 = vpop.f32.mrf.mxu0
      %v3009 = vpop.f32.mrf.mxu0
      %v3010 = vadd.f32 %v2680, %v3009
      %v3011 = vpop.f32.mrf.mxu0
      %3012 = vmatprep.mubr.bf16.mxu0 %v2851
      %3013 = vmatmul.mubr.bf16.gmra.mxu0 %v2850
      %v3014 = vpop.f32.mrf.mxu0
      %v3015 = vadd.f32 %v2685, %v3014
      %v3016 = vpop.f32.mrf.mxu0
      %v3017 = vpop.f32.mrf.mxu0
      %v3018 = vadd.f32 %v2690, %v3017
      %v3019 = vpop.f32.mrf.mxu0
      %3020 = vmatprep.mubr.bf16.mxu0 %v2853
      %3021 = vmatmul.mubr.bf16.gmra.mxu0 %v2852
      %v3022 = vpop.f32.mrf.mxu0
      %v3023 = vadd.f32 %v2695, %v3022
      %v3024 = vpop.f32.mrf.mxu0
      %v3025 = vpop.f32.mrf.mxu0
      %v3026 = vadd.f32 %v2700, %v3025
      %v3027 = vpop.f32.mrf.mxu0
      %3028 = vmatprep.mubr.bf16.mxu0 %v2855
      %3029 = vmatmul.mubr.bf16.gmra.mxu0 %v2854
      %v3030 = vpop.f32.mrf.mxu0
      %v3031 = vadd.f32 %v2705, %v3030
      %v3032 = vpop.f32.mrf.mxu0
      %v3033 = vpop.f32.mrf.mxu0
      %v3034 = vadd.f32 %v2710, %v3033
      %v3035 = vpop.f32.mrf.mxu0
      %3036 = vmatprep.mubr.bf16.mxu0 %v2857
      %3037 = vmatmul.mubr.bf16.gmra.mxu0 %v2856
      %v3038 = vpop.f32.mrf.mxu0
      %v3039 = vadd.f32 %v2715, %v3038
      %v3040 = vpop.f32.mrf.mxu0
      %v3041 = vpop.f32.mrf.mxu0
      %v3042 = vadd.f32 %v2720, %v3041
      %v3043 = vpop.f32.mrf.mxu0
      %3044 = vmatprep.mubr.bf16.mxu0 %v2859
      %3045 = vmatmul.mubr.bf16.gmra.mxu0 %v2858
      %v3046 = vpop.f32.mrf.mxu0
      %v3047 = vadd.f32 %v2725, %v3046
      %v3048 = vpop.f32.mrf.mxu0
      %v3049 = vpop.f32.mrf.mxu0
      %v3050 = vadd.f32 %v2730, %v3049
      %v3051 = vpop.f32.mrf.mxu0
      %3052 = vdwg.mxu0
      %vm3053 = vcmp.ge.f32.partialorder %v2927, 0.0
      %vm3054 = vcmp.ge.f32.partialorder %v2930, 0.0
      %vm3055 = vcmp.ge.f32.partialorder %v2935, 0.0
      %vm3056 = vcmp.ge.f32.partialorder %v2938, 0.0
      %vm3057 = vcmp.ge.f32.partialorder %v2943, 0.0
      %vm3058 = vcmp.ge.f32.partialorder %v2946, 0.0
      %vm3059 = vcmp.ge.f32.partialorder %v2951, 0.0
      %vm3060 = vcmp.ge.f32.partialorder %v2954, 0.0
      %vm3061 = vcmp.ge.f32.partialorder %v2959, 0.0
      %vm3062 = vcmp.ge.f32.partialorder %v2962, 0.0
      %vm3063 = vcmp.ge.f32.partialorder %v2967, 0.0
      %vm3064 = vcmp.ge.f32.partialorder %v2970, 0.0
      %vm3065 = vcmp.ge.f32.partialorder %v2975, 0.0
      %vm3066 = vcmp.ge.f32.partialorder %v2978, 0.0
      %vm3067 = vcmp.ge.f32.partialorder %v2983, 0.0
      %vm3068 = vcmp.ge.f32.partialorder %v2986, 0.0
      %vm3069 = vcmp.ge.f32.partialorder %v2991, 0.0
      %vm3070 = vcmp.ge.f32.partialorder %v2994, 0.0
      %vm3071 = vcmp.ge.f32.partialorder %v2999, 0.0
      %vm3072 = vcmp.ge.f32.partialorder %v3002, 0.0
      %vm3073 = vcmp.ge.f32.partialorder %v3007, 0.0
      %vm3074 = vcmp.ge.f32.partialorder %v3010, 0.0
      %vm3075 = vcmp.ge.f32.partialorder %v3015, 0.0
      %vm3076 = vcmp.ge.f32.partialorder %v3018, 0.0
      %vm3077 = vcmp.ge.f32.partialorder %v3023, 0.0
      %vm3078 = vcmp.ge.f32.partialorder %v3026, 0.0
      %vm3079 = vcmp.ge.f32.partialorder %v3031, 0.0
      %vm3080 = vcmp.ge.f32.partialorder %v3034, 0.0
      %vm3081 = vcmp.ge.f32.partialorder %v3039, 0.0
      %vm3082 = vcmp.ge.f32.partialorder %v3042, 0.0
      %vm3083 = vcmp.ge.f32.partialorder %v3047, 0.0
      %vm3084 = vcmp.ge.f32.partialorder %v3050, 0.0
      %v3085 = vmul.f32 %v2927, 0.2
      %v3086 = vmul.f32 %v2930, 0.2
      %v3087 = vmul.f32 %v2935, 0.2
      %v3088 = vmul.f32 %v2938, 0.2
      %v3089 = vmul.f32 %v2943, 0.2
      %v3090 = vmul.f32 %v2946, 0.2
      %v3091 = vmul.f32 %v2951, 0.2
      %v3092 = vmul.f32 %v2954, 0.2
      %v3093 = vmul.f32 %v2959, 0.2
      %v3094 = vmul.f32 %v2962, 0.2
      %v3095 = vmul.f32 %v2967, 0.2
      %v3096 = vmul.f32 %v2970, 0.2
      %v3097 = vmul.f32 %v2975, 0.2
      %v3098 = vmul.f32 %v2978, 0.2
      %v3099 = vmul.f32 %v2983, 0.2
      %v3100 = vmul.f32 %v2986, 0.2
      %v3101 = vmul.f32 %v2991, 0.2
      %v3102 = vmul.f32 %v2994, 0.2
      %v3103 = vmul.f32 %v2999, 0.2
      %v3104 = vmul.f32 %v3002, 0.2
      %v3105 = vmul.f32 %v3007, 0.2
      %v3106 = vmul.f32 %v3010, 0.2
      %v3107 = vmul.f32 %v3015, 0.2
      %v3108 = vmul.f32 %v3018, 0.2
      %v3109 = vmul.f32 %v3023, 0.2
      %v3110 = vmul.f32 %v3026, 0.2
      %v3111 = vmul.f32 %v3031, 0.2
      %v3112 = vmul.f32 %v3034, 0.2
      %v3113 = vmul.f32 %v3039, 0.2
      %v3114 = vmul.f32 %v3042, 0.2
      %v3115 = vmul.f32 %v3047, 0.2
      %v3116 = vmul.f32 %v3050, 0.2
      %v3117 = vsel %vm3053, %v2927, %v3085
      %v3118 = vsel %vm3054, %v2930, %v3086
      %v3119 = vsel %vm3055, %v2935, %v3087
      %v3120 = vsel %vm3056, %v2938, %v3088
      %v3121 = vsel %vm3057, %v2943, %v3089
      %v3122 = vsel %vm3058, %v2946, %v3090
      %v3123 = vsel %vm3059, %v2951, %v3091
      %v3124 = vsel %vm3060, %v2954, %v3092
      %v3125 = vsel %vm3061, %v2959, %v3093
      %v3126 = vsel %vm3062, %v2962, %v3094
      %v3127 = vsel %vm3063, %v2967, %v3095
      %v3128 = vsel %vm3064, %v2970, %v3096
      %v3129 = vsel %vm3065, %v2975, %v3097
      %v3130 = vsel %vm3066, %v2978, %v3098
      %v3131 = vsel %vm3067, %v2983, %v3099
      %v3132 = vsel %vm3068, %v2986, %v3100
      %v3133 = vsel %vm3069, %v2991, %v3101
      %v3134 = vsel %vm3070, %v2994, %v3102
      %v3135 = vsel %vm3071, %v2999, %v3103
      %v3136 = vsel %vm3072, %v3002, %v3104
      %v3137 = vsel %vm3073, %v3007, %v3105
      %v3138 = vsel %vm3074, %v3010, %v3106
      %v3139 = vsel %vm3075, %v3015, %v3107
      %v3140 = vsel %vm3076, %v3018, %v3108
      %v3141 = vsel %vm3077, %v3023, %v3109
      %v3142 = vsel %vm3078, %v3026, %v3110
      %v3143 = vsel %vm3079, %v3031, %v3111
      %v3144 = vsel %vm3080, %v3034, %v3112
      %v3145 = vsel %vm3081, %v3039, %v3113
      %v3146 = vsel %vm3082, %v3042, %v3114
      %v3147 = vsel %vm3083, %v3047, %v3115
      %v3148 = vsel %vm3084, %v3050, %v3116
      %v3149 = vadd.f32 %v796, %v3117
      %v3150 = vadd.f32 %v801, %v3118
      %v3151 = vadd.f32 %v806, %v3119
      %v3152 = vadd.f32 %v811, %v3120
      %v3153 = vadd.f32 %v816, %v3121
      %v3154 = vadd.f32 %v821, %v3122
      %v3155 = vadd.f32 %v826, %v3123
      %v3156 = vadd.f32 %v831, %v3124
      %v3157 = vadd.f32 %v836, %v3125
      %v3158 = vadd.f32 %v841, %v3126
      %v3159 = vadd.f32 %v846, %v3127
      %v3160 = vadd.f32 %v851, %v3128
      %v3161 = vadd.f32 %v856, %v3129
      %v3162 = vadd.f32 %v861, %v3130
      %v3163 = vadd.f32 %v866, %v3131
      %v3164 = vadd.f32 %v871, %v3132
      %v3165 = vadd.f32 %v876, %v3133
      %v3166 = vadd.f32 %v881, %v3134
      %v3167 = vadd.f32 %v886, %v3135
      %v3168 = vadd.f32 %v891, %v3136
      %v3169 = vadd.f32 %v896, %v3137
      %v3170 = vadd.f32 %v901, %v3138
      %v3171 = vadd.f32 %v906, %v3139
      %v3172 = vadd.f32 %v911, %v3140
      %v3173 = vadd.f32 %v916, %v3141
      %v3174 = vadd.f32 %v921, %v3142
      %v3175 = vadd.f32 %v926, %v3143
      %v3176 = vadd.f32 %v931, %v3144
      %v3177 = vadd.f32 %v936, %v3145
      %v3178 = vadd.f32 %v941, %v3146
      %v3179 = vadd.f32 %v946, %v3147
      %v3180 = vadd.f32 %v951, %v3148
      %v3181 = vpack.c.bf16 %v3150, %v3149
      %v3182 = vpack.c.bf16 %v3152, %v3151
      %v3183 = vpack.c.bf16 %v3154, %v3153
      %v3184 = vpack.c.bf16 %v3156, %v3155
      %v3185 = vpack.c.bf16 %v3158, %v3157
      %v3186 = vpack.c.bf16 %v3160, %v3159
      %v3187 = vpack.c.bf16 %v3162, %v3161
      %v3188 = vpack.c.bf16 %v3164, %v3163
      %v3189 = vpack.c.bf16 %v3166, %v3165
      %v3190 = vpack.c.bf16 %v3168, %v3167
      %v3191 = vpack.c.bf16 %v3170, %v3169
      %v3192 = vpack.c.bf16 %v3172, %v3171
      %v3193 = vpack.c.bf16 %v3174, %v3173
      %v3194 = vpack.c.bf16 %v3176, %v3175
      %v3195 = vpack.c.bf16 %v3178, %v3177
      %v3196 = vpack.c.bf16 %v3180, %v3179
      %v3197 = vld [vmem:[%s7] sm:$0xff]
      %v3198 = vld [vmem:[%s7 + $0x8] sm:$0xff]
      %v3199 = vld [vmem:[%s7 + $0x10] sm:$0xff]
      %v3200 = vld [vmem:[%s7 + $0x18] sm:$0xff]
      %v3201 = vld [vmem:[%s7 + $0x20] sm:$0xff]
      %v3202 = vld [vmem:[%s7 + $0x28] sm:$0xff]
      %v3203 = vld [vmem:[%s7 + $0x30] sm:$0xff]
      %v3204 = vld [vmem:[%s7 + $0x38] sm:$0xff]
      %v3205 = vld [vmem:[%s7 + $0x40] sm:$0xff]
      %v3206 = vld [vmem:[%s7 + $0x48] sm:$0xff]
      %v3207 = vld [vmem:[%s7 + $0x50] sm:$0xff]
      %v3208 = vld [vmem:[%s7 + $0x58] sm:$0xff]
      %v3209 = vld [vmem:[%s7 + $0x60] sm:$0xff]
      %v3210 = vld [vmem:[%s7 + $0x68] sm:$0xff]
      %v3211 = vld [vmem:[%s7 + $0x70] sm:$0xff]
      %v3212 = vld [vmem:[%s7 + $0x78] sm:$0xff]
      %v3213 = vld [vmem:[%s7 + $0x80] sm:$0xff]
      %v3214 = vld [vmem:[%s7 + $0x88] sm:$0xff]
      %v3215 = vld [vmem:[%s7 + $0x90] sm:$0xff]
      %v3216 = vld [vmem:[%s7 + $0x98] sm:$0xff]
      %v3217 = vld [vmem:[%s7 + $0xa0] sm:$0xff]
      %v3218 = vld [vmem:[%s7 + $0xa8] sm:$0xff]
      %v3219 = vld [vmem:[%s7 + $0xb0] sm:$0xff]
      %v3220 = vld [vmem:[%s7 + $0xb8] sm:$0xff]
      %v3221 = vld [vmem:[%s7 + $0xc0] sm:$0xff]
      %v3222 = vld [vmem:[%s7 + $0xc8] sm:$0xff]
      %v3223 = vld [vmem:[%s7 + $0xd0] sm:$0xff]
      %v3224 = vld [vmem:[%s7 + $0xd8] sm:$0xff]
      %v3225 = vld [vmem:[%s7 + $0xe0] sm:$0xff]
      %v3226 = vld [vmem:[%s7 + $0xe8] sm:$0xff]
      %v3227 = vld [vmem:[%s7 + $0xf0] sm:$0xff]
      %v3228 = vld [vmem:[%s7 + $0xf8] sm:$0xff]
      %s3229 = scalar_lea.vmem %s3, 320
      %v3230 = vld [vmem:[%s3229] sm:$0xff]
      %v3231 = vld [vmem:[%s3229 + $0x8] sm:$0xff]
      %v3232 = vld [vmem:[%s3229 + $0x10] sm:$0xff]
      %v3233 = vld [vmem:[%s3229 + $0x18] sm:$0xff]
      %v3234 = vld [vmem:[%s3229 + $0x20] sm:$0xff]
      %v3235 = vld [vmem:[%s3229 + $0x28] sm:$0xff]
      %v3236 = vld [vmem:[%s3229 + $0x30] sm:$0xff]
      %v3237 = vld [vmem:[%s3229 + $0x38] sm:$0xff]
      %v3238 = vld [vmem:[%s3229 + $0x40] sm:$0xff]
      %v3239 = vld [vmem:[%s3229 + $0x48] sm:$0xff]
      %v3240 = vld [vmem:[%s3229 + $0x50] sm:$0xff]
      %v3241 = vld [vmem:[%s3229 + $0x58] sm:$0xff]
      %v3242 = vld [vmem:[%s3229 + $0x60] sm:$0xff]
      %v3243 = vld [vmem:[%s3229 + $0x68] sm:$0xff]
      %v3244 = vld [vmem:[%s3229 + $0x70] sm:$0xff]
      %v3245 = vld [vmem:[%s3229 + $0x78] sm:$0xff]
      %v3246 = vld [vmem:[%s3229 + $0x80] sm:$0xff]
      %v3247 = vld [vmem:[%s3229 + $0x88] sm:$0xff]
      %v3248 = vld [vmem:[%s3229 + $0x90] sm:$0xff]
      %v3249 = vld [vmem:[%s3229 + $0x98] sm:$0xff]
      %v3250 = vld [vmem:[%s3229 + $0xa0] sm:$0xff]
      %v3251 = vld [vmem:[%s3229 + $0xa8] sm:$0xff]
      %v3252 = vld [vmem:[%s3229 + $0xb0] sm:$0xff]
      %v3253 = vld [vmem:[%s3229 + $0xb8] sm:$0xff]
      %v3254 = vld [vmem:[%s3229 + $0xc0] sm:$0xff]
      %v3255 = vld [vmem:[%s3229 + $0xc8] sm:$0xff]
      %v3256 = vld [vmem:[%s3229 + $0xd0] sm:$0xff]
      %v3257 = vld [vmem:[%s3229 + $0xd8] sm:$0xff]
      %v3258 = vld [vmem:[%s3229 + $0xe0] sm:$0xff]
      %v3259 = vld [vmem:[%s3229 + $0xe8] sm:$0xff]
      %v3260 = vld [vmem:[%s3229 + $0xf0] sm:$0xff]
      %v3261 = vld [vmem:[%s3229 + $0xf8] sm:$0xff]
      %v3262 = vld [vmem:[%s3229 + $0x100] sm:$0xff]
      %v3263 = vld [vmem:[%s3229 + $0x108] sm:$0xff]
      %v3264 = vld [vmem:[%s3229 + $0x110] sm:$0xff]
      %v3265 = vld [vmem:[%s3229 + $0x118] sm:$0xff]
      %v3266 = vld [vmem:[%s3229 + $0x120] sm:$0xff]
      %v3267 = vld [vmem:[%s3229 + $0x128] sm:$0xff]
      %v3268 = vld [vmem:[%s3229 + $0x130] sm:$0xff]
      %v3269 = vld [vmem:[%s3229 + $0x138] sm:$0xff]
      %s3270 = scalar_lea.vmem %s4, 320
      %v3271 = vld [vmem:[%s3270] sm:$0xff]
      %v3272 = vld [vmem:[%s3270 + $0x8] sm:$0xff]
      %v3273 = vld [vmem:[%s3270 + $0x10] sm:$0xff]
      %v3274 = vld [vmem:[%s3270 + $0x18] sm:$0xff]
      %v3275 = vld [vmem:[%s3270 + $0x20] sm:$0xff]
      %v3276 = vld [vmem:[%s3270 + $0x28] sm:$0xff]
      %v3277 = vld [vmem:[%s3270 + $0x30] sm:$0xff]
      %v3278 = vld [vmem:[%s3270 + $0x38] sm:$0xff]
      %v3279 = vld [vmem:[%s3270 + $0x40] sm:$0xff]
      %v3280 = vld [vmem:[%s3270 + $0x48] sm:$0xff]
      %v3281 = vld [vmem:[%s3270 + $0x50] sm:$0xff]
      %v3282 = vld [vmem:[%s3270 + $0x58] sm:$0xff]
      %v3283 = vld [vmem:[%s3270 + $0x60] sm:$0xff]
      %v3284 = vld [vmem:[%s3270 + $0x68] sm:$0xff]
      %v3285 = vld [vmem:[%s3270 + $0x70] sm:$0xff]
      %v3286 = vld [vmem:[%s3270 + $0x78] sm:$0xff]
      %v3287 = vld [vmem:[%s3270 + $0x80] sm:$0xff]
      %v3288 = vld [vmem:[%s3270 + $0x88] sm:$0xff]
      %v3289 = vld [vmem:[%s3270 + $0x90] sm:$0xff]
      %v3290 = vld [vmem:[%s3270 + $0x98] sm:$0xff]
      %v3291 = vld [vmem:[%s3270 + $0xa0] sm:$0xff]
      %v3292 = vld [vmem:[%s3270 + $0xa8] sm:$0xff]
      %v3293 = vld [vmem:[%s3270 + $0xb0] sm:$0xff]
      %v3294 = vld [vmem:[%s3270 + $0xb8] sm:$0xff]
      %v3295 = vld [vmem:[%s3270 + $0xc0] sm:$0xff]
      %v3296 = vld [vmem:[%s3270 + $0xc8] sm:$0xff]
      %v3297 = vld [vmem:[%s3270 + $0xd0] sm:$0xff]
      %v3298 = vld [vmem:[%s3270 + $0xd8] sm:$0xff]
      %v3299 = vld [vmem:[%s3270 + $0xe0] sm:$0xff]
      %v3300 = vld [vmem:[%s3270 + $0xe8] sm:$0xff]
      %v3301 = vld [vmem:[%s3270 + $0xf0] sm:$0xff]
      %v3302 = vld [vmem:[%s3270 + $0xf8] sm:$0xff]
      %v3303 = vld [vmem:[%s3270 + $0x100] sm:$0xff]
      %v3304 = vld [vmem:[%s3270 + $0x108] sm:$0xff]
      %v3305 = vld [vmem:[%s3270 + $0x110] sm:$0xff]
      %v3306 = vld [vmem:[%s3270 + $0x118] sm:$0xff]
      %v3307 = vld [vmem:[%s3270 + $0x120] sm:$0xff]
      %v3308 = vld [vmem:[%s3270 + $0x128] sm:$0xff]
      %v3309 = vld [vmem:[%s3270 + $0x130] sm:$0xff]
      %v3310 = vld [vmem:[%s3270 + $0x138] sm:$0xff]
      %3312 = vset.pattern.permute.xlu0 0
      %3313 = vperm.xlu0 %3312, %v3271
      %v3314 = vpop.permute.xlu0 %3313
      %3317 = vset.pattern.permute.xlu0 0
      %3318 = vperm.xlu0 %3317, %v3272
      %v3319 = vpop.permute.xlu0 %3318
      %3322 = vset.pattern.permute.xlu0 0
      %3323 = vperm.xlu0 %3322, %v3273
      %v3324 = vpop.permute.xlu0 %3323
      %3327 = vset.pattern.permute.xlu0 0
      %3328 = vperm.xlu0 %3327, %v3274
      %v3329 = vpop.permute.xlu0 %3328
      %3332 = vset.pattern.permute.xlu0 0
      %3333 = vperm.xlu0 %3332, %v3275
      %v3334 = vpop.permute.xlu0 %3333
      %3337 = vset.pattern.permute.xlu0 0
      %3338 = vperm.xlu0 %3337, %v3276
      %v3339 = vpop.permute.xlu0 %3338
      %3342 = vset.pattern.permute.xlu0 0
      %3343 = vperm.xlu0 %3342, %v3277
      %v3344 = vpop.permute.xlu0 %3343
      %3347 = vset.pattern.permute.xlu0 0
      %3348 = vperm.xlu0 %3347, %v3278
      %v3349 = vpop.permute.xlu0 %3348
      %3352 = vset.pattern.permute.xlu0 0
      %3353 = vperm.xlu0 %3352, %v3279
      %v3354 = vpop.permute.xlu0 %3353
      %3357 = vset.pattern.permute.xlu0 0
      %3358 = vperm.xlu0 %3357, %v3280
      %v3359 = vpop.permute.xlu0 %3358
      %3362 = vset.pattern.permute.xlu0 0
      %3363 = vperm.xlu0 %3362, %v3281
      %v3364 = vpop.permute.xlu0 %3363
      %3367 = vset.pattern.permute.xlu0 0
      %3368 = vperm.xlu0 %3367, %v3282
      %v3369 = vpop.permute.xlu0 %3368
      %3372 = vset.pattern.permute.xlu0 0
      %3373 = vperm.xlu0 %3372, %v3283
      %v3374 = vpop.permute.xlu0 %3373
      %3377 = vset.pattern.permute.xlu0 0
      %3378 = vperm.xlu0 %3377, %v3284
      %v3379 = vpop.permute.xlu0 %3378
      %3382 = vset.pattern.permute.xlu0 0
      %3383 = vperm.xlu0 %3382, %v3285
      %v3384 = vpop.permute.xlu0 %3383
      %3387 = vset.pattern.permute.xlu0 0
      %3388 = vperm.xlu0 %3387, %v3286
      %v3389 = vpop.permute.xlu0 %3388
      %3392 = vset.pattern.permute.xlu0 0
      %3393 = vperm.xlu0 %3392, %v3287
      %v3394 = vpop.permute.xlu0 %3393
      %3397 = vset.pattern.permute.xlu0 0
      %3398 = vperm.xlu0 %3397, %v3288
      %v3399 = vpop.permute.xlu0 %3398
      %3402 = vset.pattern.permute.xlu0 0
      %3403 = vperm.xlu0 %3402, %v3289
      %v3404 = vpop.permute.xlu0 %3403
      %3407 = vset.pattern.permute.xlu0 0
      %3408 = vperm.xlu0 %3407, %v3290
      %v3409 = vpop.permute.xlu0 %3408
      %3412 = vset.pattern.permute.xlu0 0
      %3413 = vperm.xlu0 %3412, %v3291
      %v3414 = vpop.permute.xlu0 %3413
      %3417 = vset.pattern.permute.xlu0 0
      %3418 = vperm.xlu0 %3417, %v3292
      %v3419 = vpop.permute.xlu0 %3418
      %3422 = vset.pattern.permute.xlu0 0
      %3423 = vperm.xlu0 %3422, %v3293
      %v3424 = vpop.permute.xlu0 %3423
      %3427 = vset.pattern.permute.xlu0 0
      %3428 = vperm.xlu0 %3427, %v3294
      %v3429 = vpop.permute.xlu0 %3428
      %3432 = vset.pattern.permute.xlu0 0
      %3433 = vperm.xlu0 %3432, %v3295
      %v3434 = vpop.permute.xlu0 %3433
      %3437 = vset.pattern.permute.xlu0 0
      %3438 = vperm.xlu0 %3437, %v3296
      %v3439 = vpop.permute.xlu0 %3438
      %3442 = vset.pattern.permute.xlu0 0
      %3443 = vperm.xlu0 %3442, %v3297
      %v3444 = vpop.permute.xlu0 %3443
      %3447 = vset.pattern.permute.xlu0 0
      %3448 = vperm.xlu0 %3447, %v3298
      %v3449 = vpop.permute.xlu0 %3448
      %3452 = vset.pattern.permute.xlu0 0
      %3453 = vperm.xlu0 %3452, %v3299
      %v3454 = vpop.permute.xlu0 %3453
      %3457 = vset.pattern.permute.xlu0 0
      %3458 = vperm.xlu0 %3457, %v3300
      %v3459 = vpop.permute.xlu0 %3458
      %3462 = vset.pattern.permute.xlu0 0
      %3463 = vperm.xlu0 %3462, %v3301
      %v3464 = vpop.permute.xlu0 %3463
      %3467 = vset.pattern.permute.xlu0 0
      %3468 = vperm.xlu0 %3467, %v3302
      %v3469 = vpop.permute.xlu0 %3468
      %3472 = vset.pattern.permute.xlu0 0
      %3473 = vperm.xlu0 %3472, %v3303
      %v3474 = vpop.permute.xlu0 %3473
      %3477 = vset.pattern.permute.xlu0 0
      %3478 = vperm.xlu0 %3477, %v3304
      %v3479 = vpop.permute.xlu0 %3478
      %3482 = vset.pattern.permute.xlu0 0
      %3483 = vperm.xlu0 %3482, %v3305
      %v3484 = vpop.permute.xlu0 %3483
      %3487 = vset.pattern.permute.xlu0 0
      %3488 = vperm.xlu0 %3487, %v3306
      %v3489 = vpop.permute.xlu0 %3488
      %3492 = vset.pattern.permute.xlu0 0
      %3493 = vperm.xlu0 %3492, %v3307
      %v3494 = vpop.permute.xlu0 %3493
      %3497 = vset.pattern.permute.xlu0 0
      %3498 = vperm.xlu0 %3497, %v3308
      %v3499 = vpop.permute.xlu0 %3498
      %3502 = vset.pattern.permute.xlu0 0
      %3503 = vperm.xlu0 %3502, %v3309
      %v3504 = vpop.permute.xlu0 %3503
      %3507 = vset.pattern.permute.xlu0 0
      %3508 = vperm.xlu0 %3507, %v3310
      %v3509 = vpop.permute.xlu0 %3508
      %v3551 = vunpack.c.l.b16 %v3230
      %v3552 = vunpack.c.h.b16 %v3230
      %v3553 = vunpack.c.l.b16 %v3231
      %v3554 = vunpack.c.h.b16 %v3231
      %v3555 = vunpack.c.l.b16 %v3232
      %v3556 = vunpack.c.h.b16 %v3232
      %v3557 = vunpack.c.l.b16 %v3233
      %v3558 = vunpack.c.h.b16 %v3233
      %v3559 = vunpack.c.l.b16 %v3234
      %v3560 = vunpack.c.h.b16 %v3234
      %v3561 = vunpack.c.l.b16 %v3235
      %v3562 = vunpack.c.h.b16 %v3235
      %v3563 = vunpack.c.l.b16 %v3236
      %v3564 = vunpack.c.h.b16 %v3236
      %v3565 = vunpack.c.l.b16 %v3237
      %v3566 = vunpack.c.h.b16 %v3237
      %v3567 = vunpack.c.l.b16 %v3238
      %v3568 = vunpack.c.h.b16 %v3238
      %v3569 = vunpack.c.l.b16 %v3239
      %v3570 = vunpack.c.h.b16 %v3239
      %v3571 = vunpack.c.l.b16 %v3240
      %v3572 = vunpack.c.h.b16 %v3240
      %v3573 = vunpack.c.l.b16 %v3241
      %v3574 = vunpack.c.h.b16 %v3241
      %v3575 = vunpack.c.l.b16 %v3242
      %v3576 = vunpack.c.h.b16 %v3242
      %v3577 = vunpack.c.l.b16 %v3243
      %v3578 = vunpack.c.h.b16 %v3243
      %v3579 = vunpack.c.l.b16 %v3244
      %v3580 = vunpack.c.h.b16 %v3244
      %v3581 = vunpack.c.l.b16 %v3245
      %v3582 = vunpack.c.h.b16 %v3245
      %v3583 = vunpack.c.l.b16 %v3246
      %v3584 = vunpack.c.h.b16 %v3246
      %v3585 = vunpack.c.l.b16 %v3247
      %v3586 = vunpack.c.h.b16 %v3247
      %v3587 = vunpack.c.l.b16 %v3248
      %v3588 = vunpack.c.h.b16 %v3248
      %v3589 = vunpack.c.l.b16 %v3249
      %v3590 = vunpack.c.h.b16 %v3249
      %v3591 = vunpack.c.l.b16 %v3250
      %v3592 = vunpack.c.h.b16 %v3250
      %v3593 = vunpack.c.l.b16 %v3251
      %v3594 = vunpack.c.h.b16 %v3251
      %v3595 = vunpack.c.l.b16 %v3252
      %v3596 = vunpack.c.h.b16 %v3252
      %v3597 = vunpack.c.l.b16 %v3253
      %v3598 = vunpack.c.h.b16 %v3253
      %v3599 = vunpack.c.l.b16 %v3254
      %v3600 = vunpack.c.h.b16 %v3254
      %v3601 = vunpack.c.l.b16 %v3255
      %v3602 = vunpack.c.h.b16 %v3255
      %v3603 = vunpack.c.l.b16 %v3256
      %v3604 = vunpack.c.h.b16 %v3256
      %v3605 = vunpack.c.l.b16 %v3257
      %v3606 = vunpack.c.h.b16 %v3257
      %v3607 = vunpack.c.l.b16 %v3258
      %v3608 = vunpack.c.h.b16 %v3258
      %v3609 = vunpack.c.l.b16 %v3259
      %v3610 = vunpack.c.h.b16 %v3259
      %v3611 = vunpack.c.l.b16 %v3260
      %v3612 = vunpack.c.h.b16 %v3260
      %v3613 = vunpack.c.l.b16 %v3261
      %v3614 = vunpack.c.h.b16 %v3261
      %v3615 = vunpack.c.l.b16 %v3262
      %v3616 = vunpack.c.h.b16 %v3262
      %v3617 = vunpack.c.l.b16 %v3263
      %v3618 = vunpack.c.h.b16 %v3263
      %v3619 = vunpack.c.l.b16 %v3264
      %v3620 = vunpack.c.h.b16 %v3264
      %v3621 = vunpack.c.l.b16 %v3265
      %v3622 = vunpack.c.h.b16 %v3265
      %v3623 = vunpack.c.l.b16 %v3266
      %v3624 = vunpack.c.h.b16 %v3266
      %v3625 = vunpack.c.l.b16 %v3267
      %v3626 = vunpack.c.h.b16 %v3267
      %v3627 = vunpack.c.l.b16 %v3268
      %v3628 = vunpack.c.h.b16 %v3268
      %v3629 = vunpack.c.l.b16 %v3269
      %v3630 = vunpack.c.h.b16 %v3269
      %v3631 = vpack.c.b16 %v3553, %v3551
      %v3632 = vpack.c.b16 %v3554, %v3552
      %v3633 = vpack.c.b16 %v3557, %v3555
      %v3634 = vpack.c.b16 %v3558, %v3556
      %v3635 = vpack.c.b16 %v3561, %v3559
      %v3636 = vpack.c.b16 %v3562, %v3560
      %v3637 = vpack.c.b16 %v3565, %v3563
      %v3638 = vpack.c.b16 %v3566, %v3564
      %v3639 = vpack.c.b16 %v3569, %v3567
      %v3640 = vpack.c.b16 %v3570, %v3568
      %v3641 = vpack.c.b16 %v3573, %v3571
      %v3642 = vpack.c.b16 %v3574, %v3572
      %v3643 = vpack.c.b16 %v3577, %v3575
      %v3644 = vpack.c.b16 %v3578, %v3576
      %v3645 = vpack.c.b16 %v3581, %v3579
      %v3646 = vpack.c.b16 %v3582, %v3580
      %v3647 = vpack.c.b16 %v3585, %v3583
      %v3648 = vpack.c.b16 %v3586, %v3584
      %v3649 = vpack.c.b16 %v3589, %v3587
      %v3650 = vpack.c.b16 %v3590, %v3588
      %v3651 = vpack.c.b16 %v3593, %v3591
      %v3652 = vpack.c.b16 %v3594, %v3592
      %v3653 = vpack.c.b16 %v3597, %v3595
      %v3654 = vpack.c.b16 %v3598, %v3596
      %v3655 = vpack.c.b16 %v3601, %v3599
      %v3656 = vpack.c.b16 %v3602, %v3600
      %v3657 = vpack.c.b16 %v3605, %v3603
      %v3658 = vpack.c.b16 %v3606, %v3604
      %v3659 = vpack.c.b16 %v3609, %v3607
      %v3660 = vpack.c.b16 %v3610, %v3608
      %v3661 = vpack.c.b16 %v3613, %v3611
      %v3662 = vpack.c.b16 %v3614, %v3612
      %v3663 = vpack.c.b16 %v3617, %v3615
      %v3664 = vpack.c.b16 %v3618, %v3616
      %v3665 = vpack.c.b16 %v3621, %v3619
      %v3666 = vpack.c.b16 %v3622, %v3620
      %v3667 = vpack.c.b16 %v3625, %v3623
      %v3668 = vpack.c.b16 %v3626, %v3624
      %v3669 = vpack.c.b16 %v3629, %v3627
      %v3670 = vpack.c.b16 %v3630, %v3628
      %3711 = vmatprep.subr.bf16.mxu0 0
      %3712 = vmatpush1.bf16.msra.mxu0 %v3188
      %3713 = vmatprep.subr.bf16.mxu0 0
      %3714 = vmatpush1.bf16.msra.mxu0 %v3187
      %3715 = vmatprep.subr.bf16.mxu0 0
      %3716 = vmatpush1.bf16.msra.mxu0 %v3186
      %3717 = vmatprep.subr.bf16.mxu0 0
      %3718 = vmatpush1.bf16.msra.mxu0 %v3185
      %3719 = vmatprep.subr.bf16.mxu0 0
      %3720 = vmatpush1.bf16.msra.mxu0 %v3184
      %3721 = vmatprep.subr.bf16.mxu0 0
      %3722 = vmatpush1.bf16.msra.mxu0 %v3183
      %3723 = vmatprep.subr.bf16.mxu0 0
      %3724 = vmatpush1.bf16.msra.mxu0 %v3182
      %3725 = vmatprep.subr.bf16.mxu0 0
      %3726 = vmatpush1.bf16.msra.mxu0 %v3181
      %3727 = vmatprep.subr.bf16.mxu0 0
      %3728 = vmatpush2.bf16.msra.mxu0 %v3196
      %3729 = vmatprep.subr.bf16.mxu0 0
      %3730 = vmatpush2.bf16.msra.mxu0 %v3195
      %3731 = vmatprep.subr.bf16.mxu0 0
      %3732 = vmatpush2.bf16.msra.mxu0 %v3194
      %3733 = vmatprep.subr.bf16.mxu0 0
      %3734 = vmatpush2.bf16.msra.mxu0 %v3193
      %3735 = vmatprep.subr.bf16.mxu0 0
      %3736 = vmatpush2.bf16.msra.mxu0 %v3192
      %3737 = vmatprep.subr.bf16.mxu0 0
      %3738 = vmatpush2.bf16.msra.mxu0 %v3191
      %3739 = vmatprep.subr.bf16.mxu0 0
      %3740 = vmatpush2.bf16.msra.mxu0 %v3190
      %3741 = vmatprep.subr.bf16.mxu0 0
      %3742 = vmatpush2.bf16.msra.mxu0 %v3189
      %3743 = vmatprep.mubr.bf16.mxu0 %v3632
      %3744 = vmatmul.mubr.bf16.gmra.mxu0 %v3631
      %v3745 = vpop.f32.mrf.mxu0
      %v3746 = vadd.f32 %v3314, %v3745
      %v3747 = vpop.f32.mrf.mxu0
      %v3748 = vpop.f32.mrf.mxu0
      %v3749 = vadd.f32 %v3319, %v3748
      %v3750 = vpop.f32.mrf.mxu0
      %3751 = vmatprep.mubr.bf16.mxu0 %v3634
      %3752 = vmatmul.mubr.bf16.gmra.mxu0 %v3633
      %v3753 = vpop.f32.mrf.mxu0
      %v3754 = vadd.f32 %v3324, %v3753
      %v3755 = vpop.f32.mrf.mxu0
      %v3756 = vpop.f32.mrf.mxu0
      %v3757 = vadd.f32 %v3329, %v3756
      %v3758 = vpop.f32.mrf.mxu0
      %3759 = vmatprep.mubr.bf16.mxu0 %v3636
      %3760 = vmatmul.mubr.bf16.gmra.mxu0 %v3635
      %v3761 = vpop.f32.mrf.mxu0
      %v3762 = vadd.f32 %v3334, %v3761
      %v3763 = vpop.f32.mrf.mxu0
      %v3764 = vpop.f32.mrf.mxu0
      %v3765 = vadd.f32 %v3339, %v3764
      %v3766 = vpop.f32.mrf.mxu0
      %3767 = vmatprep.mubr.bf16.mxu0 %v3638
      %3768 = vmatmul.mubr.bf16.gmra.mxu0 %v3637
      %v3769 = vpop.f32.mrf.mxu0
      %v3770 = vadd.f32 %v3344, %v3769
      %v3771 = vpop.f32.mrf.mxu0
      %v3772 = vpop.f32.mrf.mxu0
      %v3773 = vadd.f32 %v3349, %v3772
      %v3774 = vpop.f32.mrf.mxu0
      %3775 = vmatprep.mubr.bf16.mxu0 %v3640
      %3776 = vmatmul.mubr.bf16.gmra.mxu0 %v3639
      %v3777 = vpop.f32.mrf.mxu0
      %v3778 = vadd.f32 %v3354, %v3777
      %v3779 = vpop.f32.mrf.mxu0
      %v3780 = vpop.f32.mrf.mxu0
      %v3781 = vadd.f32 %v3359, %v3780
      %v3782 = vpop.f32.mrf.mxu0
      %3783 = vmatprep.mubr.bf16.mxu0 %v3642
      %3784 = vmatmul.mubr.bf16.gmra.mxu0 %v3641
      %v3785 = vpop.f32.mrf.mxu0
      %v3786 = vadd.f32 %v3364, %v3785
      %v3787 = vpop.f32.mrf.mxu0
      %v3788 = vpop.f32.mrf.mxu0
      %v3789 = vadd.f32 %v3369, %v3788
      %v3790 = vpop.f32.mrf.mxu0
      %3791 = vmatprep.mubr.bf16.mxu0 %v3644
      %3792 = vmatmul.mubr.bf16.gmra.mxu0 %v3643
      %v3793 = vpop.f32.mrf.mxu0
      %v3794 = vadd.f32 %v3374, %v3793
      %v3795 = vpop.f32.mrf.mxu0
      %v3796 = vpop.f32.mrf.mxu0
      %v3797 = vadd.f32 %v3379, %v3796
      %v3798 = vpop.f32.mrf.mxu0
      %3799 = vmatprep.mubr.bf16.mxu0 %v3646
      %3800 = vmatmul.mubr.bf16.gmra.mxu0 %v3645
      %v3801 = vpop.f32.mrf.mxu0
      %v3802 = vadd.f32 %v3384, %v3801
      %v3803 = vpop.f32.mrf.mxu0
      %v3804 = vpop.f32.mrf.mxu0
      %v3805 = vadd.f32 %v3389, %v3804
      %v3806 = vpop.f32.mrf.mxu0
      %3807 = vmatprep.mubr.bf16.mxu0 %v3648
      %3808 = vmatmul.mubr.bf16.gmra.mxu0 %v3647
      %v3809 = vpop.f32.mrf.mxu0
      %v3810 = vadd.f32 %v3394, %v3809
      %v3811 = vpop.f32.mrf.mxu0
      %v3812 = vpop.f32.mrf.mxu0
      %v3813 = vadd.f32 %v3399, %v3812
      %v3814 = vpop.f32.mrf.mxu0
      %3815 = vmatprep.mubr.bf16.mxu0 %v3650
      %3816 = vmatmul.mubr.bf16.gmra.mxu0 %v3649
      %v3817 = vpop.f32.mrf.mxu0
      %v3818 = vadd.f32 %v3404, %v3817
      %v3819 = vpop.f32.mrf.mxu0
      %v3820 = vpop.f32.mrf.mxu0
      %v3821 = vadd.f32 %v3409, %v3820
      %v3822 = vpop.f32.mrf.mxu0
      %3823 = vmatprep.mubr.bf16.mxu0 %v3652
      %3824 = vmatmul.mubr.bf16.gmra.mxu0 %v3651
      %v3825 = vpop.f32.mrf.mxu0
      %v3826 = vadd.f32 %v3414, %v3825
      %v3827 = vpop.f32.mrf.mxu0
      %v3828 = vpop.f32.mrf.mxu0
      %v3829 = vadd.f32 %v3419, %v3828
      %v3830 = vpop.f32.mrf.mxu0
      %3831 = vmatprep.mubr.bf16.mxu0 %v3654
      %3832 = vmatmul.mubr.bf16.gmra.mxu0 %v3653
      %v3833 = vpop.f32.mrf.mxu0
      %v3834 = vadd.f32 %v3424, %v3833
      %v3835 = vpop.f32.mrf.mxu0
      %v3836 = vpop.f32.mrf.mxu0
      %v3837 = vadd.f32 %v3429, %v3836
      %v3838 = vpop.f32.mrf.mxu0
      %3839 = vmatprep.mubr.bf16.mxu0 %v3656
      %3840 = vmatmul.mubr.bf16.gmra.mxu0 %v3655
      %v3841 = vpop.f32.mrf.mxu0
      %v3842 = vadd.f32 %v3434, %v3841
      %v3843 = vpop.f32.mrf.mxu0
      %v3844 = vpop.f32.mrf.mxu0
      %v3845 = vadd.f32 %v3439, %v3844
      %v3846 = vpop.f32.mrf.mxu0
      %3847 = vmatprep.mubr.bf16.mxu0 %v3658
      %3848 = vmatmul.mubr.bf16.gmra.mxu0 %v3657
      %v3849 = vpop.f32.mrf.mxu0
      %v3850 = vadd.f32 %v3444, %v3849
      %v3851 = vpop.f32.mrf.mxu0
      %v3852 = vpop.f32.mrf.mxu0
      %v3853 = vadd.f32 %v3449, %v3852
      %v3854 = vpop.f32.mrf.mxu0
      %3855 = vmatprep.mubr.bf16.mxu0 %v3660
      %3856 = vmatmul.mubr.bf16.gmra.mxu0 %v3659
      %v3857 = vpop.f32.mrf.mxu0
      %v3858 = vadd.f32 %v3454, %v3857
      %v3859 = vpop.f32.mrf.mxu0
      %v3860 = vpop.f32.mrf.mxu0
      %v3861 = vadd.f32 %v3459, %v3860
      %v3862 = vpop.f32.mrf.mxu0
      %3863 = vmatprep.mubr.bf16.mxu0 %v3662
      %3864 = vmatmul.mubr.bf16.gmra.mxu0 %v3661
      %v3865 = vpop.f32.mrf.mxu0
      %v3866 = vadd.f32 %v3464, %v3865
      %v3867 = vpop.f32.mrf.mxu0
      %v3868 = vpop.f32.mrf.mxu0
      %v3869 = vadd.f32 %v3469, %v3868
      %v3870 = vpop.f32.mrf.mxu0
      %3871 = vmatprep.mubr.bf16.mxu0 %v3664
      %3872 = vmatmul.mubr.bf16.gmra.mxu0 %v3663
      %v3873 = vpop.f32.mrf.mxu0
      %v3874 = vadd.f32 %v3474, %v3873
      %v3875 = vpop.f32.mrf.mxu0
      %v3876 = vpop.f32.mrf.mxu0
      %v3877 = vadd.f32 %v3479, %v3876
      %v3878 = vpop.f32.mrf.mxu0
      %3879 = vmatprep.mubr.bf16.mxu0 %v3666
      %3880 = vmatmul.mubr.bf16.gmra.mxu0 %v3665
      %v3881 = vpop.f32.mrf.mxu0
      %v3882 = vadd.f32 %v3484, %v3881
      %v3883 = vpop.f32.mrf.mxu0
      %v3884 = vpop.f32.mrf.mxu0
      %v3885 = vadd.f32 %v3489, %v3884
      %v3886 = vpop.f32.mrf.mxu0
      %3887 = vmatprep.mubr.bf16.mxu0 %v3668
      %3888 = vmatmul.mubr.bf16.gmra.mxu0 %v3667
      %v3889 = vpop.f32.mrf.mxu0
      %v3890 = vadd.f32 %v3494, %v3889
      %v3891 = vpop.f32.mrf.mxu0
      %v3892 = vpop.f32.mrf.mxu0
      %v3893 = vadd.f32 %v3499, %v3892
      %v3894 = vpop.f32.mrf.mxu0
      %3895 = vmatprep.mubr.bf16.mxu0 %v3670
      %3896 = vmatmul.mubr.bf16.gmra.mxu0 %v3669
      %v3897 = vpop.f32.mrf.mxu0
      %v3898 = vadd.f32 %v3504, %v3897
      %v3899 = vpop.f32.mrf.mxu0
      %v3900 = vpop.f32.mrf.mxu0
      %v3901 = vadd.f32 %v3509, %v3900
      %v3902 = vpop.f32.mrf.mxu0
      %3903 = vdwg.mxu0
      %v3904 = vpack.c.bf16 %v3749, %v3746
      %v3905 = vpack.c.bf16 %v3757, %v3754
      %v3906 = vpack.c.bf16 %v3765, %v3762
      %v3907 = vpack.c.bf16 %v3773, %v3770
      %3908 = vxpose.xlu0.c.b16.start [1/8] %v3904, 128
      %3909 = vxpose.xlu0.c.b16.cont [2/8] %v3905, 128
      %3910 = vxpose.xlu0.c.b16.cont [3/8] %v3906, 128
      %3911 = vxpose.xlu0.c.b16.cont [4/8] %v3907, 128
      %3912 = vxpose.xlu0.c.b16.cont [5/8] 0, 128
      %3913 = vxpose.xlu0.c.b16.cont [6/8] 0, 128
      %3914 = vxpose.xlu0.c.b16.cont [7/8] 0, 128
      %3915 = vxpose.xlu0.c.b16.end [8/8] 0, 128
      %v3916 = vpop.trf.xlu0
      %v3917 = vpop.trf.xlu0
      %v3918 = vpop.trf.xlu0
      %v3919 = vpop.trf.xlu0
      %v3920 = vpop.trf.xlu0
      %v3921 = vpop.trf.xlu0
      %v3922 = vpop.trf.xlu0
      %v3923 = vpop.trf.xlu0
      %v3925 = vsel %vm1663, %v3916, 0
      %v3928 = vsel %vm1663, %v3917, 0
      %v3931 = vsel %vm1663, %v3918, 0
      %v3934 = vsel %vm1663, %v3919, 0
      %v3937 = vsel %vm1663, %v3920, 0
      %v3940 = vsel %vm1663, %v3921, 0
      %v3943 = vsel %vm1663, %v3922, 0
      %v3946 = vsel %vm1663, %v3923, 0
      %3948 = vmatprep.subr.bf16.mxu0 0
      %3949 = vmatpush1.bf16.msra.mxu0 0
      %3950 = vmatprep.subr.bf16.mxu0 0
      %3951 = vmatpush1.bf16.msra.mxu0 0
      %3952 = vmatprep.subr.bf16.mxu0 0
      %3953 = vmatpush1.bf16.msra.mxu0 0
      %3954 = vmatprep.subr.bf16.mxu0 0
      %3955 = vmatpush1.bf16.msra.mxu0 0
      %3956 = vmatprep.subr.bf16.mxu0 0
      %3957 = vmatpush1.bf16.msra.mxu0 %v3907
      %3958 = vmatprep.subr.bf16.mxu0 0
      %3959 = vmatpush1.bf16.msra.mxu0 %v3906
      %3960 = vmatprep.subr.bf16.mxu0 0
      %3961 = vmatpush1.bf16.msra.mxu0 %v3905
      %3962 = vmatprep.subr.bf16.mxu0 0
      %3963 = vmatpush1.bf16.msra.mxu0 %v3904
      %3964 = vmatprep.subr.bf16.mxu0 0
      %3965 = vmatpush2.bf16.msra.mxu0 0
      %3966 = vmatprep.subr.bf16.mxu0 0
      %3967 = vmatpush2.bf16.msra.mxu0 0
      %3968 = vmatprep.subr.bf16.mxu0 0
      %3969 = vmatpush2.bf16.msra.mxu0 0
      %3970 = vmatprep.subr.bf16.mxu0 0
      %3971 = vmatpush2.bf16.msra.mxu0 0
      %3972 = vmatprep.subr.bf16.mxu0 0
      %3973 = vmatpush2.bf16.msra.mxu0 0
      %3974 = vmatprep.subr.bf16.mxu0 0
      %3975 = vmatpush2.bf16.msra.mxu0 0
      %3976 = vmatprep.subr.bf16.mxu0 0
      %3977 = vmatpush2.bf16.msra.mxu0 0
      %3978 = vmatprep.subr.bf16.mxu0 0
      %3979 = vmatpush2.bf16.msra.mxu0 0
      %3980 = vmatprep.mubr.bf16.mxu0 0
      %3981 = vmatmul.mubr.bf16.gmra.mxu0 %v3925
      %v3982 = vpop.f32.mrf.mxu0
      %v3983 = vadd.f32 0.0, %v3982
      %v3984 = vpop.f32.mrf.mxu0
      %v3985 = vpop.f32.mrf.mxu0
      %v3986 = vadd.f32 0.0, %v3985
      %v3987 = vpop.f32.mrf.mxu0
      %3988 = vmatprep.mubr.bf16.mxu0 0
      %3989 = vmatmul.mubr.bf16.gmra.mxu0 %v3928
      %v3990 = vpop.f32.mrf.mxu0
      %v3991 = vadd.f32 0.0, %v3990
      %v3992 = vpop.f32.mrf.mxu0
      %v3993 = vpop.f32.mrf.mxu0
      %v3994 = vadd.f32 0.0, %v3993
      %v3995 = vpop.f32.mrf.mxu0
      %3996 = vmatprep.mubr.bf16.mxu0 0
      %3997 = vmatmul.mubr.bf16.gmra.mxu0 %v3931
      %v3998 = vpop.f32.mrf.mxu0
      %v3999 = vadd.f32 0.0, %v3998
      %v4000 = vpop.f32.mrf.mxu0
      %v4001 = vpop.f32.mrf.mxu0
      %v4002 = vadd.f32 0.0, %v4001
      %v4003 = vpop.f32.mrf.mxu0
      %4004 = vmatprep.mubr.bf16.mxu0 0
      %4005 = vmatmul.mubr.bf16.gmra.mxu0 %v3934
      %v4006 = vpop.f32.mrf.mxu0
      %v4007 = vadd.f32 0.0, %v4006
      %v4008 = vpop.f32.mrf.mxu0
      %v4009 = vpop.f32.mrf.mxu0
      %v4010 = vadd.f32 0.0, %v4009
      %v4011 = vpop.f32.mrf.mxu0
      %4012 = vmatprep.mubr.bf16.mxu0 0
      %4013 = vmatmul.mubr.bf16.gmra.mxu0 %v3937
      %v4014 = vpop.f32.mrf.mxu0
      %v4015 = vadd.f32 0.0, %v4014
      %v4016 = vpop.f32.mrf.mxu0
      %v4017 = vpop.f32.mrf.mxu0
      %v4018 = vadd.f32 0.0, %v4017
      %v4019 = vpop.f32.mrf.mxu0
      %4020 = vmatprep.mubr.bf16.mxu0 0
      %4021 = vmatmul.mubr.bf16.gmra.mxu0 %v3940
      %v4022 = vpop.f32.mrf.mxu0
      %v4023 = vadd.f32 0.0, %v4022
      %v4024 = vpop.f32.mrf.mxu0
      %v4025 = vpop.f32.mrf.mxu0
      %v4026 = vadd.f32 0.0, %v4025
      %v4027 = vpop.f32.mrf.mxu0
      %4028 = vmatprep.mubr.bf16.mxu0 0
      %4029 = vmatmul.mubr.bf16.gmra.mxu0 %v3943
      %v4030 = vpop.f32.mrf.mxu0
      %v4031 = vadd.f32 0.0, %v4030
      %v4032 = vpop.f32.mrf.mxu0
      %v4033 = vpop.f32.mrf.mxu0
      %v4034 = vadd.f32 0.0, %v4033
      %v4035 = vpop.f32.mrf.mxu0
      %4036 = vmatprep.mubr.bf16.mxu0 0
      %4037 = vmatmul.mubr.bf16.gmra.mxu0 %v3946
      %v4038 = vpop.f32.mrf.mxu0
      %v4039 = vadd.f32 0.0, %v4038
      %v4040 = vpop.f32.mrf.mxu0
      %v4041 = vpop.f32.mrf.mxu0
      %v4042 = vadd.f32 0.0, %v4041
      %v4043 = vpop.f32.mrf.mxu0
      %4044 = vdwg.mxu0
      %4045 = vmax.xlane.f32.xlu0 %v3983
      %v4046 = vpop.xlane.xlu0 %4045
      %4047 = vmax.xlane.f32.xlu0 %v3986
      %v4048 = vpop.xlane.xlu0 %4047
      %4049 = vmax.xlane.f32.xlu0 %v3991
      %v4050 = vpop.xlane.xlu0 %4049
      %4051 = vmax.xlane.f32.xlu0 %v3994
      %v4052 = vpop.xlane.xlu0 %4051
      %4053 = vmax.xlane.f32.xlu0 %v3999
      %v4054 = vpop.xlane.xlu0 %4053
      %4055 = vmax.xlane.f32.xlu0 %v4002
      %v4056 = vpop.xlane.xlu0 %4055
      %4057 = vmax.xlane.f32.xlu0 %v4007
      %v4058 = vpop.xlane.xlu0 %4057
      %4059 = vmax.xlane.f32.xlu0 %v4010
      %v4060 = vpop.xlane.xlu0 %4059
      %4061 = vmax.xlane.f32.xlu0 %v4015
      %v4062 = vpop.xlane.xlu0 %4061
      %4063 = vmax.xlane.f32.xlu0 %v4018
      %v4064 = vpop.xlane.xlu0 %4063
      %4065 = vmax.xlane.f32.xlu0 %v4023
      %v4066 = vpop.xlane.xlu0 %4065
      %4067 = vmax.xlane.f32.xlu0 %v4026
      %v4068 = vpop.xlane.xlu0 %4067
      %4069 = vmax.xlane.f32.xlu0 %v4031
      %v4070 = vpop.xlane.xlu0 %4069
      %4071 = vmax.xlane.f32.xlu0 %v4034
      %v4072 = vpop.xlane.xlu0 %4071
      %4073 = vmax.xlane.f32.xlu0 %v4039
      %v4074 = vpop.xlane.xlu0 %4073
      %4075 = vmax.xlane.f32.xlu0 %v4042
      %v4076 = vpop.xlane.xlu0 %4075
      %v4077 = vsub.f32 %v3983, %v4046
      %v4078 = vsub.f32 %v3986, %v4048
      %v4079 = vsub.f32 %v3991, %v4050
      %v4080 = vsub.f32 %v3994, %v4052
      %v4081 = vsub.f32 %v3999, %v4054
      %v4082 = vsub.f32 %v4002, %v4056
      %v4083 = vsub.f32 %v4007, %v4058
      %v4084 = vsub.f32 %v4010, %v4060
      %v4085 = vsub.f32 %v4015, %v4062
      %v4086 = vsub.f32 %v4018, %v4064
      %v4087 = vsub.f32 %v4023, %v4066
      %v4088 = vsub.f32 %v4026, %v4068
      %v4089 = vsub.f32 %v4031, %v4070
      %v4090 = vsub.f32 %v4034, %v4072
      %v4091 = vsub.f32 %v4039, %v4074
      %v4092 = vsub.f32 %v4042, %v4076
      %v4093 = vmul.f32 %v4077, 1.442695
      %v4094 = vpow.pop %v4093
      %v4095 = vmul.f32 %v4078, 1.442695
      %v4096 = vpow.pop %v4095
      %v4097 = vmul.f32 %v4079, 1.442695
      %v4098 = vpow.pop %v4097
      %v4099 = vmul.f32 %v4080, 1.442695
      %v4100 = vpow.pop %v4099
      %v4101 = vmul.f32 %v4081, 1.442695
      %v4102 = vpow.pop %v4101
      %v4103 = vmul.f32 %v4082, 1.442695
      %v4104 = vpow.pop %v4103
      %v4105 = vmul.f32 %v4083, 1.442695
      %v4106 = vpow.pop %v4105
      %v4107 = vmul.f32 %v4084, 1.442695
      %v4108 = vpow.pop %v4107
      %v4109 = vmul.f32 %v4085, 1.442695
      %v4110 = vpow.pop %v4109
      %v4111 = vmul.f32 %v4086, 1.442695
      %v4112 = vpow.pop %v4111
      %v4113 = vmul.f32 %v4087, 1.442695
      %v4114 = vpow.pop %v4113
      %v4115 = vmul.f32 %v4088, 1.442695
      %v4116 = vpow.pop %v4115
      %v4117 = vmul.f32 %v4089, 1.442695
      %v4118 = vpow.pop %v4117
      %v4119 = vmul.f32 %v4090, 1.442695
      %v4120 = vpow.pop %v4119
      %v4121 = vmul.f32 %v4091, 1.442695
      %v4122 = vpow.pop %v4121
      %v4123 = vmul.f32 %v4092, 1.442695
      %v4124 = vpow.pop %v4123
      %4125 = vadd.xlane.f32.xlu0 %v4094
      %v4126 = vpop.xlane.xlu0 %4125
      %4127 = vadd.xlane.f32.xlu0 %v4096
      %v4128 = vpop.xlane.xlu0 %4127
      %4129 = vadd.xlane.f32.xlu0 %v4098
      %v4130 = vpop.xlane.xlu0 %4129
      %4131 = vadd.xlane.f32.xlu0 %v4100
      %v4132 = vpop.xlane.xlu0 %4131
      %4133 = vadd.xlane.f32.xlu0 %v4102
      %v4134 = vpop.xlane.xlu0 %4133
      %4135 = vadd.xlane.f32.xlu0 %v4104
      %v4136 = vpop.xlane.xlu0 %4135
      %4137 = vadd.xlane.f32.xlu0 %v4106
      %v4138 = vpop.xlane.xlu0 %4137
      %4139 = vadd.xlane.f32.xlu0 %v4108
      %v4140 = vpop.xlane.xlu0 %4139
      %4141 = vadd.xlane.f32.xlu0 %v4110
      %v4142 = vpop.xlane.xlu0 %4141
      %4143 = vadd.xlane.f32.xlu0 %v4112
      %v4144 = vpop.xlane.xlu0 %4143
      %4145 = vadd.xlane.f32.xlu0 %v4114
      %v4146 = vpop.xlane.xlu0 %4145
      %4147 = vadd.xlane.f32.xlu0 %v4116
      %v4148 = vpop.xlane.xlu0 %4147
      %4149 = vadd.xlane.f32.xlu0 %v4118
      %v4150 = vpop.xlane.xlu0 %4149
      %4151 = vadd.xlane.f32.xlu0 %v4120
      %v4152 = vpop.xlane.xlu0 %4151
      %4153 = vadd.xlane.f32.xlu0 %v4122
      %v4154 = vpop.xlane.xlu0 %4153
      %4155 = vadd.xlane.f32.xlu0 %v4124
      %v4156 = vpop.xlane.xlu0 %4155
      %v4157 = vpack.c.bf16 %v4096, %v4094
      %v4158 = vpack.c.bf16 %v4100, %v4098
      %v4159 = vpack.c.bf16 %v4104, %v4102
      %v4160 = vpack.c.bf16 %v4108, %v4106
      %v4161 = vpack.c.bf16 %v4112, %v4110
      %v4162 = vpack.c.bf16 %v4116, %v4114
      %v4163 = vpack.c.bf16 %v4120, %v4118
      %v4164 = vpack.c.bf16 %v4124, %v4122
      %v4165 = vrcp.pop %v4126
      %v4166 = vrcp.pop %v4128
      %v4167 = vrcp.pop %v4130
      %v4168 = vrcp.pop %v4132
      %v4169 = vrcp.pop %v4134
      %v4170 = vrcp.pop %v4136
      %v4171 = vrcp.pop %v4138
      %v4172 = vrcp.pop %v4140
      %v4173 = vrcp.pop %v4142
      %v4174 = vrcp.pop %v4144
      %v4175 = vrcp.pop %v4146
      %v4176 = vrcp.pop %v4148
      %v4177 = vrcp.pop %v4150
      %v4178 = vrcp.pop %v4152
      %v4179 = vrcp.pop %v4154
      %v4180 = vrcp.pop %v4156
      %v4181 = vpack.c.bf16 %v4166, %v4165
      %v4182 = vpack.c.bf16 %v4168, %v4167
      %v4183 = vpack.c.bf16 %v4170, %v4169
      %v4184 = vpack.c.bf16 %v4172, %v4171
      %v4185 = vpack.c.bf16 %v4174, %v4173
      %v4186 = vpack.c.bf16 %v4176, %v4175
      %v4187 = vpack.c.bf16 %v4178, %v4177
      %v4188 = vpack.c.bf16 %v4180, %v4179
      %v4205 = vlaneseq
      %v4206 = vshrl.u32 %v4205, 7
      %v4207 = vsub.s32 %v1946, %v4206
      %v4208 = vrot.slane %v4165, %v4207
      %v4209 = vlaneseq
      %v4210 = vshrl.u32 %v4209, 7
      %v4211 = vsub.s32 %v1951, %v4210
      %v4212 = vrot.slane %v4166, %v4211
      %v4213 = vsel %vm1956, %v4212, %v4208
      %v4214 = vlaneseq
      %v4215 = vshrl.u32 %v4214, 7
      %v4216 = vsub.s32 %v1958, %v4215
      %v4217 = vrot.slane %v4167, %v4216
      %v4218 = vsel %vm1963, %v4217, %v4213
      %v4219 = vlaneseq
      %v4220 = vshrl.u32 %v4219, 7
      %v4221 = vsub.s32 %v1965, %v4220
      %v4222 = vrot.slane %v4168, %v4221
      %v4223 = vsel %vm1970, %v4222, %v4218
      %v4224 = vlaneseq
      %v4225 = vshrl.u32 %v4224, 7
      %v4226 = vsub.s32 %v1972, %v4225
      %v4227 = vrot.slane %v4169, %v4226
      %v4228 = vsel %vm1977, %v4227, %v4223
      %v4229 = vlaneseq
      %v4230 = vshrl.u32 %v4229, 7
      %v4231 = vsub.s32 %v1979, %v4230
      %v4232 = vrot.slane %v4170, %v4231
      %v4233 = vsel %vm1984, %v4232, %v4228
      %v4234 = vlaneseq
      %v4235 = vshrl.u32 %v4234, 7
      %v4236 = vsub.s32 %v1986, %v4235
      %v4237 = vrot.slane %v4171, %v4236
      %v4238 = vsel %vm1991, %v4237, %v4233
      %v4239 = vlaneseq
      %v4240 = vshrl.u32 %v4239, 7
      %v4241 = vsub.s32 %v1993, %v4240
      %v4242 = vrot.slane %v4172, %v4241
      %v4243 = vsel %vm1998, %v4242, %v4238
      %v4244 = vlaneseq
      %v4245 = vshrl.u32 %v4244, 7
      %v4246 = vsub.s32 %v2000, %v4245
      %v4247 = vrot.slane %v4173, %v4246
      %v4248 = vsel %vm2005, %v4247, %v4243
      %v4249 = vlaneseq
      %v4250 = vshrl.u32 %v4249, 7
      %v4251 = vsub.s32 %v2007, %v4250
      %v4252 = vrot.slane %v4174, %v4251
      %v4253 = vsel %vm2012, %v4252, %v4248
      %v4254 = vlaneseq
      %v4255 = vshrl.u32 %v4254, 7
      %v4256 = vsub.s32 %v2014, %v4255
      %v4257 = vrot.slane %v4175, %v4256
      %v4258 = vsel %vm2019, %v4257, %v4253
      %v4259 = vlaneseq
      %v4260 = vshrl.u32 %v4259, 7
      %v4261 = vsub.s32 %v2021, %v4260
      %v4262 = vrot.slane %v4176, %v4261
      %v4263 = vsel %vm2026, %v4262, %v4258
      %v4264 = vlaneseq
      %v4265 = vshrl.u32 %v4264, 7
      %v4266 = vsub.s32 %v2028, %v4265
      %v4267 = vrot.slane %v4177, %v4266
      %v4268 = vsel %vm2033, %v4267, %v4263
      %v4269 = vlaneseq
      %v4270 = vshrl.u32 %v4269, 7
      %v4271 = vsub.s32 %v2035, %v4270
      %v4272 = vrot.slane %v4178, %v4271
      %v4273 = vsel %vm2040, %v4272, %v4268
      %v4274 = vlaneseq
      %v4275 = vshrl.u32 %v4274, 7
      %v4276 = vsub.s32 %v2042, %v4275
      %v4277 = vrot.slane %v4179, %v4276
      %v4278 = vsel %vm2047, %v4277, %v4273
      %v4279 = vlaneseq
      %v4280 = vshrl.u32 %v4279, 7
      %v4281 = vsub.s32 %v2049, %v4280
      %v4282 = vrot.slane %v4180, %v4281
      %v4283 = vsel %vm2054, %v4282, %v4278
      %v4284 = vsel %vm2056, %v4283, %v4283
      %v4285 = vsel %vm2058, %v4283, %v4284
      %v4286 = vsel %vm2060, %v4283, %v4285
      %v4287 = vsel %vm2062, %v4283, %v4286
      %v4288 = vsel %vm2064, %v4283, %v4287
      %v4289 = vsel %vm2066, %v4283, %v4288
      %v4291 = vmul.f32 %v3778, %v4289
      %v4292 = vmul.f32 %v3781, %v4289
      %v4293 = vmul.f32 %v3786, %v4289
      %v4294 = vmul.f32 %v3789, %v4289
      %v4295 = vmul.f32 %v3794, %v4289
      %v4296 = vmul.f32 %v3797, %v4289
      %v4297 = vmul.f32 %v3802, %v4289
      %v4298 = vmul.f32 %v3805, %v4289
      %v4299 = vmul.f32 %v3810, %v4289
      %v4300 = vmul.f32 %v3813, %v4289
      %v4301 = vmul.f32 %v3818, %v4289
      %v4302 = vmul.f32 %v3821, %v4289
      %v4303 = vmul.f32 %v3826, %v4289
      %v4304 = vmul.f32 %v3829, %v4289
      %v4305 = vmul.f32 %v3834, %v4289
      %v4306 = vmul.f32 %v3837, %v4289
      %v4307 = vmul.f32 %v3842, %v4289
      %v4308 = vmul.f32 %v3845, %v4289
      %v4309 = vmul.f32 %v3850, %v4289
      %v4310 = vmul.f32 %v3853, %v4289
      %v4311 = vmul.f32 %v3858, %v4289
      %v4312 = vmul.f32 %v3861, %v4289
      %v4313 = vmul.f32 %v3866, %v4289
      %v4314 = vmul.f32 %v3869, %v4289
      %v4315 = vmul.f32 %v3874, %v4289
      %v4316 = vmul.f32 %v3877, %v4289
      %v4317 = vmul.f32 %v3882, %v4289
      %v4318 = vmul.f32 %v3885, %v4289
      %v4319 = vmul.f32 %v3890, %v4289
      %v4320 = vmul.f32 %v3893, %v4289
      %v4321 = vmul.f32 %v3898, %v4289
      %v4322 = vmul.f32 %v3901, %v4289
      %v4323 = vpack.c.bf16 %v4292, %v4291
      %v4324 = vpack.c.bf16 %v4294, %v4293
      %v4325 = vpack.c.bf16 %v4296, %v4295
      %v4326 = vpack.c.bf16 %v4298, %v4297
      %v4327 = vpack.c.bf16 %v4300, %v4299
      %v4328 = vpack.c.bf16 %v4302, %v4301
      %v4329 = vpack.c.bf16 %v4304, %v4303
      %v4330 = vpack.c.bf16 %v4306, %v4305
      %v4331 = vpack.c.bf16 %v4308, %v4307
      %v4332 = vpack.c.bf16 %v4310, %v4309
      %v4333 = vpack.c.bf16 %v4312, %v4311
      %v4334 = vpack.c.bf16 %v4314, %v4313
      %v4335 = vpack.c.bf16 %v4316, %v4315
      %v4336 = vpack.c.bf16 %v4318, %v4317
      %v4337 = vpack.c.bf16 %v4320, %v4319
      %v4338 = vpack.c.bf16 %v4322, %v4321
      %4339 = vmatprep.subr.bf16.mxu0 0
      %4340 = vmatpush1.bf16.msra.mxu0 %v4164
      %4341 = vmatprep.subr.bf16.mxu0 0
      %4342 = vmatpush1.bf16.msra.mxu0 %v4163
      %4343 = vmatprep.subr.bf16.mxu0 0
      %4344 = vmatpush1.bf16.msra.mxu0 %v4162
      %4345 = vmatprep.subr.bf16.mxu0 0
      %4346 = vmatpush1.bf16.msra.mxu0 %v4161
      %4347 = vmatprep.subr.bf16.mxu0 0
      %4348 = vmatpush1.bf16.msra.mxu0 %v4160
      %4349 = vmatprep.subr.bf16.mxu0 0
      %4350 = vmatpush1.bf16.msra.mxu0 %v4159
      %4351 = vmatprep.subr.bf16.mxu0 0
      %4352 = vmatpush1.bf16.msra.mxu0 %v4158
      %4353 = vmatprep.subr.bf16.mxu0 0
      %4354 = vmatpush1.bf16.msra.mxu0 %v4157
      %4355 = vmatprep.subr.bf16.mxu0 0
      %4356 = vmatpush2.bf16.msra.mxu0 0
      %4357 = vmatprep.subr.bf16.mxu0 0
      %4358 = vmatpush2.bf16.msra.mxu0 0
      %4359 = vmatprep.subr.bf16.mxu0 0
      %4360 = vmatpush2.bf16.msra.mxu0 0
      %4361 = vmatprep.subr.bf16.mxu0 0
      %4362 = vmatpush2.bf16.msra.mxu0 0
      %4363 = vmatprep.subr.bf16.mxu0 0
      %4364 = vmatpush2.bf16.msra.mxu0 0
      %4365 = vmatprep.subr.bf16.mxu0 0
      %4366 = vmatpush2.bf16.msra.mxu0 0
      %4367 = vmatprep.subr.bf16.mxu0 0
      %4368 = vmatpush2.bf16.msra.mxu0 0
      %4369 = vmatprep.subr.bf16.mxu0 0
      %4370 = vmatpush2.bf16.msra.mxu0 0
      %4371 = vmatprep.mubr.bf16.mxu0 0
      %4372 = vmatmul.mubr.bf16.gmra.mxu0 %v4323
      %v4373 = vpop.f32.mrf.mxu0
      %v4374 = vadd.f32 0.0, %v4373
      %v4375 = vpop.f32.mrf.mxu0
      %v4376 = vpop.f32.mrf.mxu0
      %v4377 = vadd.f32 0.0, %v4376
      %v4378 = vpop.f32.mrf.mxu0
      %4379 = vmatprep.mubr.bf16.mxu0 0
      %4380 = vmatmul.mubr.bf16.gmra.mxu0 %v4324
      %v4381 = vpop.f32.mrf.mxu0
      %v4382 = vadd.f32 0.0, %v4381
      %v4383 = vpop.f32.mrf.mxu0
      %v4384 = vpop.f32.mrf.mxu0
      %v4385 = vadd.f32 0.0, %v4384
      %v4386 = vpop.f32.mrf.mxu0
      %4387 = vmatprep.mubr.bf16.mxu0 0
      %4388 = vmatmul.mubr.bf16.gmra.mxu0 %v4325
      %v4389 = vpop.f32.mrf.mxu0
      %v4390 = vadd.f32 0.0, %v4389
      %v4391 = vpop.f32.mrf.mxu0
      %v4392 = vpop.f32.mrf.mxu0
      %v4393 = vadd.f32 0.0, %v4392
      %v4394 = vpop.f32.mrf.mxu0
      %4395 = vmatprep.mubr.bf16.mxu0 0
      %4396 = vmatmul.mubr.bf16.gmra.mxu0 %v4326
      %v4397 = vpop.f32.mrf.mxu0
      %v4398 = vadd.f32 0.0, %v4397
      %v4399 = vpop.f32.mrf.mxu0
      %v4400 = vpop.f32.mrf.mxu0
      %v4401 = vadd.f32 0.0, %v4400
      %v4402 = vpop.f32.mrf.mxu0
      %4403 = vmatprep.mubr.bf16.mxu0 0
      %4404 = vmatmul.mubr.bf16.gmra.mxu0 %v4327
      %v4405 = vpop.f32.mrf.mxu0
      %v4406 = vadd.f32 0.0, %v4405
      %v4407 = vpop.f32.mrf.mxu0
      %v4408 = vpop.f32.mrf.mxu0
      %v4409 = vadd.f32 0.0, %v4408
      %v4410 = vpop.f32.mrf.mxu0
      %4411 = vmatprep.mubr.bf16.mxu0 0
      %4412 = vmatmul.mubr.bf16.gmra.mxu0 %v4328
      %v4413 = vpop.f32.mrf.mxu0
      %v4414 = vadd.f32 0.0, %v4413
      %v4415 = vpop.f32.mrf.mxu0
      %v4416 = vpop.f32.mrf.mxu0
      %v4417 = vadd.f32 0.0, %v4416
      %v4418 = vpop.f32.mrf.mxu0
      %4419 = vmatprep.mubr.bf16.mxu0 0
      %4420 = vmatmul.mubr.bf16.gmra.mxu0 %v4329
      %v4421 = vpop.f32.mrf.mxu0
      %v4422 = vadd.f32 0.0, %v4421
      %v4423 = vpop.f32.mrf.mxu0
      %v4424 = vpop.f32.mrf.mxu0
      %v4425 = vadd.f32 0.0, %v4424
      %v4426 = vpop.f32.mrf.mxu0
      %4427 = vmatprep.mubr.bf16.mxu0 0
      %4428 = vmatmul.mubr.bf16.gmra.mxu0 %v4330
      %v4429 = vpop.f32.mrf.mxu0
      %v4430 = vadd.f32 0.0, %v4429
      %v4431 = vpop.f32.mrf.mxu0
      %v4432 = vpop.f32.mrf.mxu0
      %v4433 = vadd.f32 0.0, %v4432
      %v4434 = vpop.f32.mrf.mxu0
      %4435 = vmatprep.mubr.bf16.mxu0 0
      %4436 = vmatmul.mubr.bf16.gmra.mxu0 %v4331
      %v4437 = vpop.f32.mrf.mxu0
      %v4438 = vadd.f32 0.0, %v4437
      %v4439 = vpop.f32.mrf.mxu0
      %v4440 = vpop.f32.mrf.mxu0
      %v4441 = vadd.f32 0.0, %v4440
      %v4442 = vpop.f32.mrf.mxu0
      %4443 = vmatprep.mubr.bf16.mxu0 0
      %4444 = vmatmul.mubr.bf16.gmra.mxu0 %v4332
      %v4445 = vpop.f32.mrf.mxu0
      %v4446 = vadd.f32 0.0, %v4445
      %v4447 = vpop.f32.mrf.mxu0
      %v4448 = vpop.f32.mrf.mxu0
      %v4449 = vadd.f32 0.0, %v4448
      %v4450 = vpop.f32.mrf.mxu0
      %4451 = vmatprep.mubr.bf16.mxu0 0
      %4452 = vmatmul.mubr.bf16.gmra.mxu0 %v4333
      %v4453 = vpop.f32.mrf.mxu0
      %v4454 = vadd.f32 0.0, %v4453
      %v4455 = vpop.f32.mrf.mxu0
      %v4456 = vpop.f32.mrf.mxu0
      %v4457 = vadd.f32 0.0, %v4456
      %v4458 = vpop.f32.mrf.mxu0
      %4459 = vmatprep.mubr.bf16.mxu0 0
      %4460 = vmatmul.mubr.bf16.gmra.mxu0 %v4334
      %v4461 = vpop.f32.mrf.mxu0
      %v4462 = vadd.f32 0.0, %v4461
      %v4463 = vpop.f32.mrf.mxu0
      %v4464 = vpop.f32.mrf.mxu0
      %v4465 = vadd.f32 0.0, %v4464
      %v4466 = vpop.f32.mrf.mxu0
      %4467 = vmatprep.mubr.bf16.mxu0 0
      %4468 = vmatmul.mubr.bf16.gmra.mxu0 %v4335
      %v4469 = vpop.f32.mrf.mxu0
      %v4470 = vadd.f32 0.0, %v4469
      %v4471 = vpop.f32.mrf.mxu0
      %v4472 = vpop.f32.mrf.mxu0
      %v4473 = vadd.f32 0.0, %v4472
      %v4474 = vpop.f32.mrf.mxu0
      %4475 = vmatprep.mubr.bf16.mxu0 0
      %4476 = vmatmul.mubr.bf16.gmra.mxu0 %v4336
      %v4477 = vpop.f32.mrf.mxu0
      %v4478 = vadd.f32 0.0, %v4477
      %v4479 = vpop.f32.mrf.mxu0
      %v4480 = vpop.f32.mrf.mxu0
      %v4481 = vadd.f32 0.0, %v4480
      %v4482 = vpop.f32.mrf.mxu0
      %4483 = vmatprep.mubr.bf16.mxu0 0
      %4484 = vmatmul.mubr.bf16.gmra.mxu0 %v4337
      %v4485 = vpop.f32.mrf.mxu0
      %v4486 = vadd.f32 0.0, %v4485
      %v4487 = vpop.f32.mrf.mxu0
      %v4488 = vpop.f32.mrf.mxu0
      %v4489 = vadd.f32 0.0, %v4488
      %v4490 = vpop.f32.mrf.mxu0
      %4491 = vmatprep.mubr.bf16.mxu0 0
      %4492 = vmatmul.mubr.bf16.gmra.mxu0 %v4338
      %v4493 = vpop.f32.mrf.mxu0
      %v4494 = vadd.f32 0.0, %v4493
      %v4495 = vpop.f32.mrf.mxu0
      %v4496 = vpop.f32.mrf.mxu0
      %v4497 = vadd.f32 0.0, %v4496
      %v4498 = vpop.f32.mrf.mxu0
      %4499 = vdwg.mxu0
      %v4508 = vunpack.c.l.b16 %v4181
      %v4509 = vunpack.c.h.b16 %v4181
      %v4510 = vunpack.c.l.b16 %v4182
      %v4511 = vunpack.c.h.b16 %v4182
      %v4512 = vunpack.c.l.b16 %v4183
      %v4513 = vunpack.c.h.b16 %v4183
      %v4514 = vunpack.c.l.b16 %v4184
      %v4515 = vunpack.c.h.b16 %v4184
      %v4516 = vunpack.c.l.b16 %v4185
      %v4517 = vunpack.c.h.b16 %v4185
      %v4518 = vunpack.c.l.b16 %v4186
      %v4519 = vunpack.c.h.b16 %v4186
      %v4520 = vunpack.c.l.b16 %v4187
      %v4521 = vunpack.c.h.b16 %v4187
      %v4522 = vunpack.c.l.b16 %v4188
      %v4523 = vunpack.c.h.b16 %v4188
      %v4524 = vlaneseq
      %v4525 = vshrl.u32 %v4524, 7
      %v4526 = vsub.s32 %v1946, %v4525
      %v4527 = vrot.slane %v4508, %v4526
      %v4528 = vlaneseq
      %v4529 = vshrl.u32 %v4528, 7
      %v4530 = vsub.s32 %v1951, %v4529
      %v4531 = vrot.slane %v4509, %v4530
      %v4532 = vsel %vm1956, %v4531, %v4527
      %v4533 = vlaneseq
      %v4534 = vshrl.u32 %v4533, 7
      %v4535 = vsub.s32 %v1958, %v4534
      %v4536 = vrot.slane %v4510, %v4535
      %v4537 = vsel %vm1963, %v4536, %v4532
      %v4538 = vlaneseq
      %v4539 = vshrl.u32 %v4538, 7
      %v4540 = vsub.s32 %v1965, %v4539
      %v4541 = vrot.slane %v4511, %v4540
      %v4542 = vsel %vm1970, %v4541, %v4537
      %v4543 = vlaneseq
      %v4544 = vshrl.u32 %v4543, 7
      %v4545 = vsub.s32 %v1972, %v4544
      %v4546 = vrot.slane %v4512, %v4545
      %v4547 = vsel %vm1977, %v4546, %v4542
      %v4548 = vlaneseq
      %v4549 = vshrl.u32 %v4548, 7
      %v4550 = vsub.s32 %v1979, %v4549
      %v4551 = vrot.slane %v4513, %v4550
      %v4552 = vsel %vm1984, %v4551, %v4547
      %v4553 = vlaneseq
      %v4554 = vshrl.u32 %v4553, 7
      %v4555 = vsub.s32 %v1986, %v4554
      %v4556 = vrot.slane %v4514, %v4555
      %v4557 = vsel %vm1991, %v4556, %v4552
      %v4558 = vlaneseq
      %v4559 = vshrl.u32 %v4558, 7
      %v4560 = vsub.s32 %v1993, %v4559
      %v4561 = vrot.slane %v4515, %v4560
      %v4562 = vsel %vm1998, %v4561, %v4557
      %v4563 = vlaneseq
      %v4564 = vshrl.u32 %v4563, 7
      %v4565 = vsub.s32 %v2000, %v4564
      %v4566 = vrot.slane %v4516, %v4565
      %v4567 = vsel %vm2005, %v4566, %v4562
      %v4568 = vlaneseq
      %v4569 = vshrl.u32 %v4568, 7
      %v4570 = vsub.s32 %v2007, %v4569
      %v4571 = vrot.slane %v4517, %v4570
      %v4572 = vsel %vm2012, %v4571, %v4567
      %v4573 = vlaneseq
      %v4574 = vshrl.u32 %v4573, 7
      %v4575 = vsub.s32 %v2014, %v4574
      %v4576 = vrot.slane %v4518, %v4575
      %v4577 = vsel %vm2019, %v4576, %v4572
      %v4578 = vlaneseq
      %v4579 = vshrl.u32 %v4578, 7
      %v4580 = vsub.s32 %v2021, %v4579
      %v4581 = vrot.slane %v4519, %v4580
      %v4582 = vsel %vm2026, %v4581, %v4577
      %v4583 = vlaneseq
      %v4584 = vshrl.u32 %v4583, 7
      %v4585 = vsub.s32 %v2028, %v4584
      %v4586 = vrot.slane %v4520, %v4585
      %v4587 = vsel %vm2033, %v4586, %v4582
      %v4588 = vlaneseq
      %v4589 = vshrl.u32 %v4588, 7
      %v4590 = vsub.s32 %v2035, %v4589
      %v4591 = vrot.slane %v4521, %v4590
      %v4592 = vsel %vm2040, %v4591, %v4587
      %v4593 = vlaneseq
      %v4594 = vshrl.u32 %v4593, 7
      %v4595 = vsub.s32 %v2042, %v4594
      %v4596 = vrot.slane %v4522, %v4595
      %v4597 = vsel %vm2047, %v4596, %v4592
      %v4598 = vlaneseq
      %v4599 = vshrl.u32 %v4598, 7
      %v4600 = vsub.s32 %v2049, %v4599
      %v4601 = vrot.slane %v4523, %v4600
      %v4602 = vsel %vm2054, %v4601, %v4597
      %v4603 = vpack.c.b16 %v4602, %v4602
      %4605 = vmatprep.subr.bf16.mxu0 0
      %4606 = vmatpush1.bf16.msra.mxu0 %v4164
      %4607 = vmatprep.subr.bf16.mxu0 0
      %4608 = vmatpush1.bf16.msra.mxu0 %v4163
      %4609 = vmatprep.subr.bf16.mxu0 0
      %4610 = vmatpush1.bf16.msra.mxu0 %v4162
      %4611 = vmatprep.subr.bf16.mxu0 0
      %4612 = vmatpush1.bf16.msra.mxu0 %v4161
      %4613 = vmatprep.subr.bf16.mxu0 0
      %4614 = vmatpush1.bf16.msra.mxu0 %v4160
      %4615 = vmatprep.subr.bf16.mxu0 0
      %4616 = vmatpush1.bf16.msra.mxu0 %v4159
      %4617 = vmatprep.subr.bf16.mxu0 0
      %4618 = vmatpush1.bf16.msra.mxu0 %v4158
      %4619 = vmatprep.subr.bf16.mxu0 0
      %4620 = vmatpush1.bf16.msra.mxu0 %v4157
      %4621 = vmatprep.subr.bf16.mxu0 0
      %4622 = vmatpush2.bf16.msra.mxu0 0
      %4623 = vmatprep.subr.bf16.mxu0 0
      %4624 = vmatpush2.bf16.msra.mxu0 0
      %4625 = vmatprep.subr.bf16.mxu0 0
      %4626 = vmatpush2.bf16.msra.mxu0 0
      %4627 = vmatprep.subr.bf16.mxu0 0
      %4628 = vmatpush2.bf16.msra.mxu0 0
      %4629 = vmatprep.subr.bf16.mxu0 0
      %4630 = vmatpush2.bf16.msra.mxu0 0
      %4631 = vmatprep.subr.bf16.mxu0 0
      %4632 = vmatpush2.bf16.msra.mxu0 0
      %4633 = vmatprep.subr.bf16.mxu0 0
      %4634 = vmatpush2.bf16.msra.mxu0 0
      %4635 = vmatprep.subr.bf16.mxu0 0
      %4636 = vmatpush2.bf16.msra.mxu0 0
      %4637 = vmatprep.mubr.bf16.mxu0 0
      %4638 = vmatmul.mubr.bf16.gmra.mxu0 %v4603
      %v4639 = vpop.f32.mrf.mxu0
      %v4640 = vadd.f32 1e-09, %v4639
      %v4641 = vpop.f32.mrf.mxu0
      %v4642 = vpop.f32.mrf.mxu0
      %v4643 = vpop.f32.mrf.mxu0
      %4644 = vdwg.mxu0
      %v4645 = vrcp.pop %v4640
      %v4646 = vlaneseq
      %v4647 = vshrl.u32 %v4646, 7
      %v4648 = vsub.s32 0, %v4647
      %v4649 = vrot.slane %v4645, %v4648
      %v4650 = vmul.f32 %v4374, %v4649
      %v4651 = vmul.f32 %v4377, %v4649
      %v4652 = vmul.f32 %v4382, %v4649
      %v4653 = vmul.f32 %v4385, %v4649
      %v4654 = vmul.f32 %v4390, %v4649
      %v4655 = vmul.f32 %v4393, %v4649
      %v4656 = vmul.f32 %v4398, %v4649
      %v4657 = vmul.f32 %v4401, %v4649
      %v4658 = vmul.f32 %v4406, %v4649
      %v4659 = vmul.f32 %v4409, %v4649
      %v4660 = vmul.f32 %v4414, %v4649
      %v4661 = vmul.f32 %v4417, %v4649
      %v4662 = vmul.f32 %v4422, %v4649
      %v4663 = vmul.f32 %v4425, %v4649
      %v4664 = vmul.f32 %v4430, %v4649
      %v4665 = vmul.f32 %v4433, %v4649
      %v4666 = vmul.f32 %v4438, %v4649
      %v4667 = vmul.f32 %v4441, %v4649
      %v4668 = vmul.f32 %v4446, %v4649
      %v4669 = vmul.f32 %v4449, %v4649
      %v4670 = vmul.f32 %v4454, %v4649
      %v4671 = vmul.f32 %v4457, %v4649
      %v4672 = vmul.f32 %v4462, %v4649
      %v4673 = vmul.f32 %v4465, %v4649
      %v4674 = vmul.f32 %v4470, %v4649
      %v4675 = vmul.f32 %v4473, %v4649
      %v4676 = vmul.f32 %v4478, %v4649
      %v4677 = vmul.f32 %v4481, %v4649
      %v4678 = vmul.f32 %v4486, %v4649
      %v4679 = vmul.f32 %v4489, %v4649
      %v4680 = vmul.f32 %v4494, %v4649
      %v4681 = vmul.f32 %v4497, %v4649
      %s4682 = scalar_lea.vmem %s5, 256
      %v4683 = vld [vmem:[%s4682] sm:$0xff]
      %v4684 = vld [vmem:[%s4682 + $0x8] sm:$0xff]
      %v4685 = vld [vmem:[%s4682 + $0x10] sm:$0xff]
      %v4686 = vld [vmem:[%s4682 + $0x18] sm:$0xff]
      %v4687 = vld [vmem:[%s4682 + $0x20] sm:$0xff]
      %v4688 = vld [vmem:[%s4682 + $0x28] sm:$0xff]
      %v4689 = vld [vmem:[%s4682 + $0x30] sm:$0xff]
      %v4690 = vld [vmem:[%s4682 + $0x38] sm:$0xff]
      %v4691 = vld [vmem:[%s4682 + $0x40] sm:$0xff]
      %v4692 = vld [vmem:[%s4682 + $0x48] sm:$0xff]
      %v4693 = vld [vmem:[%s4682 + $0x50] sm:$0xff]
      %v4694 = vld [vmem:[%s4682 + $0x58] sm:$0xff]
      %v4695 = vld [vmem:[%s4682 + $0x60] sm:$0xff]
      %v4696 = vld [vmem:[%s4682 + $0x68] sm:$0xff]
      %v4697 = vld [vmem:[%s4682 + $0x70] sm:$0xff]
      %v4698 = vld [vmem:[%s4682 + $0x78] sm:$0xff]
      %v4699 = vld [vmem:[%s4682 + $0x80] sm:$0xff]
      %v4700 = vld [vmem:[%s4682 + $0x88] sm:$0xff]
      %v4701 = vld [vmem:[%s4682 + $0x90] sm:$0xff]
      %v4702 = vld [vmem:[%s4682 + $0x98] sm:$0xff]
      %v4703 = vld [vmem:[%s4682 + $0xa0] sm:$0xff]
      %v4704 = vld [vmem:[%s4682 + $0xa8] sm:$0xff]
      %v4705 = vld [vmem:[%s4682 + $0xb0] sm:$0xff]
      %v4706 = vld [vmem:[%s4682 + $0xb8] sm:$0xff]
      %v4707 = vld [vmem:[%s4682 + $0xc0] sm:$0xff]
      %v4708 = vld [vmem:[%s4682 + $0xc8] sm:$0xff]
      %v4709 = vld [vmem:[%s4682 + $0xd0] sm:$0xff]
      %v4710 = vld [vmem:[%s4682 + $0xd8] sm:$0xff]
      %v4711 = vld [vmem:[%s4682 + $0xe0] sm:$0xff]
      %v4712 = vld [vmem:[%s4682 + $0xe8] sm:$0xff]
      %v4713 = vld [vmem:[%s4682 + $0xf0] sm:$0xff]
      %v4714 = vld [vmem:[%s4682 + $0xf8] sm:$0xff]
      %v4715 = vsub.f32 %v3149, %v4650
      %v4716 = vsub.f32 %v3150, %v4651
      %v4717 = vsub.f32 %v3151, %v4652
      %v4718 = vsub.f32 %v3152, %v4653
      %v4719 = vsub.f32 %v3153, %v4654
      %v4720 = vsub.f32 %v3154, %v4655
      %v4721 = vsub.f32 %v3155, %v4656
      %v4722 = vsub.f32 %v3156, %v4657
      %v4723 = vsub.f32 %v3157, %v4658
      %v4724 = vsub.f32 %v3158, %v4659
      %v4725 = vsub.f32 %v3159, %v4660
      %v4726 = vsub.f32 %v3160, %v4661
      %v4727 = vsub.f32 %v3161, %v4662
      %v4728 = vsub.f32 %v3162, %v4663
      %v4729 = vsub.f32 %v3163, %v4664
      %v4730 = vsub.f32 %v3164, %v4665
      %v4731 = vsub.f32 %v3165, %v4666
      %v4732 = vsub.f32 %v3166, %v4667
      %v4733 = vsub.f32 %v3167, %v4668
      %v4734 = vsub.f32 %v3168, %v4669
      %v4735 = vsub.f32 %v3169, %v4670
      %v4736 = vsub.f32 %v3170, %v4671
      %v4737 = vsub.f32 %v3171, %v4672
      %v4738 = vsub.f32 %v3172, %v4673
      %v4739 = vsub.f32 %v3173, %v4674
      %v4740 = vsub.f32 %v3174, %v4675
      %v4741 = vsub.f32 %v3175, %v4676
      %v4742 = vsub.f32 %v3176, %v4677
      %v4743 = vsub.f32 %v3177, %v4678
      %v4744 = vsub.f32 %v3178, %v4679
      %v4745 = vsub.f32 %v3179, %v4680
      %v4746 = vsub.f32 %v3180, %v4681
      %v4747 = vpack.c.bf16 %v4716, %v4715
      %v4748 = vpack.c.bf16 %v4718, %v4717
      %v4749 = vpack.c.bf16 %v4720, %v4719
      %v4750 = vpack.c.bf16 %v4722, %v4721
      %v4751 = vpack.c.bf16 %v4724, %v4723
      %v4752 = vpack.c.bf16 %v4726, %v4725
      %v4753 = vpack.c.bf16 %v4728, %v4727
      %v4754 = vpack.c.bf16 %v4730, %v4729
      %v4755 = vpack.c.bf16 %v4732, %v4731
      %v4756 = vpack.c.bf16 %v4734, %v4733
      %v4757 = vpack.c.bf16 %v4736, %v4735
      %v4758 = vpack.c.bf16 %v4738, %v4737
      %v4759 = vpack.c.bf16 %v4740, %v4739
      %v4760 = vpack.c.bf16 %v4742, %v4741
      %v4761 = vpack.c.bf16 %v4744, %v4743
      %v4762 = vpack.c.bf16 %v4746, %v4745
      %s4763 = scalar_lea.vmem %s6, 256
      %v4764 = vld [vmem:[%s4763] sm:$0xff]
      %v4765 = vld [vmem:[%s4763 + $0x8] sm:$0xff]
      %v4766 = vld [vmem:[%s4763 + $0x10] sm:$0xff]
      %v4767 = vld [vmem:[%s4763 + $0x18] sm:$0xff]
      %v4768 = vld [vmem:[%s4763 + $0x20] sm:$0xff]
      %v4769 = vld [vmem:[%s4763 + $0x28] sm:$0xff]
      %v4770 = vld [vmem:[%s4763 + $0x30] sm:$0xff]
      %v4771 = vld [vmem:[%s4763 + $0x38] sm:$0xff]
      %v4772 = vld [vmem:[%s4763 + $0x40] sm:$0xff]
      %v4773 = vld [vmem:[%s4763 + $0x48] sm:$0xff]
      %v4774 = vld [vmem:[%s4763 + $0x50] sm:$0xff]
      %v4775 = vld [vmem:[%s4763 + $0x58] sm:$0xff]
      %v4776 = vld [vmem:[%s4763 + $0x60] sm:$0xff]
      %v4777 = vld [vmem:[%s4763 + $0x68] sm:$0xff]
      %v4778 = vld [vmem:[%s4763 + $0x70] sm:$0xff]
      %v4779 = vld [vmem:[%s4763 + $0x78] sm:$0xff]
      %v4780 = vld [vmem:[%s4763 + $0x80] sm:$0xff]
      %v4781 = vld [vmem:[%s4763 + $0x88] sm:$0xff]
      %v4782 = vld [vmem:[%s4763 + $0x90] sm:$0xff]
      %v4783 = vld [vmem:[%s4763 + $0x98] sm:$0xff]
      %v4784 = vld [vmem:[%s4763 + $0xa0] sm:$0xff]
      %v4785 = vld [vmem:[%s4763 + $0xa8] sm:$0xff]
      %v4786 = vld [vmem:[%s4763 + $0xb0] sm:$0xff]
      %v4787 = vld [vmem:[%s4763 + $0xb8] sm:$0xff]
      %v4788 = vld [vmem:[%s4763 + $0xc0] sm:$0xff]
      %v4789 = vld [vmem:[%s4763 + $0xc8] sm:$0xff]
      %v4790 = vld [vmem:[%s4763 + $0xd0] sm:$0xff]
      %v4791 = vld [vmem:[%s4763 + $0xd8] sm:$0xff]
      %v4792 = vld [vmem:[%s4763 + $0xe0] sm:$0xff]
      %v4793 = vld [vmem:[%s4763 + $0xe8] sm:$0xff]
      %v4794 = vld [vmem:[%s4763 + $0xf0] sm:$0xff]
      %v4795 = vld [vmem:[%s4763 + $0xf8] sm:$0xff]
      %4797 = vset.pattern.permute.xlu0 0
      %4798 = vperm.xlu0 %4797, %v4764
      %v4799 = vpop.permute.xlu0 %4798
      %4802 = vset.pattern.permute.xlu0 0
      %4803 = vperm.xlu0 %4802, %v4765
      %v4804 = vpop.permute.xlu0 %4803
      %4807 = vset.pattern.permute.xlu0 0
      %4808 = vperm.xlu0 %4807, %v4766
      %v4809 = vpop.permute.xlu0 %4808
      %4812 = vset.pattern.permute.xlu0 0
      %4813 = vperm.xlu0 %4812, %v4767
      %v4814 = vpop.permute.xlu0 %4813
      %4817 = vset.pattern.permute.xlu0 0
      %4818 = vperm.xlu0 %4817, %v4768
      %v4819 = vpop.permute.xlu0 %4818
      %4822 = vset.pattern.permute.xlu0 0
      %4823 = vperm.xlu0 %4822, %v4769
      %v4824 = vpop.permute.xlu0 %4823
      %4827 = vset.pattern.permute.xlu0 0
      %4828 = vperm.xlu0 %4827, %v4770
      %v4829 = vpop.permute.xlu0 %4828
      %4832 = vset.pattern.permute.xlu0 0
      %4833 = vperm.xlu0 %4832, %v4771
      %v4834 = vpop.permute.xlu0 %4833
      %4837 = vset.pattern.permute.xlu0 0
      %4838 = vperm.xlu0 %4837, %v4772
      %v4839 = vpop.permute.xlu0 %4838
      %4842 = vset.pattern.permute.xlu0 0
      %4843 = vperm.xlu0 %4842, %v4773
      %v4844 = vpop.permute.xlu0 %4843
      %4847 = vset.pattern.permute.xlu0 0
      %4848 = vperm.xlu0 %4847, %v4774
      %v4849 = vpop.permute.xlu0 %4848
      %4852 = vset.pattern.permute.xlu0 0
      %4853 = vperm.xlu0 %4852, %v4775
      %v4854 = vpop.permute.xlu0 %4853
      %4857 = vset.pattern.permute.xlu0 0
      %4858 = vperm.xlu0 %4857, %v4776
      %v4859 = vpop.permute.xlu0 %4858
      %4862 = vset.pattern.permute.xlu0 0
      %4863 = vperm.xlu0 %4862, %v4777
      %v4864 = vpop.permute.xlu0 %4863
      %4867 = vset.pattern.permute.xlu0 0
      %4868 = vperm.xlu0 %4867, %v4778
      %v4869 = vpop.permute.xlu0 %4868
      %4872 = vset.pattern.permute.xlu0 0
      %4873 = vperm.xlu0 %4872, %v4779
      %v4874 = vpop.permute.xlu0 %4873
      %4877 = vset.pattern.permute.xlu0 0
      %4878 = vperm.xlu0 %4877, %v4780
      %v4879 = vpop.permute.xlu0 %4878
      %4882 = vset.pattern.permute.xlu0 0
      %4883 = vperm.xlu0 %4882, %v4781
      %v4884 = vpop.permute.xlu0 %4883
      %4887 = vset.pattern.permute.xlu0 0
      %4888 = vperm.xlu0 %4887, %v4782
      %v4889 = vpop.permute.xlu0 %4888
      %4892 = vset.pattern.permute.xlu0 0
      %4893 = vperm.xlu0 %4892, %v4783
      %v4894 = vpop.permute.xlu0 %4893
      %4897 = vset.pattern.permute.xlu0 0
      %4898 = vperm.xlu0 %4897, %v4784
      %v4899 = vpop.permute.xlu0 %4898
      %4902 = vset.pattern.permute.xlu0 0
      %4903 = vperm.xlu0 %4902, %v4785
      %v4904 = vpop.permute.xlu0 %4903
      %4907 = vset.pattern.permute.xlu0 0
      %4908 = vperm.xlu0 %4907, %v4786
      %v4909 = vpop.permute.xlu0 %4908
      %4912 = vset.pattern.permute.xlu0 0
      %4913 = vperm.xlu0 %4912, %v4787
      %v4914 = vpop.permute.xlu0 %4913
      %4917 = vset.pattern.permute.xlu0 0
      %4918 = vperm.xlu0 %4917, %v4788
      %v4919 = vpop.permute.xlu0 %4918
      %4922 = vset.pattern.permute.xlu0 0
      %4923 = vperm.xlu0 %4922, %v4789
      %v4924 = vpop.permute.xlu0 %4923
      %4927 = vset.pattern.permute.xlu0 0
      %4928 = vperm.xlu0 %4927, %v4790
      %v4929 = vpop.permute.xlu0 %4928
      %4932 = vset.pattern.permute.xlu0 0
      %4933 = vperm.xlu0 %4932, %v4791
      %v4934 = vpop.permute.xlu0 %4933
      %4937 = vset.pattern.permute.xlu0 0
      %4938 = vperm.xlu0 %4937, %v4792
      %v4939 = vpop.permute.xlu0 %4938
      %4942 = vset.pattern.permute.xlu0 0
      %4943 = vperm.xlu0 %4942, %v4793
      %v4944 = vpop.permute.xlu0 %4943
      %4947 = vset.pattern.permute.xlu0 0
      %4948 = vperm.xlu0 %4947, %v4794
      %v4949 = vpop.permute.xlu0 %4948
      %4952 = vset.pattern.permute.xlu0 0
      %4953 = vperm.xlu0 %4952, %v4795
      %v4954 = vpop.permute.xlu0 %4953
      %v4988 = vunpack.c.l.b16 %v4683
      %v4989 = vunpack.c.h.b16 %v4683
      %v4990 = vunpack.c.l.b16 %v4684
      %v4991 = vunpack.c.h.b16 %v4684
      %v4992 = vunpack.c.l.b16 %v4685
      %v4993 = vunpack.c.h.b16 %v4685
      %v4994 = vunpack.c.l.b16 %v4686
      %v4995 = vunpack.c.h.b16 %v4686
      %v4996 = vunpack.c.l.b16 %v4687
      %v4997 = vunpack.c.h.b16 %v4687
      %v4998 = vunpack.c.l.b16 %v4688
      %v4999 = vunpack.c.h.b16 %v4688
      %v5000 = vunpack.c.l.b16 %v4689
      %v5001 = vunpack.c.h.b16 %v4689
      %v5002 = vunpack.c.l.b16 %v4690
      %v5003 = vunpack.c.h.b16 %v4690
      %v5004 = vunpack.c.l.b16 %v4691
      %v5005 = vunpack.c.h.b16 %v4691
      %v5006 = vunpack.c.l.b16 %v4692
      %v5007 = vunpack.c.h.b16 %v4692
      %v5008 = vunpack.c.l.b16 %v4693
      %v5009 = vunpack.c.h.b16 %v4693
      %v5010 = vunpack.c.l.b16 %v4694
      %v5011 = vunpack.c.h.b16 %v4694
      %v5012 = vunpack.c.l.b16 %v4695
      %v5013 = vunpack.c.h.b16 %v4695
      %v5014 = vunpack.c.l.b16 %v4696
      %v5015 = vunpack.c.h.b16 %v4696
      %v5016 = vunpack.c.l.b16 %v4697
      %v5017 = vunpack.c.h.b16 %v4697
      %v5018 = vunpack.c.l.b16 %v4698
      %v5019 = vunpack.c.h.b16 %v4698
      %v5020 = vunpack.c.l.b16 %v4699
      %v5021 = vunpack.c.h.b16 %v4699
      %v5022 = vunpack.c.l.b16 %v4700
      %v5023 = vunpack.c.h.b16 %v4700
      %v5024 = vunpack.c.l.b16 %v4701
      %v5025 = vunpack.c.h.b16 %v4701
      %v5026 = vunpack.c.l.b16 %v4702
      %v5027 = vunpack.c.h.b16 %v4702
      %v5028 = vunpack.c.l.b16 %v4703
      %v5029 = vunpack.c.h.b16 %v4703
      %v5030 = vunpack.c.l.b16 %v4704
      %v5031 = vunpack.c.h.b16 %v4704
      %v5032 = vunpack.c.l.b16 %v4705
      %v5033 = vunpack.c.h.b16 %v4705
      %v5034 = vunpack.c.l.b16 %v4706
      %v5035 = vunpack.c.h.b16 %v4706
      %v5036 = vunpack.c.l.b16 %v4707
      %v5037 = vunpack.c.h.b16 %v4707
      %v5038 = vunpack.c.l.b16 %v4708
      %v5039 = vunpack.c.h.b16 %v4708
      %v5040 = vunpack.c.l.b16 %v4709
      %v5041 = vunpack.c.h.b16 %v4709
      %v5042 = vunpack.c.l.b16 %v4710
      %v5043 = vunpack.c.h.b16 %v4710
      %v5044 = vunpack.c.l.b16 %v4711
      %v5045 = vunpack.c.h.b16 %v4711
      %v5046 = vunpack.c.l.b16 %v4712
      %v5047 = vunpack.c.h.b16 %v4712
      %v5048 = vunpack.c.l.b16 %v4713
      %v5049 = vunpack.c.h.b16 %v4713
      %v5050 = vunpack.c.l.b16 %v4714
      %v5051 = vunpack.c.h.b16 %v4714
      %v5052 = vpack.c.b16 %v4990, %v4988
      %v5053 = vpack.c.b16 %v4991, %v4989
      %v5054 = vpack.c.b16 %v4994, %v4992
      %v5055 = vpack.c.b16 %v4995, %v4993
      %v5056 = vpack.c.b16 %v4998, %v4996
      %v5057 = vpack.c.b16 %v4999, %v4997
      %v5058 = vpack.c.b16 %v5002, %v5000
      %v5059 = vpack.c.b16 %v5003, %v5001
      %v5060 = vpack.c.b16 %v5006, %v5004
      %v5061 = vpack.c.b16 %v5007, %v5005
      %v5062 = vpack.c.b16 %v5010, %v5008
      %v5063 = vpack.c.b16 %v5011, %v5009
      %v5064 = vpack.c.b16 %v5014, %v5012
      %v5065 = vpack.c.b16 %v5015, %v5013
      %v5066 = vpack.c.b16 %v5018, %v5016
      %v5067 = vpack.c.b16 %v5019, %v5017
      %v5068 = vpack.c.b16 %v5022, %v5020
      %v5069 = vpack.c.b16 %v5023, %v5021
      %v5070 = vpack.c.b16 %v5026, %v5024
      %v5071 = vpack.c.b16 %v5027, %v5025
      %v5072 = vpack.c.b16 %v5030, %v5028
      %v5073 = vpack.c.b16 %v5031, %v5029
      %v5074 = vpack.c.b16 %v5034, %v5032
      %v5075 = vpack.c.b16 %v5035, %v5033
      %v5076 = vpack.c.b16 %v5038, %v5036
      %v5077 = vpack.c.b16 %v5039, %v5037
      %v5078 = vpack.c.b16 %v5042, %v5040
      %v5079 = vpack.c.b16 %v5043, %v5041
      %v5080 = vpack.c.b16 %v5046, %v5044
      %v5081 = vpack.c.b16 %v5047, %v5045
      %v5082 = vpack.c.b16 %v5050, %v5048
      %v5083 = vpack.c.b16 %v5051, %v5049
      %5116 = vmatprep.subr.bf16.mxu0 0
      %5117 = vmatpush1.bf16.msra.mxu0 %v4754
      %5118 = vmatprep.subr.bf16.mxu0 0
      %5119 = vmatpush1.bf16.msra.mxu0 %v4753
      %5120 = vmatprep.subr.bf16.mxu0 0
      %5121 = vmatpush1.bf16.msra.mxu0 %v4752
      %5122 = vmatprep.subr.bf16.mxu0 0
      %5123 = vmatpush1.bf16.msra.mxu0 %v4751
      %5124 = vmatprep.subr.bf16.mxu0 0
      %5125 = vmatpush1.bf16.msra.mxu0 %v4750
      %5126 = vmatprep.subr.bf16.mxu0 0
      %5127 = vmatpush1.bf16.msra.mxu0 %v4749
      %5128 = vmatprep.subr.bf16.mxu0 0
      %5129 = vmatpush1.bf16.msra.mxu0 %v4748
      %5130 = vmatprep.subr.bf16.mxu0 0
      %5131 = vmatpush1.bf16.msra.mxu0 %v4747
      %5132 = vmatprep.subr.bf16.mxu0 0
      %5133 = vmatpush2.bf16.msra.mxu0 %v4762
      %5134 = vmatprep.subr.bf16.mxu0 0
      %5135 = vmatpush2.bf16.msra.mxu0 %v4761
      %5136 = vmatprep.subr.bf16.mxu0 0
      %5137 = vmatpush2.bf16.msra.mxu0 %v4760
      %5138 = vmatprep.subr.bf16.mxu0 0
      %5139 = vmatpush2.bf16.msra.mxu0 %v4759
      %5140 = vmatprep.subr.bf16.mxu0 0
      %5141 = vmatpush2.bf16.msra.mxu0 %v4758
      %5142 = vmatprep.subr.bf16.mxu0 0
      %5143 = vmatpush2.bf16.msra.mxu0 %v4757
      %5144 = vmatprep.subr.bf16.mxu0 0
      %5145 = vmatpush2.bf16.msra.mxu0 %v4756
      %5146 = vmatprep.subr.bf16.mxu0 0
      %5147 = vmatpush2.bf16.msra.mxu0 %v4755
      %5148 = vmatprep.mubr.bf16.mxu0 %v5053
      %5149 = vmatmul.mubr.bf16.gmra.mxu0 %v5052
      %v5150 = vpop.f32.mrf.mxu0
      %v5151 = vadd.f32 %v4799, %v5150
      %v5152 = vpop.f32.mrf.mxu0
      %v5153 = vpop.f32.mrf.mxu0
      %v5154 = vadd.f32 %v4804, %v5153
      %v5155 = vpop.f32.mrf.mxu0
      %5156 = vmatprep.mubr.bf16.mxu0 %v5055
      %5157 = vmatmul.mubr.bf16.gmra.mxu0 %v5054
      %v5158 = vpop.f32.mrf.mxu0
      %v5159 = vadd.f32 %v4809, %v5158
      %v5160 = vpop.f32.mrf.mxu0
      %v5161 = vpop.f32.mrf.mxu0
      %v5162 = vadd.f32 %v4814, %v5161
      %v5163 = vpop.f32.mrf.mxu0
      %5164 = vmatprep.mubr.bf16.mxu0 %v5057
      %5165 = vmatmul.mubr.bf16.gmra.mxu0 %v5056
      %v5166 = vpop.f32.mrf.mxu0
      %v5167 = vadd.f32 %v4819, %v5166
      %v5168 = vpop.f32.mrf.mxu0
      %v5169 = vpop.f32.mrf.mxu0
      %v5170 = vadd.f32 %v4824, %v5169
      %v5171 = vpop.f32.mrf.mxu0
      %5172 = vmatprep.mubr.bf16.mxu0 %v5059
      %5173 = vmatmul.mubr.bf16.gmra.mxu0 %v5058
      %v5174 = vpop.f32.mrf.mxu0
      %v5175 = vadd.f32 %v4829, %v5174
      %v5176 = vpop.f32.mrf.mxu0
      %v5177 = vpop.f32.mrf.mxu0
      %v5178 = vadd.f32 %v4834, %v5177
      %v5179 = vpop.f32.mrf.mxu0
      %5180 = vmatprep.mubr.bf16.mxu0 %v5061
      %5181 = vmatmul.mubr.bf16.gmra.mxu0 %v5060
      %v5182 = vpop.f32.mrf.mxu0
      %v5183 = vadd.f32 %v4839, %v5182
      %v5184 = vpop.f32.mrf.mxu0
      %v5185 = vpop.f32.mrf.mxu0
      %v5186 = vadd.f32 %v4844, %v5185
      %v5187 = vpop.f32.mrf.mxu0
      %5188 = vmatprep.mubr.bf16.mxu0 %v5063
      %5189 = vmatmul.mubr.bf16.gmra.mxu0 %v5062
      %v5190 = vpop.f32.mrf.mxu0
      %v5191 = vadd.f32 %v4849, %v5190
      %v5192 = vpop.f32.mrf.mxu0
      %v5193 = vpop.f32.mrf.mxu0
      %v5194 = vadd.f32 %v4854, %v5193
      %v5195 = vpop.f32.mrf.mxu0
      %5196 = vmatprep.mubr.bf16.mxu0 %v5065
      %5197 = vmatmul.mubr.bf16.gmra.mxu0 %v5064
      %v5198 = vpop.f32.mrf.mxu0
      %v5199 = vadd.f32 %v4859, %v5198
      %v5200 = vpop.f32.mrf.mxu0
      %v5201 = vpop.f32.mrf.mxu0
      %v5202 = vadd.f32 %v4864, %v5201
      %v5203 = vpop.f32.mrf.mxu0
      %5204 = vmatprep.mubr.bf16.mxu0 %v5067
      %5205 = vmatmul.mubr.bf16.gmra.mxu0 %v5066
      %v5206 = vpop.f32.mrf.mxu0
      %v5207 = vadd.f32 %v4869, %v5206
      %v5208 = vpop.f32.mrf.mxu0
      %v5209 = vpop.f32.mrf.mxu0
      %v5210 = vadd.f32 %v4874, %v5209
      %v5211 = vpop.f32.mrf.mxu0
      %5212 = vmatprep.mubr.bf16.mxu0 %v5069
      %5213 = vmatmul.mubr.bf16.gmra.mxu0 %v5068
      %v5214 = vpop.f32.mrf.mxu0
      %v5215 = vadd.f32 %v4879, %v5214
      %v5216 = vpop.f32.mrf.mxu0
      %v5217 = vpop.f32.mrf.mxu0
      %v5218 = vadd.f32 %v4884, %v5217
      %v5219 = vpop.f32.mrf.mxu0
      %5220 = vmatprep.mubr.bf16.mxu0 %v5071
      %5221 = vmatmul.mubr.bf16.gmra.mxu0 %v5070
      %v5222 = vpop.f32.mrf.mxu0
      %v5223 = vadd.f32 %v4889, %v5222
      %v5224 = vpop.f32.mrf.mxu0
      %v5225 = vpop.f32.mrf.mxu0
      %v5226 = vadd.f32 %v4894, %v5225
      %v5227 = vpop.f32.mrf.mxu0
      %5228 = vmatprep.mubr.bf16.mxu0 %v5073
      %5229 = vmatmul.mubr.bf16.gmra.mxu0 %v5072
      %v5230 = vpop.f32.mrf.mxu0
      %v5231 = vadd.f32 %v4899, %v5230
      %v5232 = vpop.f32.mrf.mxu0
      %v5233 = vpop.f32.mrf.mxu0
      %v5234 = vadd.f32 %v4904, %v5233
      %v5235 = vpop.f32.mrf.mxu0
      %5236 = vmatprep.mubr.bf16.mxu0 %v5075
      %5237 = vmatmul.mubr.bf16.gmra.mxu0 %v5074
      %v5238 = vpop.f32.mrf.mxu0
      %v5239 = vadd.f32 %v4909, %v5238
      %v5240 = vpop.f32.mrf.mxu0
      %v5241 = vpop.f32.mrf.mxu0
      %v5242 = vadd.f32 %v4914, %v5241
      %v5243 = vpop.f32.mrf.mxu0
      %5244 = vmatprep.mubr.bf16.mxu0 %v5077
      %5245 = vmatmul.mubr.bf16.gmra.mxu0 %v5076
      %v5246 = vpop.f32.mrf.mxu0
      %v5247 = vadd.f32 %v4919, %v5246
      %v5248 = vpop.f32.mrf.mxu0
      %v5249 = vpop.f32.mrf.mxu0
      %v5250 = vadd.f32 %v4924, %v5249
      %v5251 = vpop.f32.mrf.mxu0
      %5252 = vmatprep.mubr.bf16.mxu0 %v5079
      %5253 = vmatmul.mubr.bf16.gmra.mxu0 %v5078
      %v5254 = vpop.f32.mrf.mxu0
      %v5255 = vadd.f32 %v4929, %v5254
      %v5256 = vpop.f32.mrf.mxu0
      %v5257 = vpop.f32.mrf.mxu0
      %v5258 = vadd.f32 %v4934, %v5257
      %v5259 = vpop.f32.mrf.mxu0
      %5260 = vmatprep.mubr.bf16.mxu0 %v5081
      %5261 = vmatmul.mubr.bf16.gmra.mxu0 %v5080
      %v5262 = vpop.f32.mrf.mxu0
      %v5263 = vadd.f32 %v4939, %v5262
      %v5264 = vpop.f32.mrf.mxu0
      %v5265 = vpop.f32.mrf.mxu0
      %v5266 = vadd.f32 %v4944, %v5265
      %v5267 = vpop.f32.mrf.mxu0
      %5268 = vmatprep.mubr.bf16.mxu0 %v5083
      %5269 = vmatmul.mubr.bf16.gmra.mxu0 %v5082
      %v5270 = vpop.f32.mrf.mxu0
      %v5271 = vadd.f32 %v4949, %v5270
      %v5272 = vpop.f32.mrf.mxu0
      %v5273 = vpop.f32.mrf.mxu0
      %v5274 = vadd.f32 %v4954, %v5273
      %v5275 = vpop.f32.mrf.mxu0
      %5276 = vdwg.mxu0
      %vm5277 = vcmp.ge.f32.partialorder %v5151, 0.0
      %vm5278 = vcmp.ge.f32.partialorder %v5154, 0.0
      %vm5279 = vcmp.ge.f32.partialorder %v5159, 0.0
      %vm5280 = vcmp.ge.f32.partialorder %v5162, 0.0
      %vm5281 = vcmp.ge.f32.partialorder %v5167, 0.0
      %vm5282 = vcmp.ge.f32.partialorder %v5170, 0.0
      %vm5283 = vcmp.ge.f32.partialorder %v5175, 0.0
      %vm5284 = vcmp.ge.f32.partialorder %v5178, 0.0
      %vm5285 = vcmp.ge.f32.partialorder %v5183, 0.0
      %vm5286 = vcmp.ge.f32.partialorder %v5186, 0.0
      %vm5287 = vcmp.ge.f32.partialorder %v5191, 0.0
      %vm5288 = vcmp.ge.f32.partialorder %v5194, 0.0
      %vm5289 = vcmp.ge.f32.partialorder %v5199, 0.0
      %vm5290 = vcmp.ge.f32.partialorder %v5202, 0.0
      %vm5291 = vcmp.ge.f32.partialorder %v5207, 0.0
      %vm5292 = vcmp.ge.f32.partialorder %v5210, 0.0
      %vm5293 = vcmp.ge.f32.partialorder %v5215, 0.0
      %vm5294 = vcmp.ge.f32.partialorder %v5218, 0.0
      %vm5295 = vcmp.ge.f32.partialorder %v5223, 0.0
      %vm5296 = vcmp.ge.f32.partialorder %v5226, 0.0
      %vm5297 = vcmp.ge.f32.partialorder %v5231, 0.0
      %vm5298 = vcmp.ge.f32.partialorder %v5234, 0.0
      %vm5299 = vcmp.ge.f32.partialorder %v5239, 0.0
      %vm5300 = vcmp.ge.f32.partialorder %v5242, 0.0
      %vm5301 = vcmp.ge.f32.partialorder %v5247, 0.0
      %vm5302 = vcmp.ge.f32.partialorder %v5250, 0.0
      %vm5303 = vcmp.ge.f32.partialorder %v5255, 0.0
      %vm5304 = vcmp.ge.f32.partialorder %v5258, 0.0
      %vm5305 = vcmp.ge.f32.partialorder %v5263, 0.0
      %vm5306 = vcmp.ge.f32.partialorder %v5266, 0.0
      %vm5307 = vcmp.ge.f32.partialorder %v5271, 0.0
      %vm5308 = vcmp.ge.f32.partialorder %v5274, 0.0
      %v5309 = vmul.f32 %v5151, 0.2
      %v5310 = vmul.f32 %v5154, 0.2
      %v5311 = vmul.f32 %v5159, 0.2
      %v5312 = vmul.f32 %v5162, 0.2
      %v5313 = vmul.f32 %v5167, 0.2
      %v5314 = vmul.f32 %v5170, 0.2
      %v5315 = vmul.f32 %v5175, 0.2
      %v5316 = vmul.f32 %v5178, 0.2
      %v5317 = vmul.f32 %v5183, 0.2
      %v5318 = vmul.f32 %v5186, 0.2
      %v5319 = vmul.f32 %v5191, 0.2
      %v5320 = vmul.f32 %v5194, 0.2
      %v5321 = vmul.f32 %v5199, 0.2
      %v5322 = vmul.f32 %v5202, 0.2
      %v5323 = vmul.f32 %v5207, 0.2
      %v5324 = vmul.f32 %v5210, 0.2
      %v5325 = vmul.f32 %v5215, 0.2
      %v5326 = vmul.f32 %v5218, 0.2
      %v5327 = vmul.f32 %v5223, 0.2
      %v5328 = vmul.f32 %v5226, 0.2
      %v5329 = vmul.f32 %v5231, 0.2
      %v5330 = vmul.f32 %v5234, 0.2
      %v5331 = vmul.f32 %v5239, 0.2
      %v5332 = vmul.f32 %v5242, 0.2
      %v5333 = vmul.f32 %v5247, 0.2
      %v5334 = vmul.f32 %v5250, 0.2
      %v5335 = vmul.f32 %v5255, 0.2
      %v5336 = vmul.f32 %v5258, 0.2
      %v5337 = vmul.f32 %v5263, 0.2
      %v5338 = vmul.f32 %v5266, 0.2
      %v5339 = vmul.f32 %v5271, 0.2
      %v5340 = vmul.f32 %v5274, 0.2
      %v5341 = vsel %vm5277, %v5151, %v5309
      %v5342 = vsel %vm5278, %v5154, %v5310
      %v5343 = vsel %vm5279, %v5159, %v5311
      %v5344 = vsel %vm5280, %v5162, %v5312
      %v5345 = vsel %vm5281, %v5167, %v5313
      %v5346 = vsel %vm5282, %v5170, %v5314
      %v5347 = vsel %vm5283, %v5175, %v5315
      %v5348 = vsel %vm5284, %v5178, %v5316
      %v5349 = vsel %vm5285, %v5183, %v5317
      %v5350 = vsel %vm5286, %v5186, %v5318
      %v5351 = vsel %vm5287, %v5191, %v5319
      %v5352 = vsel %vm5288, %v5194, %v5320
      %v5353 = vsel %vm5289, %v5199, %v5321
      %v5354 = vsel %vm5290, %v5202, %v5322
      %v5355 = vsel %vm5291, %v5207, %v5323
      %v5356 = vsel %vm5292, %v5210, %v5324
      %v5357 = vsel %vm5293, %v5215, %v5325
      %v5358 = vsel %vm5294, %v5218, %v5326
      %v5359 = vsel %vm5295, %v5223, %v5327
      %v5360 = vsel %vm5296, %v5226, %v5328
      %v5361 = vsel %vm5297, %v5231, %v5329
      %v5362 = vsel %vm5298, %v5234, %v5330
      %v5363 = vsel %vm5299, %v5239, %v5331
      %v5364 = vsel %vm5300, %v5242, %v5332
      %v5365 = vsel %vm5301, %v5247, %v5333
      %v5366 = vsel %vm5302, %v5250, %v5334
      %v5367 = vsel %vm5303, %v5255, %v5335
      %v5368 = vsel %vm5304, %v5258, %v5336
      %v5369 = vsel %vm5305, %v5263, %v5337
      %v5370 = vsel %vm5306, %v5266, %v5338
      %v5371 = vsel %vm5307, %v5271, %v5339
      %v5372 = vsel %vm5308, %v5274, %v5340
      %v5373 = vadd.f32 %v3149, %v5341
      %v5374 = vadd.f32 %v3150, %v5342
      %v5375 = vadd.f32 %v3151, %v5343
      %v5376 = vadd.f32 %v3152, %v5344
      %v5377 = vadd.f32 %v3153, %v5345
      %v5378 = vadd.f32 %v3154, %v5346
      %v5379 = vadd.f32 %v3155, %v5347
      %v5380 = vadd.f32 %v3156, %v5348
      %v5381 = vadd.f32 %v3157, %v5349
      %v5382 = vadd.f32 %v3158, %v5350
      %v5383 = vadd.f32 %v3159, %v5351
      %v5384 = vadd.f32 %v3160, %v5352
      %v5385 = vadd.f32 %v3161, %v5353
      %v5386 = vadd.f32 %v3162, %v5354
      %v5387 = vadd.f32 %v3163, %v5355
      %v5388 = vadd.f32 %v3164, %v5356
      %v5389 = vadd.f32 %v3165, %v5357
      %v5390 = vadd.f32 %v3166, %v5358
      %v5391 = vadd.f32 %v3167, %v5359
      %v5392 = vadd.f32 %v3168, %v5360
      %v5393 = vadd.f32 %v3169, %v5361
      %v5394 = vadd.f32 %v3170, %v5362
      %v5395 = vadd.f32 %v3171, %v5363
      %v5396 = vadd.f32 %v3172, %v5364
      %v5397 = vadd.f32 %v3173, %v5365
      %v5398 = vadd.f32 %v3174, %v5366
      %v5399 = vadd.f32 %v3175, %v5367
      %v5400 = vadd.f32 %v3176, %v5368
      %v5401 = vadd.f32 %v3177, %v5369
      %v5402 = vadd.f32 %v3178, %v5370
      %v5403 = vadd.f32 %v3179, %v5371
      %v5404 = vadd.f32 %v3180, %v5372
      %v5405 = vpack.c.bf16 %v5374, %v5373
      %v5406 = vpack.c.bf16 %v5376, %v5375
      %v5407 = vpack.c.bf16 %v5378, %v5377
      %v5408 = vpack.c.bf16 %v5380, %v5379
      %v5409 = vpack.c.bf16 %v5382, %v5381
      %v5410 = vpack.c.bf16 %v5384, %v5383
      %v5411 = vpack.c.bf16 %v5386, %v5385
      %v5412 = vpack.c.bf16 %v5388, %v5387
      %v5413 = vpack.c.bf16 %v5390, %v5389
      %v5414 = vpack.c.bf16 %v5392, %v5391
      %v5415 = vpack.c.bf16 %v5394, %v5393
      %v5416 = vpack.c.bf16 %v5396, %v5395
      %v5417 = vpack.c.bf16 %v5398, %v5397
      %v5418 = vpack.c.bf16 %v5400, %v5399
      %v5419 = vpack.c.bf16 %v5402, %v5401
      %v5420 = vpack.c.bf16 %v5404, %v5403
      %s5421 = scalar_lea.vmem %s7, 256
      %v5422 = vld [vmem:[%s5421] sm:$0xff]
      %v5423 = vld [vmem:[%s5421 + $0x8] sm:$0xff]
      %v5424 = vld [vmem:[%s5421 + $0x10] sm:$0xff]
      %v5425 = vld [vmem:[%s5421 + $0x18] sm:$0xff]
      %v5426 = vld [vmem:[%s5421 + $0x20] sm:$0xff]
      %v5427 = vld [vmem:[%s5421 + $0x28] sm:$0xff]
      %v5428 = vld [vmem:[%s5421 + $0x30] sm:$0xff]
      %v5429 = vld [vmem:[%s5421 + $0x38] sm:$0xff]
      %v5430 = vld [vmem:[%s5421 + $0x40] sm:$0xff]
      %v5431 = vld [vmem:[%s5421 + $0x48] sm:$0xff]
      %v5432 = vld [vmem:[%s5421 + $0x50] sm:$0xff]
      %v5433 = vld [vmem:[%s5421 + $0x58] sm:$0xff]
      %v5434 = vld [vmem:[%s5421 + $0x60] sm:$0xff]
      %v5435 = vld [vmem:[%s5421 + $0x68] sm:$0xff]
      %v5436 = vld [vmem:[%s5421 + $0x70] sm:$0xff]
      %v5437 = vld [vmem:[%s5421 + $0x78] sm:$0xff]
      %v5438 = vld [vmem:[%s5421 + $0x80] sm:$0xff]
      %v5439 = vld [vmem:[%s5421 + $0x88] sm:$0xff]
      %v5440 = vld [vmem:[%s5421 + $0x90] sm:$0xff]
      %v5441 = vld [vmem:[%s5421 + $0x98] sm:$0xff]
      %v5442 = vld [vmem:[%s5421 + $0xa0] sm:$0xff]
      %v5443 = vld [vmem:[%s5421 + $0xa8] sm:$0xff]
      %v5444 = vld [vmem:[%s5421 + $0xb0] sm:$0xff]
      %v5445 = vld [vmem:[%s5421 + $0xb8] sm:$0xff]
      %v5446 = vld [vmem:[%s5421 + $0xc0] sm:$0xff]
      %v5447 = vld [vmem:[%s5421 + $0xc8] sm:$0xff]
      %v5448 = vld [vmem:[%s5421 + $0xd0] sm:$0xff]
      %v5449 = vld [vmem:[%s5421 + $0xd8] sm:$0xff]
      %v5450 = vld [vmem:[%s5421 + $0xe0] sm:$0xff]
      %v5451 = vld [vmem:[%s5421 + $0xe8] sm:$0xff]
      %v5452 = vld [vmem:[%s5421 + $0xf0] sm:$0xff]
      %v5453 = vld [vmem:[%s5421 + $0xf8] sm:$0xff]
      %v5486 = vunpack.c.l.b16 %v5422
      %v5487 = vunpack.c.h.b16 %v5422
      %v5488 = vunpack.c.l.b16 %v5423
      %v5489 = vunpack.c.h.b16 %v5423
      %v5490 = vunpack.c.l.b16 %v5424
      %v5491 = vunpack.c.h.b16 %v5424
      %v5492 = vunpack.c.l.b16 %v5425
      %v5493 = vunpack.c.h.b16 %v5425
      %v5494 = vunpack.c.l.b16 %v5426
      %v5495 = vunpack.c.h.b16 %v5426
      %v5496 = vunpack.c.l.b16 %v5427
      %v5497 = vunpack.c.h.b16 %v5427
      %v5498 = vunpack.c.l.b16 %v5428
      %v5499 = vunpack.c.h.b16 %v5428
      %v5500 = vunpack.c.l.b16 %v5429
      %v5501 = vunpack.c.h.b16 %v5429
      %v5502 = vunpack.c.l.b16 %v5430
      %v5503 = vunpack.c.h.b16 %v5430
      %v5504 = vunpack.c.l.b16 %v5431
      %v5505 = vunpack.c.h.b16 %v5431
      %v5506 = vunpack.c.l.b16 %v5432
      %v5507 = vunpack.c.h.b16 %v5432
      %v5508 = vunpack.c.l.b16 %v5433
      %v5509 = vunpack.c.h.b16 %v5433
      %v5510 = vunpack.c.l.b16 %v5434
      %v5511 = vunpack.c.h.b16 %v5434
      %v5512 = vunpack.c.l.b16 %v5435
      %v5513 = vunpack.c.h.b16 %v5435
      %v5514 = vunpack.c.l.b16 %v5436
      %v5515 = vunpack.c.h.b16 %v5436
      %v5516 = vunpack.c.l.b16 %v5437
      %v5517 = vunpack.c.h.b16 %v5437
      %v5518 = vunpack.c.l.b16 %v5438
      %v5519 = vunpack.c.h.b16 %v5438
      %v5520 = vunpack.c.l.b16 %v5439
      %v5521 = vunpack.c.h.b16 %v5439
      %v5522 = vunpack.c.l.b16 %v5440
      %v5523 = vunpack.c.h.b16 %v5440
      %v5524 = vunpack.c.l.b16 %v5441
      %v5525 = vunpack.c.h.b16 %v5441
      %v5526 = vunpack.c.l.b16 %v5442
      %v5527 = vunpack.c.h.b16 %v5442
      %v5528 = vunpack.c.l.b16 %v5443
      %v5529 = vunpack.c.h.b16 %v5443
      %v5530 = vunpack.c.l.b16 %v5444
      %v5531 = vunpack.c.h.b16 %v5444
      %v5532 = vunpack.c.l.b16 %v5445
      %v5533 = vunpack.c.h.b16 %v5445
      %v5534 = vunpack.c.l.b16 %v5446
      %v5535 = vunpack.c.h.b16 %v5446
      %v5536 = vunpack.c.l.b16 %v5447
      %v5537 = vunpack.c.h.b16 %v5447
      %v5538 = vunpack.c.l.b16 %v5448
      %v5539 = vunpack.c.h.b16 %v5448
      %v5540 = vunpack.c.l.b16 %v5449
      %v5541 = vunpack.c.h.b16 %v5449
      %v5542 = vunpack.c.l.b16 %v5450
      %v5543 = vunpack.c.h.b16 %v5450
      %v5544 = vunpack.c.l.b16 %v5451
      %v5545 = vunpack.c.h.b16 %v5451
      %v5546 = vunpack.c.l.b16 %v5452
      %v5547 = vunpack.c.h.b16 %v5452
      %v5548 = vunpack.c.l.b16 %v5453
      %v5549 = vunpack.c.h.b16 %v5453
      %v5550 = vpack.c.b16 %v5488, %v5486
      %v5551 = vpack.c.b16 %v5489, %v5487
      %v5552 = vpack.c.b16 %v5492, %v5490
      %v5553 = vpack.c.b16 %v5493, %v5491
      %v5554 = vpack.c.b16 %v5496, %v5494
      %v5555 = vpack.c.b16 %v5497, %v5495
      %v5556 = vpack.c.b16 %v5500, %v5498
      %v5557 = vpack.c.b16 %v5501, %v5499
      %v5558 = vpack.c.b16 %v5504, %v5502
      %v5559 = vpack.c.b16 %v5505, %v5503
      %v5560 = vpack.c.b16 %v5508, %v5506
      %v5561 = vpack.c.b16 %v5509, %v5507
      %v5562 = vpack.c.b16 %v5512, %v5510
      %v5563 = vpack.c.b16 %v5513, %v5511
      %v5564 = vpack.c.b16 %v5516, %v5514
      %v5565 = vpack.c.b16 %v5517, %v5515
      %v5566 = vpack.c.b16 %v5520, %v5518
      %v5567 = vpack.c.b16 %v5521, %v5519
      %v5568 = vpack.c.b16 %v5524, %v5522
      %v5569 = vpack.c.b16 %v5525, %v5523
      %v5570 = vpack.c.b16 %v5528, %v5526
      %v5571 = vpack.c.b16 %v5529, %v5527
      %v5572 = vpack.c.b16 %v5532, %v5530
      %v5573 = vpack.c.b16 %v5533, %v5531
      %v5574 = vpack.c.b16 %v5536, %v5534
      %v5575 = vpack.c.b16 %v5537, %v5535
      %v5576 = vpack.c.b16 %v5540, %v5538
      %v5577 = vpack.c.b16 %v5541, %v5539
      %v5578 = vpack.c.b16 %v5544, %v5542
      %v5579 = vpack.c.b16 %v5545, %v5543
      %v5580 = vpack.c.b16 %v5548, %v5546
      %v5581 = vpack.c.b16 %v5549, %v5547
      %5614 = vmatprep.subr.bf16.mxu0 0
      %5615 = vmatpush1.bf16.msra.mxu0 %v5412
      %5616 = vmatprep.subr.bf16.mxu0 0
      %5617 = vmatpush1.bf16.msra.mxu0 %v5411
      %5618 = vmatprep.subr.bf16.mxu0 0
      %5619 = vmatpush1.bf16.msra.mxu0 %v5410
      %5620 = vmatprep.subr.bf16.mxu0 0
      %5621 = vmatpush1.bf16.msra.mxu0 %v5409
      %5622 = vmatprep.subr.bf16.mxu0 0
      %5623 = vmatpush1.bf16.msra.mxu0 %v5408
      %5624 = vmatprep.subr.bf16.mxu0 0
      %5625 = vmatpush1.bf16.msra.mxu0 %v5407
      %5626 = vmatprep.subr.bf16.mxu0 0
      %5627 = vmatpush1.bf16.msra.mxu0 %v5406
      %5628 = vmatprep.subr.bf16.mxu0 0
      %5629 = vmatpush1.bf16.msra.mxu0 %v5405
      %5630 = vmatprep.subr.bf16.mxu0 0
      %5631 = vmatpush2.bf16.msra.mxu0 %v5420
      %5632 = vmatprep.subr.bf16.mxu0 0
      %5633 = vmatpush2.bf16.msra.mxu0 %v5419
      %5634 = vmatprep.subr.bf16.mxu0 0
      %5635 = vmatpush2.bf16.msra.mxu0 %v5418
      %5636 = vmatprep.subr.bf16.mxu0 0
      %5637 = vmatpush2.bf16.msra.mxu0 %v5417
      %5638 = vmatprep.subr.bf16.mxu0 0
      %5639 = vmatpush2.bf16.msra.mxu0 %v5416
      %5640 = vmatprep.subr.bf16.mxu0 0
      %5641 = vmatpush2.bf16.msra.mxu0 %v5415
      %5642 = vmatprep.subr.bf16.mxu0 0
      %5643 = vmatpush2.bf16.msra.mxu0 %v5414
      %5644 = vmatprep.subr.bf16.mxu0 0
      %5645 = vmatpush2.bf16.msra.mxu0 %v5413
      %5646 = vmatprep.mubr.bf16.mxu0 %v5551
      %5647 = vmatmul.mubr.bf16.gmra.mxu0 %v5550
      %v5648 = vpop.f32.mrf.mxu0
      %v5649 = vadd.f32 0.0, %v5648
      %v5650 = vpop.f32.mrf.mxu0
      %v5651 = vpop.f32.mrf.mxu0
      %v5652 = vadd.f32 0.0, %v5651
      %v5653 = vpop.f32.mrf.mxu0
      %5654 = vmatprep.mubr.bf16.mxu0 %v5553
      %5655 = vmatmul.mubr.bf16.gmra.mxu0 %v5552
      %v5656 = vpop.f32.mrf.mxu0
      %v5657 = vadd.f32 0.0, %v5656
      %v5658 = vpop.f32.mrf.mxu0
      %v5659 = vpop.f32.mrf.mxu0
      %v5660 = vadd.f32 0.0, %v5659
      %v5661 = vpop.f32.mrf.mxu0
      %5662 = vmatprep.mubr.bf16.mxu0 %v5555
      %5663 = vmatmul.mubr.bf16.gmra.mxu0 %v5554
      %v5664 = vpop.f32.mrf.mxu0
      %v5665 = vadd.f32 0.0, %v5664
      %v5666 = vpop.f32.mrf.mxu0
      %v5667 = vpop.f32.mrf.mxu0
      %v5668 = vadd.f32 0.0, %v5667
      %v5669 = vpop.f32.mrf.mxu0
      %5670 = vmatprep.mubr.bf16.mxu0 %v5557
      %5671 = vmatmul.mubr.bf16.gmra.mxu0 %v5556
      %v5672 = vpop.f32.mrf.mxu0
      %v5673 = vadd.f32 0.0, %v5672
      %v5674 = vpop.f32.mrf.mxu0
      %v5675 = vpop.f32.mrf.mxu0
      %v5676 = vadd.f32 0.0, %v5675
      %v5677 = vpop.f32.mrf.mxu0
      %5678 = vmatprep.mubr.bf16.mxu0 %v5559
      %5679 = vmatmul.mubr.bf16.gmra.mxu0 %v5558
      %v5680 = vpop.f32.mrf.mxu0
      %v5681 = vadd.f32 0.0, %v5680
      %v5682 = vpop.f32.mrf.mxu0
      %v5683 = vpop.f32.mrf.mxu0
      %v5684 = vadd.f32 0.0, %v5683
      %v5685 = vpop.f32.mrf.mxu0
      %5686 = vmatprep.mubr.bf16.mxu0 %v5561
      %5687 = vmatmul.mubr.bf16.gmra.mxu0 %v5560
      %v5688 = vpop.f32.mrf.mxu0
      %v5689 = vadd.f32 0.0, %v5688
      %v5690 = vpop.f32.mrf.mxu0
      %v5691 = vpop.f32.mrf.mxu0
      %v5692 = vadd.f32 0.0, %v5691
      %v5693 = vpop.f32.mrf.mxu0
      %5694 = vmatprep.mubr.bf16.mxu0 %v5563
      %5695 = vmatmul.mubr.bf16.gmra.mxu0 %v5562
      %v5696 = vpop.f32.mrf.mxu0
      %v5697 = vadd.f32 0.0, %v5696
      %v5698 = vpop.f32.mrf.mxu0
      %v5699 = vpop.f32.mrf.mxu0
      %v5700 = vadd.f32 0.0, %v5699
      %v5701 = vpop.f32.mrf.mxu0
      %5702 = vmatprep.mubr.bf16.mxu0 %v5565
      %5703 = vmatmul.mubr.bf16.gmra.mxu0 %v5564
      %v5704 = vpop.f32.mrf.mxu0
      %v5705 = vadd.f32 0.0, %v5704
      %v5706 = vpop.f32.mrf.mxu0
      %v5707 = vpop.f32.mrf.mxu0
      %v5708 = vadd.f32 0.0, %v5707
      %v5709 = vpop.f32.mrf.mxu0
      %5710 = vmatprep.mubr.bf16.mxu0 %v5567
      %5711 = vmatmul.mubr.bf16.gmra.mxu0 %v5566
      %v5712 = vpop.f32.mrf.mxu0
      %v5713 = vadd.f32 0.0, %v5712
      %v5714 = vpop.f32.mrf.mxu0
      %v5715 = vpop.f32.mrf.mxu0
      %v5716 = vadd.f32 0.0, %v5715
      %v5717 = vpop.f32.mrf.mxu0
      %5718 = vmatprep.mubr.bf16.mxu0 %v5569
      %5719 = vmatmul.mubr.bf16.gmra.mxu0 %v5568
      %v5720 = vpop.f32.mrf.mxu0
      %v5721 = vadd.f32 0.0, %v5720
      %v5722 = vpop.f32.mrf.mxu0
      %v5723 = vpop.f32.mrf.mxu0
      %v5724 = vadd.f32 0.0, %v5723
      %v5725 = vpop.f32.mrf.mxu0
      %5726 = vmatprep.mubr.bf16.mxu0 %v5571
      %5727 = vmatmul.mubr.bf16.gmra.mxu0 %v5570
      %v5728 = vpop.f32.mrf.mxu0
      %v5729 = vadd.f32 0.0, %v5728
      %v5730 = vpop.f32.mrf.mxu0
      %v5731 = vpop.f32.mrf.mxu0
      %v5732 = vadd.f32 0.0, %v5731
      %v5733 = vpop.f32.mrf.mxu0
      %5734 = vmatprep.mubr.bf16.mxu0 %v5573
      %5735 = vmatmul.mubr.bf16.gmra.mxu0 %v5572
      %v5736 = vpop.f32.mrf.mxu0
      %v5737 = vadd.f32 0.0, %v5736
      %v5738 = vpop.f32.mrf.mxu0
      %v5739 = vpop.f32.mrf.mxu0
      %v5740 = vadd.f32 0.0, %v5739
      %v5741 = vpop.f32.mrf.mxu0
      %5742 = vmatprep.mubr.bf16.mxu0 %v5575
      %5743 = vmatmul.mubr.bf16.gmra.mxu0 %v5574
      %v5744 = vpop.f32.mrf.mxu0
      %v5745 = vadd.f32 0.0, %v5744
      %v5746 = vpop.f32.mrf.mxu0
      %v5747 = vpop.f32.mrf.mxu0
      %v5748 = vadd.f32 0.0, %v5747
      %v5749 = vpop.f32.mrf.mxu0
      %5750 = vmatprep.mubr.bf16.mxu0 %v5577
      %5751 = vmatmul.mubr.bf16.gmra.mxu0 %v5576
      %v5752 = vpop.f32.mrf.mxu0
      %v5753 = vadd.f32 0.0, %v5752
      %v5754 = vpop.f32.mrf.mxu0
      %v5755 = vpop.f32.mrf.mxu0
      %v5756 = vadd.f32 0.0, %v5755
      %v5757 = vpop.f32.mrf.mxu0
      %5758 = vmatprep.mubr.bf16.mxu0 %v5579
      %5759 = vmatmul.mubr.bf16.gmra.mxu0 %v5578
      %v5760 = vpop.f32.mrf.mxu0
      %v5761 = vadd.f32 0.0, %v5760
      %v5762 = vpop.f32.mrf.mxu0
      %v5763 = vpop.f32.mrf.mxu0
      %v5764 = vadd.f32 0.0, %v5763
      %v5765 = vpop.f32.mrf.mxu0
      %5766 = vmatprep.mubr.bf16.mxu0 %v5581
      %5767 = vmatmul.mubr.bf16.gmra.mxu0 %v5580
      %v5768 = vpop.f32.mrf.mxu0
      %v5769 = vadd.f32 0.0, %v5768
      %v5770 = vpop.f32.mrf.mxu0
      %v5771 = vpop.f32.mrf.mxu0
      %v5772 = vadd.f32 0.0, %v5771
      %v5773 = vpop.f32.mrf.mxu0
      %5774 = vdwg.mxu0
      %v5807 = vunpack.c.l.b16 %v3197
      %v5808 = vunpack.c.h.b16 %v3197
      %v5809 = vunpack.c.l.b16 %v3198
      %v5810 = vunpack.c.h.b16 %v3198
      %v5811 = vunpack.c.l.b16 %v3199
      %v5812 = vunpack.c.h.b16 %v3199
      %v5813 = vunpack.c.l.b16 %v3200
      %v5814 = vunpack.c.h.b16 %v3200
      %v5815 = vunpack.c.l.b16 %v3201
      %v5816 = vunpack.c.h.b16 %v3201
      %v5817 = vunpack.c.l.b16 %v3202
      %v5818 = vunpack.c.h.b16 %v3202
      %v5819 = vunpack.c.l.b16 %v3203
      %v5820 = vunpack.c.h.b16 %v3203
      %v5821 = vunpack.c.l.b16 %v3204
      %v5822 = vunpack.c.h.b16 %v3204
      %v5823 = vunpack.c.l.b16 %v3205
      %v5824 = vunpack.c.h.b16 %v3205
      %v5825 = vunpack.c.l.b16 %v3206
      %v5826 = vunpack.c.h.b16 %v3206
      %v5827 = vunpack.c.l.b16 %v3207
      %v5828 = vunpack.c.h.b16 %v3207
      %v5829 = vunpack.c.l.b16 %v3208
      %v5830 = vunpack.c.h.b16 %v3208
      %v5831 = vunpack.c.l.b16 %v3209
      %v5832 = vunpack.c.h.b16 %v3209
      %v5833 = vunpack.c.l.b16 %v3210
      %v5834 = vunpack.c.h.b16 %v3210
      %v5835 = vunpack.c.l.b16 %v3211
      %v5836 = vunpack.c.h.b16 %v3211
      %v5837 = vunpack.c.l.b16 %v3212
      %v5838 = vunpack.c.h.b16 %v3212
      %v5839 = vunpack.c.l.b16 %v3213
      %v5840 = vunpack.c.h.b16 %v3213
      %v5841 = vunpack.c.l.b16 %v3214
      %v5842 = vunpack.c.h.b16 %v3214
      %v5843 = vunpack.c.l.b16 %v3215
      %v5844 = vunpack.c.h.b16 %v3215
      %v5845 = vunpack.c.l.b16 %v3216
      %v5846 = vunpack.c.h.b16 %v3216
      %v5847 = vunpack.c.l.b16 %v3217
      %v5848 = vunpack.c.h.b16 %v3217
      %v5849 = vunpack.c.l.b16 %v3218
      %v5850 = vunpack.c.h.b16 %v3218
      %v5851 = vunpack.c.l.b16 %v3219
      %v5852 = vunpack.c.h.b16 %v3219
      %v5853 = vunpack.c.l.b16 %v3220
      %v5854 = vunpack.c.h.b16 %v3220
      %v5855 = vunpack.c.l.b16 %v3221
      %v5856 = vunpack.c.h.b16 %v3221
      %v5857 = vunpack.c.l.b16 %v3222
      %v5858 = vunpack.c.h.b16 %v3222
      %v5859 = vunpack.c.l.b16 %v3223
      %v5860 = vunpack.c.h.b16 %v3223
      %v5861 = vunpack.c.l.b16 %v3224
      %v5862 = vunpack.c.h.b16 %v3224
      %v5863 = vunpack.c.l.b16 %v3225
      %v5864 = vunpack.c.h.b16 %v3225
      %v5865 = vunpack.c.l.b16 %v3226
      %v5866 = vunpack.c.h.b16 %v3226
      %v5867 = vunpack.c.l.b16 %v3227
      %v5868 = vunpack.c.h.b16 %v3227
      %v5869 = vunpack.c.l.b16 %v3228
      %v5870 = vunpack.c.h.b16 %v3228
      %v5871 = vpack.c.b16 %v5809, %v5807
      %v5872 = vpack.c.b16 %v5810, %v5808
      %v5873 = vpack.c.b16 %v5813, %v5811
      %v5874 = vpack.c.b16 %v5814, %v5812
      %v5875 = vpack.c.b16 %v5817, %v5815
      %v5876 = vpack.c.b16 %v5818, %v5816
      %v5877 = vpack.c.b16 %v5821, %v5819
      %v5878 = vpack.c.b16 %v5822, %v5820
      %v5879 = vpack.c.b16 %v5825, %v5823
      %v5880 = vpack.c.b16 %v5826, %v5824
      %v5881 = vpack.c.b16 %v5829, %v5827
      %v5882 = vpack.c.b16 %v5830, %v5828
      %v5883 = vpack.c.b16 %v5833, %v5831
      %v5884 = vpack.c.b16 %v5834, %v5832
      %v5885 = vpack.c.b16 %v5837, %v5835
      %v5886 = vpack.c.b16 %v5838, %v5836
      %v5887 = vpack.c.b16 %v5841, %v5839
      %v5888 = vpack.c.b16 %v5842, %v5840
      %v5889 = vpack.c.b16 %v5845, %v5843
      %v5890 = vpack.c.b16 %v5846, %v5844
      %v5891 = vpack.c.b16 %v5849, %v5847
      %v5892 = vpack.c.b16 %v5850, %v5848
      %v5893 = vpack.c.b16 %v5853, %v5851
      %v5894 = vpack.c.b16 %v5854, %v5852
      %v5895 = vpack.c.b16 %v5857, %v5855
      %v5896 = vpack.c.b16 %v5858, %v5856
      %v5897 = vpack.c.b16 %v5861, %v5859
      %v5898 = vpack.c.b16 %v5862, %v5860
      %v5899 = vpack.c.b16 %v5865, %v5863
      %v5900 = vpack.c.b16 %v5866, %v5864
      %v5901 = vpack.c.b16 %v5869, %v5867
      %v5902 = vpack.c.b16 %v5870, %v5868
      %5935 = vmatprep.subr.bf16.mxu0 0
      %5936 = vmatpush1.bf16.msra.mxu0 %v3188
      %5937 = vmatprep.subr.bf16.mxu0 0
      %5938 = vmatpush1.bf16.msra.mxu0 %v3187
      %5939 = vmatprep.subr.bf16.mxu0 0
      %5940 = vmatpush1.bf16.msra.mxu0 %v3186
      %5941 = vmatprep.subr.bf16.mxu0 0
      %5942 = vmatpush1.bf16.msra.mxu0 %v3185
      %5943 = vmatprep.subr.bf16.mxu0 0
      %5944 = vmatpush1.bf16.msra.mxu0 %v3184
      %5945 = vmatprep.subr.bf16.mxu0 0
      %5946 = vmatpush1.bf16.msra.mxu0 %v3183
      %5947 = vmatprep.subr.bf16.mxu0 0
      %5948 = vmatpush1.bf16.msra.mxu0 %v3182
      %5949 = vmatprep.subr.bf16.mxu0 0
      %5950 = vmatpush1.bf16.msra.mxu0 %v3181
      %5951 = vmatprep.subr.bf16.mxu0 0
      %5952 = vmatpush2.bf16.msra.mxu0 %v3196
      %5953 = vmatprep.subr.bf16.mxu0 0
      %5954 = vmatpush2.bf16.msra.mxu0 %v3195
      %5955 = vmatprep.subr.bf16.mxu0 0
      %5956 = vmatpush2.bf16.msra.mxu0 %v3194
      %5957 = vmatprep.subr.bf16.mxu0 0
      %5958 = vmatpush2.bf16.msra.mxu0 %v3193
      %5959 = vmatprep.subr.bf16.mxu0 0
      %5960 = vmatpush2.bf16.msra.mxu0 %v3192
      %5961 = vmatprep.subr.bf16.mxu0 0
      %5962 = vmatpush2.bf16.msra.mxu0 %v3191
      %5963 = vmatprep.subr.bf16.mxu0 0
      %5964 = vmatpush2.bf16.msra.mxu0 %v3190
      %5965 = vmatprep.subr.bf16.mxu0 0
      %5966 = vmatpush2.bf16.msra.mxu0 %v3189
      %5967 = vmatprep.mubr.bf16.mxu0 %v5872
      %5968 = vmatmul.mubr.bf16.gmra.mxu0 %v5871
      %v5969 = vpop.f32.mrf.mxu0
      %v5970 = vadd.f32 %v5649, %v5969
      %v5971 = vpop.f32.mrf.mxu0
      %v5972 = vpop.f32.mrf.mxu0
      %v5973 = vadd.f32 %v5652, %v5972
      %v5974 = vpop.f32.mrf.mxu0
      %5975 = vmatprep.mubr.bf16.mxu0 %v5874
      %5976 = vmatmul.mubr.bf16.gmra.mxu0 %v5873
      %v5977 = vpop.f32.mrf.mxu0
      %v5978 = vadd.f32 %v5657, %v5977
      %v5979 = vpop.f32.mrf.mxu0
      %v5980 = vpop.f32.mrf.mxu0
      %v5981 = vadd.f32 %v5660, %v5980
      %v5982 = vpop.f32.mrf.mxu0
      %5983 = vmatprep.mubr.bf16.mxu0 %v5876
      %5984 = vmatmul.mubr.bf16.gmra.mxu0 %v5875
      %v5985 = vpop.f32.mrf.mxu0
      %v5986 = vadd.f32 %v5665, %v5985
      %v5987 = vpop.f32.mrf.mxu0
      %v5988 = vpop.f32.mrf.mxu0
      %v5989 = vadd.f32 %v5668, %v5988
      %v5990 = vpop.f32.mrf.mxu0
      %5991 = vmatprep.mubr.bf16.mxu0 %v5878
      %5992 = vmatmul.mubr.bf16.gmra.mxu0 %v5877
      %v5993 = vpop.f32.mrf.mxu0
      %v5994 = vadd.f32 %v5673, %v5993
      %v5995 = vpop.f32.mrf.mxu0
      %v5996 = vpop.f32.mrf.mxu0
      %v5997 = vadd.f32 %v5676, %v5996
      %v5998 = vpop.f32.mrf.mxu0
      %5999 = vmatprep.mubr.bf16.mxu0 %v5880
      %6000 = vmatmul.mubr.bf16.gmra.mxu0 %v5879
      %v6001 = vpop.f32.mrf.mxu0
      %v6002 = vadd.f32 %v5681, %v6001
      %v6003 = vpop.f32.mrf.mxu0
      %v6004 = vpop.f32.mrf.mxu0
      %v6005 = vadd.f32 %v5684, %v6004
      %v6006 = vpop.f32.mrf.mxu0
      %6007 = vmatprep.mubr.bf16.mxu0 %v5882
      %6008 = vmatmul.mubr.bf16.gmra.mxu0 %v5881
      %v6009 = vpop.f32.mrf.mxu0
      %v6010 = vadd.f32 %v5689, %v6009
      %v6011 = vpop.f32.mrf.mxu0
      %v6012 = vpop.f32.mrf.mxu0
      %v6013 = vadd.f32 %v5692, %v6012
      %v6014 = vpop.f32.mrf.mxu0
      %6015 = vmatprep.mubr.bf16.mxu0 %v5884
      %6016 = vmatmul.mubr.bf16.gmra.mxu0 %v5883
      %v6017 = vpop.f32.mrf.mxu0
      %v6018 = vadd.f32 %v5697, %v6017
      %v6019 = vpop.f32.mrf.mxu0
      %v6020 = vpop.f32.mrf.mxu0
      %v6021 = vadd.f32 %v5700, %v6020
      %v6022 = vpop.f32.mrf.mxu0
      %6023 = vmatprep.mubr.bf16.mxu0 %v5886
      %6024 = vmatmul.mubr.bf16.gmra.mxu0 %v5885
      %v6025 = vpop.f32.mrf.mxu0
      %v6026 = vadd.f32 %v5705, %v6025
      %v6027 = vpop.f32.mrf.mxu0
      %v6028 = vpop.f32.mrf.mxu0
      %v6029 = vadd.f32 %v5708, %v6028
      %v6030 = vpop.f32.mrf.mxu0
      %6031 = vmatprep.mubr.bf16.mxu0 %v5888
      %6032 = vmatmul.mubr.bf16.gmra.mxu0 %v5887
      %v6033 = vpop.f32.mrf.mxu0
      %v6034 = vadd.f32 %v5713, %v6033
      %v6035 = vpop.f32.mrf.mxu0
      %v6036 = vpop.f32.mrf.mxu0
      %v6037 = vadd.f32 %v5716, %v6036
      %v6038 = vpop.f32.mrf.mxu0
      %6039 = vmatprep.mubr.bf16.mxu0 %v5890
      %6040 = vmatmul.mubr.bf16.gmra.mxu0 %v5889
      %v6041 = vpop.f32.mrf.mxu0
      %v6042 = vadd.f32 %v5721, %v6041
      %v6043 = vpop.f32.mrf.mxu0
      %v6044 = vpop.f32.mrf.mxu0
      %v6045 = vadd.f32 %v5724, %v6044
      %v6046 = vpop.f32.mrf.mxu0
      %6047 = vmatprep.mubr.bf16.mxu0 %v5892
      %6048 = vmatmul.mubr.bf16.gmra.mxu0 %v5891
      %v6049 = vpop.f32.mrf.mxu0
      %v6050 = vadd.f32 %v5729, %v6049
      %v6051 = vpop.f32.mrf.mxu0
      %v6052 = vpop.f32.mrf.mxu0
      %v6053 = vadd.f32 %v5732, %v6052
      %v6054 = vpop.f32.mrf.mxu0
      %6055 = vmatprep.mubr.bf16.mxu0 %v5894
      %6056 = vmatmul.mubr.bf16.gmra.mxu0 %v5893
      %v6057 = vpop.f32.mrf.mxu0
      %v6058 = vadd.f32 %v5737, %v6057
      %v6059 = vpop.f32.mrf.mxu0
      %v6060 = vpop.f32.mrf.mxu0
      %v6061 = vadd.f32 %v5740, %v6060
      %v6062 = vpop.f32.mrf.mxu0
      %6063 = vmatprep.mubr.bf16.mxu0 %v5896
      %6064 = vmatmul.mubr.bf16.gmra.mxu0 %v5895
      %v6065 = vpop.f32.mrf.mxu0
      %v6066 = vadd.f32 %v5745, %v6065
      %v6067 = vpop.f32.mrf.mxu0
      %v6068 = vpop.f32.mrf.mxu0
      %v6069 = vadd.f32 %v5748, %v6068
      %v6070 = vpop.f32.mrf.mxu0
      %6071 = vmatprep.mubr.bf16.mxu0 %v5898
      %6072 = vmatmul.mubr.bf16.gmra.mxu0 %v5897
      %v6073 = vpop.f32.mrf.mxu0
      %v6074 = vadd.f32 %v5753, %v6073
      %v6075 = vpop.f32.mrf.mxu0
      %v6076 = vpop.f32.mrf.mxu0
      %v6077 = vadd.f32 %v5756, %v6076
      %v6078 = vpop.f32.mrf.mxu0
      %6079 = vmatprep.mubr.bf16.mxu0 %v5900
      %6080 = vmatmul.mubr.bf16.gmra.mxu0 %v5899
      %v6081 = vpop.f32.mrf.mxu0
      %v6082 = vadd.f32 %v5761, %v6081
      %v6083 = vpop.f32.mrf.mxu0
      %v6084 = vpop.f32.mrf.mxu0
      %v6085 = vadd.f32 %v5764, %v6084
      %v6086 = vpop.f32.mrf.mxu0
      %6087 = vmatprep.mubr.bf16.mxu0 %v5902
      %6088 = vmatmul.mubr.bf16.gmra.mxu0 %v5901
      %v6089 = vpop.f32.mrf.mxu0
      %v6090 = vadd.f32 %v5769, %v6089
      %v6091 = vpop.f32.mrf.mxu0
      %v6092 = vpop.f32.mrf.mxu0
      %v6093 = vadd.f32 %v5772, %v6092
      %v6094 = vpop.f32.mrf.mxu0
      %6095 = vdwg.mxu0
      %s6096 = scalar_lea.vmem %s3, 640
      %v6097 = vld [vmem:[%s6096] sm:$0xff]
      %v6098 = vld [vmem:[%s6096 + $0x8] sm:$0xff]
      %v6099 = vld [vmem:[%s6096 + $0x10] sm:$0xff]
      %v6100 = vld [vmem:[%s6096 + $0x18] sm:$0xff]
      %v6101 = vld [vmem:[%s6096 + $0x20] sm:$0xff]
      %v6102 = vld [vmem:[%s6096 + $0x28] sm:$0xff]
      %v6103 = vld [vmem:[%s6096 + $0x30] sm:$0xff]
      %v6104 = vld [vmem:[%s6096 + $0x38] sm:$0xff]
      %v6105 = vld [vmem:[%s6096 + $0x40] sm:$0xff]
      %v6106 = vld [vmem:[%s6096 + $0x48] sm:$0xff]
      %v6107 = vld [vmem:[%s6096 + $0x50] sm:$0xff]
      %v6108 = vld [vmem:[%s6096 + $0x58] sm:$0xff]
      %v6109 = vld [vmem:[%s6096 + $0x60] sm:$0xff]
      %v6110 = vld [vmem:[%s6096 + $0x68] sm:$0xff]
      %v6111 = vld [vmem:[%s6096 + $0x70] sm:$0xff]
      %v6112 = vld [vmem:[%s6096 + $0x78] sm:$0xff]
      %v6113 = vld [vmem:[%s6096 + $0x80] sm:$0xff]
      %v6114 = vld [vmem:[%s6096 + $0x88] sm:$0xff]
      %v6115 = vld [vmem:[%s6096 + $0x90] sm:$0xff]
      %v6116 = vld [vmem:[%s6096 + $0x98] sm:$0xff]
      %v6117 = vld [vmem:[%s6096 + $0xa0] sm:$0xff]
      %v6118 = vld [vmem:[%s6096 + $0xa8] sm:$0xff]
      %v6119 = vld [vmem:[%s6096 + $0xb0] sm:$0xff]
      %v6120 = vld [vmem:[%s6096 + $0xb8] sm:$0xff]
      %v6121 = vld [vmem:[%s6096 + $0xc0] sm:$0xff]
      %v6122 = vld [vmem:[%s6096 + $0xc8] sm:$0xff]
      %v6123 = vld [vmem:[%s6096 + $0xd0] sm:$0xff]
      %v6124 = vld [vmem:[%s6096 + $0xd8] sm:$0xff]
      %v6125 = vld [vmem:[%s6096 + $0xe0] sm:$0xff]
      %v6126 = vld [vmem:[%s6096 + $0xe8] sm:$0xff]
      %v6127 = vld [vmem:[%s6096 + $0xf0] sm:$0xff]
      %v6128 = vld [vmem:[%s6096 + $0xf8] sm:$0xff]
      %v6129 = vld [vmem:[%s6096 + $0x100] sm:$0xff]
      %v6130 = vld [vmem:[%s6096 + $0x108] sm:$0xff]
      %v6131 = vld [vmem:[%s6096 + $0x110] sm:$0xff]
      %v6132 = vld [vmem:[%s6096 + $0x118] sm:$0xff]
      %v6133 = vld [vmem:[%s6096 + $0x120] sm:$0xff]
      %v6134 = vld [vmem:[%s6096 + $0x128] sm:$0xff]
      %v6135 = vld [vmem:[%s6096 + $0x130] sm:$0xff]
      %v6136 = vld [vmem:[%s6096 + $0x138] sm:$0xff]
      %s6137 = scalar_lea.vmem %s4, 640
      %v6138 = vld [vmem:[%s6137] sm:$0xff]
      %v6139 = vld [vmem:[%s6137 + $0x8] sm:$0xff]
      %v6140 = vld [vmem:[%s6137 + $0x10] sm:$0xff]
      %v6141 = vld [vmem:[%s6137 + $0x18] sm:$0xff]
      %v6142 = vld [vmem:[%s6137 + $0x20] sm:$0xff]
      %v6143 = vld [vmem:[%s6137 + $0x28] sm:$0xff]
      %v6144 = vld [vmem:[%s6137 + $0x30] sm:$0xff]
      %v6145 = vld [vmem:[%s6137 + $0x38] sm:$0xff]
      %v6146 = vld [vmem:[%s6137 + $0x40] sm:$0xff]
      %v6147 = vld [vmem:[%s6137 + $0x48] sm:$0xff]
      %v6148 = vld [vmem:[%s6137 + $0x50] sm:$0xff]
      %v6149 = vld [vmem:[%s6137 + $0x58] sm:$0xff]
      %v6150 = vld [vmem:[%s6137 + $0x60] sm:$0xff]
      %v6151 = vld [vmem:[%s6137 + $0x68] sm:$0xff]
      %v6152 = vld [vmem:[%s6137 + $0x70] sm:$0xff]
      %v6153 = vld [vmem:[%s6137 + $0x78] sm:$0xff]
      %v6154 = vld [vmem:[%s6137 + $0x80] sm:$0xff]
      %v6155 = vld [vmem:[%s6137 + $0x88] sm:$0xff]
      %v6156 = vld [vmem:[%s6137 + $0x90] sm:$0xff]
      %v6157 = vld [vmem:[%s6137 + $0x98] sm:$0xff]
      %v6158 = vld [vmem:[%s6137 + $0xa0] sm:$0xff]
      %v6159 = vld [vmem:[%s6137 + $0xa8] sm:$0xff]
      %v6160 = vld [vmem:[%s6137 + $0xb0] sm:$0xff]
      %v6161 = vld [vmem:[%s6137 + $0xb8] sm:$0xff]
      %v6162 = vld [vmem:[%s6137 + $0xc0] sm:$0xff]
      %v6163 = vld [vmem:[%s6137 + $0xc8] sm:$0xff]
      %v6164 = vld [vmem:[%s6137 + $0xd0] sm:$0xff]
      %v6165 = vld [vmem:[%s6137 + $0xd8] sm:$0xff]
      %v6166 = vld [vmem:[%s6137 + $0xe0] sm:$0xff]
      %v6167 = vld [vmem:[%s6137 + $0xe8] sm:$0xff]
      %v6168 = vld [vmem:[%s6137 + $0xf0] sm:$0xff]
      %v6169 = vld [vmem:[%s6137 + $0xf8] sm:$0xff]
      %v6170 = vld [vmem:[%s6137 + $0x100] sm:$0xff]
      %v6171 = vld [vmem:[%s6137 + $0x108] sm:$0xff]
      %v6172 = vld [vmem:[%s6137 + $0x110] sm:$0xff]
      %v6173 = vld [vmem:[%s6137 + $0x118] sm:$0xff]
      %v6174 = vld [vmem:[%s6137 + $0x120] sm:$0xff]
      %v6175 = vld [vmem:[%s6137 + $0x128] sm:$0xff]
      %v6176 = vld [vmem:[%s6137 + $0x130] sm:$0xff]
      %v6177 = vld [vmem:[%s6137 + $0x138] sm:$0xff]
      %6179 = vset.pattern.permute.xlu0 0
      %6180 = vperm.xlu0 %6179, %v6138
      %v6181 = vpop.permute.xlu0 %6180
      %6184 = vset.pattern.permute.xlu0 0
      %6185 = vperm.xlu0 %6184, %v6139
      %v6186 = vpop.permute.xlu0 %6185
      %6189 = vset.pattern.permute.xlu0 0
      %6190 = vperm.xlu0 %6189, %v6140
      %v6191 = vpop.permute.xlu0 %6190
      %6194 = vset.pattern.permute.xlu0 0
      %6195 = vperm.xlu0 %6194, %v6141
      %v6196 = vpop.permute.xlu0 %6195
      %6199 = vset.pattern.permute.xlu0 0
      %6200 = vperm.xlu0 %6199, %v6142
      %v6201 = vpop.permute.xlu0 %6200
      %6204 = vset.pattern.permute.xlu0 0
      %6205 = vperm.xlu0 %6204, %v6143
      %v6206 = vpop.permute.xlu0 %6205
      %6209 = vset.pattern.permute.xlu0 0
      %6210 = vperm.xlu0 %6209, %v6144
      %v6211 = vpop.permute.xlu0 %6210
      %6214 = vset.pattern.permute.xlu0 0
      %6215 = vperm.xlu0 %6214, %v6145
      %v6216 = vpop.permute.xlu0 %6215
      %6219 = vset.pattern.permute.xlu0 0
      %6220 = vperm.xlu0 %6219, %v6146
      %v6221 = vpop.permute.xlu0 %6220
      %6224 = vset.pattern.permute.xlu0 0
      %6225 = vperm.xlu0 %6224, %v6147
      %v6226 = vpop.permute.xlu0 %6225
      %6229 = vset.pattern.permute.xlu0 0
      %6230 = vperm.xlu0 %6229, %v6148
      %v6231 = vpop.permute.xlu0 %6230
      %6234 = vset.pattern.permute.xlu0 0
      %6235 = vperm.xlu0 %6234, %v6149
      %v6236 = vpop.permute.xlu0 %6235
      %6239 = vset.pattern.permute.xlu0 0
      %6240 = vperm.xlu0 %6239, %v6150
      %v6241 = vpop.permute.xlu0 %6240
      %6244 = vset.pattern.permute.xlu0 0
      %6245 = vperm.xlu0 %6244, %v6151
      %v6246 = vpop.permute.xlu0 %6245
      %6249 = vset.pattern.permute.xlu0 0
      %6250 = vperm.xlu0 %6249, %v6152
      %v6251 = vpop.permute.xlu0 %6250
      %6254 = vset.pattern.permute.xlu0 0
      %6255 = vperm.xlu0 %6254, %v6153
      %v6256 = vpop.permute.xlu0 %6255
      %6259 = vset.pattern.permute.xlu0 0
      %6260 = vperm.xlu0 %6259, %v6154
      %v6261 = vpop.permute.xlu0 %6260
      %6264 = vset.pattern.permute.xlu0 0
      %6265 = vperm.xlu0 %6264, %v6155
      %v6266 = vpop.permute.xlu0 %6265
      %6269 = vset.pattern.permute.xlu0 0
      %6270 = vperm.xlu0 %6269, %v6156
      %v6271 = vpop.permute.xlu0 %6270
      %6274 = vset.pattern.permute.xlu0 0
      %6275 = vperm.xlu0 %6274, %v6157
      %v6276 = vpop.permute.xlu0 %6275
      %6279 = vset.pattern.permute.xlu0 0
      %6280 = vperm.xlu0 %6279, %v6158
      %v6281 = vpop.permute.xlu0 %6280
      %6284 = vset.pattern.permute.xlu0 0
      %6285 = vperm.xlu0 %6284, %v6159
      %v6286 = vpop.permute.xlu0 %6285
      %6289 = vset.pattern.permute.xlu0 0
      %6290 = vperm.xlu0 %6289, %v6160
      %v6291 = vpop.permute.xlu0 %6290
      %6294 = vset.pattern.permute.xlu0 0
      %6295 = vperm.xlu0 %6294, %v6161
      %v6296 = vpop.permute.xlu0 %6295
      %6299 = vset.pattern.permute.xlu0 0
      %6300 = vperm.xlu0 %6299, %v6162
      %v6301 = vpop.permute.xlu0 %6300
      %6304 = vset.pattern.permute.xlu0 0
      %6305 = vperm.xlu0 %6304, %v6163
      %v6306 = vpop.permute.xlu0 %6305
      %6309 = vset.pattern.permute.xlu0 0
      %6310 = vperm.xlu0 %6309, %v6164
      %v6311 = vpop.permute.xlu0 %6310
      %6314 = vset.pattern.permute.xlu0 0
      %6315 = vperm.xlu0 %6314, %v6165
      %v6316 = vpop.permute.xlu0 %6315
      %6319 = vset.pattern.permute.xlu0 0
      %6320 = vperm.xlu0 %6319, %v6166
      %v6321 = vpop.permute.xlu0 %6320
      %6324 = vset.pattern.permute.xlu0 0
      %6325 = vperm.xlu0 %6324, %v6167
      %v6326 = vpop.permute.xlu0 %6325
      %6329 = vset.pattern.permute.xlu0 0
      %6330 = vperm.xlu0 %6329, %v6168
      %v6331 = vpop.permute.xlu0 %6330
      %6334 = vset.pattern.permute.xlu0 0
      %6335 = vperm.xlu0 %6334, %v6169
      %v6336 = vpop.permute.xlu0 %6335
      %6339 = vset.pattern.permute.xlu0 0
      %6340 = vperm.xlu0 %6339, %v6170
      %v6341 = vpop.permute.xlu0 %6340
      %6344 = vset.pattern.permute.xlu0 0
      %6345 = vperm.xlu0 %6344, %v6171
      %v6346 = vpop.permute.xlu0 %6345
      %6349 = vset.pattern.permute.xlu0 0
      %6350 = vperm.xlu0 %6349, %v6172
      %v6351 = vpop.permute.xlu0 %6350
      %6354 = vset.pattern.permute.xlu0 0
      %6355 = vperm.xlu0 %6354, %v6173
      %v6356 = vpop.permute.xlu0 %6355
      %6359 = vset.pattern.permute.xlu0 0
      %6360 = vperm.xlu0 %6359, %v6174
      %v6361 = vpop.permute.xlu0 %6360
      %6364 = vset.pattern.permute.xlu0 0
      %6365 = vperm.xlu0 %6364, %v6175
      %v6366 = vpop.permute.xlu0 %6365
      %6369 = vset.pattern.permute.xlu0 0
      %6370 = vperm.xlu0 %6369, %v6176
      %v6371 = vpop.permute.xlu0 %6370
      %6374 = vset.pattern.permute.xlu0 0
      %6375 = vperm.xlu0 %6374, %v6177
      %v6376 = vpop.permute.xlu0 %6375
      %v6418 = vunpack.c.l.b16 %v6097
      %v6419 = vunpack.c.h.b16 %v6097
      %v6420 = vunpack.c.l.b16 %v6098
      %v6421 = vunpack.c.h.b16 %v6098
      %v6422 = vunpack.c.l.b16 %v6099
      %v6423 = vunpack.c.h.b16 %v6099
      %v6424 = vunpack.c.l.b16 %v6100
      %v6425 = vunpack.c.h.b16 %v6100
      %v6426 = vunpack.c.l.b16 %v6101
      %v6427 = vunpack.c.h.b16 %v6101
      %v6428 = vunpack.c.l.b16 %v6102
      %v6429 = vunpack.c.h.b16 %v6102
      %v6430 = vunpack.c.l.b16 %v6103
      %v6431 = vunpack.c.h.b16 %v6103
      %v6432 = vunpack.c.l.b16 %v6104
      %v6433 = vunpack.c.h.b16 %v6104
      %v6434 = vunpack.c.l.b16 %v6105
      %v6435 = vunpack.c.h.b16 %v6105
      %v6436 = vunpack.c.l.b16 %v6106
      %v6437 = vunpack.c.h.b16 %v6106
      %v6438 = vunpack.c.l.b16 %v6107
      %v6439 = vunpack.c.h.b16 %v6107
      %v6440 = vunpack.c.l.b16 %v6108
      %v6441 = vunpack.c.h.b16 %v6108
      %v6442 = vunpack.c.l.b16 %v6109
      %v6443 = vunpack.c.h.b16 %v6109
      %v6444 = vunpack.c.l.b16 %v6110
      %v6445 = vunpack.c.h.b16 %v6110
      %v6446 = vunpack.c.l.b16 %v6111
      %v6447 = vunpack.c.h.b16 %v6111
      %v6448 = vunpack.c.l.b16 %v6112
      %v6449 = vunpack.c.h.b16 %v6112
      %v6450 = vunpack.c.l.b16 %v6113
      %v6451 = vunpack.c.h.b16 %v6113
      %v6452 = vunpack.c.l.b16 %v6114
      %v6453 = vunpack.c.h.b16 %v6114
      %v6454 = vunpack.c.l.b16 %v6115
      %v6455 = vunpack.c.h.b16 %v6115
      %v6456 = vunpack.c.l.b16 %v6116
      %v6457 = vunpack.c.h.b16 %v6116
      %v6458 = vunpack.c.l.b16 %v6117
      %v6459 = vunpack.c.h.b16 %v6117
      %v6460 = vunpack.c.l.b16 %v6118
      %v6461 = vunpack.c.h.b16 %v6118
      %v6462 = vunpack.c.l.b16 %v6119
      %v6463 = vunpack.c.h.b16 %v6119
      %v6464 = vunpack.c.l.b16 %v6120
      %v6465 = vunpack.c.h.b16 %v6120
      %v6466 = vunpack.c.l.b16 %v6121
      %v6467 = vunpack.c.h.b16 %v6121
      %v6468 = vunpack.c.l.b16 %v6122
      %v6469 = vunpack.c.h.b16 %v6122
      %v6470 = vunpack.c.l.b16 %v6123
      %v6471 = vunpack.c.h.b16 %v6123
      %v6472 = vunpack.c.l.b16 %v6124
      %v6473 = vunpack.c.h.b16 %v6124
      %v6474 = vunpack.c.l.b16 %v6125
      %v6475 = vunpack.c.h.b16 %v6125
      %v6476 = vunpack.c.l.b16 %v6126
      %v6477 = vunpack.c.h.b16 %v6126
      %v6478 = vunpack.c.l.b16 %v6127
      %v6479 = vunpack.c.h.b16 %v6127
      %v6480 = vunpack.c.l.b16 %v6128
      %v6481 = vunpack.c.h.b16 %v6128
      %v6482 = vunpack.c.l.b16 %v6129
      %v6483 = vunpack.c.h.b16 %v6129
      %v6484 = vunpack.c.l.b16 %v6130
      %v6485 = vunpack.c.h.b16 %v6130
      %v6486 = vunpack.c.l.b16 %v6131
      %v6487 = vunpack.c.h.b16 %v6131
      %v6488 = vunpack.c.l.b16 %v6132
      %v6489 = vunpack.c.h.b16 %v6132
      %v6490 = vunpack.c.l.b16 %v6133
      %v6491 = vunpack.c.h.b16 %v6133
      %v6492 = vunpack.c.l.b16 %v6134
      %v6493 = vunpack.c.h.b16 %v6134
      %v6494 = vunpack.c.l.b16 %v6135
      %v6495 = vunpack.c.h.b16 %v6135
      %v6496 = vunpack.c.l.b16 %v6136
      %v6497 = vunpack.c.h.b16 %v6136
      %v6498 = vpack.c.b16 %v6420, %v6418
      %v6499 = vpack.c.b16 %v6421, %v6419
      %v6500 = vpack.c.b16 %v6424, %v6422
      %v6501 = vpack.c.b16 %v6425, %v6423
      %v6502 = vpack.c.b16 %v6428, %v6426
      %v6503 = vpack.c.b16 %v6429, %v6427
      %v6504 = vpack.c.b16 %v6432, %v6430
      %v6505 = vpack.c.b16 %v6433, %v6431
      %v6506 = vpack.c.b16 %v6436, %v6434
      %v6507 = vpack.c.b16 %v6437, %v6435
      %v6508 = vpack.c.b16 %v6440, %v6438
      %v6509 = vpack.c.b16 %v6441, %v6439
      %v6510 = vpack.c.b16 %v6444, %v6442
      %v6511 = vpack.c.b16 %v6445, %v6443
      %v6512 = vpack.c.b16 %v6448, %v6446
      %v6513 = vpack.c.b16 %v6449, %v6447
      %v6514 = vpack.c.b16 %v6452, %v6450
      %v6515 = vpack.c.b16 %v6453, %v6451
      %v6516 = vpack.c.b16 %v6456, %v6454
      %v6517 = vpack.c.b16 %v6457, %v6455
      %v6518 = vpack.c.b16 %v6460, %v6458
      %v6519 = vpack.c.b16 %v6461, %v6459
      %v6520 = vpack.c.b16 %v6464, %v6462
      %v6521 = vpack.c.b16 %v6465, %v6463
      %v6522 = vpack.c.b16 %v6468, %v6466
      %v6523 = vpack.c.b16 %v6469, %v6467
      %v6524 = vpack.c.b16 %v6472, %v6470
      %v6525 = vpack.c.b16 %v6473, %v6471
      %v6526 = vpack.c.b16 %v6476, %v6474
      %v6527 = vpack.c.b16 %v6477, %v6475
      %v6528 = vpack.c.b16 %v6480, %v6478
      %v6529 = vpack.c.b16 %v6481, %v6479
      %v6530 = vpack.c.b16 %v6484, %v6482
      %v6531 = vpack.c.b16 %v6485, %v6483
      %v6532 = vpack.c.b16 %v6488, %v6486
      %v6533 = vpack.c.b16 %v6489, %v6487
      %v6534 = vpack.c.b16 %v6492, %v6490
      %v6535 = vpack.c.b16 %v6493, %v6491
      %v6536 = vpack.c.b16 %v6496, %v6494
      %v6537 = vpack.c.b16 %v6497, %v6495
      %6578 = vmatprep.subr.bf16.mxu0 0
      %6579 = vmatpush1.bf16.msra.mxu0 %v5412
      %6580 = vmatprep.subr.bf16.mxu0 0
      %6581 = vmatpush1.bf16.msra.mxu0 %v5411
      %6582 = vmatprep.subr.bf16.mxu0 0
      %6583 = vmatpush1.bf16.msra.mxu0 %v5410
      %6584 = vmatprep.subr.bf16.mxu0 0
      %6585 = vmatpush1.bf16.msra.mxu0 %v5409
      %6586 = vmatprep.subr.bf16.mxu0 0
      %6587 = vmatpush1.bf16.msra.mxu0 %v5408
      %6588 = vmatprep.subr.bf16.mxu0 0
      %6589 = vmatpush1.bf16.msra.mxu0 %v5407
      %6590 = vmatprep.subr.bf16.mxu0 0
      %6591 = vmatpush1.bf16.msra.mxu0 %v5406
      %6592 = vmatprep.subr.bf16.mxu0 0
      %6593 = vmatpush1.bf16.msra.mxu0 %v5405
      %6594 = vmatprep.subr.bf16.mxu0 0
      %6595 = vmatpush2.bf16.msra.mxu0 %v5420
      %6596 = vmatprep.subr.bf16.mxu0 0
      %6597 = vmatpush2.bf16.msra.mxu0 %v5419
      %6598 = vmatprep.subr.bf16.mxu0 0
      %6599 = vmatpush2.bf16.msra.mxu0 %v5418
      %6600 = vmatprep.subr.bf16.mxu0 0
      %6601 = vmatpush2.bf16.msra.mxu0 %v5417
      %6602 = vmatprep.subr.bf16.mxu0 0
      %6603 = vmatpush2.bf16.msra.mxu0 %v5416
      %6604 = vmatprep.subr.bf16.mxu0 0
      %6605 = vmatpush2.bf16.msra.mxu0 %v5415
      %6606 = vmatprep.subr.bf16.mxu0 0
      %6607 = vmatpush2.bf16.msra.mxu0 %v5414
      %6608 = vmatprep.subr.bf16.mxu0 0
      %6609 = vmatpush2.bf16.msra.mxu0 %v5413
      %6610 = vmatprep.mubr.bf16.mxu0 %v6499
      %6611 = vmatmul.mubr.bf16.gmra.mxu0 %v6498
      %v6612 = vpop.f32.mrf.mxu0
      %v6613 = vadd.f32 %v6181, %v6612
      %v6614 = vpop.f32.mrf.mxu0
      %v6615 = vpop.f32.mrf.mxu0
      %v6616 = vadd.f32 %v6186, %v6615
      %v6617 = vpop.f32.mrf.mxu0
      %6618 = vmatprep.mubr.bf16.mxu0 %v6501
      %6619 = vmatmul.mubr.bf16.gmra.mxu0 %v6500
      %v6620 = vpop.f32.mrf.mxu0
      %v6621 = vadd.f32 %v6191, %v6620
      %v6622 = vpop.f32.mrf.mxu0
      %v6623 = vpop.f32.mrf.mxu0
      %v6624 = vadd.f32 %v6196, %v6623
      %v6625 = vpop.f32.mrf.mxu0
      %6626 = vmatprep.mubr.bf16.mxu0 %v6503
      %6627 = vmatmul.mubr.bf16.gmra.mxu0 %v6502
      %v6628 = vpop.f32.mrf.mxu0
      %v6629 = vadd.f32 %v6201, %v6628
      %v6630 = vpop.f32.mrf.mxu0
      %v6631 = vpop.f32.mrf.mxu0
      %v6632 = vadd.f32 %v6206, %v6631
      %v6633 = vpop.f32.mrf.mxu0
      %6634 = vmatprep.mubr.bf16.mxu0 %v6505
      %6635 = vmatmul.mubr.bf16.gmra.mxu0 %v6504
      %v6636 = vpop.f32.mrf.mxu0
      %v6637 = vadd.f32 %v6211, %v6636
      %v6638 = vpop.f32.mrf.mxu0
      %v6639 = vpop.f32.mrf.mxu0
      %v6640 = vadd.f32 %v6216, %v6639
      %v6641 = vpop.f32.mrf.mxu0
      %6642 = vmatprep.mubr.bf16.mxu0 %v6507
      %6643 = vmatmul.mubr.bf16.gmra.mxu0 %v6506
      %v6644 = vpop.f32.mrf.mxu0
      %v6645 = vadd.f32 %v6221, %v6644
      %v6646 = vpop.f32.mrf.mxu0
      %v6647 = vpop.f32.mrf.mxu0
      %v6648 = vadd.f32 %v6226, %v6647
      %v6649 = vpop.f32.mrf.mxu0
      %6650 = vmatprep.mubr.bf16.mxu0 %v6509
      %6651 = vmatmul.mubr.bf16.gmra.mxu0 %v6508
      %v6652 = vpop.f32.mrf.mxu0
      %v6653 = vadd.f32 %v6231, %v6652
      %v6654 = vpop.f32.mrf.mxu0
      %v6655 = vpop.f32.mrf.mxu0
      %v6656 = vadd.f32 %v6236, %v6655
      %v6657 = vpop.f32.mrf.mxu0
      %6658 = vmatprep.mubr.bf16.mxu0 %v6511
      %6659 = vmatmul.mubr.bf16.gmra.mxu0 %v6510
      %v6660 = vpop.f32.mrf.mxu0
      %v6661 = vadd.f32 %v6241, %v6660
      %v6662 = vpop.f32.mrf.mxu0
      %v6663 = vpop.f32.mrf.mxu0
      %v6664 = vadd.f32 %v6246, %v6663
      %v6665 = vpop.f32.mrf.mxu0
      %6666 = vmatprep.mubr.bf16.mxu0 %v6513
      %6667 = vmatmul.mubr.bf16.gmra.mxu0 %v6512
      %v6668 = vpop.f32.mrf.mxu0
      %v6669 = vadd.f32 %v6251, %v6668
      %v6670 = vpop.f32.mrf.mxu0
      %v6671 = vpop.f32.mrf.mxu0
      %v6672 = vadd.f32 %v6256, %v6671
      %v6673 = vpop.f32.mrf.mxu0
      %6674 = vmatprep.mubr.bf16.mxu0 %v6515
      %6675 = vmatmul.mubr.bf16.gmra.mxu0 %v6514
      %v6676 = vpop.f32.mrf.mxu0
      %v6677 = vadd.f32 %v6261, %v6676
      %v6678 = vpop.f32.mrf.mxu0
      %v6679 = vpop.f32.mrf.mxu0
      %v6680 = vadd.f32 %v6266, %v6679
      %v6681 = vpop.f32.mrf.mxu0
      %6682 = vmatprep.mubr.bf16.mxu0 %v6517
      %6683 = vmatmul.mubr.bf16.gmra.mxu0 %v6516
      %v6684 = vpop.f32.mrf.mxu0
      %v6685 = vadd.f32 %v6271, %v6684
      %v6686 = vpop.f32.mrf.mxu0
      %v6687 = vpop.f32.mrf.mxu0
      %v6688 = vadd.f32 %v6276, %v6687
      %v6689 = vpop.f32.mrf.mxu0
      %6690 = vmatprep.mubr.bf16.mxu0 %v6519
      %6691 = vmatmul.mubr.bf16.gmra.mxu0 %v6518
      %v6692 = vpop.f32.mrf.mxu0
      %v6693 = vadd.f32 %v6281, %v6692
      %v6694 = vpop.f32.mrf.mxu0
      %v6695 = vpop.f32.mrf.mxu0
      %v6696 = vadd.f32 %v6286, %v6695
      %v6697 = vpop.f32.mrf.mxu0
      %6698 = vmatprep.mubr.bf16.mxu0 %v6521
      %6699 = vmatmul.mubr.bf16.gmra.mxu0 %v6520
      %v6700 = vpop.f32.mrf.mxu0
      %v6701 = vadd.f32 %v6291, %v6700
      %v6702 = vpop.f32.mrf.mxu0
      %v6703 = vpop.f32.mrf.mxu0
      %v6704 = vadd.f32 %v6296, %v6703
      %v6705 = vpop.f32.mrf.mxu0
      %6706 = vmatprep.mubr.bf16.mxu0 %v6523
      %6707 = vmatmul.mubr.bf16.gmra.mxu0 %v6522
      %v6708 = vpop.f32.mrf.mxu0
      %v6709 = vadd.f32 %v6301, %v6708
      %v6710 = vpop.f32.mrf.mxu0
      %v6711 = vpop.f32.mrf.mxu0
      %v6712 = vadd.f32 %v6306, %v6711
      %v6713 = vpop.f32.mrf.mxu0
      %6714 = vmatprep.mubr.bf16.mxu0 %v6525
      %6715 = vmatmul.mubr.bf16.gmra.mxu0 %v6524
      %v6716 = vpop.f32.mrf.mxu0
      %v6717 = vadd.f32 %v6311, %v6716
      %v6718 = vpop.f32.mrf.mxu0
      %v6719 = vpop.f32.mrf.mxu0
      %v6720 = vadd.f32 %v6316, %v6719
      %v6721 = vpop.f32.mrf.mxu0
      %6722 = vmatprep.mubr.bf16.mxu0 %v6527
      %6723 = vmatmul.mubr.bf16.gmra.mxu0 %v6526
      %v6724 = vpop.f32.mrf.mxu0
      %v6725 = vadd.f32 %v6321, %v6724
      %v6726 = vpop.f32.mrf.mxu0
      %v6727 = vpop.f32.mrf.mxu0
      %v6728 = vadd.f32 %v6326, %v6727
      %v6729 = vpop.f32.mrf.mxu0
      %6730 = vmatprep.mubr.bf16.mxu0 %v6529
      %6731 = vmatmul.mubr.bf16.gmra.mxu0 %v6528
      %v6732 = vpop.f32.mrf.mxu0
      %v6733 = vadd.f32 %v6331, %v6732
      %v6734 = vpop.f32.mrf.mxu0
      %v6735 = vpop.f32.mrf.mxu0
      %v6736 = vadd.f32 %v6336, %v6735
      %v6737 = vpop.f32.mrf.mxu0
      %6738 = vmatprep.mubr.bf16.mxu0 %v6531
      %6739 = vmatmul.mubr.bf16.gmra.mxu0 %v6530
      %v6740 = vpop.f32.mrf.mxu0
      %v6741 = vadd.f32 %v6341, %v6740
      %v6742 = vpop.f32.mrf.mxu0
      %v6743 = vpop.f32.mrf.mxu0
      %v6744 = vadd.f32 %v6346, %v6743
      %v6745 = vpop.f32.mrf.mxu0
      %6746 = vmatprep.mubr.bf16.mxu0 %v6533
      %6747 = vmatmul.mubr.bf16.gmra.mxu0 %v6532
      %v6748 = vpop.f32.mrf.mxu0
      %v6749 = vadd.f32 %v6351, %v6748
      %v6750 = vpop.f32.mrf.mxu0
      %v6751 = vpop.f32.mrf.mxu0
      %v6752 = vadd.f32 %v6356, %v6751
      %v6753 = vpop.f32.mrf.mxu0
      %6754 = vmatprep.mubr.bf16.mxu0 %v6535
      %6755 = vmatmul.mubr.bf16.gmra.mxu0 %v6534
      %v6756 = vpop.f32.mrf.mxu0
      %v6757 = vadd.f32 %v6361, %v6756
      %v6758 = vpop.f32.mrf.mxu0
      %v6759 = vpop.f32.mrf.mxu0
      %v6760 = vadd.f32 %v6366, %v6759
      %v6761 = vpop.f32.mrf.mxu0
      %6762 = vmatprep.mubr.bf16.mxu0 %v6537
      %6763 = vmatmul.mubr.bf16.gmra.mxu0 %v6536
      %v6764 = vpop.f32.mrf.mxu0
      %v6765 = vadd.f32 %v6371, %v6764
      %v6766 = vpop.f32.mrf.mxu0
      %v6767 = vpop.f32.mrf.mxu0
      %v6768 = vadd.f32 %v6376, %v6767
      %v6769 = vpop.f32.mrf.mxu0
      %6770 = vdwg.mxu0
      %v6771 = vpack.c.bf16 %v6616, %v6613
      %v6772 = vpack.c.bf16 %v6624, %v6621
      %v6773 = vpack.c.bf16 %v6632, %v6629
      %v6774 = vpack.c.bf16 %v6640, %v6637
      %6775 = vxpose.xlu0.c.b16.start [1/8] %v6771, 128
      %6776 = vxpose.xlu0.c.b16.cont [2/8] %v6772, 128
      %6777 = vxpose.xlu0.c.b16.cont [3/8] %v6773, 128
      %6778 = vxpose.xlu0.c.b16.cont [4/8] %v6774, 128
      %6779 = vxpose.xlu0.c.b16.cont [5/8] 0, 128
      %6780 = vxpose.xlu0.c.b16.cont [6/8] 0, 128
      %6781 = vxpose.xlu0.c.b16.cont [7/8] 0, 128
      %6782 = vxpose.xlu0.c.b16.end [8/8] 0, 128
      %v6783 = vpop.trf.xlu0
      %v6784 = vpop.trf.xlu0
      %v6785 = vpop.trf.xlu0
      %v6786 = vpop.trf.xlu0
      %v6787 = vpop.trf.xlu0
      %v6788 = vpop.trf.xlu0
      %v6789 = vpop.trf.xlu0
      %v6790 = vpop.trf.xlu0
      %v6792 = vsel %vm1663, %v6783, 0
      %v6795 = vsel %vm1663, %v6784, 0
      %v6798 = vsel %vm1663, %v6785, 0
      %v6801 = vsel %vm1663, %v6786, 0
      %v6804 = vsel %vm1663, %v6787, 0
      %v6807 = vsel %vm1663, %v6788, 0
      %v6810 = vsel %vm1663, %v6789, 0
      %v6813 = vsel %vm1663, %v6790, 0
      %6815 = vmatprep.subr.bf16.mxu0 0
      %6816 = vmatpush1.bf16.msra.mxu0 0
      %6817 = vmatprep.subr.bf16.mxu0 0
      %6818 = vmatpush1.bf16.msra.mxu0 0
      %6819 = vmatprep.subr.bf16.mxu0 0
      %6820 = vmatpush1.bf16.msra.mxu0 0
      %6821 = vmatprep.subr.bf16.mxu0 0
      %6822 = vmatpush1.bf16.msra.mxu0 0
      %6823 = vmatprep.subr.bf16.mxu0 0
      %6824 = vmatpush1.bf16.msra.mxu0 %v6774
      %6825 = vmatprep.subr.bf16.mxu0 0
      %6826 = vmatpush1.bf16.msra.mxu0 %v6773
      %6827 = vmatprep.subr.bf16.mxu0 0
      %6828 = vmatpush1.bf16.msra.mxu0 %v6772
      %6829 = vmatprep.subr.bf16.mxu0 0
      %6830 = vmatpush1.bf16.msra.mxu0 %v6771
      %6831 = vmatprep.subr.bf16.mxu0 0
      %6832 = vmatpush2.bf16.msra.mxu0 0
      %6833 = vmatprep.subr.bf16.mxu0 0
      %6834 = vmatpush2.bf16.msra.mxu0 0
      %6835 = vmatprep.subr.bf16.mxu0 0
      %6836 = vmatpush2.bf16.msra.mxu0 0
      %6837 = vmatprep.subr.bf16.mxu0 0
      %6838 = vmatpush2.bf16.msra.mxu0 0
      %6839 = vmatprep.subr.bf16.mxu0 0
      %6840 = vmatpush2.bf16.msra.mxu0 0
      %6841 = vmatprep.subr.bf16.mxu0 0
      %6842 = vmatpush2.bf16.msra.mxu0 0
      %6843 = vmatprep.subr.bf16.mxu0 0
      %6844 = vmatpush2.bf16.msra.mxu0 0
      %6845 = vmatprep.subr.bf16.mxu0 0
      %6846 = vmatpush2.bf16.msra.mxu0 0
      %6847 = vmatprep.mubr.bf16.mxu0 0
      %6848 = vmatmul.mubr.bf16.gmra.mxu0 %v6792
      %v6849 = vpop.f32.mrf.mxu0
      %v6850 = vadd.f32 0.0, %v6849
      %v6851 = vpop.f32.mrf.mxu0
      %v6852 = vpop.f32.mrf.mxu0
      %v6853 = vadd.f32 0.0, %v6852
      %v6854 = vpop.f32.mrf.mxu0
      %6855 = vmatprep.mubr.bf16.mxu0 0
      %6856 = vmatmul.mubr.bf16.gmra.mxu0 %v6795
      %v6857 = vpop.f32.mrf.mxu0
      %v6858 = vadd.f32 0.0, %v6857
      %v6859 = vpop.f32.mrf.mxu0
      %v6860 = vpop.f32.mrf.mxu0
      %v6861 = vadd.f32 0.0, %v6860
      %v6862 = vpop.f32.mrf.mxu0
      %6863 = vmatprep.mubr.bf16.mxu0 0
      %6864 = vmatmul.mubr.bf16.gmra.mxu0 %v6798
      %v6865 = vpop.f32.mrf.mxu0
      %v6866 = vadd.f32 0.0, %v6865
      %v6867 = vpop.f32.mrf.mxu0
      %v6868 = vpop.f32.mrf.mxu0
      %v6869 = vadd.f32 0.0, %v6868
      %v6870 = vpop.f32.mrf.mxu0
      %6871 = vmatprep.mubr.bf16.mxu0 0
      %6872 = vmatmul.mubr.bf16.gmra.mxu0 %v6801
      %v6873 = vpop.f32.mrf.mxu0
      %v6874 = vadd.f32 0.0, %v6873
      %v6875 = vpop.f32.mrf.mxu0
      %v6876 = vpop.f32.mrf.mxu0
      %v6877 = vadd.f32 0.0, %v6876
      %v6878 = vpop.f32.mrf.mxu0
      %6879 = vmatprep.mubr.bf16.mxu0 0
      %6880 = vmatmul.mubr.bf16.gmra.mxu0 %v6804
      %v6881 = vpop.f32.mrf.mxu0
      %v6882 = vadd.f32 0.0, %v6881
      %v6883 = vpop.f32.mrf.mxu0
      %v6884 = vpop.f32.mrf.mxu0
      %v6885 = vadd.f32 0.0, %v6884
      %v6886 = vpop.f32.mrf.mxu0
      %6887 = vmatprep.mubr.bf16.mxu0 0
      %6888 = vmatmul.mubr.bf16.gmra.mxu0 %v6807
      %v6889 = vpop.f32.mrf.mxu0
      %v6890 = vadd.f32 0.0, %v6889
      %v6891 = vpop.f32.mrf.mxu0
      %v6892 = vpop.f32.mrf.mxu0
      %v6893 = vadd.f32 0.0, %v6892
      %v6894 = vpop.f32.mrf.mxu0
      %6895 = vmatprep.mubr.bf16.mxu0 0
      %6896 = vmatmul.mubr.bf16.gmra.mxu0 %v6810
      %v6897 = vpop.f32.mrf.mxu0
      %v6898 = vadd.f32 0.0, %v6897
      %v6899 = vpop.f32.mrf.mxu0
      %v6900 = vpop.f32.mrf.mxu0
      %v6901 = vadd.f32 0.0, %v6900
      %v6902 = vpop.f32.mrf.mxu0
      %6903 = vmatprep.mubr.bf16.mxu0 0
      %6904 = vmatmul.mubr.bf16.gmra.mxu0 %v6813
      %v6905 = vpop.f32.mrf.mxu0
      %v6906 = vadd.f32 0.0, %v6905
      %v6907 = vpop.f32.mrf.mxu0
      %v6908 = vpop.f32.mrf.mxu0
      %v6909 = vadd.f32 0.0, %v6908
      %v6910 = vpop.f32.mrf.mxu0
      %6911 = vdwg.mxu0
      %6912 = vmax.xlane.f32.xlu0 %v6850
      %v6913 = vpop.xlane.xlu0 %6912
      %6914 = vmax.xlane.f32.xlu0 %v6853
      %v6915 = vpop.xlane.xlu0 %6914
      %6916 = vmax.xlane.f32.xlu0 %v6858
      %v6917 = vpop.xlane.xlu0 %6916
      %6918 = vmax.xlane.f32.xlu0 %v6861
      %v6919 = vpop.xlane.xlu0 %6918
      %6920 = vmax.xlane.f32.xlu0 %v6866
      %v6921 = vpop.xlane.xlu0 %6920
      %6922 = vmax.xlane.f32.xlu0 %v6869
      %v6923 = vpop.xlane.xlu0 %6922
      %6924 = vmax.xlane.f32.xlu0 %v6874
      %v6925 = vpop.xlane.xlu0 %6924
      %6926 = vmax.xlane.f32.xlu0 %v6877
      %v6927 = vpop.xlane.xlu0 %6926
      %6928 = vmax.xlane.f32.xlu0 %v6882
      %v6929 = vpop.xlane.xlu0 %6928
      %6930 = vmax.xlane.f32.xlu0 %v6885
      %v6931 = vpop.xlane.xlu0 %6930
      %6932 = vmax.xlane.f32.xlu0 %v6890
      %v6933 = vpop.xlane.xlu0 %6932
      %6934 = vmax.xlane.f32.xlu0 %v6893
      %v6935 = vpop.xlane.xlu0 %6934
      %6936 = vmax.xlane.f32.xlu0 %v6898
      %v6937 = vpop.xlane.xlu0 %6936
      %6938 = vmax.xlane.f32.xlu0 %v6901
      %v6939 = vpop.xlane.xlu0 %6938
      %6940 = vmax.xlane.f32.xlu0 %v6906
      %v6941 = vpop.xlane.xlu0 %6940
      %6942 = vmax.xlane.f32.xlu0 %v6909
      %v6943 = vpop.xlane.xlu0 %6942
      %v6944 = vsub.f32 %v6850, %v6913
      %v6945 = vsub.f32 %v6853, %v6915
      %v6946 = vsub.f32 %v6858, %v6917
      %v6947 = vsub.f32 %v6861, %v6919
      %v6948 = vsub.f32 %v6866, %v6921
      %v6949 = vsub.f32 %v6869, %v6923
      %v6950 = vsub.f32 %v6874, %v6925
      %v6951 = vsub.f32 %v6877, %v6927
      %v6952 = vsub.f32 %v6882, %v6929
      %v6953 = vsub.f32 %v6885, %v6931
      %v6954 = vsub.f32 %v6890, %v6933
      %v6955 = vsub.f32 %v6893, %v6935
      %v6956 = vsub.f32 %v6898, %v6937
      %v6957 = vsub.f32 %v6901, %v6939
      %v6958 = vsub.f32 %v6906, %v6941
      %v6959 = vsub.f32 %v6909, %v6943
      %v6960 = vmul.f32 %v6944, 1.442695
      %v6961 = vpow.pop %v6960
      %v6962 = vmul.f32 %v6945, 1.442695
      %v6963 = vpow.pop %v6962
      %v6964 = vmul.f32 %v6946, 1.442695
      %v6965 = vpow.pop %v6964
      %v6966 = vmul.f32 %v6947, 1.442695
      %v6967 = vpow.pop %v6966
      %v6968 = vmul.f32 %v6948, 1.442695
      %v6969 = vpow.pop %v6968
      %v6970 = vmul.f32 %v6949, 1.442695
      %v6971 = vpow.pop %v6970
      %v6972 = vmul.f32 %v6950, 1.442695
      %v6973 = vpow.pop %v6972
      %v6974 = vmul.f32 %v6951, 1.442695
      %v6975 = vpow.pop %v6974
      %v6976 = vmul.f32 %v6952, 1.442695
      %v6977 = vpow.pop %v6976
      %v6978 = vmul.f32 %v6953, 1.442695
      %v6979 = vpow.pop %v6978
      %v6980 = vmul.f32 %v6954, 1.442695
      %v6981 = vpow.pop %v6980
      %v6982 = vmul.f32 %v6955, 1.442695
      %v6983 = vpow.pop %v6982
      %v6984 = vmul.f32 %v6956, 1.442695
      %v6985 = vpow.pop %v6984
      %v6986 = vmul.f32 %v6957, 1.442695
      %v6987 = vpow.pop %v6986
      %v6988 = vmul.f32 %v6958, 1.442695
      %v6989 = vpow.pop %v6988
      %v6990 = vmul.f32 %v6959, 1.442695
      %v6991 = vpow.pop %v6990
      %6992 = vadd.xlane.f32.xlu0 %v6961
      %v6993 = vpop.xlane.xlu0 %6992
      %6994 = vadd.xlane.f32.xlu0 %v6963
      %v6995 = vpop.xlane.xlu0 %6994
      %6996 = vadd.xlane.f32.xlu0 %v6965
      %v6997 = vpop.xlane.xlu0 %6996
      %6998 = vadd.xlane.f32.xlu0 %v6967
      %v6999 = vpop.xlane.xlu0 %6998
      %7000 = vadd.xlane.f32.xlu0 %v6969
      %v7001 = vpop.xlane.xlu0 %7000
      %7002 = vadd.xlane.f32.xlu0 %v6971
      %v7003 = vpop.xlane.xlu0 %7002
      %7004 = vadd.xlane.f32.xlu0 %v6973
      %v7005 = vpop.xlane.xlu0 %7004
      %7006 = vadd.xlane.f32.xlu0 %v6975
      %v7007 = vpop.xlane.xlu0 %7006
      %7008 = vadd.xlane.f32.xlu0 %v6977
      %v7009 = vpop.xlane.xlu0 %7008
      %7010 = vadd.xlane.f32.xlu0 %v6979
      %v7011 = vpop.xlane.xlu0 %7010
      %7012 = vadd.xlane.f32.xlu0 %v6981
      %v7013 = vpop.xlane.xlu0 %7012
      %7014 = vadd.xlane.f32.xlu0 %v6983
      %v7015 = vpop.xlane.xlu0 %7014
      %7016 = vadd.xlane.f32.xlu0 %v6985
      %v7017 = vpop.xlane.xlu0 %7016
      %7018 = vadd.xlane.f32.xlu0 %v6987
      %v7019 = vpop.xlane.xlu0 %7018
      %7020 = vadd.xlane.f32.xlu0 %v6989
      %v7021 = vpop.xlane.xlu0 %7020
      %7022 = vadd.xlane.f32.xlu0 %v6991
      %v7023 = vpop.xlane.xlu0 %7022
      %v7024 = vpack.c.bf16 %v6963, %v6961
      %v7025 = vpack.c.bf16 %v6967, %v6965
      %v7026 = vpack.c.bf16 %v6971, %v6969
      %v7027 = vpack.c.bf16 %v6975, %v6973
      %v7028 = vpack.c.bf16 %v6979, %v6977
      %v7029 = vpack.c.bf16 %v6983, %v6981
      %v7030 = vpack.c.bf16 %v6987, %v6985
      %v7031 = vpack.c.bf16 %v6991, %v6989
      %v7032 = vrcp.pop %v6993
      %v7033 = vrcp.pop %v6995
      %v7034 = vrcp.pop %v6997
      %v7035 = vrcp.pop %v6999
      %v7036 = vrcp.pop %v7001
      %v7037 = vrcp.pop %v7003
      %v7038 = vrcp.pop %v7005
      %v7039 = vrcp.pop %v7007
      %v7040 = vrcp.pop %v7009
      %v7041 = vrcp.pop %v7011
      %v7042 = vrcp.pop %v7013
      %v7043 = vrcp.pop %v7015
      %v7044 = vrcp.pop %v7017
      %v7045 = vrcp.pop %v7019
      %v7046 = vrcp.pop %v7021
      %v7047 = vrcp.pop %v7023
      %v7048 = vpack.c.bf16 %v7033, %v7032
      %v7049 = vpack.c.bf16 %v7035, %v7034
      %v7050 = vpack.c.bf16 %v7037, %v7036
      %v7051 = vpack.c.bf16 %v7039, %v7038
      %v7052 = vpack.c.bf16 %v7041, %v7040
      %v7053 = vpack.c.bf16 %v7043, %v7042
      %v7054 = vpack.c.bf16 %v7045, %v7044
      %v7055 = vpack.c.bf16 %v7047, %v7046
      %v7072 = vlaneseq
      %v7073 = vshrl.u32 %v7072, 7
      %v7074 = vsub.s32 %v1946, %v7073
      %v7075 = vrot.slane %v7032, %v7074
      %v7076 = vlaneseq
      %v7077 = vshrl.u32 %v7076, 7
      %v7078 = vsub.s32 %v1951, %v7077
      %v7079 = vrot.slane %v7033, %v7078
      %v7080 = vsel %vm1956, %v7079, %v7075
      %v7081 = vlaneseq
      %v7082 = vshrl.u32 %v7081, 7
      %v7083 = vsub.s32 %v1958, %v7082
      %v7084 = vrot.slane %v7034, %v7083
      %v7085 = vsel %vm1963, %v7084, %v7080
      %v7086 = vlaneseq
      %v7087 = vshrl.u32 %v7086, 7
      %v7088 = vsub.s32 %v1965, %v7087
      %v7089 = vrot.slane %v7035, %v7088
      %v7090 = vsel %vm1970, %v7089, %v7085
      %v7091 = vlaneseq
      %v7092 = vshrl.u32 %v7091, 7
      %v7093 = vsub.s32 %v1972, %v7092
      %v7094 = vrot.slane %v7036, %v7093
      %v7095 = vsel %vm1977, %v7094, %v7090
      %v7096 = vlaneseq
      %v7097 = vshrl.u32 %v7096, 7
      %v7098 = vsub.s32 %v1979, %v7097
      %v7099 = vrot.slane %v7037, %v7098
      %v7100 = vsel %vm1984, %v7099, %v7095
      %v7101 = vlaneseq
      %v7102 = vshrl.u32 %v7101, 7
      %v7103 = vsub.s32 %v1986, %v7102
      %v7104 = vrot.slane %v7038, %v7103
      %v7105 = vsel %vm1991, %v7104, %v7100
      %v7106 = vlaneseq
      %v7107 = vshrl.u32 %v7106, 7
      %v7108 = vsub.s32 %v1993, %v7107
      %v7109 = vrot.slane %v7039, %v7108
      %v7110 = vsel %vm1998, %v7109, %v7105
      %v7111 = vlaneseq
      %v7112 = vshrl.u32 %v7111, 7
      %v7113 = vsub.s32 %v2000, %v7112
      %v7114 = vrot.slane %v7040, %v7113
      %v7115 = vsel %vm2005, %v7114, %v7110
      %v7116 = vlaneseq
      %v7117 = vshrl.u32 %v7116, 7
      %v7118 = vsub.s32 %v2007, %v7117
      %v7119 = vrot.slane %v7041, %v7118
      %v7120 = vsel %vm2012, %v7119, %v7115
      %v7121 = vlaneseq
      %v7122 = vshrl.u32 %v7121, 7
      %v7123 = vsub.s32 %v2014, %v7122
      %v7124 = vrot.slane %v7042, %v7123
      %v7125 = vsel %vm2019, %v7124, %v7120
      %v7126 = vlaneseq
      %v7127 = vshrl.u32 %v7126, 7
      %v7128 = vsub.s32 %v2021, %v7127
      %v7129 = vrot.slane %v7043, %v7128
      %v7130 = vsel %vm2026, %v7129, %v7125
      %v7131 = vlaneseq
      %v7132 = vshrl.u32 %v7131, 7
      %v7133 = vsub.s32 %v2028, %v7132
      %v7134 = vrot.slane %v7044, %v7133
      %v7135 = vsel %vm2033, %v7134, %v7130
      %v7136 = vlaneseq
      %v7137 = vshrl.u32 %v7136, 7
      %v7138 = vsub.s32 %v2035, %v7137
      %v7139 = vrot.slane %v7045, %v7138
      %v7140 = vsel %vm2040, %v7139, %v7135
      %v7141 = vlaneseq
      %v7142 = vshrl.u32 %v7141, 7
      %v7143 = vsub.s32 %v2042, %v7142
      %v7144 = vrot.slane %v7046, %v7143
      %v7145 = vsel %vm2047, %v7144, %v7140
      %v7146 = vlaneseq
      %v7147 = vshrl.u32 %v7146, 7
      %v7148 = vsub.s32 %v2049, %v7147
      %v7149 = vrot.slane %v7047, %v7148
      %v7150 = vsel %vm2054, %v7149, %v7145
      %v7151 = vsel %vm2056, %v7150, %v7150
      %v7152 = vsel %vm2058, %v7150, %v7151
      %v7153 = vsel %vm2060, %v7150, %v7152
      %v7154 = vsel %vm2062, %v7150, %v7153
      %v7155 = vsel %vm2064, %v7150, %v7154
      %v7156 = vsel %vm2066, %v7150, %v7155
      %v7158 = vmul.f32 %v6645, %v7156
      %v7159 = vmul.f32 %v6648, %v7156
      %v7160 = vmul.f32 %v6653, %v7156
      %v7161 = vmul.f32 %v6656, %v7156
      %v7162 = vmul.f32 %v6661, %v7156
      %v7163 = vmul.f32 %v6664, %v7156
      %v7164 = vmul.f32 %v6669, %v7156
      %v7165 = vmul.f32 %v6672, %v7156
      %v7166 = vmul.f32 %v6677, %v7156
      %v7167 = vmul.f32 %v6680, %v7156
      %v7168 = vmul.f32 %v6685, %v7156
      %v7169 = vmul.f32 %v6688, %v7156
      %v7170 = vmul.f32 %v6693, %v7156
      %v7171 = vmul.f32 %v6696, %v7156
      %v7172 = vmul.f32 %v6701, %v7156
      %v7173 = vmul.f32 %v6704, %v7156
      %v7174 = vmul.f32 %v6709, %v7156
      %v7175 = vmul.f32 %v6712, %v7156
      %v7176 = vmul.f32 %v6717, %v7156
      %v7177 = vmul.f32 %v6720, %v7156
      %v7178 = vmul.f32 %v6725, %v7156
      %v7179 = vmul.f32 %v6728, %v7156
      %v7180 = vmul.f32 %v6733, %v7156
      %v7181 = vmul.f32 %v6736, %v7156
      %v7182 = vmul.f32 %v6741, %v7156
      %v7183 = vmul.f32 %v6744, %v7156
      %v7184 = vmul.f32 %v6749, %v7156
      %v7185 = vmul.f32 %v6752, %v7156
      %v7186 = vmul.f32 %v6757, %v7156
      %v7187 = vmul.f32 %v6760, %v7156
      %v7188 = vmul.f32 %v6765, %v7156
      %v7189 = vmul.f32 %v6768, %v7156
      %v7190 = vpack.c.bf16 %v7159, %v7158
      %v7191 = vpack.c.bf16 %v7161, %v7160
      %v7192 = vpack.c.bf16 %v7163, %v7162
      %v7193 = vpack.c.bf16 %v7165, %v7164
      %v7194 = vpack.c.bf16 %v7167, %v7166
      %v7195 = vpack.c.bf16 %v7169, %v7168
      %v7196 = vpack.c.bf16 %v7171, %v7170
      %v7197 = vpack.c.bf16 %v7173, %v7172
      %v7198 = vpack.c.bf16 %v7175, %v7174
      %v7199 = vpack.c.bf16 %v7177, %v7176
      %v7200 = vpack.c.bf16 %v7179, %v7178
      %v7201 = vpack.c.bf16 %v7181, %v7180
      %v7202 = vpack.c.bf16 %v7183, %v7182
      %v7203 = vpack.c.bf16 %v7185, %v7184
      %v7204 = vpack.c.bf16 %v7187, %v7186
      %v7205 = vpack.c.bf16 %v7189, %v7188
      %7206 = vmatprep.subr.bf16.mxu0 0
      %7207 = vmatpush1.bf16.msra.mxu0 %v7031
      %7208 = vmatprep.subr.bf16.mxu0 0
      %7209 = vmatpush1.bf16.msra.mxu0 %v7030
      %7210 = vmatprep.subr.bf16.mxu0 0
      %7211 = vmatpush1.bf16.msra.mxu0 %v7029
      %7212 = vmatprep.subr.bf16.mxu0 0
      %7213 = vmatpush1.bf16.msra.mxu0 %v7028
      %7214 = vmatprep.subr.bf16.mxu0 0
      %7215 = vmatpush1.bf16.msra.mxu0 %v7027
      %7216 = vmatprep.subr.bf16.mxu0 0
      %7217 = vmatpush1.bf16.msra.mxu0 %v7026
      %7218 = vmatprep.subr.bf16.mxu0 0
      %7219 = vmatpush1.bf16.msra.mxu0 %v7025
      %7220 = vmatprep.subr.bf16.mxu0 0
      %7221 = vmatpush1.bf16.msra.mxu0 %v7024
      %7222 = vmatprep.subr.bf16.mxu0 0
      %7223 = vmatpush2.bf16.msra.mxu0 0
      %7224 = vmatprep.subr.bf16.mxu0 0
      %7225 = vmatpush2.bf16.msra.mxu0 0
      %7226 = vmatprep.subr.bf16.mxu0 0
      %7227 = vmatpush2.bf16.msra.mxu0 0
      %7228 = vmatprep.subr.bf16.mxu0 0
      %7229 = vmatpush2.bf16.msra.mxu0 0
      %7230 = vmatprep.subr.bf16.mxu0 0
      %7231 = vmatpush2.bf16.msra.mxu0 0
      %7232 = vmatprep.subr.bf16.mxu0 0
      %7233 = vmatpush2.bf16.msra.mxu0 0
      %7234 = vmatprep.subr.bf16.mxu0 0
      %7235 = vmatpush2.bf16.msra.mxu0 0
      %7236 = vmatprep.subr.bf16.mxu0 0
      %7237 = vmatpush2.bf16.msra.mxu0 0
      %7238 = vmatprep.mubr.bf16.mxu0 0
      %7239 = vmatmul.mubr.bf16.gmra.mxu0 %v7190
      %v7240 = vpop.f32.mrf.mxu0
      %v7241 = vadd.f32 0.0, %v7240
      %v7242 = vpop.f32.mrf.mxu0
      %v7243 = vpop.f32.mrf.mxu0
      %v7244 = vadd.f32 0.0, %v7243
      %v7245 = vpop.f32.mrf.mxu0
      %7246 = vmatprep.mubr.bf16.mxu0 0
      %7247 = vmatmul.mubr.bf16.gmra.mxu0 %v7191
      %v7248 = vpop.f32.mrf.mxu0
      %v7249 = vadd.f32 0.0, %v7248
      %v7250 = vpop.f32.mrf.mxu0
      %v7251 = vpop.f32.mrf.mxu0
      %v7252 = vadd.f32 0.0, %v7251
      %v7253 = vpop.f32.mrf.mxu0
      %7254 = vmatprep.mubr.bf16.mxu0 0
      %7255 = vmatmul.mubr.bf16.gmra.mxu0 %v7192
      %v7256 = vpop.f32.mrf.mxu0
      %v7257 = vadd.f32 0.0, %v7256
      %v7258 = vpop.f32.mrf.mxu0
      %v7259 = vpop.f32.mrf.mxu0
      %v7260 = vadd.f32 0.0, %v7259
      %v7261 = vpop.f32.mrf.mxu0
      %7262 = vmatprep.mubr.bf16.mxu0 0
      %7263 = vmatmul.mubr.bf16.gmra.mxu0 %v7193
      %v7264 = vpop.f32.mrf.mxu0
      %v7265 = vadd.f32 0.0, %v7264
      %v7266 = vpop.f32.mrf.mxu0
      %v7267 = vpop.f32.mrf.mxu0
      %v7268 = vadd.f32 0.0, %v7267
      %v7269 = vpop.f32.mrf.mxu0
      %7270 = vmatprep.mubr.bf16.mxu0 0
      %7271 = vmatmul.mubr.bf16.gmra.mxu0 %v7194
      %v7272 = vpop.f32.mrf.mxu0
      %v7273 = vadd.f32 0.0, %v7272
      %v7274 = vpop.f32.mrf.mxu0
      %v7275 = vpop.f32.mrf.mxu0
      %v7276 = vadd.f32 0.0, %v7275
      %v7277 = vpop.f32.mrf.mxu0
      %7278 = vmatprep.mubr.bf16.mxu0 0
      %7279 = vmatmul.mubr.bf16.gmra.mxu0 %v7195
      %v7280 = vpop.f32.mrf.mxu0
      %v7281 = vadd.f32 0.0, %v7280
      %v7282 = vpop.f32.mrf.mxu0
      %v7283 = vpop.f32.mrf.mxu0
      %v7284 = vadd.f32 0.0, %v7283
      %v7285 = vpop.f32.mrf.mxu0
      %7286 = vmatprep.mubr.bf16.mxu0 0
      %7287 = vmatmul.mubr.bf16.gmra.mxu0 %v7196
      %v7288 = vpop.f32.mrf.mxu0
      %v7289 = vadd.f32 0.0, %v7288
      %v7290 = vpop.f32.mrf.mxu0
      %v7291 = vpop.f32.mrf.mxu0
      %v7292 = vadd.f32 0.0, %v7291
      %v7293 = vpop.f32.mrf.mxu0
      %7294 = vmatprep.mubr.bf16.mxu0 0
      %7295 = vmatmul.mubr.bf16.gmra.mxu0 %v7197
      %v7296 = vpop.f32.mrf.mxu0
      %v7297 = vadd.f32 0.0, %v7296
      %v7298 = vpop.f32.mrf.mxu0
      %v7299 = vpop.f32.mrf.mxu0
      %v7300 = vadd.f32 0.0, %v7299
      %v7301 = vpop.f32.mrf.mxu0
      %7302 = vmatprep.mubr.bf16.mxu0 0
      %7303 = vmatmul.mubr.bf16.gmra.mxu0 %v7198
      %v7304 = vpop.f32.mrf.mxu0
      %v7305 = vadd.f32 0.0, %v7304
      %v7306 = vpop.f32.mrf.mxu0
      %v7307 = vpop.f32.mrf.mxu0
      %v7308 = vadd.f32 0.0, %v7307
      %v7309 = vpop.f32.mrf.mxu0
      %7310 = vmatprep.mubr.bf16.mxu0 0
      %7311 = vmatmul.mubr.bf16.gmra.mxu0 %v7199
      %v7312 = vpop.f32.mrf.mxu0
      %v7313 = vadd.f32 0.0, %v7312
      %v7314 = vpop.f32.mrf.mxu0
      %v7315 = vpop.f32.mrf.mxu0
      %v7316 = vadd.f32 0.0, %v7315
      %v7317 = vpop.f32.mrf.mxu0
      %7318 = vmatprep.mubr.bf16.mxu0 0
      %7319 = vmatmul.mubr.bf16.gmra.mxu0 %v7200
      %v7320 = vpop.f32.mrf.mxu0
      %v7321 = vadd.f32 0.0, %v7320
      %v7322 = vpop.f32.mrf.mxu0
      %v7323 = vpop.f32.mrf.mxu0
      %v7324 = vadd.f32 0.0, %v7323
      %v7325 = vpop.f32.mrf.mxu0
      %7326 = vmatprep.mubr.bf16.mxu0 0
      %7327 = vmatmul.mubr.bf16.gmra.mxu0 %v7201
      %v7328 = vpop.f32.mrf.mxu0
      %v7329 = vadd.f32 0.0, %v7328
      %v7330 = vpop.f32.mrf.mxu0
      %v7331 = vpop.f32.mrf.mxu0
      %v7332 = vadd.f32 0.0, %v7331
      %v7333 = vpop.f32.mrf.mxu0
      %7334 = vmatprep.mubr.bf16.mxu0 0
      %7335 = vmatmul.mubr.bf16.gmra.mxu0 %v7202
      %v7336 = vpop.f32.mrf.mxu0
      %v7337 = vadd.f32 0.0, %v7336
      %v7338 = vpop.f32.mrf.mxu0
      %v7339 = vpop.f32.mrf.mxu0
      %v7340 = vadd.f32 0.0, %v7339
      %v7341 = vpop.f32.mrf.mxu0
      %7342 = vmatprep.mubr.bf16.mxu0 0
      %7343 = vmatmul.mubr.bf16.gmra.mxu0 %v7203
      %v7344 = vpop.f32.mrf.mxu0
      %v7345 = vadd.f32 0.0, %v7344
      %v7346 = vpop.f32.mrf.mxu0
      %v7347 = vpop.f32.mrf.mxu0
      %v7348 = vadd.f32 0.0, %v7347
      %v7349 = vpop.f32.mrf.mxu0
      %7350 = vmatprep.mubr.bf16.mxu0 0
      %7351 = vmatmul.mubr.bf16.gmra.mxu0 %v7204
      %v7352 = vpop.f32.mrf.mxu0
      %v7353 = vadd.f32 0.0, %v7352
      %v7354 = vpop.f32.mrf.mxu0
      %v7355 = vpop.f32.mrf.mxu0
      %v7356 = vadd.f32 0.0, %v7355
      %v7357 = vpop.f32.mrf.mxu0
      %7358 = vmatprep.mubr.bf16.mxu0 0
      %7359 = vmatmul.mubr.bf16.gmra.mxu0 %v7205
      %v7360 = vpop.f32.mrf.mxu0
      %v7361 = vadd.f32 0.0, %v7360
      %v7362 = vpop.f32.mrf.mxu0
      %v7363 = vpop.f32.mrf.mxu0
      %v7364 = vadd.f32 0.0, %v7363
      %v7365 = vpop.f32.mrf.mxu0
      %7366 = vdwg.mxu0
      %v7375 = vunpack.c.l.b16 %v7048
      %v7376 = vunpack.c.h.b16 %v7048
      %v7377 = vunpack.c.l.b16 %v7049
      %v7378 = vunpack.c.h.b16 %v7049
      %v7379 = vunpack.c.l.b16 %v7050
      %v7380 = vunpack.c.h.b16 %v7050
      %v7381 = vunpack.c.l.b16 %v7051
      %v7382 = vunpack.c.h.b16 %v7051
      %v7383 = vunpack.c.l.b16 %v7052
      %v7384 = vunpack.c.h.b16 %v7052
      %v7385 = vunpack.c.l.b16 %v7053
      %v7386 = vunpack.c.h.b16 %v7053
      %v7387 = vunpack.c.l.b16 %v7054
      %v7388 = vunpack.c.h.b16 %v7054
      %v7389 = vunpack.c.l.b16 %v7055
      %v7390 = vunpack.c.h.b16 %v7055
      %v7391 = vlaneseq
      %v7392 = vshrl.u32 %v7391, 7
      %v7393 = vsub.s32 %v1946, %v7392
      %v7394 = vrot.slane %v7375, %v7393
      %v7395 = vlaneseq
      %v7396 = vshrl.u32 %v7395, 7
      %v7397 = vsub.s32 %v1951, %v7396
      %v7398 = vrot.slane %v7376, %v7397
      %v7399 = vsel %vm1956, %v7398, %v7394
      %v7400 = vlaneseq
      %v7401 = vshrl.u32 %v7400, 7
      %v7402 = vsub.s32 %v1958, %v7401
      %v7403 = vrot.slane %v7377, %v7402
      %v7404 = vsel %vm1963, %v7403, %v7399
      %v7405 = vlaneseq
      %v7406 = vshrl.u32 %v7405, 7
      %v7407 = vsub.s32 %v1965, %v7406
      %v7408 = vrot.slane %v7378, %v7407
      %v7409 = vsel %vm1970, %v7408, %v7404
      %v7410 = vlaneseq
      %v7411 = vshrl.u32 %v7410, 7
      %v7412 = vsub.s32 %v1972, %v7411
      %v7413 = vrot.slane %v7379, %v7412
      %v7414 = vsel %vm1977, %v7413, %v7409
      %v7415 = vlaneseq
      %v7416 = vshrl.u32 %v7415, 7
      %v7417 = vsub.s32 %v1979, %v7416
      %v7418 = vrot.slane %v7380, %v7417
      %v7419 = vsel %vm1984, %v7418, %v7414
      %v7420 = vlaneseq
      %v7421 = vshrl.u32 %v7420, 7
      %v7422 = vsub.s32 %v1986, %v7421
      %v7423 = vrot.slane %v7381, %v7422
      %v7424 = vsel %vm1991, %v7423, %v7419
      %v7425 = vlaneseq
      %v7426 = vshrl.u32 %v7425, 7
      %v7427 = vsub.s32 %v1993, %v7426
      %v7428 = vrot.slane %v7382, %v7427
      %v7429 = vsel %vm1998, %v7428, %v7424
      %v7430 = vlaneseq
      %v7431 = vshrl.u32 %v7430, 7
      %v7432 = vsub.s32 %v2000, %v7431
      %v7433 = vrot.slane %v7383, %v7432
      %v7434 = vsel %vm2005, %v7433, %v7429
      %v7435 = vlaneseq
      %v7436 = vshrl.u32 %v7435, 7
      %v7437 = vsub.s32 %v2007, %v7436
      %v7438 = vrot.slane %v7384, %v7437
      %v7439 = vsel %vm2012, %v7438, %v7434
      %v7440 = vlaneseq
      %v7441 = vshrl.u32 %v7440, 7
      %v7442 = vsub.s32 %v2014, %v7441
      %v7443 = vrot.slane %v7385, %v7442
      %v7444 = vsel %vm2019, %v7443, %v7439
      %v7445 = vlaneseq
      %v7446 = vshrl.u32 %v7445, 7
      %v7447 = vsub.s32 %v2021, %v7446
      %v7448 = vrot.slane %v7386, %v7447
      %v7449 = vsel %vm2026, %v7448, %v7444
      %v7450 = vlaneseq
      %v7451 = vshrl.u32 %v7450, 7
      %v7452 = vsub.s32 %v2028, %v7451
      %v7453 = vrot.slane %v7387, %v7452
      %v7454 = vsel %vm2033, %v7453, %v7449
      %v7455 = vlaneseq
      %v7456 = vshrl.u32 %v7455, 7
      %v7457 = vsub.s32 %v2035, %v7456
      %v7458 = vrot.slane %v7388, %v7457
      %v7459 = vsel %vm2040, %v7458, %v7454
      %v7460 = vlaneseq
      %v7461 = vshrl.u32 %v7460, 7
      %v7462 = vsub.s32 %v2042, %v7461
      %v7463 = vrot.slane %v7389, %v7462
      %v7464 = vsel %vm2047, %v7463, %v7459
      %v7465 = vlaneseq
      %v7466 = vshrl.u32 %v7465, 7
      %v7467 = vsub.s32 %v2049, %v7466
      %v7468 = vrot.slane %v7390, %v7467
      %v7469 = vsel %vm2054, %v7468, %v7464
      %v7470 = vpack.c.b16 %v7469, %v7469
      %7472 = vmatprep.subr.bf16.mxu0 0
      %7473 = vmatpush1.bf16.msra.mxu0 %v7031
      %7474 = vmatprep.subr.bf16.mxu0 0
      %7475 = vmatpush1.bf16.msra.mxu0 %v7030
      %7476 = vmatprep.subr.bf16.mxu0 0
      %7477 = vmatpush1.bf16.msra.mxu0 %v7029
      %7478 = vmatprep.subr.bf16.mxu0 0
      %7479 = vmatpush1.bf16.msra.mxu0 %v7028
      %7480 = vmatprep.subr.bf16.mxu0 0
      %7481 = vmatpush1.bf16.msra.mxu0 %v7027
      %7482 = vmatprep.subr.bf16.mxu0 0
      %7483 = vmatpush1.bf16.msra.mxu0 %v7026
      %7484 = vmatprep.subr.bf16.mxu0 0
      %7485 = vmatpush1.bf16.msra.mxu0 %v7025
      %7486 = vmatprep.subr.bf16.mxu0 0
      %7487 = vmatpush1.bf16.msra.mxu0 %v7024
      %7488 = vmatprep.subr.bf16.mxu0 0
      %7489 = vmatpush2.bf16.msra.mxu0 0
      %7490 = vmatprep.subr.bf16.mxu0 0
      %7491 = vmatpush2.bf16.msra.mxu0 0
      %7492 = vmatprep.subr.bf16.mxu0 0
      %7493 = vmatpush2.bf16.msra.mxu0 0
      %7494 = vmatprep.subr.bf16.mxu0 0
      %7495 = vmatpush2.bf16.msra.mxu0 0
      %7496 = vmatprep.subr.bf16.mxu0 0
      %7497 = vmatpush2.bf16.msra.mxu0 0
      %7498 = vmatprep.subr.bf16.mxu0 0
      %7499 = vmatpush2.bf16.msra.mxu0 0
      %7500 = vmatprep.subr.bf16.mxu0 0
      %7501 = vmatpush2.bf16.msra.mxu0 0
      %7502 = vmatprep.subr.bf16.mxu0 0
      %7503 = vmatpush2.bf16.msra.mxu0 0
      %7504 = vmatprep.mubr.bf16.mxu0 0
      %7505 = vmatmul.mubr.bf16.gmra.mxu0 %v7470
      %v7506 = vpop.f32.mrf.mxu0
      %v7507 = vadd.f32 1e-09, %v7506
      %v7508 = vpop.f32.mrf.mxu0
      %v7509 = vpop.f32.mrf.mxu0
      %v7510 = vpop.f32.mrf.mxu0
      %7511 = vdwg.mxu0
      %v7512 = vrcp.pop %v7507
      %v7513 = vlaneseq
      %v7514 = vshrl.u32 %v7513, 7
      %v7515 = vsub.s32 0, %v7514
      %v7516 = vrot.slane %v7512, %v7515
      %v7517 = vmul.f32 %v7241, %v7516
      %v7518 = vmul.f32 %v7244, %v7516
      %v7519 = vmul.f32 %v7249, %v7516
      %v7520 = vmul.f32 %v7252, %v7516
      %v7521 = vmul.f32 %v7257, %v7516
      %v7522 = vmul.f32 %v7260, %v7516
      %v7523 = vmul.f32 %v7265, %v7516
      %v7524 = vmul.f32 %v7268, %v7516
      %v7525 = vmul.f32 %v7273, %v7516
      %v7526 = vmul.f32 %v7276, %v7516
      %v7527 = vmul.f32 %v7281, %v7516
      %v7528 = vmul.f32 %v7284, %v7516
      %v7529 = vmul.f32 %v7289, %v7516
      %v7530 = vmul.f32 %v7292, %v7516
      %v7531 = vmul.f32 %v7297, %v7516
      %v7532 = vmul.f32 %v7300, %v7516
      %v7533 = vmul.f32 %v7305, %v7516
      %v7534 = vmul.f32 %v7308, %v7516
      %v7535 = vmul.f32 %v7313, %v7516
      %v7536 = vmul.f32 %v7316, %v7516
      %v7537 = vmul.f32 %v7321, %v7516
      %v7538 = vmul.f32 %v7324, %v7516
      %v7539 = vmul.f32 %v7329, %v7516
      %v7540 = vmul.f32 %v7332, %v7516
      %v7541 = vmul.f32 %v7337, %v7516
      %v7542 = vmul.f32 %v7340, %v7516
      %v7543 = vmul.f32 %v7345, %v7516
      %v7544 = vmul.f32 %v7348, %v7516
      %v7545 = vmul.f32 %v7353, %v7516
      %v7546 = vmul.f32 %v7356, %v7516
      %v7547 = vmul.f32 %v7361, %v7516
      %v7548 = vmul.f32 %v7364, %v7516
      %s7549 = scalar_lea.vmem %s5, 512
      %v7550 = vld [vmem:[%s7549] sm:$0xff]
      %v7551 = vld [vmem:[%s7549 + $0x8] sm:$0xff]
      %v7552 = vld [vmem:[%s7549 + $0x10] sm:$0xff]
      %v7553 = vld [vmem:[%s7549 + $0x18] sm:$0xff]
      %v7554 = vld [vmem:[%s7549 + $0x20] sm:$0xff]
      %v7555 = vld [vmem:[%s7549 + $0x28] sm:$0xff]
      %v7556 = vld [vmem:[%s7549 + $0x30] sm:$0xff]
      %v7557 = vld [vmem:[%s7549 + $0x38] sm:$0xff]
      %v7558 = vld [vmem:[%s7549 + $0x40] sm:$0xff]
      %v7559 = vld [vmem:[%s7549 + $0x48] sm:$0xff]
      %v7560 = vld [vmem:[%s7549 + $0x50] sm:$0xff]
      %v7561 = vld [vmem:[%s7549 + $0x58] sm:$0xff]
      %v7562 = vld [vmem:[%s7549 + $0x60] sm:$0xff]
      %v7563 = vld [vmem:[%s7549 + $0x68] sm:$0xff]
      %v7564 = vld [vmem:[%s7549 + $0x70] sm:$0xff]
      %v7565 = vld [vmem:[%s7549 + $0x78] sm:$0xff]
      %v7566 = vld [vmem:[%s7549 + $0x80] sm:$0xff]
      %v7567 = vld [vmem:[%s7549 + $0x88] sm:$0xff]
      %v7568 = vld [vmem:[%s7549 + $0x90] sm:$0xff]
      %v7569 = vld [vmem:[%s7549 + $0x98] sm:$0xff]
      %v7570 = vld [vmem:[%s7549 + $0xa0] sm:$0xff]
      %v7571 = vld [vmem:[%s7549 + $0xa8] sm:$0xff]
      %v7572 = vld [vmem:[%s7549 + $0xb0] sm:$0xff]
      %v7573 = vld [vmem:[%s7549 + $0xb8] sm:$0xff]
      %v7574 = vld [vmem:[%s7549 + $0xc0] sm:$0xff]
      %v7575 = vld [vmem:[%s7549 + $0xc8] sm:$0xff]
      %v7576 = vld [vmem:[%s7549 + $0xd0] sm:$0xff]
      %v7577 = vld [vmem:[%s7549 + $0xd8] sm:$0xff]
      %v7578 = vld [vmem:[%s7549 + $0xe0] sm:$0xff]
      %v7579 = vld [vmem:[%s7549 + $0xe8] sm:$0xff]
      %v7580 = vld [vmem:[%s7549 + $0xf0] sm:$0xff]
      %v7581 = vld [vmem:[%s7549 + $0xf8] sm:$0xff]
      %v7582 = vsub.f32 %v5373, %v7517
      %v7583 = vsub.f32 %v5374, %v7518
      %v7584 = vsub.f32 %v5375, %v7519
      %v7585 = vsub.f32 %v5376, %v7520
      %v7586 = vsub.f32 %v5377, %v7521
      %v7587 = vsub.f32 %v5378, %v7522
      %v7588 = vsub.f32 %v5379, %v7523
      %v7589 = vsub.f32 %v5380, %v7524
      %v7590 = vsub.f32 %v5381, %v7525
      %v7591 = vsub.f32 %v5382, %v7526
      %v7592 = vsub.f32 %v5383, %v7527
      %v7593 = vsub.f32 %v5384, %v7528
      %v7594 = vsub.f32 %v5385, %v7529
      %v7595 = vsub.f32 %v5386, %v7530
      %v7596 = vsub.f32 %v5387, %v7531
      %v7597 = vsub.f32 %v5388, %v7532
      %v7598 = vsub.f32 %v5389, %v7533
      %v7599 = vsub.f32 %v5390, %v7534
      %v7600 = vsub.f32 %v5391, %v7535
      %v7601 = vsub.f32 %v5392, %v7536
      %v7602 = vsub.f32 %v5393, %v7537
      %v7603 = vsub.f32 %v5394, %v7538
      %v7604 = vsub.f32 %v5395, %v7539
      %v7605 = vsub.f32 %v5396, %v7540
      %v7606 = vsub.f32 %v5397, %v7541
      %v7607 = vsub.f32 %v5398, %v7542
      %v7608 = vsub.f32 %v5399, %v7543
      %v7609 = vsub.f32 %v5400, %v7544
      %v7610 = vsub.f32 %v5401, %v7545
      %v7611 = vsub.f32 %v5402, %v7546
      %v7612 = vsub.f32 %v5403, %v7547
      %v7613 = vsub.f32 %v5404, %v7548
      %v7614 = vpack.c.bf16 %v7583, %v7582
      %v7615 = vpack.c.bf16 %v7585, %v7584
      %v7616 = vpack.c.bf16 %v7587, %v7586
      %v7617 = vpack.c.bf16 %v7589, %v7588
      %v7618 = vpack.c.bf16 %v7591, %v7590
      %v7619 = vpack.c.bf16 %v7593, %v7592
      %v7620 = vpack.c.bf16 %v7595, %v7594
      %v7621 = vpack.c.bf16 %v7597, %v7596
      %v7622 = vpack.c.bf16 %v7599, %v7598
      %v7623 = vpack.c.bf16 %v7601, %v7600
      %v7624 = vpack.c.bf16 %v7603, %v7602
      %v7625 = vpack.c.bf16 %v7605, %v7604
      %v7626 = vpack.c.bf16 %v7607, %v7606
      %v7627 = vpack.c.bf16 %v7609, %v7608
      %v7628 = vpack.c.bf16 %v7611, %v7610
      %v7629 = vpack.c.bf16 %v7613, %v7612
      %s7630 = scalar_lea.vmem %s6, 512
      %v7631 = vld [vmem:[%s7630] sm:$0xff]
      %v7632 = vld [vmem:[%s7630 + $0x8] sm:$0xff]
      %v7633 = vld [vmem:[%s7630 + $0x10] sm:$0xff]
      %v7634 = vld [vmem:[%s7630 + $0x18] sm:$0xff]
      %v7635 = vld [vmem:[%s7630 + $0x20] sm:$0xff]
      %v7636 = vld [vmem:[%s7630 + $0x28] sm:$0xff]
      %v7637 = vld [vmem:[%s7630 + $0x30] sm:$0xff]
      %v7638 = vld [vmem:[%s7630 + $0x38] sm:$0xff]
      %v7639 = vld [vmem:[%s7630 + $0x40] sm:$0xff]
      %v7640 = vld [vmem:[%s7630 + $0x48] sm:$0xff]
      %v7641 = vld [vmem:[%s7630 + $0x50] sm:$0xff]
      %v7642 = vld [vmem:[%s7630 + $0x58] sm:$0xff]
      %v7643 = vld [vmem:[%s7630 + $0x60] sm:$0xff]
      %v7644 = vld [vmem:[%s7630 + $0x68] sm:$0xff]
      %v7645 = vld [vmem:[%s7630 + $0x70] sm:$0xff]
      %v7646 = vld [vmem:[%s7630 + $0x78] sm:$0xff]
      %v7647 = vld [vmem:[%s7630 + $0x80] sm:$0xff]
      %v7648 = vld [vmem:[%s7630 + $0x88] sm:$0xff]
      %v7649 = vld [vmem:[%s7630 + $0x90] sm:$0xff]
      %v7650 = vld [vmem:[%s7630 + $0x98] sm:$0xff]
      %v7651 = vld [vmem:[%s7630 + $0xa0] sm:$0xff]
      %v7652 = vld [vmem:[%s7630 + $0xa8] sm:$0xff]
      %v7653 = vld [vmem:[%s7630 + $0xb0] sm:$0xff]
      %v7654 = vld [vmem:[%s7630 + $0xb8] sm:$0xff]
      %v7655 = vld [vmem:[%s7630 + $0xc0] sm:$0xff]
      %v7656 = vld [vmem:[%s7630 + $0xc8] sm:$0xff]
      %v7657 = vld [vmem:[%s7630 + $0xd0] sm:$0xff]
      %v7658 = vld [vmem:[%s7630 + $0xd8] sm:$0xff]
      %v7659 = vld [vmem:[%s7630 + $0xe0] sm:$0xff]
      %v7660 = vld [vmem:[%s7630 + $0xe8] sm:$0xff]
      %v7661 = vld [vmem:[%s7630 + $0xf0] sm:$0xff]
      %v7662 = vld [vmem:[%s7630 + $0xf8] sm:$0xff]
      %7664 = vset.pattern.permute.xlu0 0
      %7665 = vperm.xlu0 %7664, %v7631
      %v7666 = vpop.permute.xlu0 %7665
      %7669 = vset.pattern.permute.xlu0 0
      %7670 = vperm.xlu0 %7669, %v7632
      %v7671 = vpop.permute.xlu0 %7670
      %7674 = vset.pattern.permute.xlu0 0
      %7675 = vperm.xlu0 %7674, %v7633
      %v7676 = vpop.permute.xlu0 %7675
      %7679 = vset.pattern.permute.xlu0 0
      %7680 = vperm.xlu0 %7679, %v7634
      %v7681 = vpop.permute.xlu0 %7680
      %7684 = vset.pattern.permute.xlu0 0
      %7685 = vperm.xlu0 %7684, %v7635
      %v7686 = vpop.permute.xlu0 %7685
      %7689 = vset.pattern.permute.xlu0 0
      %7690 = vperm.xlu0 %7689, %v7636
      %v7691 = vpop.permute.xlu0 %7690
      %7694 = vset.pattern.permute.xlu0 0
      %7695 = vperm.xlu0 %7694, %v7637
      %v7696 = vpop.permute.xlu0 %7695
      %7699 = vset.pattern.permute.xlu0 0
      %7700 = vperm.xlu0 %7699, %v7638
      %v7701 = vpop.permute.xlu0 %7700
      %7704 = vset.pattern.permute.xlu0 0
      %7705 = vperm.xlu0 %7704, %v7639
      %v7706 = vpop.permute.xlu0 %7705
      %7709 = vset.pattern.permute.xlu0 0
      %7710 = vperm.xlu0 %7709, %v7640
      %v7711 = vpop.permute.xlu0 %7710
      %7714 = vset.pattern.permute.xlu0 0
      %7715 = vperm.xlu0 %7714, %v7641
      %v7716 = vpop.permute.xlu0 %7715
      %7719 = vset.pattern.permute.xlu0 0
      %7720 = vperm.xlu0 %7719, %v7642
      %v7721 = vpop.permute.xlu0 %7720
      %7724 = vset.pattern.permute.xlu0 0
      %7725 = vperm.xlu0 %7724, %v7643
      %v7726 = vpop.permute.xlu0 %7725
      %7729 = vset.pattern.permute.xlu0 0
      %7730 = vperm.xlu0 %7729, %v7644
      %v7731 = vpop.permute.xlu0 %7730
      %7734 = vset.pattern.permute.xlu0 0
      %7735 = vperm.xlu0 %7734, %v7645
      %v7736 = vpop.permute.xlu0 %7735
      %7739 = vset.pattern.permute.xlu0 0
      %7740 = vperm.xlu0 %7739, %v7646
      %v7741 = vpop.permute.xlu0 %7740
      %7744 = vset.pattern.permute.xlu0 0
      %7745 = vperm.xlu0 %7744, %v7647
      %v7746 = vpop.permute.xlu0 %7745
      %7749 = vset.pattern.permute.xlu0 0
      %7750 = vperm.xlu0 %7749, %v7648
      %v7751 = vpop.permute.xlu0 %7750
      %7754 = vset.pattern.permute.xlu0 0
      %7755 = vperm.xlu0 %7754, %v7649
      %v7756 = vpop.permute.xlu0 %7755
      %7759 = vset.pattern.permute.xlu0 0
      %7760 = vperm.xlu0 %7759, %v7650
      %v7761 = vpop.permute.xlu0 %7760
      %7764 = vset.pattern.permute.xlu0 0
      %7765 = vperm.xlu0 %7764, %v7651
      %v7766 = vpop.permute.xlu0 %7765
      %7769 = vset.pattern.permute.xlu0 0
      %7770 = vperm.xlu0 %7769, %v7652
      %v7771 = vpop.permute.xlu0 %7770
      %7774 = vset.pattern.permute.xlu0 0
      %7775 = vperm.xlu0 %7774, %v7653
      %v7776 = vpop.permute.xlu0 %7775
      %7779 = vset.pattern.permute.xlu0 0
      %7780 = vperm.xlu0 %7779, %v7654
      %v7781 = vpop.permute.xlu0 %7780
      %7784 = vset.pattern.permute.xlu0 0
      %7785 = vperm.xlu0 %7784, %v7655
      %v7786 = vpop.permute.xlu0 %7785
      %7789 = vset.pattern.permute.xlu0 0
      %7790 = vperm.xlu0 %7789, %v7656
      %v7791 = vpop.permute.xlu0 %7790
      %7794 = vset.pattern.permute.xlu0 0
      %7795 = vperm.xlu0 %7794, %v7657
      %v7796 = vpop.permute.xlu0 %7795
      %7799 = vset.pattern.permute.xlu0 0
      %7800 = vperm.xlu0 %7799, %v7658
      %v7801 = vpop.permute.xlu0 %7800
      %7804 = vset.pattern.permute.xlu0 0
      %7805 = vperm.xlu0 %7804, %v7659
      %v7806 = vpop.permute.xlu0 %7805
      %7809 = vset.pattern.permute.xlu0 0
      %7810 = vperm.xlu0 %7809, %v7660
      %v7811 = vpop.permute.xlu0 %7810
      %7814 = vset.pattern.permute.xlu0 0
      %7815 = vperm.xlu0 %7814, %v7661
      %v7816 = vpop.permute.xlu0 %7815
      %7819 = vset.pattern.permute.xlu0 0
      %7820 = vperm.xlu0 %7819, %v7662
      %v7821 = vpop.permute.xlu0 %7820
      %v7855 = vunpack.c.l.b16 %v7550
      %v7856 = vunpack.c.h.b16 %v7550
      %v7857 = vunpack.c.l.b16 %v7551
      %v7858 = vunpack.c.h.b16 %v7551
      %v7859 = vunpack.c.l.b16 %v7552
      %v7860 = vunpack.c.h.b16 %v7552
      %v7861 = vunpack.c.l.b16 %v7553
      %v7862 = vunpack.c.h.b16 %v7553
      %v7863 = vunpack.c.l.b16 %v7554
      %v7864 = vunpack.c.h.b16 %v7554
      %v7865 = vunpack.c.l.b16 %v7555
      %v7866 = vunpack.c.h.b16 %v7555
      %v7867 = vunpack.c.l.b16 %v7556
      %v7868 = vunpack.c.h.b16 %v7556
      %v7869 = vunpack.c.l.b16 %v7557
      %v7870 = vunpack.c.h.b16 %v7557
      %v7871 = vunpack.c.l.b16 %v7558
      %v7872 = vunpack.c.h.b16 %v7558
      %v7873 = vunpack.c.l.b16 %v7559
      %v7874 = vunpack.c.h.b16 %v7559
      %v7875 = vunpack.c.l.b16 %v7560
      %v7876 = vunpack.c.h.b16 %v7560
      %v7877 = vunpack.c.l.b16 %v7561
      %v7878 = vunpack.c.h.b16 %v7561
      %v7879 = vunpack.c.l.b16 %v7562
      %v7880 = vunpack.c.h.b16 %v7562
      %v7881 = vunpack.c.l.b16 %v7563
      %v7882 = vunpack.c.h.b16 %v7563
      %v7883 = vunpack.c.l.b16 %v7564
      %v7884 = vunpack.c.h.b16 %v7564
      %v7885 = vunpack.c.l.b16 %v7565
      %v7886 = vunpack.c.h.b16 %v7565
      %v7887 = vunpack.c.l.b16 %v7566
      %v7888 = vunpack.c.h.b16 %v7566
      %v7889 = vunpack.c.l.b16 %v7567
      %v7890 = vunpack.c.h.b16 %v7567
      %v7891 = vunpack.c.l.b16 %v7568
      %v7892 = vunpack.c.h.b16 %v7568
      %v7893 = vunpack.c.l.b16 %v7569
      %v7894 = vunpack.c.h.b16 %v7569
      %v7895 = vunpack.c.l.b16 %v7570
      %v7896 = vunpack.c.h.b16 %v7570
      %v7897 = vunpack.c.l.b16 %v7571
      %v7898 = vunpack.c.h.b16 %v7571
      %v7899 = vunpack.c.l.b16 %v7572
      %v7900 = vunpack.c.h.b16 %v7572
      %v7901 = vunpack.c.l.b16 %v7573
      %v7902 = vunpack.c.h.b16 %v7573
      %v7903 = vunpack.c.l.b16 %v7574
      %v7904 = vunpack.c.h.b16 %v7574
      %v7905 = vunpack.c.l.b16 %v7575
      %v7906 = vunpack.c.h.b16 %v7575
      %v7907 = vunpack.c.l.b16 %v7576
      %v7908 = vunpack.c.h.b16 %v7576
      %v7909 = vunpack.c.l.b16 %v7577
      %v7910 = vunpack.c.h.b16 %v7577
      %v7911 = vunpack.c.l.b16 %v7578
      %v7912 = vunpack.c.h.b16 %v7578
      %v7913 = vunpack.c.l.b16 %v7579
      %v7914 = vunpack.c.h.b16 %v7579
      %v7915 = vunpack.c.l.b16 %v7580
      %v7916 = vunpack.c.h.b16 %v7580
      %v7917 = vunpack.c.l.b16 %v7581
      %v7918 = vunpack.c.h.b16 %v7581
      %v7919 = vpack.c.b16 %v7857, %v7855
      %v7920 = vpack.c.b16 %v7858, %v7856
      %v7921 = vpack.c.b16 %v7861, %v7859
      %v7922 = vpack.c.b16 %v7862, %v7860
      %v7923 = vpack.c.b16 %v7865, %v7863
      %v7924 = vpack.c.b16 %v7866, %v7864
      %v7925 = vpack.c.b16 %v7869, %v7867
      %v7926 = vpack.c.b16 %v7870, %v7868
      %v7927 = vpack.c.b16 %v7873, %v7871
      %v7928 = vpack.c.b16 %v7874, %v7872
      %v7929 = vpack.c.b16 %v7877, %v7875
      %v7930 = vpack.c.b16 %v7878, %v7876
      %v7931 = vpack.c.b16 %v7881, %v7879
      %v7932 = vpack.c.b16 %v7882, %v7880
      %v7933 = vpack.c.b16 %v7885, %v7883
      %v7934 = vpack.c.b16 %v7886, %v7884
      %v7935 = vpack.c.b16 %v7889, %v7887
      %v7936 = vpack.c.b16 %v7890, %v7888
      %v7937 = vpack.c.b16 %v7893, %v7891
      %v7938 = vpack.c.b16 %v7894, %v7892
      %v7939 = vpack.c.b16 %v7897, %v7895
      %v7940 = vpack.c.b16 %v7898, %v7896
      %v7941 = vpack.c.b16 %v7901, %v7899
      %v7942 = vpack.c.b16 %v7902, %v7900
      %v7943 = vpack.c.b16 %v7905, %v7903
      %v7944 = vpack.c.b16 %v7906, %v7904
      %v7945 = vpack.c.b16 %v7909, %v7907
      %v7946 = vpack.c.b16 %v7910, %v7908
      %v7947 = vpack.c.b16 %v7913, %v7911
      %v7948 = vpack.c.b16 %v7914, %v7912
      %v7949 = vpack.c.b16 %v7917, %v7915
      %v7950 = vpack.c.b16 %v7918, %v7916
      %7983 = vmatprep.subr.bf16.mxu0 0
      %7984 = vmatpush1.bf16.msra.mxu0 %v7621
      %7985 = vmatprep.subr.bf16.mxu0 0
      %7986 = vmatpush1.bf16.msra.mxu0 %v7620
      %7987 = vmatprep.subr.bf16.mxu0 0
      %7988 = vmatpush1.bf16.msra.mxu0 %v7619
      %7989 = vmatprep.subr.bf16.mxu0 0
      %7990 = vmatpush1.bf16.msra.mxu0 %v7618
      %7991 = vmatprep.subr.bf16.mxu0 0
      %7992 = vmatpush1.bf16.msra.mxu0 %v7617
      %7993 = vmatprep.subr.bf16.mxu0 0
      %7994 = vmatpush1.bf16.msra.mxu0 %v7616
      %7995 = vmatprep.subr.bf16.mxu0 0
      %7996 = vmatpush1.bf16.msra.mxu0 %v7615
      %7997 = vmatprep.subr.bf16.mxu0 0
      %7998 = vmatpush1.bf16.msra.mxu0 %v7614
      %7999 = vmatprep.subr.bf16.mxu0 0
      %8000 = vmatpush2.bf16.msra.mxu0 %v7629
      %8001 = vmatprep.subr.bf16.mxu0 0
      %8002 = vmatpush2.bf16.msra.mxu0 %v7628
      %8003 = vmatprep.subr.bf16.mxu0 0
      %8004 = vmatpush2.bf16.msra.mxu0 %v7627
      %8005 = vmatprep.subr.bf16.mxu0 0
      %8006 = vmatpush2.bf16.msra.mxu0 %v7626
      %8007 = vmatprep.subr.bf16.mxu0 0
      %8008 = vmatpush2.bf16.msra.mxu0 %v7625
      %8009 = vmatprep.subr.bf16.mxu0 0
      %8010 = vmatpush2.bf16.msra.mxu0 %v7624
      %8011 = vmatprep.subr.bf16.mxu0 0
      %8012 = vmatpush2.bf16.msra.mxu0 %v7623
      %8013 = vmatprep.subr.bf16.mxu0 0
      %8014 = vmatpush2.bf16.msra.mxu0 %v7622
      %8015 = vmatprep.mubr.bf16.mxu0 %v7920
      %8016 = vmatmul.mubr.bf16.gmra.mxu0 %v7919
      %v8017 = vpop.f32.mrf.mxu0
      %v8018 = vadd.f32 %v7666, %v8017
      %v8019 = vpop.f32.mrf.mxu0
      %v8020 = vpop.f32.mrf.mxu0
      %v8021 = vadd.f32 %v7671, %v8020
      %v8022 = vpop.f32.mrf.mxu0
      %8023 = vmatprep.mubr.bf16.mxu0 %v7922
      %8024 = vmatmul.mubr.bf16.gmra.mxu0 %v7921
      %v8025 = vpop.f32.mrf.mxu0
      %v8026 = vadd.f32 %v7676, %v8025
      %v8027 = vpop.f32.mrf.mxu0
      %v8028 = vpop.f32.mrf.mxu0
      %v8029 = vadd.f32 %v7681, %v8028
      %v8030 = vpop.f32.mrf.mxu0
      %8031 = vmatprep.mubr.bf16.mxu0 %v7924
      %8032 = vmatmul.mubr.bf16.gmra.mxu0 %v7923
      %v8033 = vpop.f32.mrf.mxu0
      %v8034 = vadd.f32 %v7686, %v8033
      %v8035 = vpop.f32.mrf.mxu0
      %v8036 = vpop.f32.mrf.mxu0
      %v8037 = vadd.f32 %v7691, %v8036
      %v8038 = vpop.f32.mrf.mxu0
      %8039 = vmatprep.mubr.bf16.mxu0 %v7926
      %8040 = vmatmul.mubr.bf16.gmra.mxu0 %v7925
      %v8041 = vpop.f32.mrf.mxu0
      %v8042 = vadd.f32 %v7696, %v8041
      %v8043 = vpop.f32.mrf.mxu0
      %v8044 = vpop.f32.mrf.mxu0
      %v8045 = vadd.f32 %v7701, %v8044
      %v8046 = vpop.f32.mrf.mxu0
      %8047 = vmatprep.mubr.bf16.mxu0 %v7928
      %8048 = vmatmul.mubr.bf16.gmra.mxu0 %v7927
      %v8049 = vpop.f32.mrf.mxu0
      %v8050 = vadd.f32 %v7706, %v8049
      %v8051 = vpop.f32.mrf.mxu0
      %v8052 = vpop.f32.mrf.mxu0
      %v8053 = vadd.f32 %v7711, %v8052
      %v8054 = vpop.f32.mrf.mxu0
      %8055 = vmatprep.mubr.bf16.mxu0 %v7930
      %8056 = vmatmul.mubr.bf16.gmra.mxu0 %v7929
      %v8057 = vpop.f32.mrf.mxu0
      %v8058 = vadd.f32 %v7716, %v8057
      %v8059 = vpop.f32.mrf.mxu0
      %v8060 = vpop.f32.mrf.mxu0
      %v8061 = vadd.f32 %v7721, %v8060
      %v8062 = vpop.f32.mrf.mxu0
      %8063 = vmatprep.mubr.bf16.mxu0 %v7932
      %8064 = vmatmul.mubr.bf16.gmra.mxu0 %v7931
      %v8065 = vpop.f32.mrf.mxu0
      %v8066 = vadd.f32 %v7726, %v8065
      %v8067 = vpop.f32.mrf.mxu0
      %v8068 = vpop.f32.mrf.mxu0
      %v8069 = vadd.f32 %v7731, %v8068
      %v8070 = vpop.f32.mrf.mxu0
      %8071 = vmatprep.mubr.bf16.mxu0 %v7934
      %8072 = vmatmul.mubr.bf16.gmra.mxu0 %v7933
      %v8073 = vpop.f32.mrf.mxu0
      %v8074 = vadd.f32 %v7736, %v8073
      %v8075 = vpop.f32.mrf.mxu0
      %v8076 = vpop.f32.mrf.mxu0
      %v8077 = vadd.f32 %v7741, %v8076
      %v8078 = vpop.f32.mrf.mxu0
      %8079 = vmatprep.mubr.bf16.mxu0 %v7936
      %8080 = vmatmul.mubr.bf16.gmra.mxu0 %v7935
      %v8081 = vpop.f32.mrf.mxu0
      %v8082 = vadd.f32 %v7746, %v8081
      %v8083 = vpop.f32.mrf.mxu0
      %v8084 = vpop.f32.mrf.mxu0
      %v8085 = vadd.f32 %v7751, %v8084
      %v8086 = vpop.f32.mrf.mxu0
      %8087 = vmatprep.mubr.bf16.mxu0 %v7938
      %8088 = vmatmul.mubr.bf16.gmra.mxu0 %v7937
      %v8089 = vpop.f32.mrf.mxu0
      %v8090 = vadd.f32 %v7756, %v8089
      %v8091 = vpop.f32.mrf.mxu0
      %v8092 = vpop.f32.mrf.mxu0
      %v8093 = vadd.f32 %v7761, %v8092
      %v8094 = vpop.f32.mrf.mxu0
      %8095 = vmatprep.mubr.bf16.mxu0 %v7940
      %8096 = vmatmul.mubr.bf16.gmra.mxu0 %v7939
      %v8097 = vpop.f32.mrf.mxu0
      %v8098 = vadd.f32 %v7766, %v8097
      %v8099 = vpop.f32.mrf.mxu0
      %v8100 = vpop.f32.mrf.mxu0
      %v8101 = vadd.f32 %v7771, %v8100
      %v8102 = vpop.f32.mrf.mxu0
      %8103 = vmatprep.mubr.bf16.mxu0 %v7942
      %8104 = vmatmul.mubr.bf16.gmra.mxu0 %v7941
      %v8105 = vpop.f32.mrf.mxu0
      %v8106 = vadd.f32 %v7776, %v8105
      %v8107 = vpop.f32.mrf.mxu0
      %v8108 = vpop.f32.mrf.mxu0
      %v8109 = vadd.f32 %v7781, %v8108
      %v8110 = vpop.f32.mrf.mxu0
      %8111 = vmatprep.mubr.bf16.mxu0 %v7944
      %8112 = vmatmul.mubr.bf16.gmra.mxu0 %v7943
      %v8113 = vpop.f32.mrf.mxu0
      %v8114 = vadd.f32 %v7786, %v8113
      %v8115 = vpop.f32.mrf.mxu0
      %v8116 = vpop.f32.mrf.mxu0
      %v8117 = vadd.f32 %v7791, %v8116
      %v8118 = vpop.f32.mrf.mxu0
      %8119 = vmatprep.mubr.bf16.mxu0 %v7946
      %8120 = vmatmul.mubr.bf16.gmra.mxu0 %v7945
      %v8121 = vpop.f32.mrf.mxu0
      %v8122 = vadd.f32 %v7796, %v8121
      %v8123 = vpop.f32.mrf.mxu0
      %v8124 = vpop.f32.mrf.mxu0
      %v8125 = vadd.f32 %v7801, %v8124
      %v8126 = vpop.f32.mrf.mxu0
      %8127 = vmatprep.mubr.bf16.mxu0 %v7948
      %8128 = vmatmul.mubr.bf16.gmra.mxu0 %v7947
      %v8129 = vpop.f32.mrf.mxu0
      %v8130 = vadd.f32 %v7806, %v8129
      %v8131 = vpop.f32.mrf.mxu0
      %v8132 = vpop.f32.mrf.mxu0
      %v8133 = vadd.f32 %v7811, %v8132
      %v8134 = vpop.f32.mrf.mxu0
      %8135 = vmatprep.mubr.bf16.mxu0 %v7950
      %8136 = vmatmul.mubr.bf16.gmra.mxu0 %v7949
      %v8137 = vpop.f32.mrf.mxu0
      %v8138 = vadd.f32 %v7816, %v8137
      %v8139 = vpop.f32.mrf.mxu0
      %v8140 = vpop.f32.mrf.mxu0
      %v8141 = vadd.f32 %v7821, %v8140
      %v8142 = vpop.f32.mrf.mxu0
      %8143 = vdwg.mxu0
      %vm8144 = vcmp.ge.f32.partialorder %v8018, 0.0
      %vm8145 = vcmp.ge.f32.partialorder %v8021, 0.0
      %vm8146 = vcmp.ge.f32.partialorder %v8026, 0.0
      %vm8147 = vcmp.ge.f32.partialorder %v8029, 0.0
      %vm8148 = vcmp.ge.f32.partialorder %v8034, 0.0
      %vm8149 = vcmp.ge.f32.partialorder %v8037, 0.0
      %vm8150 = vcmp.ge.f32.partialorder %v8042, 0.0
      %vm8151 = vcmp.ge.f32.partialorder %v8045, 0.0
      %vm8152 = vcmp.ge.f32.partialorder %v8050, 0.0
      %vm8153 = vcmp.ge.f32.partialorder %v8053, 0.0
      %vm8154 = vcmp.ge.f32.partialorder %v8058, 0.0
      %vm8155 = vcmp.ge.f32.partialorder %v8061, 0.0
      %vm8156 = vcmp.ge.f32.partialorder %v8066, 0.0
      %vm8157 = vcmp.ge.f32.partialorder %v8069, 0.0
      %vm8158 = vcmp.ge.f32.partialorder %v8074, 0.0
      %vm8159 = vcmp.ge.f32.partialorder %v8077, 0.0
      %vm8160 = vcmp.ge.f32.partialorder %v8082, 0.0
      %vm8161 = vcmp.ge.f32.partialorder %v8085, 0.0
      %vm8162 = vcmp.ge.f32.partialorder %v8090, 0.0
      %vm8163 = vcmp.ge.f32.partialorder %v8093, 0.0
      %vm8164 = vcmp.ge.f32.partialorder %v8098, 0.0
      %vm8165 = vcmp.ge.f32.partialorder %v8101, 0.0
      %vm8166 = vcmp.ge.f32.partialorder %v8106, 0.0
      %vm8167 = vcmp.ge.f32.partialorder %v8109, 0.0
      %vm8168 = vcmp.ge.f32.partialorder %v8114, 0.0
      %vm8169 = vcmp.ge.f32.partialorder %v8117, 0.0
      %vm8170 = vcmp.ge.f32.partialorder %v8122, 0.0
      %vm8171 = vcmp.ge.f32.partialorder %v8125, 0.0
      %vm8172 = vcmp.ge.f32.partialorder %v8130, 0.0
      %vm8173 = vcmp.ge.f32.partialorder %v8133, 0.0
      %vm8174 = vcmp.ge.f32.partialorder %v8138, 0.0
      %vm8175 = vcmp.ge.f32.partialorder %v8141, 0.0
      %v8176 = vmul.f32 %v8018, 0.2
      %v8177 = vmul.f32 %v8021, 0.2
      %v8178 = vmul.f32 %v8026, 0.2
      %v8179 = vmul.f32 %v8029, 0.2
      %v8180 = vmul.f32 %v8034, 0.2
      %v8181 = vmul.f32 %v8037, 0.2
      %v8182 = vmul.f32 %v8042, 0.2
      %v8183 = vmul.f32 %v8045, 0.2
      %v8184 = vmul.f32 %v8050, 0.2
      %v8185 = vmul.f32 %v8053, 0.2
      %v8186 = vmul.f32 %v8058, 0.2
      %v8187 = vmul.f32 %v8061, 0.2
      %v8188 = vmul.f32 %v8066, 0.2
      %v8189 = vmul.f32 %v8069, 0.2
      %v8190 = vmul.f32 %v8074, 0.2
      %v8191 = vmul.f32 %v8077, 0.2
      %v8192 = vmul.f32 %v8082, 0.2
      %v8193 = vmul.f32 %v8085, 0.2
      %v8194 = vmul.f32 %v8090, 0.2
      %v8195 = vmul.f32 %v8093, 0.2
      %v8196 = vmul.f32 %v8098, 0.2
      %v8197 = vmul.f32 %v8101, 0.2
      %v8198 = vmul.f32 %v8106, 0.2
      %v8199 = vmul.f32 %v8109, 0.2
      %v8200 = vmul.f32 %v8114, 0.2
      %v8201 = vmul.f32 %v8117, 0.2
      %v8202 = vmul.f32 %v8122, 0.2
      %v8203 = vmul.f32 %v8125, 0.2
      %v8204 = vmul.f32 %v8130, 0.2
      %v8205 = vmul.f32 %v8133, 0.2
      %v8206 = vmul.f32 %v8138, 0.2
      %v8207 = vmul.f32 %v8141, 0.2
      %v8208 = vsel %vm8144, %v8018, %v8176
      %v8209 = vsel %vm8145, %v8021, %v8177
      %v8210 = vsel %vm8146, %v8026, %v8178
      %v8211 = vsel %vm8147, %v8029, %v8179
      %v8212 = vsel %vm8148, %v8034, %v8180
      %v8213 = vsel %vm8149, %v8037, %v8181
      %v8214 = vsel %vm8150, %v8042, %v8182
      %v8215 = vsel %vm8151, %v8045, %v8183
      %v8216 = vsel %vm8152, %v8050, %v8184
      %v8217 = vsel %vm8153, %v8053, %v8185
      %v8218 = vsel %vm8154, %v8058, %v8186
      %v8219 = vsel %vm8155, %v8061, %v8187
      %v8220 = vsel %vm8156, %v8066, %v8188
      %v8221 = vsel %vm8157, %v8069, %v8189
      %v8222 = vsel %vm8158, %v8074, %v8190
      %v8223 = vsel %vm8159, %v8077, %v8191
      %v8224 = vsel %vm8160, %v8082, %v8192
      %v8225 = vsel %vm8161, %v8085, %v8193
      %v8226 = vsel %vm8162, %v8090, %v8194
      %v8227 = vsel %vm8163, %v8093, %v8195
      %v8228 = vsel %vm8164, %v8098, %v8196
      %v8229 = vsel %vm8165, %v8101, %v8197
      %v8230 = vsel %vm8166, %v8106, %v8198
      %v8231 = vsel %vm8167, %v8109, %v8199
      %v8232 = vsel %vm8168, %v8114, %v8200
      %v8233 = vsel %vm8169, %v8117, %v8201
      %v8234 = vsel %vm8170, %v8122, %v8202
      %v8235 = vsel %vm8171, %v8125, %v8203
      %v8236 = vsel %vm8172, %v8130, %v8204
      %v8237 = vsel %vm8173, %v8133, %v8205
      %v8238 = vsel %vm8174, %v8138, %v8206
      %v8239 = vsel %vm8175, %v8141, %v8207
      %v8240 = vadd.f32 %v5373, %v8208
      %v8241 = vadd.f32 %v5374, %v8209
      %v8242 = vadd.f32 %v5375, %v8210
      %v8243 = vadd.f32 %v5376, %v8211
      %v8244 = vadd.f32 %v5377, %v8212
      %v8245 = vadd.f32 %v5378, %v8213
      %v8246 = vadd.f32 %v5379, %v8214
      %v8247 = vadd.f32 %v5380, %v8215
      %v8248 = vadd.f32 %v5381, %v8216
      %v8249 = vadd.f32 %v5382, %v8217
      %v8250 = vadd.f32 %v5383, %v8218
      %v8251 = vadd.f32 %v5384, %v8219
      %v8252 = vadd.f32 %v5385, %v8220
      %v8253 = vadd.f32 %v5386, %v8221
      %v8254 = vadd.f32 %v5387, %v8222
      %v8255 = vadd.f32 %v5388, %v8223
      %v8256 = vadd.f32 %v5389, %v8224
      %v8257 = vadd.f32 %v5390, %v8225
      %v8258 = vadd.f32 %v5391, %v8226
      %v8259 = vadd.f32 %v5392, %v8227
      %v8260 = vadd.f32 %v5393, %v8228
      %v8261 = vadd.f32 %v5394, %v8229
      %v8262 = vadd.f32 %v5395, %v8230
      %v8263 = vadd.f32 %v5396, %v8231
      %v8264 = vadd.f32 %v5397, %v8232
      %v8265 = vadd.f32 %v5398, %v8233
      %v8266 = vadd.f32 %v5399, %v8234
      %v8267 = vadd.f32 %v5400, %v8235
      %v8268 = vadd.f32 %v5401, %v8236
      %v8269 = vadd.f32 %v5402, %v8237
      %v8270 = vadd.f32 %v5403, %v8238
      %v8271 = vadd.f32 %v5404, %v8239
      %v8272 = vpack.c.bf16 %v8241, %v8240
      %v8273 = vpack.c.bf16 %v8243, %v8242
      %v8274 = vpack.c.bf16 %v8245, %v8244
      %v8275 = vpack.c.bf16 %v8247, %v8246
      %v8276 = vpack.c.bf16 %v8249, %v8248
      %v8277 = vpack.c.bf16 %v8251, %v8250
      %v8278 = vpack.c.bf16 %v8253, %v8252
      %v8279 = vpack.c.bf16 %v8255, %v8254
      %v8280 = vpack.c.bf16 %v8257, %v8256
      %v8281 = vpack.c.bf16 %v8259, %v8258
      %v8282 = vpack.c.bf16 %v8261, %v8260
      %v8283 = vpack.c.bf16 %v8263, %v8262
      %v8284 = vpack.c.bf16 %v8265, %v8264
      %v8285 = vpack.c.bf16 %v8267, %v8266
      %v8286 = vpack.c.bf16 %v8269, %v8268
      %v8287 = vpack.c.bf16 %v8271, %v8270
      %s8288 = scalar_lea.vmem %s7, 512
      %v8289 = vld [vmem:[%s8288] sm:$0xff]
      %v8290 = vld [vmem:[%s8288 + $0x8] sm:$0xff]
      %v8291 = vld [vmem:[%s8288 + $0x10] sm:$0xff]
      %v8292 = vld [vmem:[%s8288 + $0x18] sm:$0xff]
      %v8293 = vld [vmem:[%s8288 + $0x20] sm:$0xff]
      %v8294 = vld [vmem:[%s8288 + $0x28] sm:$0xff]
      %v8295 = vld [vmem:[%s8288 + $0x30] sm:$0xff]
      %v8296 = vld [vmem:[%s8288 + $0x38] sm:$0xff]
      %v8297 = vld [vmem:[%s8288 + $0x40] sm:$0xff]
      %v8298 = vld [vmem:[%s8288 + $0x48] sm:$0xff]
      %v8299 = vld [vmem:[%s8288 + $0x50] sm:$0xff]
      %v8300 = vld [vmem:[%s8288 + $0x58] sm:$0xff]
      %v8301 = vld [vmem:[%s8288 + $0x60] sm:$0xff]
      %v8302 = vld [vmem:[%s8288 + $0x68] sm:$0xff]
      %v8303 = vld [vmem:[%s8288 + $0x70] sm:$0xff]
      %v8304 = vld [vmem:[%s8288 + $0x78] sm:$0xff]
      %v8305 = vld [vmem:[%s8288 + $0x80] sm:$0xff]
      %v8306 = vld [vmem:[%s8288 + $0x88] sm:$0xff]
      %v8307 = vld [vmem:[%s8288 + $0x90] sm:$0xff]
      %v8308 = vld [vmem:[%s8288 + $0x98] sm:$0xff]
      %v8309 = vld [vmem:[%s8288 + $0xa0] sm:$0xff]
      %v8310 = vld [vmem:[%s8288 + $0xa8] sm:$0xff]
      %v8311 = vld [vmem:[%s8288 + $0xb0] sm:$0xff]
      %v8312 = vld [vmem:[%s8288 + $0xb8] sm:$0xff]
      %v8313 = vld [vmem:[%s8288 + $0xc0] sm:$0xff]
      %v8314 = vld [vmem:[%s8288 + $0xc8] sm:$0xff]
      %v8315 = vld [vmem:[%s8288 + $0xd0] sm:$0xff]
      %v8316 = vld [vmem:[%s8288 + $0xd8] sm:$0xff]
      %v8317 = vld [vmem:[%s8288 + $0xe0] sm:$0xff]
      %v8318 = vld [vmem:[%s8288 + $0xe8] sm:$0xff]
      %v8319 = vld [vmem:[%s8288 + $0xf0] sm:$0xff]
      %v8320 = vld [vmem:[%s8288 + $0xf8] sm:$0xff]
      %v8353 = vunpack.c.l.b16 %v8289
      %v8354 = vunpack.c.h.b16 %v8289
      %v8355 = vunpack.c.l.b16 %v8290
      %v8356 = vunpack.c.h.b16 %v8290
      %v8357 = vunpack.c.l.b16 %v8291
      %v8358 = vunpack.c.h.b16 %v8291
      %v8359 = vunpack.c.l.b16 %v8292
      %v8360 = vunpack.c.h.b16 %v8292
      %v8361 = vunpack.c.l.b16 %v8293
      %v8362 = vunpack.c.h.b16 %v8293
      %v8363 = vunpack.c.l.b16 %v8294
      %v8364 = vunpack.c.h.b16 %v8294
      %v8365 = vunpack.c.l.b16 %v8295
      %v8366 = vunpack.c.h.b16 %v8295
      %v8367 = vunpack.c.l.b16 %v8296
      %v8368 = vunpack.c.h.b16 %v8296
      %v8369 = vunpack.c.l.b16 %v8297
      %v8370 = vunpack.c.h.b16 %v8297
      %v8371 = vunpack.c.l.b16 %v8298
      %v8372 = vunpack.c.h.b16 %v8298
      %v8373 = vunpack.c.l.b16 %v8299
      %v8374 = vunpack.c.h.b16 %v8299
      %v8375 = vunpack.c.l.b16 %v8300
      %v8376 = vunpack.c.h.b16 %v8300
      %v8377 = vunpack.c.l.b16 %v8301
      %v8378 = vunpack.c.h.b16 %v8301
      %v8379 = vunpack.c.l.b16 %v8302
      %v8380 = vunpack.c.h.b16 %v8302
      %v8381 = vunpack.c.l.b16 %v8303
      %v8382 = vunpack.c.h.b16 %v8303
      %v8383 = vunpack.c.l.b16 %v8304
      %v8384 = vunpack.c.h.b16 %v8304
      %v8385 = vunpack.c.l.b16 %v8305
      %v8386 = vunpack.c.h.b16 %v8305
      %v8387 = vunpack.c.l.b16 %v8306
      %v8388 = vunpack.c.h.b16 %v8306
      %v8389 = vunpack.c.l.b16 %v8307
      %v8390 = vunpack.c.h.b16 %v8307
      %v8391 = vunpack.c.l.b16 %v8308
      %v8392 = vunpack.c.h.b16 %v8308
      %v8393 = vunpack.c.l.b16 %v8309
      %v8394 = vunpack.c.h.b16 %v8309
      %v8395 = vunpack.c.l.b16 %v8310
      %v8396 = vunpack.c.h.b16 %v8310
      %v8397 = vunpack.c.l.b16 %v8311
      %v8398 = vunpack.c.h.b16 %v8311
      %v8399 = vunpack.c.l.b16 %v8312
      %v8400 = vunpack.c.h.b16 %v8312
      %v8401 = vunpack.c.l.b16 %v8313
      %v8402 = vunpack.c.h.b16 %v8313
      %v8403 = vunpack.c.l.b16 %v8314
      %v8404 = vunpack.c.h.b16 %v8314
      %v8405 = vunpack.c.l.b16 %v8315
      %v8406 = vunpack.c.h.b16 %v8315
      %v8407 = vunpack.c.l.b16 %v8316
      %v8408 = vunpack.c.h.b16 %v8316
      %v8409 = vunpack.c.l.b16 %v8317
      %v8410 = vunpack.c.h.b16 %v8317
      %v8411 = vunpack.c.l.b16 %v8318
      %v8412 = vunpack.c.h.b16 %v8318
      %v8413 = vunpack.c.l.b16 %v8319
      %v8414 = vunpack.c.h.b16 %v8319
      %v8415 = vunpack.c.l.b16 %v8320
      %v8416 = vunpack.c.h.b16 %v8320
      %v8417 = vpack.c.b16 %v8355, %v8353
      %v8418 = vpack.c.b16 %v8356, %v8354
      %v8419 = vpack.c.b16 %v8359, %v8357
      %v8420 = vpack.c.b16 %v8360, %v8358
      %v8421 = vpack.c.b16 %v8363, %v8361
      %v8422 = vpack.c.b16 %v8364, %v8362
      %v8423 = vpack.c.b16 %v8367, %v8365
      %v8424 = vpack.c.b16 %v8368, %v8366
      %v8425 = vpack.c.b16 %v8371, %v8369
      %v8426 = vpack.c.b16 %v8372, %v8370
      %v8427 = vpack.c.b16 %v8375, %v8373
      %v8428 = vpack.c.b16 %v8376, %v8374
      %v8429 = vpack.c.b16 %v8379, %v8377
      %v8430 = vpack.c.b16 %v8380, %v8378
      %v8431 = vpack.c.b16 %v8383, %v8381
      %v8432 = vpack.c.b16 %v8384, %v8382
      %v8433 = vpack.c.b16 %v8387, %v8385
      %v8434 = vpack.c.b16 %v8388, %v8386
      %v8435 = vpack.c.b16 %v8391, %v8389
      %v8436 = vpack.c.b16 %v8392, %v8390
      %v8437 = vpack.c.b16 %v8395, %v8393
      %v8438 = vpack.c.b16 %v8396, %v8394
      %v8439 = vpack.c.b16 %v8399, %v8397
      %v8440 = vpack.c.b16 %v8400, %v8398
      %v8441 = vpack.c.b16 %v8403, %v8401
      %v8442 = vpack.c.b16 %v8404, %v8402
      %v8443 = vpack.c.b16 %v8407, %v8405
      %v8444 = vpack.c.b16 %v8408, %v8406
      %v8445 = vpack.c.b16 %v8411, %v8409
      %v8446 = vpack.c.b16 %v8412, %v8410
      %v8447 = vpack.c.b16 %v8415, %v8413
      %v8448 = vpack.c.b16 %v8416, %v8414
      %8481 = vmatprep.subr.bf16.mxu0 0
      %8482 = vmatpush1.bf16.msra.mxu0 %v8279
      %8483 = vmatprep.subr.bf16.mxu0 0
      %8484 = vmatpush1.bf16.msra.mxu0 %v8278
      %8485 = vmatprep.subr.bf16.mxu0 0
      %8486 = vmatpush1.bf16.msra.mxu0 %v8277
      %8487 = vmatprep.subr.bf16.mxu0 0
      %8488 = vmatpush1.bf16.msra.mxu0 %v8276
      %8489 = vmatprep.subr.bf16.mxu0 0
      %8490 = vmatpush1.bf16.msra.mxu0 %v8275
      %8491 = vmatprep.subr.bf16.mxu0 0
      %8492 = vmatpush1.bf16.msra.mxu0 %v8274
      %8493 = vmatprep.subr.bf16.mxu0 0
      %8494 = vmatpush1.bf16.msra.mxu0 %v8273
      %8495 = vmatprep.subr.bf16.mxu0 0
      %8496 = vmatpush1.bf16.msra.mxu0 %v8272
      %8497 = vmatprep.subr.bf16.mxu0 0
      %8498 = vmatpush2.bf16.msra.mxu0 %v8287
      %8499 = vmatprep.subr.bf16.mxu0 0
      %8500 = vmatpush2.bf16.msra.mxu0 %v8286
      %8501 = vmatprep.subr.bf16.mxu0 0
      %8502 = vmatpush2.bf16.msra.mxu0 %v8285
      %8503 = vmatprep.subr.bf16.mxu0 0
      %8504 = vmatpush2.bf16.msra.mxu0 %v8284
      %8505 = vmatprep.subr.bf16.mxu0 0
      %8506 = vmatpush2.bf16.msra.mxu0 %v8283
      %8507 = vmatprep.subr.bf16.mxu0 0
      %8508 = vmatpush2.bf16.msra.mxu0 %v8282
      %8509 = vmatprep.subr.bf16.mxu0 0
      %8510 = vmatpush2.bf16.msra.mxu0 %v8281
      %8511 = vmatprep.subr.bf16.mxu0 0
      %8512 = vmatpush2.bf16.msra.mxu0 %v8280
      %8513 = vmatprep.mubr.bf16.mxu0 %v8418
      %8514 = vmatmul.mubr.bf16.gmra.mxu0 %v8417
      %v8515 = vpop.f32.mrf.mxu0
      %v8516 = vadd.f32 0.0, %v8515
      %v8517 = vpop.f32.mrf.mxu0
      %v8518 = vpop.f32.mrf.mxu0
      %v8519 = vadd.f32 0.0, %v8518
      %v8520 = vpop.f32.mrf.mxu0
      %8521 = vmatprep.mubr.bf16.mxu0 %v8420
      %8522 = vmatmul.mubr.bf16.gmra.mxu0 %v8419
      %v8523 = vpop.f32.mrf.mxu0
      %v8524 = vadd.f32 0.0, %v8523
      %v8525 = vpop.f32.mrf.mxu0
      %v8526 = vpop.f32.mrf.mxu0
      %v8527 = vadd.f32 0.0, %v8526
      %v8528 = vpop.f32.mrf.mxu0
      %8529 = vmatprep.mubr.bf16.mxu0 %v8422
      %8530 = vmatmul.mubr.bf16.gmra.mxu0 %v8421
      %v8531 = vpop.f32.mrf.mxu0
      %v8532 = vadd.f32 0.0, %v8531
      %v8533 = vpop.f32.mrf.mxu0
      %v8534 = vpop.f32.mrf.mxu0
      %v8535 = vadd.f32 0.0, %v8534
      %v8536 = vpop.f32.mrf.mxu0
      %8537 = vmatprep.mubr.bf16.mxu0 %v8424
      %8538 = vmatmul.mubr.bf16.gmra.mxu0 %v8423
      %v8539 = vpop.f32.mrf.mxu0
      %v8540 = vadd.f32 0.0, %v8539
      %v8541 = vpop.f32.mrf.mxu0
      %v8542 = vpop.f32.mrf.mxu0
      %v8543 = vadd.f32 0.0, %v8542
      %v8544 = vpop.f32.mrf.mxu0
      %8545 = vmatprep.mubr.bf16.mxu0 %v8426
      %8546 = vmatmul.mubr.bf16.gmra.mxu0 %v8425
      %v8547 = vpop.f32.mrf.mxu0
      %v8548 = vadd.f32 0.0, %v8547
      %v8549 = vpop.f32.mrf.mxu0
      %v8550 = vpop.f32.mrf.mxu0
      %v8551 = vadd.f32 0.0, %v8550
      %v8552 = vpop.f32.mrf.mxu0
      %8553 = vmatprep.mubr.bf16.mxu0 %v8428
      %8554 = vmatmul.mubr.bf16.gmra.mxu0 %v8427
      %v8555 = vpop.f32.mrf.mxu0
      %v8556 = vadd.f32 0.0, %v8555
      %v8557 = vpop.f32.mrf.mxu0
      %v8558 = vpop.f32.mrf.mxu0
      %v8559 = vadd.f32 0.0, %v8558
      %v8560 = vpop.f32.mrf.mxu0
      %8561 = vmatprep.mubr.bf16.mxu0 %v8430
      %8562 = vmatmul.mubr.bf16.gmra.mxu0 %v8429
      %v8563 = vpop.f32.mrf.mxu0
      %v8564 = vadd.f32 0.0, %v8563
      %v8565 = vpop.f32.mrf.mxu0
      %v8566 = vpop.f32.mrf.mxu0
      %v8567 = vadd.f32 0.0, %v8566
      %v8568 = vpop.f32.mrf.mxu0
      %8569 = vmatprep.mubr.bf16.mxu0 %v8432
      %8570 = vmatmul.mubr.bf16.gmra.mxu0 %v8431
      %v8571 = vpop.f32.mrf.mxu0
      %v8572 = vadd.f32 0.0, %v8571
      %v8573 = vpop.f32.mrf.mxu0
      %v8574 = vpop.f32.mrf.mxu0
      %v8575 = vadd.f32 0.0, %v8574
      %v8576 = vpop.f32.mrf.mxu0
      %8577 = vmatprep.mubr.bf16.mxu0 %v8434
      %8578 = vmatmul.mubr.bf16.gmra.mxu0 %v8433
      %v8579 = vpop.f32.mrf.mxu0
      %v8580 = vadd.f32 0.0, %v8579
      %v8581 = vpop.f32.mrf.mxu0
      %v8582 = vpop.f32.mrf.mxu0
      %v8583 = vadd.f32 0.0, %v8582
      %v8584 = vpop.f32.mrf.mxu0
      %8585 = vmatprep.mubr.bf16.mxu0 %v8436
      %8586 = vmatmul.mubr.bf16.gmra.mxu0 %v8435
      %v8587 = vpop.f32.mrf.mxu0
      %v8588 = vadd.f32 0.0, %v8587
      %v8589 = vpop.f32.mrf.mxu0
      %v8590 = vpop.f32.mrf.mxu0
      %v8591 = vadd.f32 0.0, %v8590
      %v8592 = vpop.f32.mrf.mxu0
      %8593 = vmatprep.mubr.bf16.mxu0 %v8438
      %8594 = vmatmul.mubr.bf16.gmra.mxu0 %v8437
      %v8595 = vpop.f32.mrf.mxu0
      %v8596 = vadd.f32 0.0, %v8595
      %v8597 = vpop.f32.mrf.mxu0
      %v8598 = vpop.f32.mrf.mxu0
      %v8599 = vadd.f32 0.0, %v8598
      %v8600 = vpop.f32.mrf.mxu0
      %8601 = vmatprep.mubr.bf16.mxu0 %v8440
      %8602 = vmatmul.mubr.bf16.gmra.mxu0 %v8439
      %v8603 = vpop.f32.mrf.mxu0
      %v8604 = vadd.f32 0.0, %v8603
      %v8605 = vpop.f32.mrf.mxu0
      %v8606 = vpop.f32.mrf.mxu0
      %v8607 = vadd.f32 0.0, %v8606
      %v8608 = vpop.f32.mrf.mxu0
      %8609 = vmatprep.mubr.bf16.mxu0 %v8442
      %8610 = vmatmul.mubr.bf16.gmra.mxu0 %v8441
      %v8611 = vpop.f32.mrf.mxu0
      %v8612 = vadd.f32 0.0, %v8611
      %v8613 = vpop.f32.mrf.mxu0
      %v8614 = vpop.f32.mrf.mxu0
      %v8615 = vadd.f32 0.0, %v8614
      %v8616 = vpop.f32.mrf.mxu0
      %8617 = vmatprep.mubr.bf16.mxu0 %v8444
      %8618 = vmatmul.mubr.bf16.gmra.mxu0 %v8443
      %v8619 = vpop.f32.mrf.mxu0
      %v8620 = vadd.f32 0.0, %v8619
      %v8621 = vpop.f32.mrf.mxu0
      %v8622 = vpop.f32.mrf.mxu0
      %v8623 = vadd.f32 0.0, %v8622
      %v8624 = vpop.f32.mrf.mxu0
      %8625 = vmatprep.mubr.bf16.mxu0 %v8446
      %8626 = vmatmul.mubr.bf16.gmra.mxu0 %v8445
      %v8627 = vpop.f32.mrf.mxu0
      %v8628 = vadd.f32 0.0, %v8627
      %v8629 = vpop.f32.mrf.mxu0
      %v8630 = vpop.f32.mrf.mxu0
      %v8631 = vadd.f32 0.0, %v8630
      %v8632 = vpop.f32.mrf.mxu0
      %8633 = vmatprep.mubr.bf16.mxu0 %v8448
      %8634 = vmatmul.mubr.bf16.gmra.mxu0 %v8447
      %v8635 = vpop.f32.mrf.mxu0
      %v8636 = vadd.f32 0.0, %v8635
      %v8637 = vpop.f32.mrf.mxu0
      %v8638 = vpop.f32.mrf.mxu0
      %v8639 = vadd.f32 0.0, %v8638
      %v8640 = vpop.f32.mrf.mxu0
      %8641 = vdwg.mxu0
      %v8642 = vadd.f32 %v5970, %v8516
      %v8643 = vadd.f32 %v5973, %v8519
      %v8644 = vadd.f32 %v5978, %v8524
      %v8645 = vadd.f32 %v5981, %v8527
      %v8646 = vadd.f32 %v5986, %v8532
      %v8647 = vadd.f32 %v5989, %v8535
      %v8648 = vadd.f32 %v5994, %v8540
      %v8649 = vadd.f32 %v5997, %v8543
      %v8650 = vadd.f32 %v6002, %v8548
      %v8651 = vadd.f32 %v6005, %v8551
      %v8652 = vadd.f32 %v6010, %v8556
      %v8653 = vadd.f32 %v6013, %v8559
      %v8654 = vadd.f32 %v6018, %v8564
      %v8655 = vadd.f32 %v6021, %v8567
      %v8656 = vadd.f32 %v6026, %v8572
      %v8657 = vadd.f32 %v6029, %v8575
      %v8658 = vadd.f32 %v6034, %v8580
      %v8659 = vadd.f32 %v6037, %v8583
      %v8660 = vadd.f32 %v6042, %v8588
      %v8661 = vadd.f32 %v6045, %v8591
      %v8662 = vadd.f32 %v6050, %v8596
      %v8663 = vadd.f32 %v6053, %v8599
      %v8664 = vadd.f32 %v6058, %v8604
      %v8665 = vadd.f32 %v6061, %v8607
      %v8666 = vadd.f32 %v6066, %v8612
      %v8667 = vadd.f32 %v6069, %v8615
      %v8668 = vadd.f32 %v6074, %v8620
      %v8669 = vadd.f32 %v6077, %v8623
      %v8670 = vadd.f32 %v6082, %v8628
      %v8671 = vadd.f32 %v6085, %v8631
      %v8672 = vadd.f32 %v6090, %v8636
      %v8673 = vadd.f32 %v6093, %v8639
      %s8674 = scalar_lea.vmem %s3, 960
      %v8675 = vld [vmem:[%s8674] sm:$0xff]
      %v8676 = vld [vmem:[%s8674 + $0x8] sm:$0xff]
      %v8677 = vld [vmem:[%s8674 + $0x10] sm:$0xff]
      %v8678 = vld [vmem:[%s8674 + $0x18] sm:$0xff]
      %v8679 = vld [vmem:[%s8674 + $0x20] sm:$0xff]
      %v8680 = vld [vmem:[%s8674 + $0x28] sm:$0xff]
      %v8681 = vld [vmem:[%s8674 + $0x30] sm:$0xff]
      %v8682 = vld [vmem:[%s8674 + $0x38] sm:$0xff]
      %v8683 = vld [vmem:[%s8674 + $0x40] sm:$0xff]
      %v8684 = vld [vmem:[%s8674 + $0x48] sm:$0xff]
      %v8685 = vld [vmem:[%s8674 + $0x50] sm:$0xff]
      %v8686 = vld [vmem:[%s8674 + $0x58] sm:$0xff]
      %v8687 = vld [vmem:[%s8674 + $0x60] sm:$0xff]
      %v8688 = vld [vmem:[%s8674 + $0x68] sm:$0xff]
      %v8689 = vld [vmem:[%s8674 + $0x70] sm:$0xff]
      %v8690 = vld [vmem:[%s8674 + $0x78] sm:$0xff]
      %v8691 = vld [vmem:[%s8674 + $0x80] sm:$0xff]
      %v8692 = vld [vmem:[%s8674 + $0x88] sm:$0xff]
      %v8693 = vld [vmem:[%s8674 + $0x90] sm:$0xff]
      %v8694 = vld [vmem:[%s8674 + $0x98] sm:$0xff]
      %v8695 = vld [vmem:[%s8674 + $0xa0] sm:$0xff]
      %v8696 = vld [vmem:[%s8674 + $0xa8] sm:$0xff]
      %v8697 = vld [vmem:[%s8674 + $0xb0] sm:$0xff]
      %v8698 = vld [vmem:[%s8674 + $0xb8] sm:$0xff]
      %v8699 = vld [vmem:[%s8674 + $0xc0] sm:$0xff]
      %v8700 = vld [vmem:[%s8674 + $0xc8] sm:$0xff]
      %v8701 = vld [vmem:[%s8674 + $0xd0] sm:$0xff]
      %v8702 = vld [vmem:[%s8674 + $0xd8] sm:$0xff]
      %v8703 = vld [vmem:[%s8674 + $0xe0] sm:$0xff]
      %v8704 = vld [vmem:[%s8674 + $0xe8] sm:$0xff]
      %v8705 = vld [vmem:[%s8674 + $0xf0] sm:$0xff]
      %v8706 = vld [vmem:[%s8674 + $0xf8] sm:$0xff]
      %v8707 = vld [vmem:[%s8674 + $0x100] sm:$0xff]
      %v8708 = vld [vmem:[%s8674 + $0x108] sm:$0xff]
      %v8709 = vld [vmem:[%s8674 + $0x110] sm:$0xff]
      %v8710 = vld [vmem:[%s8674 + $0x118] sm:$0xff]
      %v8711 = vld [vmem:[%s8674 + $0x120] sm:$0xff]
      %v8712 = vld [vmem:[%s8674 + $0x128] sm:$0xff]
      %v8713 = vld [vmem:[%s8674 + $0x130] sm:$0xff]
      %v8714 = vld [vmem:[%s8674 + $0x138] sm:$0xff]
      %s8715 = scalar_lea.vmem %s4, 960
      %v8716 = vld [vmem:[%s8715] sm:$0xff]
      %v8717 = vld [vmem:[%s8715 + $0x8] sm:$0xff]
      %v8718 = vld [vmem:[%s8715 + $0x10] sm:$0xff]
      %v8719 = vld [vmem:[%s8715 + $0x18] sm:$0xff]
      %v8720 = vld [vmem:[%s8715 + $0x20] sm:$0xff]
      %v8721 = vld [vmem:[%s8715 + $0x28] sm:$0xff]
      %v8722 = vld [vmem:[%s8715 + $0x30] sm:$0xff]
      %v8723 = vld [vmem:[%s8715 + $0x38] sm:$0xff]
      %v8724 = vld [vmem:[%s8715 + $0x40] sm:$0xff]
      %v8725 = vld [vmem:[%s8715 + $0x48] sm:$0xff]
      %v8726 = vld [vmem:[%s8715 + $0x50] sm:$0xff]
      %v8727 = vld [vmem:[%s8715 + $0x58] sm:$0xff]
      %v8728 = vld [vmem:[%s8715 + $0x60] sm:$0xff]
      %v8729 = vld [vmem:[%s8715 + $0x68] sm:$0xff]
      %v8730 = vld [vmem:[%s8715 + $0x70] sm:$0xff]
      %v8731 = vld [vmem:[%s8715 + $0x78] sm:$0xff]
      %v8732 = vld [vmem:[%s8715 + $0x80] sm:$0xff]
      %v8733 = vld [vmem:[%s8715 + $0x88] sm:$0xff]
      %v8734 = vld [vmem:[%s8715 + $0x90] sm:$0xff]
      %v8735 = vld [vmem:[%s8715 + $0x98] sm:$0xff]
      %v8736 = vld [vmem:[%s8715 + $0xa0] sm:$0xff]
      %v8737 = vld [vmem:[%s8715 + $0xa8] sm:$0xff]
      %v8738 = vld [vmem:[%s8715 + $0xb0] sm:$0xff]
      %v8739 = vld [vmem:[%s8715 + $0xb8] sm:$0xff]
      %v8740 = vld [vmem:[%s8715 + $0xc0] sm:$0xff]
      %v8741 = vld [vmem:[%s8715 + $0xc8] sm:$0xff]
      %v8742 = vld [vmem:[%s8715 + $0xd0] sm:$0xff]
      %v8743 = vld [vmem:[%s8715 + $0xd8] sm:$0xff]
      %v8744 = vld [vmem:[%s8715 + $0xe0] sm:$0xff]
      %v8745 = vld [vmem:[%s8715 + $0xe8] sm:$0xff]
      %v8746 = vld [vmem:[%s8715 + $0xf0] sm:$0xff]
      %v8747 = vld [vmem:[%s8715 + $0xf8] sm:$0xff]
      %v8748 = vld [vmem:[%s8715 + $0x100] sm:$0xff]
      %v8749 = vld [vmem:[%s8715 + $0x108] sm:$0xff]
      %v8750 = vld [vmem:[%s8715 + $0x110] sm:$0xff]
      %v8751 = vld [vmem:[%s8715 + $0x118] sm:$0xff]
      %v8752 = vld [vmem:[%s8715 + $0x120] sm:$0xff]
      %v8753 = vld [vmem:[%s8715 + $0x128] sm:$0xff]
      %v8754 = vld [vmem:[%s8715 + $0x130] sm:$0xff]
      %v8755 = vld [vmem:[%s8715 + $0x138] sm:$0xff]
      %8757 = vset.pattern.permute.xlu0 0
      %8758 = vperm.xlu0 %8757, %v8716
      %v8759 = vpop.permute.xlu0 %8758
      %8762 = vset.pattern.permute.xlu0 0
      %8763 = vperm.xlu0 %8762, %v8717
      %v8764 = vpop.permute.xlu0 %8763
      %8767 = vset.pattern.permute.xlu0 0
      %8768 = vperm.xlu0 %8767, %v8718
      %v8769 = vpop.permute.xlu0 %8768
      %8772 = vset.pattern.permute.xlu0 0
      %8773 = vperm.xlu0 %8772, %v8719
      %v8774 = vpop.permute.xlu0 %8773
      %8777 = vset.pattern.permute.xlu0 0
      %8778 = vperm.xlu0 %8777, %v8720
      %v8779 = vpop.permute.xlu0 %8778
      %8782 = vset.pattern.permute.xlu0 0
      %8783 = vperm.xlu0 %8782, %v8721
      %v8784 = vpop.permute.xlu0 %8783
      %8787 = vset.pattern.permute.xlu0 0
      %8788 = vperm.xlu0 %8787, %v8722
      %v8789 = vpop.permute.xlu0 %8788
      %8792 = vset.pattern.permute.xlu0 0
      %8793 = vperm.xlu0 %8792, %v8723
      %v8794 = vpop.permute.xlu0 %8793
      %8797 = vset.pattern.permute.xlu0 0
      %8798 = vperm.xlu0 %8797, %v8724
      %v8799 = vpop.permute.xlu0 %8798
      %8802 = vset.pattern.permute.xlu0 0
      %8803 = vperm.xlu0 %8802, %v8725
      %v8804 = vpop.permute.xlu0 %8803
      %8807 = vset.pattern.permute.xlu0 0
      %8808 = vperm.xlu0 %8807, %v8726
      %v8809 = vpop.permute.xlu0 %8808
      %8812 = vset.pattern.permute.xlu0 0
      %8813 = vperm.xlu0 %8812, %v8727
      %v8814 = vpop.permute.xlu0 %8813
      %8817 = vset.pattern.permute.xlu0 0
      %8818 = vperm.xlu0 %8817, %v8728
      %v8819 = vpop.permute.xlu0 %8818
      %8822 = vset.pattern.permute.xlu0 0
      %8823 = vperm.xlu0 %8822, %v8729
      %v8824 = vpop.permute.xlu0 %8823
      %8827 = vset.pattern.permute.xlu0 0
      %8828 = vperm.xlu0 %8827, %v8730
      %v8829 = vpop.permute.xlu0 %8828
      %8832 = vset.pattern.permute.xlu0 0
      %8833 = vperm.xlu0 %8832, %v8731
      %v8834 = vpop.permute.xlu0 %8833
      %8837 = vset.pattern.permute.xlu0 0
      %8838 = vperm.xlu0 %8837, %v8732
      %v8839 = vpop.permute.xlu0 %8838
      %8842 = vset.pattern.permute.xlu0 0
      %8843 = vperm.xlu0 %8842, %v8733
      %v8844 = vpop.permute.xlu0 %8843
      %8847 = vset.pattern.permute.xlu0 0
      %8848 = vperm.xlu0 %8847, %v8734
      %v8849 = vpop.permute.xlu0 %8848
      %8852 = vset.pattern.permute.xlu0 0
      %8853 = vperm.xlu0 %8852, %v8735
      %v8854 = vpop.permute.xlu0 %8853
      %8857 = vset.pattern.permute.xlu0 0
      %8858 = vperm.xlu0 %8857, %v8736
      %v8859 = vpop.permute.xlu0 %8858
      %8862 = vset.pattern.permute.xlu0 0
      %8863 = vperm.xlu0 %8862, %v8737
      %v8864 = vpop.permute.xlu0 %8863
      %8867 = vset.pattern.permute.xlu0 0
      %8868 = vperm.xlu0 %8867, %v8738
      %v8869 = vpop.permute.xlu0 %8868
      %8872 = vset.pattern.permute.xlu0 0
      %8873 = vperm.xlu0 %8872, %v8739
      %v8874 = vpop.permute.xlu0 %8873
      %8877 = vset.pattern.permute.xlu0 0
      %8878 = vperm.xlu0 %8877, %v8740
      %v8879 = vpop.permute.xlu0 %8878
      %8882 = vset.pattern.permute.xlu0 0
      %8883 = vperm.xlu0 %8882, %v8741
      %v8884 = vpop.permute.xlu0 %8883
      %8887 = vset.pattern.permute.xlu0 0
      %8888 = vperm.xlu0 %8887, %v8742
      %v8889 = vpop.permute.xlu0 %8888
      %8892 = vset.pattern.permute.xlu0 0
      %8893 = vperm.xlu0 %8892, %v8743
      %v8894 = vpop.permute.xlu0 %8893
      %8897 = vset.pattern.permute.xlu0 0
      %8898 = vperm.xlu0 %8897, %v8744
      %v8899 = vpop.permute.xlu0 %8898
      %8902 = vset.pattern.permute.xlu0 0
      %8903 = vperm.xlu0 %8902, %v8745
      %v8904 = vpop.permute.xlu0 %8903
      %8907 = vset.pattern.permute.xlu0 0
      %8908 = vperm.xlu0 %8907, %v8746
      %v8909 = vpop.permute.xlu0 %8908
      %8912 = vset.pattern.permute.xlu0 0
      %8913 = vperm.xlu0 %8912, %v8747
      %v8914 = vpop.permute.xlu0 %8913
      %8917 = vset.pattern.permute.xlu0 0
      %8918 = vperm.xlu0 %8917, %v8748
      %v8919 = vpop.permute.xlu0 %8918
      %8922 = vset.pattern.permute.xlu0 0
      %8923 = vperm.xlu0 %8922, %v8749
      %v8924 = vpop.permute.xlu0 %8923
      %8927 = vset.pattern.permute.xlu0 0
      %8928 = vperm.xlu0 %8927, %v8750
      %v8929 = vpop.permute.xlu0 %8928
      %8932 = vset.pattern.permute.xlu0 0
      %8933 = vperm.xlu0 %8932, %v8751
      %v8934 = vpop.permute.xlu0 %8933
      %8937 = vset.pattern.permute.xlu0 0
      %8938 = vperm.xlu0 %8937, %v8752
      %v8939 = vpop.permute.xlu0 %8938
      %8942 = vset.pattern.permute.xlu0 0
      %8943 = vperm.xlu0 %8942, %v8753
      %v8944 = vpop.permute.xlu0 %8943
      %8947 = vset.pattern.permute.xlu0 0
      %8948 = vperm.xlu0 %8947, %v8754
      %v8949 = vpop.permute.xlu0 %8948
      %8952 = vset.pattern.permute.xlu0 0
      %8953 = vperm.xlu0 %8952, %v8755
      %v8954 = vpop.permute.xlu0 %8953
      %v8996 = vunpack.c.l.b16 %v8675
      %v8997 = vunpack.c.h.b16 %v8675
      %v8998 = vunpack.c.l.b16 %v8676
      %v8999 = vunpack.c.h.b16 %v8676
      %v9000 = vunpack.c.l.b16 %v8677
      %v9001 = vunpack.c.h.b16 %v8677
      %v9002 = vunpack.c.l.b16 %v8678
      %v9003 = vunpack.c.h.b16 %v8678
      %v9004 = vunpack.c.l.b16 %v8679
      %v9005 = vunpack.c.h.b16 %v8679
      %v9006 = vunpack.c.l.b16 %v8680
      %v9007 = vunpack.c.h.b16 %v8680
      %v9008 = vunpack.c.l.b16 %v8681
      %v9009 = vunpack.c.h.b16 %v8681
      %v9010 = vunpack.c.l.b16 %v8682
      %v9011 = vunpack.c.h.b16 %v8682
      %v9012 = vunpack.c.l.b16 %v8683
      %v9013 = vunpack.c.h.b16 %v8683
      %v9014 = vunpack.c.l.b16 %v8684
      %v9015 = vunpack.c.h.b16 %v8684
      %v9016 = vunpack.c.l.b16 %v8685
      %v9017 = vunpack.c.h.b16 %v8685
      %v9018 = vunpack.c.l.b16 %v8686
      %v9019 = vunpack.c.h.b16 %v8686
      %v9020 = vunpack.c.l.b16 %v8687
      %v9021 = vunpack.c.h.b16 %v8687
      %v9022 = vunpack.c.l.b16 %v8688
      %v9023 = vunpack.c.h.b16 %v8688
      %v9024 = vunpack.c.l.b16 %v8689
      %v9025 = vunpack.c.h.b16 %v8689
      %v9026 = vunpack.c.l.b16 %v8690
      %v9027 = vunpack.c.h.b16 %v8690
      %v9028 = vunpack.c.l.b16 %v8691
      %v9029 = vunpack.c.h.b16 %v8691
      %v9030 = vunpack.c.l.b16 %v8692
      %v9031 = vunpack.c.h.b16 %v8692
      %v9032 = vunpack.c.l.b16 %v8693
      %v9033 = vunpack.c.h.b16 %v8693
      %v9034 = vunpack.c.l.b16 %v8694
      %v9035 = vunpack.c.h.b16 %v8694
      %v9036 = vunpack.c.l.b16 %v8695
      %v9037 = vunpack.c.h.b16 %v8695
      %v9038 = vunpack.c.l.b16 %v8696
      %v9039 = vunpack.c.h.b16 %v8696
      %v9040 = vunpack.c.l.b16 %v8697
      %v9041 = vunpack.c.h.b16 %v8697
      %v9042 = vunpack.c.l.b16 %v8698
      %v9043 = vunpack.c.h.b16 %v8698
      %v9044 = vunpack.c.l.b16 %v8699
      %v9045 = vunpack.c.h.b16 %v8699
      %v9046 = vunpack.c.l.b16 %v8700
      %v9047 = vunpack.c.h.b16 %v8700
      %v9048 = vunpack.c.l.b16 %v8701
      %v9049 = vunpack.c.h.b16 %v8701
      %v9050 = vunpack.c.l.b16 %v8702
      %v9051 = vunpack.c.h.b16 %v8702
      %v9052 = vunpack.c.l.b16 %v8703
      %v9053 = vunpack.c.h.b16 %v8703
      %v9054 = vunpack.c.l.b16 %v8704
      %v9055 = vunpack.c.h.b16 %v8704
      %v9056 = vunpack.c.l.b16 %v8705
      %v9057 = vunpack.c.h.b16 %v8705
      %v9058 = vunpack.c.l.b16 %v8706
      %v9059 = vunpack.c.h.b16 %v8706
      %v9060 = vunpack.c.l.b16 %v8707
      %v9061 = vunpack.c.h.b16 %v8707
      %v9062 = vunpack.c.l.b16 %v8708
      %v9063 = vunpack.c.h.b16 %v8708
      %v9064 = vunpack.c.l.b16 %v8709
      %v9065 = vunpack.c.h.b16 %v8709
      %v9066 = vunpack.c.l.b16 %v8710
      %v9067 = vunpack.c.h.b16 %v8710
      %v9068 = vunpack.c.l.b16 %v8711
      %v9069 = vunpack.c.h.b16 %v8711
      %v9070 = vunpack.c.l.b16 %v8712
      %v9071 = vunpack.c.h.b16 %v8712
      %v9072 = vunpack.c.l.b16 %v8713
      %v9073 = vunpack.c.h.b16 %v8713
      %v9074 = vunpack.c.l.b16 %v8714
      %v9075 = vunpack.c.h.b16 %v8714
      %v9076 = vpack.c.b16 %v8998, %v8996
      %v9077 = vpack.c.b16 %v8999, %v8997
      %v9078 = vpack.c.b16 %v9002, %v9000
      %v9079 = vpack.c.b16 %v9003, %v9001
      %v9080 = vpack.c.b16 %v9006, %v9004
      %v9081 = vpack.c.b16 %v9007, %v9005
      %v9082 = vpack.c.b16 %v9010, %v9008
      %v9083 = vpack.c.b16 %v9011, %v9009
      %v9084 = vpack.c.b16 %v9014, %v9012
      %v9085 = vpack.c.b16 %v9015, %v9013
      %v9086 = vpack.c.b16 %v9018, %v9016
      %v9087 = vpack.c.b16 %v9019, %v9017
      %v9088 = vpack.c.b16 %v9022, %v9020
      %v9089 = vpack.c.b16 %v9023, %v9021
      %v9090 = vpack.c.b16 %v9026, %v9024
      %v9091 = vpack.c.b16 %v9027, %v9025
      %v9092 = vpack.c.b16 %v9030, %v9028
      %v9093 = vpack.c.b16 %v9031, %v9029
      %v9094 = vpack.c.b16 %v9034, %v9032
      %v9095 = vpack.c.b16 %v9035, %v9033
      %v9096 = vpack.c.b16 %v9038, %v9036
      %v9097 = vpack.c.b16 %v9039, %v9037
      %v9098 = vpack.c.b16 %v9042, %v9040
      %v9099 = vpack.c.b16 %v9043, %v9041
      %v9100 = vpack.c.b16 %v9046, %v9044
      %v9101 = vpack.c.b16 %v9047, %v9045
      %v9102 = vpack.c.b16 %v9050, %v9048
      %v9103 = vpack.c.b16 %v9051, %v9049
      %v9104 = vpack.c.b16 %v9054, %v9052
      %v9105 = vpack.c.b16 %v9055, %v9053
      %v9106 = vpack.c.b16 %v9058, %v9056
      %v9107 = vpack.c.b16 %v9059, %v9057
      %v9108 = vpack.c.b16 %v9062, %v9060
      %v9109 = vpack.c.b16 %v9063, %v9061
      %v9110 = vpack.c.b16 %v9066, %v9064
      %v9111 = vpack.c.b16 %v9067, %v9065
      %v9112 = vpack.c.b16 %v9070, %v9068
      %v9113 = vpack.c.b16 %v9071, %v9069
      %v9114 = vpack.c.b16 %v9074, %v9072
      %v9115 = vpack.c.b16 %v9075, %v9073
      %9156 = vmatprep.subr.bf16.mxu0 0
      %9157 = vmatpush1.bf16.msra.mxu0 %v8279
      %9158 = vmatprep.subr.bf16.mxu0 0
      %9159 = vmatpush1.bf16.msra.mxu0 %v8278
      %9160 = vmatprep.subr.bf16.mxu0 0
      %9161 = vmatpush1.bf16.msra.mxu0 %v8277
      %9162 = vmatprep.subr.bf16.mxu0 0
      %9163 = vmatpush1.bf16.msra.mxu0 %v8276
      %9164 = vmatprep.subr.bf16.mxu0 0
      %9165 = vmatpush1.bf16.msra.mxu0 %v8275
      %9166 = vmatprep.subr.bf16.mxu0 0
      %9167 = vmatpush1.bf16.msra.mxu0 %v8274
      %9168 = vmatprep.subr.bf16.mxu0 0
      %9169 = vmatpush1.bf16.msra.mxu0 %v8273
      %9170 = vmatprep.subr.bf16.mxu0 0
      %9171 = vmatpush1.bf16.msra.mxu0 %v8272
      %9172 = vmatprep.subr.bf16.mxu0 0
      %9173 = vmatpush2.bf16.msra.mxu0 %v8287
      %9174 = vmatprep.subr.bf16.mxu0 0
      %9175 = vmatpush2.bf16.msra.mxu0 %v8286
      %9176 = vmatprep.subr.bf16.mxu0 0
      %9177 = vmatpush2.bf16.msra.mxu0 %v8285
      %9178 = vmatprep.subr.bf16.mxu0 0
      %9179 = vmatpush2.bf16.msra.mxu0 %v8284
      %9180 = vmatprep.subr.bf16.mxu0 0
      %9181 = vmatpush2.bf16.msra.mxu0 %v8283
      %9182 = vmatprep.subr.bf16.mxu0 0
      %9183 = vmatpush2.bf16.msra.mxu0 %v8282
      %9184 = vmatprep.subr.bf16.mxu0 0
      %9185 = vmatpush2.bf16.msra.mxu0 %v8281
      %9186 = vmatprep.subr.bf16.mxu0 0
      %9187 = vmatpush2.bf16.msra.mxu0 %v8280
      %9188 = vmatprep.mubr.bf16.mxu0 %v9077
      %9189 = vmatmul.mubr.bf16.gmra.mxu0 %v9076
      %v9190 = vpop.f32.mrf.mxu0
      %v9191 = vadd.f32 %v8759, %v9190
      %v9192 = vpop.f32.mrf.mxu0
      %v9193 = vpop.f32.mrf.mxu0
      %v9194 = vadd.f32 %v8764, %v9193
      %v9195 = vpop.f32.mrf.mxu0
      %9196 = vmatprep.mubr.bf16.mxu0 %v9079
      %9197 = vmatmul.mubr.bf16.gmra.mxu0 %v9078
      %v9198 = vpop.f32.mrf.mxu0
      %v9199 = vadd.f32 %v8769, %v9198
      %v9200 = vpop.f32.mrf.mxu0
      %v9201 = vpop.f32.mrf.mxu0
      %v9202 = vadd.f32 %v8774, %v9201
      %v9203 = vpop.f32.mrf.mxu0
      %9204 = vmatprep.mubr.bf16.mxu0 %v9081
      %9205 = vmatmul.mubr.bf16.gmra.mxu0 %v9080
      %v9206 = vpop.f32.mrf.mxu0
      %v9207 = vadd.f32 %v8779, %v9206
      %v9208 = vpop.f32.mrf.mxu0
      %v9209 = vpop.f32.mrf.mxu0
      %v9210 = vadd.f32 %v8784, %v9209
      %v9211 = vpop.f32.mrf.mxu0
      %9212 = vmatprep.mubr.bf16.mxu0 %v9083
      %9213 = vmatmul.mubr.bf16.gmra.mxu0 %v9082
      %v9214 = vpop.f32.mrf.mxu0
      %v9215 = vadd.f32 %v8789, %v9214
      %v9216 = vpop.f32.mrf.mxu0
      %v9217 = vpop.f32.mrf.mxu0
      %v9218 = vadd.f32 %v8794, %v9217
      %v9219 = vpop.f32.mrf.mxu0
      %9220 = vmatprep.mubr.bf16.mxu0 %v9085
      %9221 = vmatmul.mubr.bf16.gmra.mxu0 %v9084
      %v9222 = vpop.f32.mrf.mxu0
      %v9223 = vadd.f32 %v8799, %v9222
      %v9224 = vpop.f32.mrf.mxu0
      %v9225 = vpop.f32.mrf.mxu0
      %v9226 = vadd.f32 %v8804, %v9225
      %v9227 = vpop.f32.mrf.mxu0
      %9228 = vmatprep.mubr.bf16.mxu0 %v9087
      %9229 = vmatmul.mubr.bf16.gmra.mxu0 %v9086
      %v9230 = vpop.f32.mrf.mxu0
      %v9231 = vadd.f32 %v8809, %v9230
      %v9232 = vpop.f32.mrf.mxu0
      %v9233 = vpop.f32.mrf.mxu0
      %v9234 = vadd.f32 %v8814, %v9233
      %v9235 = vpop.f32.mrf.mxu0
      %9236 = vmatprep.mubr.bf16.mxu0 %v9089
      %9237 = vmatmul.mubr.bf16.gmra.mxu0 %v9088
      %v9238 = vpop.f32.mrf.mxu0
      %v9239 = vadd.f32 %v8819, %v9238
      %v9240 = vpop.f32.mrf.mxu0
      %v9241 = vpop.f32.mrf.mxu0
      %v9242 = vadd.f32 %v8824, %v9241
      %v9243 = vpop.f32.mrf.mxu0
      %9244 = vmatprep.mubr.bf16.mxu0 %v9091
      %9245 = vmatmul.mubr.bf16.gmra.mxu0 %v9090
      %v9246 = vpop.f32.mrf.mxu0
      %v9247 = vadd.f32 %v8829, %v9246
      %v9248 = vpop.f32.mrf.mxu0
      %v9249 = vpop.f32.mrf.mxu0
      %v9250 = vadd.f32 %v8834, %v9249
      %v9251 = vpop.f32.mrf.mxu0
      %9252 = vmatprep.mubr.bf16.mxu0 %v9093
      %9253 = vmatmul.mubr.bf16.gmra.mxu0 %v9092
      %v9254 = vpop.f32.mrf.mxu0
      %v9255 = vadd.f32 %v8839, %v9254
      %v9256 = vpop.f32.mrf.mxu0
      %v9257 = vpop.f32.mrf.mxu0
      %v9258 = vadd.f32 %v8844, %v9257
      %v9259 = vpop.f32.mrf.mxu0
      %9260 = vmatprep.mubr.bf16.mxu0 %v9095
      %9261 = vmatmul.mubr.bf16.gmra.mxu0 %v9094
      %v9262 = vpop.f32.mrf.mxu0
      %v9263 = vadd.f32 %v8849, %v9262
      %v9264 = vpop.f32.mrf.mxu0
      %v9265 = vpop.f32.mrf.mxu0
      %v9266 = vadd.f32 %v8854, %v9265
      %v9267 = vpop.f32.mrf.mxu0
      %9268 = vmatprep.mubr.bf16.mxu0 %v9097
      %9269 = vmatmul.mubr.bf16.gmra.mxu0 %v9096
      %v9270 = vpop.f32.mrf.mxu0
      %v9271 = vadd.f32 %v8859, %v9270
      %v9272 = vpop.f32.mrf.mxu0
      %v9273 = vpop.f32.mrf.mxu0
      %v9274 = vadd.f32 %v8864, %v9273
      %v9275 = vpop.f32.mrf.mxu0
      %9276 = vmatprep.mubr.bf16.mxu0 %v9099
      %9277 = vmatmul.mubr.bf16.gmra.mxu0 %v9098
      %v9278 = vpop.f32.mrf.mxu0
      %v9279 = vadd.f32 %v8869, %v9278
      %v9280 = vpop.f32.mrf.mxu0
      %v9281 = vpop.f32.mrf.mxu0
      %v9282 = vadd.f32 %v8874, %v9281
      %v9283 = vpop.f32.mrf.mxu0
      %9284 = vmatprep.mubr.bf16.mxu0 %v9101
      %9285 = vmatmul.mubr.bf16.gmra.mxu0 %v9100
      %v9286 = vpop.f32.mrf.mxu0
      %v9287 = vadd.f32 %v8879, %v9286
      %v9288 = vpop.f32.mrf.mxu0
      %v9289 = vpop.f32.mrf.mxu0
      %v9290 = vadd.f32 %v8884, %v9289
      %v9291 = vpop.f32.mrf.mxu0
      %9292 = vmatprep.mubr.bf16.mxu0 %v9103
      %9293 = vmatmul.mubr.bf16.gmra.mxu0 %v9102
      %v9294 = vpop.f32.mrf.mxu0
      %v9295 = vadd.f32 %v8889, %v9294
      %v9296 = vpop.f32.mrf.mxu0
      %v9297 = vpop.f32.mrf.mxu0
      %v9298 = vadd.f32 %v8894, %v9297
      %v9299 = vpop.f32.mrf.mxu0
      %9300 = vmatprep.mubr.bf16.mxu0 %v9105
      %9301 = vmatmul.mubr.bf16.gmra.mxu0 %v9104
      %v9302 = vpop.f32.mrf.mxu0
      %v9303 = vadd.f32 %v8899, %v9302
      %v9304 = vpop.f32.mrf.mxu0
      %v9305 = vpop.f32.mrf.mxu0
      %v9306 = vadd.f32 %v8904, %v9305
      %v9307 = vpop.f32.mrf.mxu0
      %9308 = vmatprep.mubr.bf16.mxu0 %v9107
      %9309 = vmatmul.mubr.bf16.gmra.mxu0 %v9106
      %v9310 = vpop.f32.mrf.mxu0
      %v9311 = vadd.f32 %v8909, %v9310
      %v9312 = vpop.f32.mrf.mxu0
      %v9313 = vpop.f32.mrf.mxu0
      %v9314 = vadd.f32 %v8914, %v9313
      %v9315 = vpop.f32.mrf.mxu0
      %9316 = vmatprep.mubr.bf16.mxu0 %v9109
      %9317 = vmatmul.mubr.bf16.gmra.mxu0 %v9108
      %v9318 = vpop.f32.mrf.mxu0
      %v9319 = vadd.f32 %v8919, %v9318
      %v9320 = vpop.f32.mrf.mxu0
      %v9321 = vpop.f32.mrf.mxu0
      %v9322 = vadd.f32 %v8924, %v9321
      %v9323 = vpop.f32.mrf.mxu0
      %9324 = vmatprep.mubr.bf16.mxu0 %v9111
      %9325 = vmatmul.mubr.bf16.gmra.mxu0 %v9110
      %v9326 = vpop.f32.mrf.mxu0
      %v9327 = vadd.f32 %v8929, %v9326
      %v9328 = vpop.f32.mrf.mxu0
      %v9329 = vpop.f32.mrf.mxu0
      %v9330 = vadd.f32 %v8934, %v9329
      %v9331 = vpop.f32.mrf.mxu0
      %9332 = vmatprep.mubr.bf16.mxu0 %v9113
      %9333 = vmatmul.mubr.bf16.gmra.mxu0 %v9112
      %v9334 = vpop.f32.mrf.mxu0
      %v9335 = vadd.f32 %v8939, %v9334
      %v9336 = vpop.f32.mrf.mxu0
      %v9337 = vpop.f32.mrf.mxu0
      %v9338 = vadd.f32 %v8944, %v9337
      %v9339 = vpop.f32.mrf.mxu0
      %9340 = vmatprep.mubr.bf16.mxu0 %v9115
      %9341 = vmatmul.mubr.bf16.gmra.mxu0 %v9114
      %v9342 = vpop.f32.mrf.mxu0
      %v9343 = vadd.f32 %v8949, %v9342
      %v9344 = vpop.f32.mrf.mxu0
      %v9345 = vpop.f32.mrf.mxu0
      %v9346 = vadd.f32 %v8954, %v9345
      %v9347 = vpop.f32.mrf.mxu0
      %9348 = vdwg.mxu0
      %v9349 = vpack.c.bf16 %v9194, %v9191
      %v9350 = vpack.c.bf16 %v9202, %v9199
      %v9351 = vpack.c.bf16 %v9210, %v9207
      %v9352 = vpack.c.bf16 %v9218, %v9215
      %9353 = vxpose.xlu0.c.b16.start [1/8] %v9349, 128
      %9354 = vxpose.xlu0.c.b16.cont [2/8] %v9350, 128
      %9355 = vxpose.xlu0.c.b16.cont [3/8] %v9351, 128
      %9356 = vxpose.xlu0.c.b16.cont [4/8] %v9352, 128
      %9357 = vxpose.xlu0.c.b16.cont [5/8] 0, 128
      %9358 = vxpose.xlu0.c.b16.cont [6/8] 0, 128
      %9359 = vxpose.xlu0.c.b16.cont [7/8] 0, 128
      %9360 = vxpose.xlu0.c.b16.end [8/8] 0, 128
      %v9361 = vpop.trf.xlu0
      %v9362 = vpop.trf.xlu0
      %v9363 = vpop.trf.xlu0
      %v9364 = vpop.trf.xlu0
      %v9365 = vpop.trf.xlu0
      %v9366 = vpop.trf.xlu0
      %v9367 = vpop.trf.xlu0
      %v9368 = vpop.trf.xlu0
      %v9370 = vsel %vm1663, %v9361, 0
      %v9373 = vsel %vm1663, %v9362, 0
      %v9376 = vsel %vm1663, %v9363, 0
      %v9379 = vsel %vm1663, %v9364, 0
      %v9382 = vsel %vm1663, %v9365, 0
      %v9385 = vsel %vm1663, %v9366, 0
      %v9388 = vsel %vm1663, %v9367, 0
      %v9391 = vsel %vm1663, %v9368, 0
      %9393 = vmatprep.subr.bf16.mxu0 0
      %9394 = vmatpush1.bf16.msra.mxu0 0
      %9395 = vmatprep.subr.bf16.mxu0 0
      %9396 = vmatpush1.bf16.msra.mxu0 0
      %9397 = vmatprep.subr.bf16.mxu0 0
      %9398 = vmatpush1.bf16.msra.mxu0 0
      %9399 = vmatprep.subr.bf16.mxu0 0
      %9400 = vmatpush1.bf16.msra.mxu0 0
      %9401 = vmatprep.subr.bf16.mxu0 0
      %9402 = vmatpush1.bf16.msra.mxu0 %v9352
      %9403 = vmatprep.subr.bf16.mxu0 0
      %9404 = vmatpush1.bf16.msra.mxu0 %v9351
      %9405 = vmatprep.subr.bf16.mxu0 0
      %9406 = vmatpush1.bf16.msra.mxu0 %v9350
      %9407 = vmatprep.subr.bf16.mxu0 0
      %9408 = vmatpush1.bf16.msra.mxu0 %v9349
      %9409 = vmatprep.subr.bf16.mxu0 0
      %9410 = vmatpush2.bf16.msra.mxu0 0
      %9411 = vmatprep.subr.bf16.mxu0 0
      %9412 = vmatpush2.bf16.msra.mxu0 0
      %9413 = vmatprep.subr.bf16.mxu0 0
      %9414 = vmatpush2.bf16.msra.mxu0 0
      %9415 = vmatprep.subr.bf16.mxu0 0
      %9416 = vmatpush2.bf16.msra.mxu0 0
      %9417 = vmatprep.subr.bf16.mxu0 0
      %9418 = vmatpush2.bf16.msra.mxu0 0
      %9419 = vmatprep.subr.bf16.mxu0 0
      %9420 = vmatpush2.bf16.msra.mxu0 0
      %9421 = vmatprep.subr.bf16.mxu0 0
      %9422 = vmatpush2.bf16.msra.mxu0 0
      %9423 = vmatprep.subr.bf16.mxu0 0
      %9424 = vmatpush2.bf16.msra.mxu0 0
      %9425 = vmatprep.mubr.bf16.mxu0 0
      %9426 = vmatmul.mubr.bf16.gmra.mxu0 %v9370
      %v9427 = vpop.f32.mrf.mxu0
      %v9428 = vadd.f32 0.0, %v9427
      %v9429 = vpop.f32.mrf.mxu0
      %v9430 = vpop.f32.mrf.mxu0
      %v9431 = vadd.f32 0.0, %v9430
      %v9432 = vpop.f32.mrf.mxu0
      %9433 = vmatprep.mubr.bf16.mxu0 0
      %9434 = vmatmul.mubr.bf16.gmra.mxu0 %v9373
      %v9435 = vpop.f32.mrf.mxu0
      %v9436 = vadd.f32 0.0, %v9435
      %v9437 = vpop.f32.mrf.mxu0
      %v9438 = vpop.f32.mrf.mxu0
      %v9439 = vadd.f32 0.0, %v9438
      %v9440 = vpop.f32.mrf.mxu0
      %9441 = vmatprep.mubr.bf16.mxu0 0
      %9442 = vmatmul.mubr.bf16.gmra.mxu0 %v9376
      %v9443 = vpop.f32.mrf.mxu0
      %v9444 = vadd.f32 0.0, %v9443
      %v9445 = vpop.f32.mrf.mxu0
      %v9446 = vpop.f32.mrf.mxu0
      %v9447 = vadd.f32 0.0, %v9446
      %v9448 = vpop.f32.mrf.mxu0
      %9449 = vmatprep.mubr.bf16.mxu0 0
      %9450 = vmatmul.mubr.bf16.gmra.mxu0 %v9379
      %v9451 = vpop.f32.mrf.mxu0
      %v9452 = vadd.f32 0.0, %v9451
      %v9453 = vpop.f32.mrf.mxu0
      %v9454 = vpop.f32.mrf.mxu0
      %v9455 = vadd.f32 0.0, %v9454
      %v9456 = vpop.f32.mrf.mxu0
      %9457 = vmatprep.mubr.bf16.mxu0 0
      %9458 = vmatmul.mubr.bf16.gmra.mxu0 %v9382
      %v9459 = vpop.f32.mrf.mxu0
      %v9460 = vadd.f32 0.0, %v9459
      %v9461 = vpop.f32.mrf.mxu0
      %v9462 = vpop.f32.mrf.mxu0
      %v9463 = vadd.f32 0.0, %v9462
      %v9464 = vpop.f32.mrf.mxu0
      %9465 = vmatprep.mubr.bf16.mxu0 0
      %9466 = vmatmul.mubr.bf16.gmra.mxu0 %v9385
      %v9467 = vpop.f32.mrf.mxu0
      %v9468 = vadd.f32 0.0, %v9467
      %v9469 = vpop.f32.mrf.mxu0
      %v9470 = vpop.f32.mrf.mxu0
      %v9471 = vadd.f32 0.0, %v9470
      %v9472 = vpop.f32.mrf.mxu0
      %9473 = vmatprep.mubr.bf16.mxu0 0
      %9474 = vmatmul.mubr.bf16.gmra.mxu0 %v9388
      %v9475 = vpop.f32.mrf.mxu0
      %v9476 = vadd.f32 0.0, %v9475
      %v9477 = vpop.f32.mrf.mxu0
      %v9478 = vpop.f32.mrf.mxu0
      %v9479 = vadd.f32 0.0, %v9478
      %v9480 = vpop.f32.mrf.mxu0
      %9481 = vmatprep.mubr.bf16.mxu0 0
      %9482 = vmatmul.mubr.bf16.gmra.mxu0 %v9391
      %v9483 = vpop.f32.mrf.mxu0
      %v9484 = vadd.f32 0.0, %v9483
      %v9485 = vpop.f32.mrf.mxu0
      %v9486 = vpop.f32.mrf.mxu0
      %v9487 = vadd.f32 0.0, %v9486
      %v9488 = vpop.f32.mrf.mxu0
      %9489 = vdwg.mxu0
      %9490 = vmax.xlane.f32.xlu0 %v9428
      %v9491 = vpop.xlane.xlu0 %9490
      %9492 = vmax.xlane.f32.xlu0 %v9431
      %v9493 = vpop.xlane.xlu0 %9492
      %9494 = vmax.xlane.f32.xlu0 %v9436
      %v9495 = vpop.xlane.xlu0 %9494
      %9496 = vmax.xlane.f32.xlu0 %v9439
      %v9497 = vpop.xlane.xlu0 %9496
      %9498 = vmax.xlane.f32.xlu0 %v9444
      %v9499 = vpop.xlane.xlu0 %9498
      %9500 = vmax.xlane.f32.xlu0 %v9447
      %v9501 = vpop.xlane.xlu0 %9500
      %9502 = vmax.xlane.f32.xlu0 %v9452
      %v9503 = vpop.xlane.xlu0 %9502
      %9504 = vmax.xlane.f32.xlu0 %v9455
      %v9505 = vpop.xlane.xlu0 %9504
      %9506 = vmax.xlane.f32.xlu0 %v9460
      %v9507 = vpop.xlane.xlu0 %9506
      %9508 = vmax.xlane.f32.xlu0 %v9463
      %v9509 = vpop.xlane.xlu0 %9508
      %9510 = vmax.xlane.f32.xlu0 %v9468
      %v9511 = vpop.xlane.xlu0 %9510
      %9512 = vmax.xlane.f32.xlu0 %v9471
      %v9513 = vpop.xlane.xlu0 %9512
      %9514 = vmax.xlane.f32.xlu0 %v9476
      %v9515 = vpop.xlane.xlu0 %9514
      %9516 = vmax.xlane.f32.xlu0 %v9479
      %v9517 = vpop.xlane.xlu0 %9516
      %9518 = vmax.xlane.f32.xlu0 %v9484
      %v9519 = vpop.xlane.xlu0 %9518
      %9520 = vmax.xlane.f32.xlu0 %v9487
      %v9521 = vpop.xlane.xlu0 %9520
      %v9522 = vsub.f32 %v9428, %v9491
      %v9523 = vsub.f32 %v9431, %v9493
      %v9524 = vsub.f32 %v9436, %v9495
      %v9525 = vsub.f32 %v9439, %v9497
      %v9526 = vsub.f32 %v9444, %v9499
      %v9527 = vsub.f32 %v9447, %v9501
      %v9528 = vsub.f32 %v9452, %v9503
      %v9529 = vsub.f32 %v9455, %v9505
      %v9530 = vsub.f32 %v9460, %v9507
      %v9531 = vsub.f32 %v9463, %v9509
      %v9532 = vsub.f32 %v9468, %v9511
      %v9533 = vsub.f32 %v9471, %v9513
      %v9534 = vsub.f32 %v9476, %v9515
      %v9535 = vsub.f32 %v9479, %v9517
      %v9536 = vsub.f32 %v9484, %v9519
      %v9537 = vsub.f32 %v9487, %v9521
      %v9538 = vmul.f32 %v9522, 1.442695
      %v9539 = vpow.pop %v9538
      %v9540 = vmul.f32 %v9523, 1.442695
      %v9541 = vpow.pop %v9540
      %v9542 = vmul.f32 %v9524, 1.442695
      %v9543 = vpow.pop %v9542
      %v9544 = vmul.f32 %v9525, 1.442695
      %v9545 = vpow.pop %v9544
      %v9546 = vmul.f32 %v9526, 1.442695
      %v9547 = vpow.pop %v9546
      %v9548 = vmul.f32 %v9527, 1.442695
      %v9549 = vpow.pop %v9548
      %v9550 = vmul.f32 %v9528, 1.442695
      %v9551 = vpow.pop %v9550
      %v9552 = vmul.f32 %v9529, 1.442695
      %v9553 = vpow.pop %v9552
      %v9554 = vmul.f32 %v9530, 1.442695
      %v9555 = vpow.pop %v9554
      %v9556 = vmul.f32 %v9531, 1.442695
      %v9557 = vpow.pop %v9556
      %v9558 = vmul.f32 %v9532, 1.442695
      %v9559 = vpow.pop %v9558
      %v9560 = vmul.f32 %v9533, 1.442695
      %v9561 = vpow.pop %v9560
      %v9562 = vmul.f32 %v9534, 1.442695
      %v9563 = vpow.pop %v9562
      %v9564 = vmul.f32 %v9535, 1.442695
      %v9565 = vpow.pop %v9564
      %v9566 = vmul.f32 %v9536, 1.442695
      %v9567 = vpow.pop %v9566
      %v9568 = vmul.f32 %v9537, 1.442695
      %v9569 = vpow.pop %v9568
      %9570 = vadd.xlane.f32.xlu0 %v9539
      %v9571 = vpop.xlane.xlu0 %9570
      %9572 = vadd.xlane.f32.xlu0 %v9541
      %v9573 = vpop.xlane.xlu0 %9572
      %9574 = vadd.xlane.f32.xlu0 %v9543
      %v9575 = vpop.xlane.xlu0 %9574
      %9576 = vadd.xlane.f32.xlu0 %v9545
      %v9577 = vpop.xlane.xlu0 %9576
      %9578 = vadd.xlane.f32.xlu0 %v9547
      %v9579 = vpop.xlane.xlu0 %9578
      %9580 = vadd.xlane.f32.xlu0 %v9549
      %v9581 = vpop.xlane.xlu0 %9580
      %9582 = vadd.xlane.f32.xlu0 %v9551
      %v9583 = vpop.xlane.xlu0 %9582
      %9584 = vadd.xlane.f32.xlu0 %v9553
      %v9585 = vpop.xlane.xlu0 %9584
      %9586 = vadd.xlane.f32.xlu0 %v9555
      %v9587 = vpop.xlane.xlu0 %9586
      %9588 = vadd.xlane.f32.xlu0 %v9557
      %v9589 = vpop.xlane.xlu0 %9588
      %9590 = vadd.xlane.f32.xlu0 %v9559
      %v9591 = vpop.xlane.xlu0 %9590
      %9592 = vadd.xlane.f32.xlu0 %v9561
      %v9593 = vpop.xlane.xlu0 %9592
      %9594 = vadd.xlane.f32.xlu0 %v9563
      %v9595 = vpop.xlane.xlu0 %9594
      %9596 = vadd.xlane.f32.xlu0 %v9565
      %v9597 = vpop.xlane.xlu0 %9596
      %9598 = vadd.xlane.f32.xlu0 %v9567
      %v9599 = vpop.xlane.xlu0 %9598
      %9600 = vadd.xlane.f32.xlu0 %v9569
      %v9601 = vpop.xlane.xlu0 %9600
      %v9602 = vpack.c.bf16 %v9541, %v9539
      %v9603 = vpack.c.bf16 %v9545, %v9543
      %v9604 = vpack.c.bf16 %v9549, %v9547
      %v9605 = vpack.c.bf16 %v9553, %v9551
      %v9606 = vpack.c.bf16 %v9557, %v9555
      %v9607 = vpack.c.bf16 %v9561, %v9559
      %v9608 = vpack.c.bf16 %v9565, %v9563
      %v9609 = vpack.c.bf16 %v9569, %v9567
      %v9610 = vrcp.pop %v9571
      %v9611 = vrcp.pop %v9573
      %v9612 = vrcp.pop %v9575
      %v9613 = vrcp.pop %v9577
      %v9614 = vrcp.pop %v9579
      %v9615 = vrcp.pop %v9581
      %v9616 = vrcp.pop %v9583
      %v9617 = vrcp.pop %v9585
      %v9618 = vrcp.pop %v9587
      %v9619 = vrcp.pop %v9589
      %v9620 = vrcp.pop %v9591
      %v9621 = vrcp.pop %v9593
      %v9622 = vrcp.pop %v9595
      %v9623 = vrcp.pop %v9597
      %v9624 = vrcp.pop %v9599
      %v9625 = vrcp.pop %v9601
      %v9626 = vpack.c.bf16 %v9611, %v9610
      %v9627 = vpack.c.bf16 %v9613, %v9612
      %v9628 = vpack.c.bf16 %v9615, %v9614
      %v9629 = vpack.c.bf16 %v9617, %v9616
      %v9630 = vpack.c.bf16 %v9619, %v9618
      %v9631 = vpack.c.bf16 %v9621, %v9620
      %v9632 = vpack.c.bf16 %v9623, %v9622
      %v9633 = vpack.c.bf16 %v9625, %v9624
      %v9650 = vlaneseq
      %v9651 = vshrl.u32 %v9650, 7
      %v9652 = vsub.s32 %v1946, %v9651
      %v9653 = vrot.slane %v9610, %v9652
      %v9654 = vlaneseq
      %v9655 = vshrl.u32 %v9654, 7
      %v9656 = vsub.s32 %v1951, %v9655
      %v9657 = vrot.slane %v9611, %v9656
      %v9658 = vsel %vm1956, %v9657, %v9653
      %v9659 = vlaneseq
      %v9660 = vshrl.u32 %v9659, 7
      %v9661 = vsub.s32 %v1958, %v9660
      %v9662 = vrot.slane %v9612, %v9661
      %v9663 = vsel %vm1963, %v9662, %v9658
      %v9664 = vlaneseq
      %v9665 = vshrl.u32 %v9664, 7
      %v9666 = vsub.s32 %v1965, %v9665
      %v9667 = vrot.slane %v9613, %v9666
      %v9668 = vsel %vm1970, %v9667, %v9663
      %v9669 = vlaneseq
      %v9670 = vshrl.u32 %v9669, 7
      %v9671 = vsub.s32 %v1972, %v9670
      %v9672 = vrot.slane %v9614, %v9671
      %v9673 = vsel %vm1977, %v9672, %v9668
      %v9674 = vlaneseq
      %v9675 = vshrl.u32 %v9674, 7
      %v9676 = vsub.s32 %v1979, %v9675
      %v9677 = vrot.slane %v9615, %v9676
      %v9678 = vsel %vm1984, %v9677, %v9673
      %v9679 = vlaneseq
      %v9680 = vshrl.u32 %v9679, 7
      %v9681 = vsub.s32 %v1986, %v9680
      %v9682 = vrot.slane %v9616, %v9681
      %v9683 = vsel %vm1991, %v9682, %v9678
      %v9684 = vlaneseq
      %v9685 = vshrl.u32 %v9684, 7
      %v9686 = vsub.s32 %v1993, %v9685
      %v9687 = vrot.slane %v9617, %v9686
      %v9688 = vsel %vm1998, %v9687, %v9683
      %v9689 = vlaneseq
      %v9690 = vshrl.u32 %v9689, 7
      %v9691 = vsub.s32 %v2000, %v9690
      %v9692 = vrot.slane %v9618, %v9691
      %v9693 = vsel %vm2005, %v9692, %v9688
      %v9694 = vlaneseq
      %v9695 = vshrl.u32 %v9694, 7
      %v9696 = vsub.s32 %v2007, %v9695
      %v9697 = vrot.slane %v9619, %v9696
      %v9698 = vsel %vm2012, %v9697, %v9693
      %v9699 = vlaneseq
      %v9700 = vshrl.u32 %v9699, 7
      %v9701 = vsub.s32 %v2014, %v9700
      %v9702 = vrot.slane %v9620, %v9701
      %v9703 = vsel %vm2019, %v9702, %v9698
      %v9704 = vlaneseq
      %v9705 = vshrl.u32 %v9704, 7
      %v9706 = vsub.s32 %v2021, %v9705
      %v9707 = vrot.slane %v9621, %v9706
      %v9708 = vsel %vm2026, %v9707, %v9703
      %v9709 = vlaneseq
      %v9710 = vshrl.u32 %v9709, 7
      %v9711 = vsub.s32 %v2028, %v9710
      %v9712 = vrot.slane %v9622, %v9711
      %v9713 = vsel %vm2033, %v9712, %v9708
      %v9714 = vlaneseq
      %v9715 = vshrl.u32 %v9714, 7
      %v9716 = vsub.s32 %v2035, %v9715
      %v9717 = vrot.slane %v9623, %v9716
      %v9718 = vsel %vm2040, %v9717, %v9713
      %v9719 = vlaneseq
      %v9720 = vshrl.u32 %v9719, 7
      %v9721 = vsub.s32 %v2042, %v9720
      %v9722 = vrot.slane %v9624, %v9721
      %v9723 = vsel %vm2047, %v9722, %v9718
      %v9724 = vlaneseq
      %v9725 = vshrl.u32 %v9724, 7
      %v9726 = vsub.s32 %v2049, %v9725
      %v9727 = vrot.slane %v9625, %v9726
      %v9728 = vsel %vm2054, %v9727, %v9723
      %v9729 = vsel %vm2056, %v9728, %v9728
      %v9730 = vsel %vm2058, %v9728, %v9729
      %v9731 = vsel %vm2060, %v9728, %v9730
      %v9732 = vsel %vm2062, %v9728, %v9731
      %v9733 = vsel %vm2064, %v9728, %v9732
      %v9734 = vsel %vm2066, %v9728, %v9733
      %v9736 = vmul.f32 %v9223, %v9734
      %v9737 = vmul.f32 %v9226, %v9734
      %v9738 = vmul.f32 %v9231, %v9734
      %v9739 = vmul.f32 %v9234, %v9734
      %v9740 = vmul.f32 %v9239, %v9734
      %v9741 = vmul.f32 %v9242, %v9734
      %v9742 = vmul.f32 %v9247, %v9734
      %v9743 = vmul.f32 %v9250, %v9734
      %v9744 = vmul.f32 %v9255, %v9734
      %v9745 = vmul.f32 %v9258, %v9734
      %v9746 = vmul.f32 %v9263, %v9734
      %v9747 = vmul.f32 %v9266, %v9734
      %v9748 = vmul.f32 %v9271, %v9734
      %v9749 = vmul.f32 %v9274, %v9734
      %v9750 = vmul.f32 %v9279, %v9734
      %v9751 = vmul.f32 %v9282, %v9734
      %v9752 = vmul.f32 %v9287, %v9734
      %v9753 = vmul.f32 %v9290, %v9734
      %v9754 = vmul.f32 %v9295, %v9734
      %v9755 = vmul.f32 %v9298, %v9734
      %v9756 = vmul.f32 %v9303, %v9734
      %v9757 = vmul.f32 %v9306, %v9734
      %v9758 = vmul.f32 %v9311, %v9734
      %v9759 = vmul.f32 %v9314, %v9734
      %v9760 = vmul.f32 %v9319, %v9734
      %v9761 = vmul.f32 %v9322, %v9734
      %v9762 = vmul.f32 %v9327, %v9734
      %v9763 = vmul.f32 %v9330, %v9734
      %v9764 = vmul.f32 %v9335, %v9734
      %v9765 = vmul.f32 %v9338, %v9734
      %v9766 = vmul.f32 %v9343, %v9734
      %v9767 = vmul.f32 %v9346, %v9734
      %v9768 = vpack.c.bf16 %v9737, %v9736
      %v9769 = vpack.c.bf16 %v9739, %v9738
      %v9770 = vpack.c.bf16 %v9741, %v9740
      %v9771 = vpack.c.bf16 %v9743, %v9742
      %v9772 = vpack.c.bf16 %v9745, %v9744
      %v9773 = vpack.c.bf16 %v9747, %v9746
      %v9774 = vpack.c.bf16 %v9749, %v9748
      %v9775 = vpack.c.bf16 %v9751, %v9750
      %v9776 = vpack.c.bf16 %v9753, %v9752
      %v9777 = vpack.c.bf16 %v9755, %v9754
      %v9778 = vpack.c.bf16 %v9757, %v9756
      %v9779 = vpack.c.bf16 %v9759, %v9758
      %v9780 = vpack.c.bf16 %v9761, %v9760
      %v9781 = vpack.c.bf16 %v9763, %v9762
      %v9782 = vpack.c.bf16 %v9765, %v9764
      %v9783 = vpack.c.bf16 %v9767, %v9766
      %9784 = vmatprep.subr.bf16.mxu0 0
      %9785 = vmatpush1.bf16.msra.mxu0 %v9609
      %9786 = vmatprep.subr.bf16.mxu0 0
      %9787 = vmatpush1.bf16.msra.mxu0 %v9608
      %9788 = vmatprep.subr.bf16.mxu0 0
      %9789 = vmatpush1.bf16.msra.mxu0 %v9607
      %9790 = vmatprep.subr.bf16.mxu0 0
      %9791 = vmatpush1.bf16.msra.mxu0 %v9606
      %9792 = vmatprep.subr.bf16.mxu0 0
      %9793 = vmatpush1.bf16.msra.mxu0 %v9605
      %9794 = vmatprep.subr.bf16.mxu0 0
      %9795 = vmatpush1.bf16.msra.mxu0 %v9604
      %9796 = vmatprep.subr.bf16.mxu0 0
      %9797 = vmatpush1.bf16.msra.mxu0 %v9603
      %9798 = vmatprep.subr.bf16.mxu0 0
      %9799 = vmatpush1.bf16.msra.mxu0 %v9602
      %9800 = vmatprep.subr.bf16.mxu0 0
      %9801 = vmatpush2.bf16.msra.mxu0 0
      %9802 = vmatprep.subr.bf16.mxu0 0
      %9803 = vmatpush2.bf16.msra.mxu0 0
      %9804 = vmatprep.subr.bf16.mxu0 0
      %9805 = vmatpush2.bf16.msra.mxu0 0
      %9806 = vmatprep.subr.bf16.mxu0 0
      %9807 = vmatpush2.bf16.msra.mxu0 0
      %9808 = vmatprep.subr.bf16.mxu0 0
      %9809 = vmatpush2.bf16.msra.mxu0 0
      %9810 = vmatprep.subr.bf16.mxu0 0
      %9811 = vmatpush2.bf16.msra.mxu0 0
      %9812 = vmatprep.subr.bf16.mxu0 0
      %9813 = vmatpush2.bf16.msra.mxu0 0
      %9814 = vmatprep.subr.bf16.mxu0 0
      %9815 = vmatpush2.bf16.msra.mxu0 0
      %9816 = vmatprep.mubr.bf16.mxu0 0
      %9817 = vmatmul.mubr.bf16.gmra.mxu0 %v9768
      %v9818 = vpop.f32.mrf.mxu0
      %v9819 = vadd.f32 0.0, %v9818
      %v9820 = vpop.f32.mrf.mxu0
      %v9821 = vpop.f32.mrf.mxu0
      %v9822 = vadd.f32 0.0, %v9821
      %v9823 = vpop.f32.mrf.mxu0
      %9824 = vmatprep.mubr.bf16.mxu0 0
      %9825 = vmatmul.mubr.bf16.gmra.mxu0 %v9769
      %v9826 = vpop.f32.mrf.mxu0
      %v9827 = vadd.f32 0.0, %v9826
      %v9828 = vpop.f32.mrf.mxu0
      %v9829 = vpop.f32.mrf.mxu0
      %v9830 = vadd.f32 0.0, %v9829
      %v9831 = vpop.f32.mrf.mxu0
      %9832 = vmatprep.mubr.bf16.mxu0 0
      %9833 = vmatmul.mubr.bf16.gmra.mxu0 %v9770
      %v9834 = vpop.f32.mrf.mxu0
      %v9835 = vadd.f32 0.0, %v9834
      %v9836 = vpop.f32.mrf.mxu0
      %v9837 = vpop.f32.mrf.mxu0
      %v9838 = vadd.f32 0.0, %v9837
      %v9839 = vpop.f32.mrf.mxu0
      %9840 = vmatprep.mubr.bf16.mxu0 0
      %9841 = vmatmul.mubr.bf16.gmra.mxu0 %v9771
      %v9842 = vpop.f32.mrf.mxu0
      %v9843 = vadd.f32 0.0, %v9842
      %v9844 = vpop.f32.mrf.mxu0
      %v9845 = vpop.f32.mrf.mxu0
      %v9846 = vadd.f32 0.0, %v9845
      %v9847 = vpop.f32.mrf.mxu0
      %9848 = vmatprep.mubr.bf16.mxu0 0
      %9849 = vmatmul.mubr.bf16.gmra.mxu0 %v9772
      %v9850 = vpop.f32.mrf.mxu0
      %v9851 = vadd.f32 0.0, %v9850
      %v9852 = vpop.f32.mrf.mxu0
      %v9853 = vpop.f32.mrf.mxu0
      %v9854 = vadd.f32 0.0, %v9853
      %v9855 = vpop.f32.mrf.mxu0
      %9856 = vmatprep.mubr.bf16.mxu0 0
      %9857 = vmatmul.mubr.bf16.gmra.mxu0 %v9773
      %v9858 = vpop.f32.mrf.mxu0
      %v9859 = vadd.f32 0.0, %v9858
      %v9860 = vpop.f32.mrf.mxu0
      %v9861 = vpop.f32.mrf.mxu0
      %v9862 = vadd.f32 0.0, %v9861
      %v9863 = vpop.f32.mrf.mxu0
      %9864 = vmatprep.mubr.bf16.mxu0 0
      %9865 = vmatmul.mubr.bf16.gmra.mxu0 %v9774
      %v9866 = vpop.f32.mrf.mxu0
      %v9867 = vadd.f32 0.0, %v9866
      %v9868 = vpop.f32.mrf.mxu0
      %v9869 = vpop.f32.mrf.mxu0
      %v9870 = vadd.f32 0.0, %v9869
      %v9871 = vpop.f32.mrf.mxu0
      %9872 = vmatprep.mubr.bf16.mxu0 0
      %9873 = vmatmul.mubr.bf16.gmra.mxu0 %v9775
      %v9874 = vpop.f32.mrf.mxu0
      %v9875 = vadd.f32 0.0, %v9874
      %v9876 = vpop.f32.mrf.mxu0
      %v9877 = vpop.f32.mrf.mxu0
      %v9878 = vadd.f32 0.0, %v9877
      %v9879 = vpop.f32.mrf.mxu0
      %9880 = vmatprep.mubr.bf16.mxu0 0
      %9881 = vmatmul.mubr.bf16.gmra.mxu0 %v9776
      %v9882 = vpop.f32.mrf.mxu0
      %v9883 = vadd.f32 0.0, %v9882
      %v9884 = vpop.f32.mrf.mxu0
      %v9885 = vpop.f32.mrf.mxu0
      %v9886 = vadd.f32 0.0, %v9885
      %v9887 = vpop.f32.mrf.mxu0
      %9888 = vmatprep.mubr.bf16.mxu0 0
      %9889 = vmatmul.mubr.bf16.gmra.mxu0 %v9777
      %v9890 = vpop.f32.mrf.mxu0
      %v9891 = vadd.f32 0.0, %v9890
      %v9892 = vpop.f32.mrf.mxu0
      %v9893 = vpop.f32.mrf.mxu0
      %v9894 = vadd.f32 0.0, %v9893
      %v9895 = vpop.f32.mrf.mxu0
      %9896 = vmatprep.mubr.bf16.mxu0 0
      %9897 = vmatmul.mubr.bf16.gmra.mxu0 %v9778
      %v9898 = vpop.f32.mrf.mxu0
      %v9899 = vadd.f32 0.0, %v9898
      %v9900 = vpop.f32.mrf.mxu0
      %v9901 = vpop.f32.mrf.mxu0
      %v9902 = vadd.f32 0.0, %v9901
      %v9903 = vpop.f32.mrf.mxu0
      %9904 = vmatprep.mubr.bf16.mxu0 0
      %9905 = vmatmul.mubr.bf16.gmra.mxu0 %v9779
      %v9906 = vpop.f32.mrf.mxu0
      %v9907 = vadd.f32 0.0, %v9906
      %v9908 = vpop.f32.mrf.mxu0
      %v9909 = vpop.f32.mrf.mxu0
      %v9910 = vadd.f32 0.0, %v9909
      %v9911 = vpop.f32.mrf.mxu0
      %9912 = vmatprep.mubr.bf16.mxu0 0
      %9913 = vmatmul.mubr.bf16.gmra.mxu0 %v9780
      %v9914 = vpop.f32.mrf.mxu0
      %v9915 = vadd.f32 0.0, %v9914
      %v9916 = vpop.f32.mrf.mxu0
      %v9917 = vpop.f32.mrf.mxu0
      %v9918 = vadd.f32 0.0, %v9917
      %v9919 = vpop.f32.mrf.mxu0
      %9920 = vmatprep.mubr.bf16.mxu0 0
      %9921 = vmatmul.mubr.bf16.gmra.mxu0 %v9781
      %v9922 = vpop.f32.mrf.mxu0
      %v9923 = vadd.f32 0.0, %v9922
      %v9924 = vpop.f32.mrf.mxu0
      %v9925 = vpop.f32.mrf.mxu0
      %v9926 = vadd.f32 0.0, %v9925
      %v9927 = vpop.f32.mrf.mxu0
      %9928 = vmatprep.mubr.bf16.mxu0 0
      %9929 = vmatmul.mubr.bf16.gmra.mxu0 %v9782
      %v9930 = vpop.f32.mrf.mxu0
      %v9931 = vadd.f32 0.0, %v9930
      %v9932 = vpop.f32.mrf.mxu0
      %v9933 = vpop.f32.mrf.mxu0
      %v9934 = vadd.f32 0.0, %v9933
      %v9935 = vpop.f32.mrf.mxu0
      %9936 = vmatprep.mubr.bf16.mxu0 0
      %9937 = vmatmul.mubr.bf16.gmra.mxu0 %v9783
      %v9938 = vpop.f32.mrf.mxu0
      %v9939 = vadd.f32 0.0, %v9938
      %v9940 = vpop.f32.mrf.mxu0
      %v9941 = vpop.f32.mrf.mxu0
      %v9942 = vadd.f32 0.0, %v9941
      %v9943 = vpop.f32.mrf.mxu0
      %9944 = vdwg.mxu0
      %v9953 = vunpack.c.l.b16 %v9626
      %v9954 = vunpack.c.h.b16 %v9626
      %v9955 = vunpack.c.l.b16 %v9627
      %v9956 = vunpack.c.h.b16 %v9627
      %v9957 = vunpack.c.l.b16 %v9628
      %v9958 = vunpack.c.h.b16 %v9628
      %v9959 = vunpack.c.l.b16 %v9629
      %v9960 = vunpack.c.h.b16 %v9629
      %v9961 = vunpack.c.l.b16 %v9630
      %v9962 = vunpack.c.h.b16 %v9630
      %v9963 = vunpack.c.l.b16 %v9631
      %v9964 = vunpack.c.h.b16 %v9631
      %v9965 = vunpack.c.l.b16 %v9632
      %v9966 = vunpack.c.h.b16 %v9632
      %v9967 = vunpack.c.l.b16 %v9633
      %v9968 = vunpack.c.h.b16 %v9633
      %v9969 = vlaneseq
      %v9970 = vshrl.u32 %v9969, 7
      %v9971 = vsub.s32 %v1946, %v9970
      %v9972 = vrot.slane %v9953, %v9971
      %v9973 = vlaneseq
      %v9974 = vshrl.u32 %v9973, 7
      %v9975 = vsub.s32 %v1951, %v9974
      %v9976 = vrot.slane %v9954, %v9975
      %v9977 = vsel %vm1956, %v9976, %v9972
      %v9978 = vlaneseq
      %v9979 = vshrl.u32 %v9978, 7
      %v9980 = vsub.s32 %v1958, %v9979
      %v9981 = vrot.slane %v9955, %v9980
      %v9982 = vsel %vm1963, %v9981, %v9977
      %v9983 = vlaneseq
      %v9984 = vshrl.u32 %v9983, 7
      %v9985 = vsub.s32 %v1965, %v9984
      %v9986 = vrot.slane %v9956, %v9985
      %v9987 = vsel %vm1970, %v9986, %v9982
      %v9988 = vlaneseq
      %v9989 = vshrl.u32 %v9988, 7
      %v9990 = vsub.s32 %v1972, %v9989
      %v9991 = vrot.slane %v9957, %v9990
      %v9992 = vsel %vm1977, %v9991, %v9987
      %v9993 = vlaneseq
      %v9994 = vshrl.u32 %v9993, 7
      %v9995 = vsub.s32 %v1979, %v9994
      %v9996 = vrot.slane %v9958, %v9995
      %v9997 = vsel %vm1984, %v9996, %v9992
      %v9998 = vlaneseq
      %v9999 = vshrl.u32 %v9998, 7
      %v10000 = vsub.s32 %v1986, %v9999
      %v10001 = vrot.slane %v9959, %v10000
      %v10002 = vsel %vm1991, %v10001, %v9997
      %v10003 = vlaneseq
      %v10004 = vshrl.u32 %v10003, 7
      %v10005 = vsub.s32 %v1993, %v10004
      %v10006 = vrot.slane %v9960, %v10005
      %v10007 = vsel %vm1998, %v10006, %v10002
      %v10008 = vlaneseq
      %v10009 = vshrl.u32 %v10008, 7
      %v10010 = vsub.s32 %v2000, %v10009
      %v10011 = vrot.slane %v9961, %v10010
      %v10012 = vsel %vm2005, %v10011, %v10007
      %v10013 = vlaneseq
      %v10014 = vshrl.u32 %v10013, 7
      %v10015 = vsub.s32 %v2007, %v10014
      %v10016 = vrot.slane %v9962, %v10015
      %v10017 = vsel %vm2012, %v10016, %v10012
      %v10018 = vlaneseq
      %v10019 = vshrl.u32 %v10018, 7
      %v10020 = vsub.s32 %v2014, %v10019
      %v10021 = vrot.slane %v9963, %v10020
      %v10022 = vsel %vm2019, %v10021, %v10017
      %v10023 = vlaneseq
      %v10024 = vshrl.u32 %v10023, 7
      %v10025 = vsub.s32 %v2021, %v10024
      %v10026 = vrot.slane %v9964, %v10025
      %v10027 = vsel %vm2026, %v10026, %v10022
      %v10028 = vlaneseq
      %v10029 = vshrl.u32 %v10028, 7
      %v10030 = vsub.s32 %v2028, %v10029
      %v10031 = vrot.slane %v9965, %v10030
      %v10032 = vsel %vm2033, %v10031, %v10027
      %v10033 = vlaneseq
      %v10034 = vshrl.u32 %v10033, 7
      %v10035 = vsub.s32 %v2035, %v10034
      %v10036 = vrot.slane %v9966, %v10035
      %v10037 = vsel %vm2040, %v10036, %v10032
      %v10038 = vlaneseq
      %v10039 = vshrl.u32 %v10038, 7
      %v10040 = vsub.s32 %v2042, %v10039
      %v10041 = vrot.slane %v9967, %v10040
      %v10042 = vsel %vm2047, %v10041, %v10037
      %v10043 = vlaneseq
      %v10044 = vshrl.u32 %v10043, 7
      %v10045 = vsub.s32 %v2049, %v10044
      %v10046 = vrot.slane %v9968, %v10045
      %v10047 = vsel %vm2054, %v10046, %v10042
      %v10048 = vpack.c.b16 %v10047, %v10047
      %10050 = vmatprep.subr.bf16.mxu0 0
      %10051 = vmatpush1.bf16.msra.mxu0 %v9609
      %10052 = vmatprep.subr.bf16.mxu0 0
      %10053 = vmatpush1.bf16.msra.mxu0 %v9608
      %10054 = vmatprep.subr.bf16.mxu0 0
      %10055 = vmatpush1.bf16.msra.mxu0 %v9607
      %10056 = vmatprep.subr.bf16.mxu0 0
      %10057 = vmatpush1.bf16.msra.mxu0 %v9606
      %10058 = vmatprep.subr.bf16.mxu0 0
      %10059 = vmatpush1.bf16.msra.mxu0 %v9605
      %10060 = vmatprep.subr.bf16.mxu0 0
      %10061 = vmatpush1.bf16.msra.mxu0 %v9604
      %10062 = vmatprep.subr.bf16.mxu0 0
      %10063 = vmatpush1.bf16.msra.mxu0 %v9603
      %10064 = vmatprep.subr.bf16.mxu0 0
      %10065 = vmatpush1.bf16.msra.mxu0 %v9602
      %10066 = vmatprep.subr.bf16.mxu0 0
      %10067 = vmatpush2.bf16.msra.mxu0 0
      %10068 = vmatprep.subr.bf16.mxu0 0
      %10069 = vmatpush2.bf16.msra.mxu0 0
      %10070 = vmatprep.subr.bf16.mxu0 0
      %10071 = vmatpush2.bf16.msra.mxu0 0
      %10072 = vmatprep.subr.bf16.mxu0 0
      %10073 = vmatpush2.bf16.msra.mxu0 0
      %10074 = vmatprep.subr.bf16.mxu0 0
      %10075 = vmatpush2.bf16.msra.mxu0 0
      %10076 = vmatprep.subr.bf16.mxu0 0
      %10077 = vmatpush2.bf16.msra.mxu0 0
      %10078 = vmatprep.subr.bf16.mxu0 0
      %10079 = vmatpush2.bf16.msra.mxu0 0
      %10080 = vmatprep.subr.bf16.mxu0 0
      %10081 = vmatpush2.bf16.msra.mxu0 0
      %10082 = vmatprep.mubr.bf16.mxu0 0
      %10083 = vmatmul.mubr.bf16.gmra.mxu0 %v10048
      %v10084 = vpop.f32.mrf.mxu0
      %v10085 = vadd.f32 1e-09, %v10084
      %v10086 = vpop.f32.mrf.mxu0
      %v10087 = vpop.f32.mrf.mxu0
      %v10088 = vpop.f32.mrf.mxu0
      %10089 = vdwg.mxu0
      %v10090 = vrcp.pop %v10085
      %v10091 = vlaneseq
      %v10092 = vshrl.u32 %v10091, 7
      %v10093 = vsub.s32 0, %v10092
      %v10094 = vrot.slane %v10090, %v10093
      %v10095 = vmul.f32 %v9819, %v10094
      %v10096 = vmul.f32 %v9822, %v10094
      %v10097 = vmul.f32 %v9827, %v10094
      %v10098 = vmul.f32 %v9830, %v10094
      %v10099 = vmul.f32 %v9835, %v10094
      %v10100 = vmul.f32 %v9838, %v10094
      %v10101 = vmul.f32 %v9843, %v10094
      %v10102 = vmul.f32 %v9846, %v10094
      %v10103 = vmul.f32 %v9851, %v10094
      %v10104 = vmul.f32 %v9854, %v10094
      %v10105 = vmul.f32 %v9859, %v10094
      %v10106 = vmul.f32 %v9862, %v10094
      %v10107 = vmul.f32 %v9867, %v10094
      %v10108 = vmul.f32 %v9870, %v10094
      %v10109 = vmul.f32 %v9875, %v10094
      %v10110 = vmul.f32 %v9878, %v10094
      %v10111 = vmul.f32 %v9883, %v10094
      %v10112 = vmul.f32 %v9886, %v10094
      %v10113 = vmul.f32 %v9891, %v10094
      %v10114 = vmul.f32 %v9894, %v10094
      %v10115 = vmul.f32 %v9899, %v10094
      %v10116 = vmul.f32 %v9902, %v10094
      %v10117 = vmul.f32 %v9907, %v10094
      %v10118 = vmul.f32 %v9910, %v10094
      %v10119 = vmul.f32 %v9915, %v10094
      %v10120 = vmul.f32 %v9918, %v10094
      %v10121 = vmul.f32 %v9923, %v10094
      %v10122 = vmul.f32 %v9926, %v10094
      %v10123 = vmul.f32 %v9931, %v10094
      %v10124 = vmul.f32 %v9934, %v10094
      %v10125 = vmul.f32 %v9939, %v10094
      %v10126 = vmul.f32 %v9942, %v10094
      %s10127 = scalar_lea.vmem %s5, 768
      %v10128 = vld [vmem:[%s10127] sm:$0xff]
      %v10129 = vld [vmem:[%s10127 + $0x8] sm:$0xff]
      %v10130 = vld [vmem:[%s10127 + $0x10] sm:$0xff]
      %v10131 = vld [vmem:[%s10127 + $0x18] sm:$0xff]
      %v10132 = vld [vmem:[%s10127 + $0x20] sm:$0xff]
      %v10133 = vld [vmem:[%s10127 + $0x28] sm:$0xff]
      %v10134 = vld [vmem:[%s10127 + $0x30] sm:$0xff]
      %v10135 = vld [vmem:[%s10127 + $0x38] sm:$0xff]
      %v10136 = vld [vmem:[%s10127 + $0x40] sm:$0xff]
      %v10137 = vld [vmem:[%s10127 + $0x48] sm:$0xff]
      %v10138 = vld [vmem:[%s10127 + $0x50] sm:$0xff]
      %v10139 = vld [vmem:[%s10127 + $0x58] sm:$0xff]
      %v10140 = vld [vmem:[%s10127 + $0x60] sm:$0xff]
      %v10141 = vld [vmem:[%s10127 + $0x68] sm:$0xff]
      %v10142 = vld [vmem:[%s10127 + $0x70] sm:$0xff]
      %v10143 = vld [vmem:[%s10127 + $0x78] sm:$0xff]
      %v10144 = vld [vmem:[%s10127 + $0x80] sm:$0xff]
      %v10145 = vld [vmem:[%s10127 + $0x88] sm:$0xff]
      %v10146 = vld [vmem:[%s10127 + $0x90] sm:$0xff]
      %v10147 = vld [vmem:[%s10127 + $0x98] sm:$0xff]
      %v10148 = vld [vmem:[%s10127 + $0xa0] sm:$0xff]
      %v10149 = vld [vmem:[%s10127 + $0xa8] sm:$0xff]
      %v10150 = vld [vmem:[%s10127 + $0xb0] sm:$0xff]
      %v10151 = vld [vmem:[%s10127 + $0xb8] sm:$0xff]
      %v10152 = vld [vmem:[%s10127 + $0xc0] sm:$0xff]
      %v10153 = vld [vmem:[%s10127 + $0xc8] sm:$0xff]
      %v10154 = vld [vmem:[%s10127 + $0xd0] sm:$0xff]
      %v10155 = vld [vmem:[%s10127 + $0xd8] sm:$0xff]
      %v10156 = vld [vmem:[%s10127 + $0xe0] sm:$0xff]
      %v10157 = vld [vmem:[%s10127 + $0xe8] sm:$0xff]
      %v10158 = vld [vmem:[%s10127 + $0xf0] sm:$0xff]
      %v10159 = vld [vmem:[%s10127 + $0xf8] sm:$0xff]
      %v10160 = vsub.f32 %v8240, %v10095
      %v10161 = vsub.f32 %v8241, %v10096
      %v10162 = vsub.f32 %v8242, %v10097
      %v10163 = vsub.f32 %v8243, %v10098
      %v10164 = vsub.f32 %v8244, %v10099
      %v10165 = vsub.f32 %v8245, %v10100
      %v10166 = vsub.f32 %v8246, %v10101
      %v10167 = vsub.f32 %v8247, %v10102
      %v10168 = vsub.f32 %v8248, %v10103
      %v10169 = vsub.f32 %v8249, %v10104
      %v10170 = vsub.f32 %v8250, %v10105
      %v10171 = vsub.f32 %v8251, %v10106
      %v10172 = vsub.f32 %v8252, %v10107
      %v10173 = vsub.f32 %v8253, %v10108
      %v10174 = vsub.f32 %v8254, %v10109
      %v10175 = vsub.f32 %v8255, %v10110
      %v10176 = vsub.f32 %v8256, %v10111
      %v10177 = vsub.f32 %v8257, %v10112
      %v10178 = vsub.f32 %v8258, %v10113
      %v10179 = vsub.f32 %v8259, %v10114
      %v10180 = vsub.f32 %v8260, %v10115
      %v10181 = vsub.f32 %v8261, %v10116
      %v10182 = vsub.f32 %v8262, %v10117
      %v10183 = vsub.f32 %v8263, %v10118
      %v10184 = vsub.f32 %v8264, %v10119
      %v10185 = vsub.f32 %v8265, %v10120
      %v10186 = vsub.f32 %v8266, %v10121
      %v10187 = vsub.f32 %v8267, %v10122
      %v10188 = vsub.f32 %v8268, %v10123
      %v10189 = vsub.f32 %v8269, %v10124
      %v10190 = vsub.f32 %v8270, %v10125
      %v10191 = vsub.f32 %v8271, %v10126
      %v10192 = vpack.c.bf16 %v10161, %v10160
      %v10193 = vpack.c.bf16 %v10163, %v10162
      %v10194 = vpack.c.bf16 %v10165, %v10164
      %v10195 = vpack.c.bf16 %v10167, %v10166
      %v10196 = vpack.c.bf16 %v10169, %v10168
      %v10197 = vpack.c.bf16 %v10171, %v10170
      %v10198 = vpack.c.bf16 %v10173, %v10172
      %v10199 = vpack.c.bf16 %v10175, %v10174
      %v10200 = vpack.c.bf16 %v10177, %v10176
      %v10201 = vpack.c.bf16 %v10179, %v10178
      %v10202 = vpack.c.bf16 %v10181, %v10180
      %v10203 = vpack.c.bf16 %v10183, %v10182
      %v10204 = vpack.c.bf16 %v10185, %v10184
      %v10205 = vpack.c.bf16 %v10187, %v10186
      %v10206 = vpack.c.bf16 %v10189, %v10188
      %v10207 = vpack.c.bf16 %v10191, %v10190
      %s10208 = scalar_lea.vmem %s6, 768
      %v10209 = vld [vmem:[%s10208] sm:$0xff]
      %v10210 = vld [vmem:[%s10208 + $0x8] sm:$0xff]
      %v10211 = vld [vmem:[%s10208 + $0x10] sm:$0xff]
      %v10212 = vld [vmem:[%s10208 + $0x18] sm:$0xff]
      %v10213 = vld [vmem:[%s10208 + $0x20] sm:$0xff]
      %v10214 = vld [vmem:[%s10208 + $0x28] sm:$0xff]
      %v10215 = vld [vmem:[%s10208 + $0x30] sm:$0xff]
      %v10216 = vld [vmem:[%s10208 + $0x38] sm:$0xff]
      %v10217 = vld [vmem:[%s10208 + $0x40] sm:$0xff]
      %v10218 = vld [vmem:[%s10208 + $0x48] sm:$0xff]
      %v10219 = vld [vmem:[%s10208 + $0x50] sm:$0xff]
      %v10220 = vld [vmem:[%s10208 + $0x58] sm:$0xff]
      %v10221 = vld [vmem:[%s10208 + $0x60] sm:$0xff]
      %v10222 = vld [vmem:[%s10208 + $0x68] sm:$0xff]
      %v10223 = vld [vmem:[%s10208 + $0x70] sm:$0xff]
      %v10224 = vld [vmem:[%s10208 + $0x78] sm:$0xff]
      %v10225 = vld [vmem:[%s10208 + $0x80] sm:$0xff]
      %v10226 = vld [vmem:[%s10208 + $0x88] sm:$0xff]
      %v10227 = vld [vmem:[%s10208 + $0x90] sm:$0xff]
      %v10228 = vld [vmem:[%s10208 + $0x98] sm:$0xff]
      %v10229 = vld [vmem:[%s10208 + $0xa0] sm:$0xff]
      %v10230 = vld [vmem:[%s10208 + $0xa8] sm:$0xff]
      %v10231 = vld [vmem:[%s10208 + $0xb0] sm:$0xff]
      %v10232 = vld [vmem:[%s10208 + $0xb8] sm:$0xff]
      %v10233 = vld [vmem:[%s10208 + $0xc0] sm:$0xff]
      %v10234 = vld [vmem:[%s10208 + $0xc8] sm:$0xff]
      %v10235 = vld [vmem:[%s10208 + $0xd0] sm:$0xff]
      %v10236 = vld [vmem:[%s10208 + $0xd8] sm:$0xff]
      %v10237 = vld [vmem:[%s10208 + $0xe0] sm:$0xff]
      %v10238 = vld [vmem:[%s10208 + $0xe8] sm:$0xff]
      %v10239 = vld [vmem:[%s10208 + $0xf0] sm:$0xff]
      %v10240 = vld [vmem:[%s10208 + $0xf8] sm:$0xff]
      %10242 = vset.pattern.permute.xlu0 0
      %10243 = vperm.xlu0 %10242, %v10209
      %v10244 = vpop.permute.xlu0 %10243
      %10247 = vset.pattern.permute.xlu0 0
      %10248 = vperm.xlu0 %10247, %v10210
      %v10249 = vpop.permute.xlu0 %10248
      %10252 = vset.pattern.permute.xlu0 0
      %10253 = vperm.xlu0 %10252, %v10211
      %v10254 = vpop.permute.xlu0 %10253
      %10257 = vset.pattern.permute.xlu0 0
      %10258 = vperm.xlu0 %10257, %v10212
      %v10259 = vpop.permute.xlu0 %10258
      %10262 = vset.pattern.permute.xlu0 0
      %10263 = vperm.xlu0 %10262, %v10213
      %v10264 = vpop.permute.xlu0 %10263
      %10267 = vset.pattern.permute.xlu0 0
      %10268 = vperm.xlu0 %10267, %v10214
      %v10269 = vpop.permute.xlu0 %10268
      %10272 = vset.pattern.permute.xlu0 0
      %10273 = vperm.xlu0 %10272, %v10215
      %v10274 = vpop.permute.xlu0 %10273
      %10277 = vset.pattern.permute.xlu0 0
      %10278 = vperm.xlu0 %10277, %v10216
      %v10279 = vpop.permute.xlu0 %10278
      %10282 = vset.pattern.permute.xlu0 0
      %10283 = vperm.xlu0 %10282, %v10217
      %v10284 = vpop.permute.xlu0 %10283
      %10287 = vset.pattern.permute.xlu0 0
      %10288 = vperm.xlu0 %10287, %v10218
      %v10289 = vpop.permute.xlu0 %10288
      %10292 = vset.pattern.permute.xlu0 0
      %10293 = vperm.xlu0 %10292, %v10219
      %v10294 = vpop.permute.xlu0 %10293
      %10297 = vset.pattern.permute.xlu0 0
      %10298 = vperm.xlu0 %10297, %v10220
      %v10299 = vpop.permute.xlu0 %10298
      %10302 = vset.pattern.permute.xlu0 0
      %10303 = vperm.xlu0 %10302, %v10221
      %v10304 = vpop.permute.xlu0 %10303
      %10307 = vset.pattern.permute.xlu0 0
      %10308 = vperm.xlu0 %10307, %v10222
      %v10309 = vpop.permute.xlu0 %10308
      %10312 = vset.pattern.permute.xlu0 0
      %10313 = vperm.xlu0 %10312, %v10223
      %v10314 = vpop.permute.xlu0 %10313
      %10317 = vset.pattern.permute.xlu0 0
      %10318 = vperm.xlu0 %10317, %v10224
      %v10319 = vpop.permute.xlu0 %10318
      %10322 = vset.pattern.permute.xlu0 0
      %10323 = vperm.xlu0 %10322, %v10225
      %v10324 = vpop.permute.xlu0 %10323
      %10327 = vset.pattern.permute.xlu0 0
      %10328 = vperm.xlu0 %10327, %v10226
      %v10329 = vpop.permute.xlu0 %10328
      %10332 = vset.pattern.permute.xlu0 0
      %10333 = vperm.xlu0 %10332, %v10227
      %v10334 = vpop.permute.xlu0 %10333
      %10337 = vset.pattern.permute.xlu0 0
      %10338 = vperm.xlu0 %10337, %v10228
      %v10339 = vpop.permute.xlu0 %10338
      %10342 = vset.pattern.permute.xlu0 0
      %10343 = vperm.xlu0 %10342, %v10229
      %v10344 = vpop.permute.xlu0 %10343
      %10347 = vset.pattern.permute.xlu0 0
      %10348 = vperm.xlu0 %10347, %v10230
      %v10349 = vpop.permute.xlu0 %10348
      %10352 = vset.pattern.permute.xlu0 0
      %10353 = vperm.xlu0 %10352, %v10231
      %v10354 = vpop.permute.xlu0 %10353
      %10357 = vset.pattern.permute.xlu0 0
      %10358 = vperm.xlu0 %10357, %v10232
      %v10359 = vpop.permute.xlu0 %10358
      %10362 = vset.pattern.permute.xlu0 0
      %10363 = vperm.xlu0 %10362, %v10233
      %v10364 = vpop.permute.xlu0 %10363
      %10367 = vset.pattern.permute.xlu0 0
      %10368 = vperm.xlu0 %10367, %v10234
      %v10369 = vpop.permute.xlu0 %10368
      %10372 = vset.pattern.permute.xlu0 0
      %10373 = vperm.xlu0 %10372, %v10235
      %v10374 = vpop.permute.xlu0 %10373
      %10377 = vset.pattern.permute.xlu0 0
      %10378 = vperm.xlu0 %10377, %v10236
      %v10379 = vpop.permute.xlu0 %10378
      %10382 = vset.pattern.permute.xlu0 0
      %10383 = vperm.xlu0 %10382, %v10237
      %v10384 = vpop.permute.xlu0 %10383
      %10387 = vset.pattern.permute.xlu0 0
      %10388 = vperm.xlu0 %10387, %v10238
      %v10389 = vpop.permute.xlu0 %10388
      %10392 = vset.pattern.permute.xlu0 0
      %10393 = vperm.xlu0 %10392, %v10239
      %v10394 = vpop.permute.xlu0 %10393
      %10397 = vset.pattern.permute.xlu0 0
      %10398 = vperm.xlu0 %10397, %v10240
      %v10399 = vpop.permute.xlu0 %10398
      %v10433 = vunpack.c.l.b16 %v10128
      %v10434 = vunpack.c.h.b16 %v10128
      %v10435 = vunpack.c.l.b16 %v10129
      %v10436 = vunpack.c.h.b16 %v10129
      %v10437 = vunpack.c.l.b16 %v10130
      %v10438 = vunpack.c.h.b16 %v10130
      %v10439 = vunpack.c.l.b16 %v10131
      %v10440 = vunpack.c.h.b16 %v10131
      %v10441 = vunpack.c.l.b16 %v10132
      %v10442 = vunpack.c.h.b16 %v10132
      %v10443 = vunpack.c.l.b16 %v10133
      %v10444 = vunpack.c.h.b16 %v10133
      %v10445 = vunpack.c.l.b16 %v10134
      %v10446 = vunpack.c.h.b16 %v10134
      %v10447 = vunpack.c.l.b16 %v10135
      %v10448 = vunpack.c.h.b16 %v10135
      %v10449 = vunpack.c.l.b16 %v10136
      %v10450 = vunpack.c.h.b16 %v10136
      %v10451 = vunpack.c.l.b16 %v10137
      %v10452 = vunpack.c.h.b16 %v10137
      %v10453 = vunpack.c.l.b16 %v10138
      %v10454 = vunpack.c.h.b16 %v10138
      %v10455 = vunpack.c.l.b16 %v10139
      %v10456 = vunpack.c.h.b16 %v10139
      %v10457 = vunpack.c.l.b16 %v10140
      %v10458 = vunpack.c.h.b16 %v10140
      %v10459 = vunpack.c.l.b16 %v10141
      %v10460 = vunpack.c.h.b16 %v10141
      %v10461 = vunpack.c.l.b16 %v10142
      %v10462 = vunpack.c.h.b16 %v10142
      %v10463 = vunpack.c.l.b16 %v10143
      %v10464 = vunpack.c.h.b16 %v10143
      %v10465 = vunpack.c.l.b16 %v10144
      %v10466 = vunpack.c.h.b16 %v10144
      %v10467 = vunpack.c.l.b16 %v10145
      %v10468 = vunpack.c.h.b16 %v10145
      %v10469 = vunpack.c.l.b16 %v10146
      %v10470 = vunpack.c.h.b16 %v10146
      %v10471 = vunpack.c.l.b16 %v10147
      %v10472 = vunpack.c.h.b16 %v10147
      %v10473 = vunpack.c.l.b16 %v10148
      %v10474 = vunpack.c.h.b16 %v10148
      %v10475 = vunpack.c.l.b16 %v10149
      %v10476 = vunpack.c.h.b16 %v10149
      %v10477 = vunpack.c.l.b16 %v10150
      %v10478 = vunpack.c.h.b16 %v10150
      %v10479 = vunpack.c.l.b16 %v10151
      %v10480 = vunpack.c.h.b16 %v10151
      %v10481 = vunpack.c.l.b16 %v10152
      %v10482 = vunpack.c.h.b16 %v10152
      %v10483 = vunpack.c.l.b16 %v10153
      %v10484 = vunpack.c.h.b16 %v10153
      %v10485 = vunpack.c.l.b16 %v10154
      %v10486 = vunpack.c.h.b16 %v10154
      %v10487 = vunpack.c.l.b16 %v10155
      %v10488 = vunpack.c.h.b16 %v10155
      %v10489 = vunpack.c.l.b16 %v10156
      %v10490 = vunpack.c.h.b16 %v10156
      %v10491 = vunpack.c.l.b16 %v10157
      %v10492 = vunpack.c.h.b16 %v10157
      %v10493 = vunpack.c.l.b16 %v10158
      %v10494 = vunpack.c.h.b16 %v10158
      %v10495 = vunpack.c.l.b16 %v10159
      %v10496 = vunpack.c.h.b16 %v10159
      %v10497 = vpack.c.b16 %v10435, %v10433
      %v10498 = vpack.c.b16 %v10436, %v10434
      %v10499 = vpack.c.b16 %v10439, %v10437
      %v10500 = vpack.c.b16 %v10440, %v10438
      %v10501 = vpack.c.b16 %v10443, %v10441
      %v10502 = vpack.c.b16 %v10444, %v10442
      %v10503 = vpack.c.b16 %v10447, %v10445
      %v10504 = vpack.c.b16 %v10448, %v10446
      %v10505 = vpack.c.b16 %v10451, %v10449
      %v10506 = vpack.c.b16 %v10452, %v10450
      %v10507 = vpack.c.b16 %v10455, %v10453
      %v10508 = vpack.c.b16 %v10456, %v10454
      %v10509 = vpack.c.b16 %v10459, %v10457
      %v10510 = vpack.c.b16 %v10460, %v10458
      %v10511 = vpack.c.b16 %v10463, %v10461
      %v10512 = vpack.c.b16 %v10464, %v10462
      %v10513 = vpack.c.b16 %v10467, %v10465
      %v10514 = vpack.c.b16 %v10468, %v10466
      %v10515 = vpack.c.b16 %v10471, %v10469
      %v10516 = vpack.c.b16 %v10472, %v10470
      %v10517 = vpack.c.b16 %v10475, %v10473
      %v10518 = vpack.c.b16 %v10476, %v10474
      %v10519 = vpack.c.b16 %v10479, %v10477
      %v10520 = vpack.c.b16 %v10480, %v10478
      %v10521 = vpack.c.b16 %v10483, %v10481
      %v10522 = vpack.c.b16 %v10484, %v10482
      %v10523 = vpack.c.b16 %v10487, %v10485
      %v10524 = vpack.c.b16 %v10488, %v10486
      %v10525 = vpack.c.b16 %v10491, %v10489
      %v10526 = vpack.c.b16 %v10492, %v10490
      %v10527 = vpack.c.b16 %v10495, %v10493
      %v10528 = vpack.c.b16 %v10496, %v10494
      %10561 = vmatprep.subr.bf16.mxu0 0
      %10562 = vmatpush1.bf16.msra.mxu0 %v10199
      %10563 = vmatprep.subr.bf16.mxu0 0
      %10564 = vmatpush1.bf16.msra.mxu0 %v10198
      %10565 = vmatprep.subr.bf16.mxu0 0
      %10566 = vmatpush1.bf16.msra.mxu0 %v10197
      %10567 = vmatprep.subr.bf16.mxu0 0
      %10568 = vmatpush1.bf16.msra.mxu0 %v10196
      %10569 = vmatprep.subr.bf16.mxu0 0
      %10570 = vmatpush1.bf16.msra.mxu0 %v10195
      %10571 = vmatprep.subr.bf16.mxu0 0
      %10572 = vmatpush1.bf16.msra.mxu0 %v10194
      %10573 = vmatprep.subr.bf16.mxu0 0
      %10574 = vmatpush1.bf16.msra.mxu0 %v10193
      %10575 = vmatprep.subr.bf16.mxu0 0
      %10576 = vmatpush1.bf16.msra.mxu0 %v10192
      %10577 = vmatprep.subr.bf16.mxu0 0
      %10578 = vmatpush2.bf16.msra.mxu0 %v10207
      %10579 = vmatprep.subr.bf16.mxu0 0
      %10580 = vmatpush2.bf16.msra.mxu0 %v10206
      %10581 = vmatprep.subr.bf16.mxu0 0
      %10582 = vmatpush2.bf16.msra.mxu0 %v10205
      %10583 = vmatprep.subr.bf16.mxu0 0
      %10584 = vmatpush2.bf16.msra.mxu0 %v10204
      %10585 = vmatprep.subr.bf16.mxu0 0
      %10586 = vmatpush2.bf16.msra.mxu0 %v10203
      %10587 = vmatprep.subr.bf16.mxu0 0
      %10588 = vmatpush2.bf16.msra.mxu0 %v10202
      %10589 = vmatprep.subr.bf16.mxu0 0
      %10590 = vmatpush2.bf16.msra.mxu0 %v10201
      %10591 = vmatprep.subr.bf16.mxu0 0
      %10592 = vmatpush2.bf16.msra.mxu0 %v10200
      %10593 = vmatprep.mubr.bf16.mxu0 %v10498
      %10594 = vmatmul.mubr.bf16.gmra.mxu0 %v10497
      %v10595 = vpop.f32.mrf.mxu0
      %v10596 = vadd.f32 %v10244, %v10595
      %v10597 = vpop.f32.mrf.mxu0
      %v10598 = vpop.f32.mrf.mxu0
      %v10599 = vadd.f32 %v10249, %v10598
      %v10600 = vpop.f32.mrf.mxu0
      %10601 = vmatprep.mubr.bf16.mxu0 %v10500
      %10602 = vmatmul.mubr.bf16.gmra.mxu0 %v10499
      %v10603 = vpop.f32.mrf.mxu0
      %v10604 = vadd.f32 %v10254, %v10603
      %v10605 = vpop.f32.mrf.mxu0
      %v10606 = vpop.f32.mrf.mxu0
      %v10607 = vadd.f32 %v10259, %v10606
      %v10608 = vpop.f32.mrf.mxu0
      %10609 = vmatprep.mubr.bf16.mxu0 %v10502
      %10610 = vmatmul.mubr.bf16.gmra.mxu0 %v10501
      %v10611 = vpop.f32.mrf.mxu0
      %v10612 = vadd.f32 %v10264, %v10611
      %v10613 = vpop.f32.mrf.mxu0
      %v10614 = vpop.f32.mrf.mxu0
      %v10615 = vadd.f32 %v10269, %v10614
      %v10616 = vpop.f32.mrf.mxu0
      %10617 = vmatprep.mubr.bf16.mxu0 %v10504
      %10618 = vmatmul.mubr.bf16.gmra.mxu0 %v10503
      %v10619 = vpop.f32.mrf.mxu0
      %v10620 = vadd.f32 %v10274, %v10619
      %v10621 = vpop.f32.mrf.mxu0
      %v10622 = vpop.f32.mrf.mxu0
      %v10623 = vadd.f32 %v10279, %v10622
      %v10624 = vpop.f32.mrf.mxu0
      %10625 = vmatprep.mubr.bf16.mxu0 %v10506
      %10626 = vmatmul.mubr.bf16.gmra.mxu0 %v10505
      %v10627 = vpop.f32.mrf.mxu0
      %v10628 = vadd.f32 %v10284, %v10627
      %v10629 = vpop.f32.mrf.mxu0
      %v10630 = vpop.f32.mrf.mxu0
      %v10631 = vadd.f32 %v10289, %v10630
      %v10632 = vpop.f32.mrf.mxu0
      %10633 = vmatprep.mubr.bf16.mxu0 %v10508
      %10634 = vmatmul.mubr.bf16.gmra.mxu0 %v10507
      %v10635 = vpop.f32.mrf.mxu0
      %v10636 = vadd.f32 %v10294, %v10635
      %v10637 = vpop.f32.mrf.mxu0
      %v10638 = vpop.f32.mrf.mxu0
      %v10639 = vadd.f32 %v10299, %v10638
      %v10640 = vpop.f32.mrf.mxu0
      %10641 = vmatprep.mubr.bf16.mxu0 %v10510
      %10642 = vmatmul.mubr.bf16.gmra.mxu0 %v10509
      %v10643 = vpop.f32.mrf.mxu0
      %v10644 = vadd.f32 %v10304, %v10643
      %v10645 = vpop.f32.mrf.mxu0
      %v10646 = vpop.f32.mrf.mxu0
      %v10647 = vadd.f32 %v10309, %v10646
      %v10648 = vpop.f32.mrf.mxu0
      %10649 = vmatprep.mubr.bf16.mxu0 %v10512
      %10650 = vmatmul.mubr.bf16.gmra.mxu0 %v10511
      %v10651 = vpop.f32.mrf.mxu0
      %v10652 = vadd.f32 %v10314, %v10651
      %v10653 = vpop.f32.mrf.mxu0
      %v10654 = vpop.f32.mrf.mxu0
      %v10655 = vadd.f32 %v10319, %v10654
      %v10656 = vpop.f32.mrf.mxu0
      %10657 = vmatprep.mubr.bf16.mxu0 %v10514
      %10658 = vmatmul.mubr.bf16.gmra.mxu0 %v10513
      %v10659 = vpop.f32.mrf.mxu0
      %v10660 = vadd.f32 %v10324, %v10659
      %v10661 = vpop.f32.mrf.mxu0
      %v10662 = vpop.f32.mrf.mxu0
      %v10663 = vadd.f32 %v10329, %v10662
      %v10664 = vpop.f32.mrf.mxu0
      %10665 = vmatprep.mubr.bf16.mxu0 %v10516
      %10666 = vmatmul.mubr.bf16.gmra.mxu0 %v10515
      %v10667 = vpop.f32.mrf.mxu0
      %v10668 = vadd.f32 %v10334, %v10667
      %v10669 = vpop.f32.mrf.mxu0
      %v10670 = vpop.f32.mrf.mxu0
      %v10671 = vadd.f32 %v10339, %v10670
      %v10672 = vpop.f32.mrf.mxu0
      %10673 = vmatprep.mubr.bf16.mxu0 %v10518
      %10674 = vmatmul.mubr.bf16.gmra.mxu0 %v10517
      %v10675 = vpop.f32.mrf.mxu0
      %v10676 = vadd.f32 %v10344, %v10675
      %v10677 = vpop.f32.mrf.mxu0
      %v10678 = vpop.f32.mrf.mxu0
      %v10679 = vadd.f32 %v10349, %v10678
      %v10680 = vpop.f32.mrf.mxu0
      %10681 = vmatprep.mubr.bf16.mxu0 %v10520
      %10682 = vmatmul.mubr.bf16.gmra.mxu0 %v10519
      %v10683 = vpop.f32.mrf.mxu0
      %v10684 = vadd.f32 %v10354, %v10683
      %v10685 = vpop.f32.mrf.mxu0
      %v10686 = vpop.f32.mrf.mxu0
      %v10687 = vadd.f32 %v10359, %v10686
      %v10688 = vpop.f32.mrf.mxu0
      %10689 = vmatprep.mubr.bf16.mxu0 %v10522
      %10690 = vmatmul.mubr.bf16.gmra.mxu0 %v10521
      %v10691 = vpop.f32.mrf.mxu0
      %v10692 = vadd.f32 %v10364, %v10691
      %v10693 = vpop.f32.mrf.mxu0
      %v10694 = vpop.f32.mrf.mxu0
      %v10695 = vadd.f32 %v10369, %v10694
      %v10696 = vpop.f32.mrf.mxu0
      %10697 = vmatprep.mubr.bf16.mxu0 %v10524
      %10698 = vmatmul.mubr.bf16.gmra.mxu0 %v10523
      %v10699 = vpop.f32.mrf.mxu0
      %v10700 = vadd.f32 %v10374, %v10699
      %v10701 = vpop.f32.mrf.mxu0
      %v10702 = vpop.f32.mrf.mxu0
      %v10703 = vadd.f32 %v10379, %v10702
      %v10704 = vpop.f32.mrf.mxu0
      %10705 = vmatprep.mubr.bf16.mxu0 %v10526
      %10706 = vmatmul.mubr.bf16.gmra.mxu0 %v10525
      %v10707 = vpop.f32.mrf.mxu0
      %v10708 = vadd.f32 %v10384, %v10707
      %v10709 = vpop.f32.mrf.mxu0
      %v10710 = vpop.f32.mrf.mxu0
      %v10711 = vadd.f32 %v10389, %v10710
      %v10712 = vpop.f32.mrf.mxu0
      %10713 = vmatprep.mubr.bf16.mxu0 %v10528
      %10714 = vmatmul.mubr.bf16.gmra.mxu0 %v10527
      %v10715 = vpop.f32.mrf.mxu0
      %v10716 = vadd.f32 %v10394, %v10715
      %v10717 = vpop.f32.mrf.mxu0
      %v10718 = vpop.f32.mrf.mxu0
      %v10719 = vadd.f32 %v10399, %v10718
      %v10720 = vpop.f32.mrf.mxu0
      %10721 = vdwg.mxu0
      %vm10722 = vcmp.ge.f32.partialorder %v10596, 0.0
      %vm10723 = vcmp.ge.f32.partialorder %v10599, 0.0
      %vm10724 = vcmp.ge.f32.partialorder %v10604, 0.0
      %vm10725 = vcmp.ge.f32.partialorder %v10607, 0.0
      %vm10726 = vcmp.ge.f32.partialorder %v10612, 0.0
      %vm10727 = vcmp.ge.f32.partialorder %v10615, 0.0
      %vm10728 = vcmp.ge.f32.partialorder %v10620, 0.0
      %vm10729 = vcmp.ge.f32.partialorder %v10623, 0.0
      %vm10730 = vcmp.ge.f32.partialorder %v10628, 0.0
      %vm10731 = vcmp.ge.f32.partialorder %v10631, 0.0
      %vm10732 = vcmp.ge.f32.partialorder %v10636, 0.0
      %vm10733 = vcmp.ge.f32.partialorder %v10639, 0.0
      %vm10734 = vcmp.ge.f32.partialorder %v10644, 0.0
      %vm10735 = vcmp.ge.f32.partialorder %v10647, 0.0
      %vm10736 = vcmp.ge.f32.partialorder %v10652, 0.0
      %vm10737 = vcmp.ge.f32.partialorder %v10655, 0.0
      %vm10738 = vcmp.ge.f32.partialorder %v10660, 0.0
      %vm10739 = vcmp.ge.f32.partialorder %v10663, 0.0
      %vm10740 = vcmp.ge.f32.partialorder %v10668, 0.0
      %vm10741 = vcmp.ge.f32.partialorder %v10671, 0.0
      %vm10742 = vcmp.ge.f32.partialorder %v10676, 0.0
      %vm10743 = vcmp.ge.f32.partialorder %v10679, 0.0
      %vm10744 = vcmp.ge.f32.partialorder %v10684, 0.0
      %vm10745 = vcmp.ge.f32.partialorder %v10687, 0.0
      %vm10746 = vcmp.ge.f32.partialorder %v10692, 0.0
      %vm10747 = vcmp.ge.f32.partialorder %v10695, 0.0
      %vm10748 = vcmp.ge.f32.partialorder %v10700, 0.0
      %vm10749 = vcmp.ge.f32.partialorder %v10703, 0.0
      %vm10750 = vcmp.ge.f32.partialorder %v10708, 0.0
      %vm10751 = vcmp.ge.f32.partialorder %v10711, 0.0
      %vm10752 = vcmp.ge.f32.partialorder %v10716, 0.0
      %vm10753 = vcmp.ge.f32.partialorder %v10719, 0.0
      %v10754 = vmul.f32 %v10596, 0.2
      %v10755 = vmul.f32 %v10599, 0.2
      %v10756 = vmul.f32 %v10604, 0.2
      %v10757 = vmul.f32 %v10607, 0.2
      %v10758 = vmul.f32 %v10612, 0.2
      %v10759 = vmul.f32 %v10615, 0.2
      %v10760 = vmul.f32 %v10620, 0.2
      %v10761 = vmul.f32 %v10623, 0.2
      %v10762 = vmul.f32 %v10628, 0.2
      %v10763 = vmul.f32 %v10631, 0.2
      %v10764 = vmul.f32 %v10636, 0.2
      %v10765 = vmul.f32 %v10639, 0.2
      %v10766 = vmul.f32 %v10644, 0.2
      %v10767 = vmul.f32 %v10647, 0.2
      %v10768 = vmul.f32 %v10652, 0.2
      %v10769 = vmul.f32 %v10655, 0.2
      %v10770 = vmul.f32 %v10660, 0.2
      %v10771 = vmul.f32 %v10663, 0.2
      %v10772 = vmul.f32 %v10668, 0.2
      %v10773 = vmul.f32 %v10671, 0.2
      %v10774 = vmul.f32 %v10676, 0.2
      %v10775 = vmul.f32 %v10679, 0.2
      %v10776 = vmul.f32 %v10684, 0.2
      %v10777 = vmul.f32 %v10687, 0.2
      %v10778 = vmul.f32 %v10692, 0.2
      %v10779 = vmul.f32 %v10695, 0.2
      %v10780 = vmul.f32 %v10700, 0.2
      %v10781 = vmul.f32 %v10703, 0.2
      %v10782 = vmul.f32 %v10708, 0.2
      %v10783 = vmul.f32 %v10711, 0.2
      %v10784 = vmul.f32 %v10716, 0.2
      %v10785 = vmul.f32 %v10719, 0.2
      %v10786 = vsel %vm10722, %v10596, %v10754
      %v10787 = vsel %vm10723, %v10599, %v10755
      %v10788 = vsel %vm10724, %v10604, %v10756
      %v10789 = vsel %vm10725, %v10607, %v10757
      %v10790 = vsel %vm10726, %v10612, %v10758
      %v10791 = vsel %vm10727, %v10615, %v10759
      %v10792 = vsel %vm10728, %v10620, %v10760
      %v10793 = vsel %vm10729, %v10623, %v10761
      %v10794 = vsel %vm10730, %v10628, %v10762
      %v10795 = vsel %vm10731, %v10631, %v10763
      %v10796 = vsel %vm10732, %v10636, %v10764
      %v10797 = vsel %vm10733, %v10639, %v10765
      %v10798 = vsel %vm10734, %v10644, %v10766
      %v10799 = vsel %vm10735, %v10647, %v10767
      %v10800 = vsel %vm10736, %v10652, %v10768
      %v10801 = vsel %vm10737, %v10655, %v10769
      %v10802 = vsel %vm10738, %v10660, %v10770
      %v10803 = vsel %vm10739, %v10663, %v10771
      %v10804 = vsel %vm10740, %v10668, %v10772
      %v10805 = vsel %vm10741, %v10671, %v10773
      %v10806 = vsel %vm10742, %v10676, %v10774
      %v10807 = vsel %vm10743, %v10679, %v10775
      %v10808 = vsel %vm10744, %v10684, %v10776
      %v10809 = vsel %vm10745, %v10687, %v10777
      %v10810 = vsel %vm10746, %v10692, %v10778
      %v10811 = vsel %vm10747, %v10695, %v10779
      %v10812 = vsel %vm10748, %v10700, %v10780
      %v10813 = vsel %vm10749, %v10703, %v10781
      %v10814 = vsel %vm10750, %v10708, %v10782
      %v10815 = vsel %vm10751, %v10711, %v10783
      %v10816 = vsel %vm10752, %v10716, %v10784
      %v10817 = vsel %vm10753, %v10719, %v10785
      %v10818 = vadd.f32 %v8240, %v10786
      %v10819 = vadd.f32 %v8241, %v10787
      %v10820 = vadd.f32 %v8242, %v10788
      %v10821 = vadd.f32 %v8243, %v10789
      %v10822 = vadd.f32 %v8244, %v10790
      %v10823 = vadd.f32 %v8245, %v10791
      %v10824 = vadd.f32 %v8246, %v10792
      %v10825 = vadd.f32 %v8247, %v10793
      %v10826 = vadd.f32 %v8248, %v10794
      %v10827 = vadd.f32 %v8249, %v10795
      %v10828 = vadd.f32 %v8250, %v10796
      %v10829 = vadd.f32 %v8251, %v10797
      %v10830 = vadd.f32 %v8252, %v10798
      %v10831 = vadd.f32 %v8253, %v10799
      %v10832 = vadd.f32 %v8254, %v10800
      %v10833 = vadd.f32 %v8255, %v10801
      %v10834 = vadd.f32 %v8256, %v10802
      %v10835 = vadd.f32 %v8257, %v10803
      %v10836 = vadd.f32 %v8258, %v10804
      %v10837 = vadd.f32 %v8259, %v10805
      %v10838 = vadd.f32 %v8260, %v10806
      %v10839 = vadd.f32 %v8261, %v10807
      %v10840 = vadd.f32 %v8262, %v10808
      %v10841 = vadd.f32 %v8263, %v10809
      %v10842 = vadd.f32 %v8264, %v10810
      %v10843 = vadd.f32 %v8265, %v10811
      %v10844 = vadd.f32 %v8266, %v10812
      %v10845 = vadd.f32 %v8267, %v10813
      %v10846 = vadd.f32 %v8268, %v10814
      %v10847 = vadd.f32 %v8269, %v10815
      %v10848 = vadd.f32 %v8270, %v10816
      %v10849 = vadd.f32 %v8271, %v10817
      %v10850 = vpack.c.bf16 %v10819, %v10818
      %v10851 = vpack.c.bf16 %v10821, %v10820
      %v10852 = vpack.c.bf16 %v10823, %v10822
      %v10853 = vpack.c.bf16 %v10825, %v10824
      %v10854 = vpack.c.bf16 %v10827, %v10826
      %v10855 = vpack.c.bf16 %v10829, %v10828
      %v10856 = vpack.c.bf16 %v10831, %v10830
      %v10857 = vpack.c.bf16 %v10833, %v10832
      %v10858 = vpack.c.bf16 %v10835, %v10834
      %v10859 = vpack.c.bf16 %v10837, %v10836
      %v10860 = vpack.c.bf16 %v10839, %v10838
      %v10861 = vpack.c.bf16 %v10841, %v10840
      %v10862 = vpack.c.bf16 %v10843, %v10842
      %v10863 = vpack.c.bf16 %v10845, %v10844
      %v10864 = vpack.c.bf16 %v10847, %v10846
      %v10865 = vpack.c.bf16 %v10849, %v10848
      %s10866 = scalar_lea.vmem %s7, 768
      %v10867 = vld [vmem:[%s10866] sm:$0xff]
      %v10868 = vld [vmem:[%s10866 + $0x8] sm:$0xff]
      %v10869 = vld [vmem:[%s10866 + $0x10] sm:$0xff]
      %v10870 = vld [vmem:[%s10866 + $0x18] sm:$0xff]
      %v10871 = vld [vmem:[%s10866 + $0x20] sm:$0xff]
      %v10872 = vld [vmem:[%s10866 + $0x28] sm:$0xff]
      %v10873 = vld [vmem:[%s10866 + $0x30] sm:$0xff]
      %v10874 = vld [vmem:[%s10866 + $0x38] sm:$0xff]
      %v10875 = vld [vmem:[%s10866 + $0x40] sm:$0xff]
      %v10876 = vld [vmem:[%s10866 + $0x48] sm:$0xff]
      %v10877 = vld [vmem:[%s10866 + $0x50] sm:$0xff]
      %v10878 = vld [vmem:[%s10866 + $0x58] sm:$0xff]
      %v10879 = vld [vmem:[%s10866 + $0x60] sm:$0xff]
      %v10880 = vld [vmem:[%s10866 + $0x68] sm:$0xff]
      %v10881 = vld [vmem:[%s10866 + $0x70] sm:$0xff]
      %v10882 = vld [vmem:[%s10866 + $0x78] sm:$0xff]
      %v10883 = vld [vmem:[%s10866 + $0x80] sm:$0xff]
      %v10884 = vld [vmem:[%s10866 + $0x88] sm:$0xff]
      %v10885 = vld [vmem:[%s10866 + $0x90] sm:$0xff]
      %v10886 = vld [vmem:[%s10866 + $0x98] sm:$0xff]
      %v10887 = vld [vmem:[%s10866 + $0xa0] sm:$0xff]
      %v10888 = vld [vmem:[%s10866 + $0xa8] sm:$0xff]
      %v10889 = vld [vmem:[%s10866 + $0xb0] sm:$0xff]
      %v10890 = vld [vmem:[%s10866 + $0xb8] sm:$0xff]
      %v10891 = vld [vmem:[%s10866 + $0xc0] sm:$0xff]
      %v10892 = vld [vmem:[%s10866 + $0xc8] sm:$0xff]
      %v10893 = vld [vmem:[%s10866 + $0xd0] sm:$0xff]
      %v10894 = vld [vmem:[%s10866 + $0xd8] sm:$0xff]
      %v10895 = vld [vmem:[%s10866 + $0xe0] sm:$0xff]
      %v10896 = vld [vmem:[%s10866 + $0xe8] sm:$0xff]
      %v10897 = vld [vmem:[%s10866 + $0xf0] sm:$0xff]
      %v10898 = vld [vmem:[%s10866 + $0xf8] sm:$0xff]
      %v10931 = vunpack.c.l.b16 %v10867
      %v10932 = vunpack.c.h.b16 %v10867
      %v10933 = vunpack.c.l.b16 %v10868
      %v10934 = vunpack.c.h.b16 %v10868
      %v10935 = vunpack.c.l.b16 %v10869
      %v10936 = vunpack.c.h.b16 %v10869
      %v10937 = vunpack.c.l.b16 %v10870
      %v10938 = vunpack.c.h.b16 %v10870
      %v10939 = vunpack.c.l.b16 %v10871
      %v10940 = vunpack.c.h.b16 %v10871
      %v10941 = vunpack.c.l.b16 %v10872
      %v10942 = vunpack.c.h.b16 %v10872
      %v10943 = vunpack.c.l.b16 %v10873
      %v10944 = vunpack.c.h.b16 %v10873
      %v10945 = vunpack.c.l.b16 %v10874
      %v10946 = vunpack.c.h.b16 %v10874
      %v10947 = vunpack.c.l.b16 %v10875
      %v10948 = vunpack.c.h.b16 %v10875
      %v10949 = vunpack.c.l.b16 %v10876
      %v10950 = vunpack.c.h.b16 %v10876
      %v10951 = vunpack.c.l.b16 %v10877
      %v10952 = vunpack.c.h.b16 %v10877
      %v10953 = vunpack.c.l.b16 %v10878
      %v10954 = vunpack.c.h.b16 %v10878
      %v10955 = vunpack.c.l.b16 %v10879
      %v10956 = vunpack.c.h.b16 %v10879
      %v10957 = vunpack.c.l.b16 %v10880
      %v10958 = vunpack.c.h.b16 %v10880
      %v10959 = vunpack.c.l.b16 %v10881
      %v10960 = vunpack.c.h.b16 %v10881
      %v10961 = vunpack.c.l.b16 %v10882
      %v10962 = vunpack.c.h.b16 %v10882
      %v10963 = vunpack.c.l.b16 %v10883
      %v10964 = vunpack.c.h.b16 %v10883
      %v10965 = vunpack.c.l.b16 %v10884
      %v10966 = vunpack.c.h.b16 %v10884
      %v10967 = vunpack.c.l.b16 %v10885
      %v10968 = vunpack.c.h.b16 %v10885
      %v10969 = vunpack.c.l.b16 %v10886
      %v10970 = vunpack.c.h.b16 %v10886
      %v10971 = vunpack.c.l.b16 %v10887
      %v10972 = vunpack.c.h.b16 %v10887
      %v10973 = vunpack.c.l.b16 %v10888
      %v10974 = vunpack.c.h.b16 %v10888
      %v10975 = vunpack.c.l.b16 %v10889
      %v10976 = vunpack.c.h.b16 %v10889
      %v10977 = vunpack.c.l.b16 %v10890
      %v10978 = vunpack.c.h.b16 %v10890
      %v10979 = vunpack.c.l.b16 %v10891
      %v10980 = vunpack.c.h.b16 %v10891
      %v10981 = vunpack.c.l.b16 %v10892
      %v10982 = vunpack.c.h.b16 %v10892
      %v10983 = vunpack.c.l.b16 %v10893
      %v10984 = vunpack.c.h.b16 %v10893
      %v10985 = vunpack.c.l.b16 %v10894
      %v10986 = vunpack.c.h.b16 %v10894
      %v10987 = vunpack.c.l.b16 %v10895
      %v10988 = vunpack.c.h.b16 %v10895
      %v10989 = vunpack.c.l.b16 %v10896
      %v10990 = vunpack.c.h.b16 %v10896
      %v10991 = vunpack.c.l.b16 %v10897
      %v10992 = vunpack.c.h.b16 %v10897
      %v10993 = vunpack.c.l.b16 %v10898
      %v10994 = vunpack.c.h.b16 %v10898
      %v10995 = vpack.c.b16 %v10933, %v10931
      %v10996 = vpack.c.b16 %v10934, %v10932
      %v10997 = vpack.c.b16 %v10937, %v10935
      %v10998 = vpack.c.b16 %v10938, %v10936
      %v10999 = vpack.c.b16 %v10941, %v10939
      %v11000 = vpack.c.b16 %v10942, %v10940
      %v11001 = vpack.c.b16 %v10945, %v10943
      %v11002 = vpack.c.b16 %v10946, %v10944
      %v11003 = vpack.c.b16 %v10949, %v10947
      %v11004 = vpack.c.b16 %v10950, %v10948
      %v11005 = vpack.c.b16 %v10953, %v10951
      %v11006 = vpack.c.b16 %v10954, %v10952
      %v11007 = vpack.c.b16 %v10957, %v10955
      %v11008 = vpack.c.b16 %v10958, %v10956
      %v11009 = vpack.c.b16 %v10961, %v10959
      %v11010 = vpack.c.b16 %v10962, %v10960
      %v11011 = vpack.c.b16 %v10965, %v10963
      %v11012 = vpack.c.b16 %v10966, %v10964
      %v11013 = vpack.c.b16 %v10969, %v10967
      %v11014 = vpack.c.b16 %v10970, %v10968
      %v11015 = vpack.c.b16 %v10973, %v10971
      %v11016 = vpack.c.b16 %v10974, %v10972
      %v11017 = vpack.c.b16 %v10977, %v10975
      %v11018 = vpack.c.b16 %v10978, %v10976
      %v11019 = vpack.c.b16 %v10981, %v10979
      %v11020 = vpack.c.b16 %v10982, %v10980
      %v11021 = vpack.c.b16 %v10985, %v10983
      %v11022 = vpack.c.b16 %v10986, %v10984
      %v11023 = vpack.c.b16 %v10989, %v10987
      %v11024 = vpack.c.b16 %v10990, %v10988
      %v11025 = vpack.c.b16 %v10993, %v10991
      %v11026 = vpack.c.b16 %v10994, %v10992
      %11059 = vmatprep.subr.bf16.mxu0 0
      %11060 = vmatpush1.bf16.msra.mxu0 %v10857
      %11061 = vmatprep.subr.bf16.mxu0 0
      %11062 = vmatpush1.bf16.msra.mxu0 %v10856
      %11063 = vmatprep.subr.bf16.mxu0 0
      %11064 = vmatpush1.bf16.msra.mxu0 %v10855
      %11065 = vmatprep.subr.bf16.mxu0 0
      %11066 = vmatpush1.bf16.msra.mxu0 %v10854
      %11067 = vmatprep.subr.bf16.mxu0 0
      %11068 = vmatpush1.bf16.msra.mxu0 %v10853
      %11069 = vmatprep.subr.bf16.mxu0 0
      %11070 = vmatpush1.bf16.msra.mxu0 %v10852
      %11071 = vmatprep.subr.bf16.mxu0 0
      %11072 = vmatpush1.bf16.msra.mxu0 %v10851
      %11073 = vmatprep.subr.bf16.mxu0 0
      %11074 = vmatpush1.bf16.msra.mxu0 %v10850
      %11075 = vmatprep.subr.bf16.mxu0 0
      %11076 = vmatpush2.bf16.msra.mxu0 %v10865
      %11077 = vmatprep.subr.bf16.mxu0 0
      %11078 = vmatpush2.bf16.msra.mxu0 %v10864
      %11079 = vmatprep.subr.bf16.mxu0 0
      %11080 = vmatpush2.bf16.msra.mxu0 %v10863
      %11081 = vmatprep.subr.bf16.mxu0 0
      %11082 = vmatpush2.bf16.msra.mxu0 %v10862
      %11083 = vmatprep.subr.bf16.mxu0 0
      %11084 = vmatpush2.bf16.msra.mxu0 %v10861
      %11085 = vmatprep.subr.bf16.mxu0 0
      %11086 = vmatpush2.bf16.msra.mxu0 %v10860
      %11087 = vmatprep.subr.bf16.mxu0 0
      %11088 = vmatpush2.bf16.msra.mxu0 %v10859
      %11089 = vmatprep.subr.bf16.mxu0 0
      %11090 = vmatpush2.bf16.msra.mxu0 %v10858
      %11091 = vmatprep.mubr.bf16.mxu0 %v10996
      %11092 = vmatmul.mubr.bf16.gmra.mxu0 %v10995
      %v11093 = vpop.f32.mrf.mxu0
      %v11094 = vadd.f32 0.0, %v11093
      %v11095 = vpop.f32.mrf.mxu0
      %v11096 = vpop.f32.mrf.mxu0
      %v11097 = vadd.f32 0.0, %v11096
      %v11098 = vpop.f32.mrf.mxu0
      %11099 = vmatprep.mubr.bf16.mxu0 %v10998
      %11100 = vmatmul.mubr.bf16.gmra.mxu0 %v10997
      %v11101 = vpop.f32.mrf.mxu0
      %v11102 = vadd.f32 0.0, %v11101
      %v11103 = vpop.f32.mrf.mxu0
      %v11104 = vpop.f32.mrf.mxu0
      %v11105 = vadd.f32 0.0, %v11104
      %v11106 = vpop.f32.mrf.mxu0
      %11107 = vmatprep.mubr.bf16.mxu0 %v11000
      %11108 = vmatmul.mubr.bf16.gmra.mxu0 %v10999
      %v11109 = vpop.f32.mrf.mxu0
      %v11110 = vadd.f32 0.0, %v11109
      %v11111 = vpop.f32.mrf.mxu0
      %v11112 = vpop.f32.mrf.mxu0
      %v11113 = vadd.f32 0.0, %v11112
      %v11114 = vpop.f32.mrf.mxu0
      %11115 = vmatprep.mubr.bf16.mxu0 %v11002
      %11116 = vmatmul.mubr.bf16.gmra.mxu0 %v11001
      %v11117 = vpop.f32.mrf.mxu0
      %v11118 = vadd.f32 0.0, %v11117
      %v11119 = vpop.f32.mrf.mxu0
      %v11120 = vpop.f32.mrf.mxu0
      %v11121 = vadd.f32 0.0, %v11120
      %v11122 = vpop.f32.mrf.mxu0
      %11123 = vmatprep.mubr.bf16.mxu0 %v11004
      %11124 = vmatmul.mubr.bf16.gmra.mxu0 %v11003
      %v11125 = vpop.f32.mrf.mxu0
      %v11126 = vadd.f32 0.0, %v11125
      %v11127 = vpop.f32.mrf.mxu0
      %v11128 = vpop.f32.mrf.mxu0
      %v11129 = vadd.f32 0.0, %v11128
      %v11130 = vpop.f32.mrf.mxu0
      %11131 = vmatprep.mubr.bf16.mxu0 %v11006
      %11132 = vmatmul.mubr.bf16.gmra.mxu0 %v11005
      %v11133 = vpop.f32.mrf.mxu0
      %v11134 = vadd.f32 0.0, %v11133
      %v11135 = vpop.f32.mrf.mxu0
      %v11136 = vpop.f32.mrf.mxu0
      %v11137 = vadd.f32 0.0, %v11136
      %v11138 = vpop.f32.mrf.mxu0
      %11139 = vmatprep.mubr.bf16.mxu0 %v11008
      %11140 = vmatmul.mubr.bf16.gmra.mxu0 %v11007
      %v11141 = vpop.f32.mrf.mxu0
      %v11142 = vadd.f32 0.0, %v11141
      %v11143 = vpop.f32.mrf.mxu0
      %v11144 = vpop.f32.mrf.mxu0
      %v11145 = vadd.f32 0.0, %v11144
      %v11146 = vpop.f32.mrf.mxu0
      %11147 = vmatprep.mubr.bf16.mxu0 %v11010
      %11148 = vmatmul.mubr.bf16.gmra.mxu0 %v11009
      %v11149 = vpop.f32.mrf.mxu0
      %v11150 = vadd.f32 0.0, %v11149
      %v11151 = vpop.f32.mrf.mxu0
      %v11152 = vpop.f32.mrf.mxu0
      %v11153 = vadd.f32 0.0, %v11152
      %v11154 = vpop.f32.mrf.mxu0
      %11155 = vmatprep.mubr.bf16.mxu0 %v11012
      %11156 = vmatmul.mubr.bf16.gmra.mxu0 %v11011
      %v11157 = vpop.f32.mrf.mxu0
      %v11158 = vadd.f32 0.0, %v11157
      %v11159 = vpop.f32.mrf.mxu0
      %v11160 = vpop.f32.mrf.mxu0
      %v11161 = vadd.f32 0.0, %v11160
      %v11162 = vpop.f32.mrf.mxu0
      %11163 = vmatprep.mubr.bf16.mxu0 %v11014
      %11164 = vmatmul.mubr.bf16.gmra.mxu0 %v11013
      %v11165 = vpop.f32.mrf.mxu0
      %v11166 = vadd.f32 0.0, %v11165
      %v11167 = vpop.f32.mrf.mxu0
      %v11168 = vpop.f32.mrf.mxu0
      %v11169 = vadd.f32 0.0, %v11168
      %v11170 = vpop.f32.mrf.mxu0
      %11171 = vmatprep.mubr.bf16.mxu0 %v11016
      %11172 = vmatmul.mubr.bf16.gmra.mxu0 %v11015
      %v11173 = vpop.f32.mrf.mxu0
      %v11174 = vadd.f32 0.0, %v11173
      %v11175 = vpop.f32.mrf.mxu0
      %v11176 = vpop.f32.mrf.mxu0
      %v11177 = vadd.f32 0.0, %v11176
      %v11178 = vpop.f32.mrf.mxu0
      %11179 = vmatprep.mubr.bf16.mxu0 %v11018
      %11180 = vmatmul.mubr.bf16.gmra.mxu0 %v11017
      %v11181 = vpop.f32.mrf.mxu0
      %v11182 = vadd.f32 0.0, %v11181
      %v11183 = vpop.f32.mrf.mxu0
      %v11184 = vpop.f32.mrf.mxu0
      %v11185 = vadd.f32 0.0, %v11184
      %v11186 = vpop.f32.mrf.mxu0
      %11187 = vmatprep.mubr.bf16.mxu0 %v11020
      %11188 = vmatmul.mubr.bf16.gmra.mxu0 %v11019
      %v11189 = vpop.f32.mrf.mxu0
      %v11190 = vadd.f32 0.0, %v11189
      %v11191 = vpop.f32.mrf.mxu0
      %v11192 = vpop.f32.mrf.mxu0
      %v11193 = vadd.f32 0.0, %v11192
      %v11194 = vpop.f32.mrf.mxu0
      %11195 = vmatprep.mubr.bf16.mxu0 %v11022
      %11196 = vmatmul.mubr.bf16.gmra.mxu0 %v11021
      %v11197 = vpop.f32.mrf.mxu0
      %v11198 = vadd.f32 0.0, %v11197
      %v11199 = vpop.f32.mrf.mxu0
      %v11200 = vpop.f32.mrf.mxu0
      %v11201 = vadd.f32 0.0, %v11200
      %v11202 = vpop.f32.mrf.mxu0
      %11203 = vmatprep.mubr.bf16.mxu0 %v11024
      %11204 = vmatmul.mubr.bf16.gmra.mxu0 %v11023
      %v11205 = vpop.f32.mrf.mxu0
      %v11206 = vadd.f32 0.0, %v11205
      %v11207 = vpop.f32.mrf.mxu0
      %v11208 = vpop.f32.mrf.mxu0
      %v11209 = vadd.f32 0.0, %v11208
      %v11210 = vpop.f32.mrf.mxu0
      %11211 = vmatprep.mubr.bf16.mxu0 %v11026
      %11212 = vmatmul.mubr.bf16.gmra.mxu0 %v11025
      %v11213 = vpop.f32.mrf.mxu0
      %v11214 = vadd.f32 0.0, %v11213
      %v11215 = vpop.f32.mrf.mxu0
      %v11216 = vpop.f32.mrf.mxu0
      %v11217 = vadd.f32 0.0, %v11216
      %v11218 = vpop.f32.mrf.mxu0
      %11219 = vdwg.mxu0
      %v11220 = vadd.f32 %v8642, %v11094
      %v11221 = vadd.f32 %v8643, %v11097
      %v11222 = vadd.f32 %v8644, %v11102
      %v11223 = vadd.f32 %v8645, %v11105
      %v11224 = vadd.f32 %v8646, %v11110
      %v11225 = vadd.f32 %v8647, %v11113
      %v11226 = vadd.f32 %v8648, %v11118
      %v11227 = vadd.f32 %v8649, %v11121
      %v11228 = vadd.f32 %v8650, %v11126
      %v11229 = vadd.f32 %v8651, %v11129
      %v11230 = vadd.f32 %v8652, %v11134
      %v11231 = vadd.f32 %v8653, %v11137
      %v11232 = vadd.f32 %v8654, %v11142
      %v11233 = vadd.f32 %v8655, %v11145
      %v11234 = vadd.f32 %v8656, %v11150
      %v11235 = vadd.f32 %v8657, %v11153
      %v11236 = vadd.f32 %v8658, %v11158
      %v11237 = vadd.f32 %v8659, %v11161
      %v11238 = vadd.f32 %v8660, %v11166
      %v11239 = vadd.f32 %v8661, %v11169
      %v11240 = vadd.f32 %v8662, %v11174
      %v11241 = vadd.f32 %v8663, %v11177
      %v11242 = vadd.f32 %v8664, %v11182
      %v11243 = vadd.f32 %v8665, %v11185
      %v11244 = vadd.f32 %v8666, %v11190
      %v11245 = vadd.f32 %v8667, %v11193
      %v11246 = vadd.f32 %v8668, %v11198
      %v11247 = vadd.f32 %v8669, %v11201
      %v11248 = vadd.f32 %v8670, %v11206
      %v11249 = vadd.f32 %v8671, %v11209
      %v11250 = vadd.f32 %v8672, %v11214
      %v11251 = vadd.f32 %v8673, %v11217
      %v11252 = vld [vmem:[%s8] sm:$0xff]
      %v11253 = vld [vmem:[%s8 + $0x8] sm:$0xff]
      %v11254 = vld [vmem:[%s8 + $0x10] sm:$0xff]
      %v11255 = vld [vmem:[%s8 + $0x18] sm:$0xff]
      %v11256 = vld [vmem:[%s8 + $0x20] sm:$0xff]
      %v11257 = vld [vmem:[%s8 + $0x28] sm:$0xff]
      %v11258 = vld [vmem:[%s8 + $0x30] sm:$0xff]
      %v11259 = vld [vmem:[%s8 + $0x38] sm:$0xff]
      %v11260 = vld [vmem:[%s8 + $0x40] sm:$0xff]
      %v11261 = vld [vmem:[%s8 + $0x48] sm:$0xff]
      %v11262 = vld [vmem:[%s8 + $0x50] sm:$0xff]
      %v11263 = vld [vmem:[%s8 + $0x58] sm:$0xff]
      %v11264 = vld [vmem:[%s8 + $0x60] sm:$0xff]
      %v11265 = vld [vmem:[%s8 + $0x68] sm:$0xff]
      %v11266 = vld [vmem:[%s8 + $0x70] sm:$0xff]
      %v11267 = vld [vmem:[%s8 + $0x78] sm:$0xff]
      %v11268 = vld [vmem:[%s8 + $0x80] sm:$0xff]
      %v11269 = vld [vmem:[%s8 + $0x88] sm:$0xff]
      %v11270 = vld [vmem:[%s8 + $0x90] sm:$0xff]
      %v11271 = vld [vmem:[%s8 + $0x98] sm:$0xff]
      %v11272 = vld [vmem:[%s8 + $0xa0] sm:$0xff]
      %v11273 = vld [vmem:[%s8 + $0xa8] sm:$0xff]
      %v11274 = vld [vmem:[%s8 + $0xb0] sm:$0xff]
      %v11275 = vld [vmem:[%s8 + $0xb8] sm:$0xff]
      %v11276 = vld [vmem:[%s8 + $0xc0] sm:$0xff]
      %v11277 = vld [vmem:[%s8 + $0xc8] sm:$0xff]
      %v11278 = vld [vmem:[%s8 + $0xd0] sm:$0xff]
      %v11279 = vld [vmem:[%s8 + $0xd8] sm:$0xff]
      %v11280 = vld [vmem:[%s8 + $0xe0] sm:$0xff]
      %v11281 = vld [vmem:[%s8 + $0xe8] sm:$0xff]
      %v11282 = vld [vmem:[%s8 + $0xf0] sm:$0xff]
      %v11283 = vld [vmem:[%s8 + $0xf8] sm:$0xff]
      %11285 = vset.pattern.permute.xlu0 0
      %11286 = vperm.xlu0 %11285, %v11252
      %v11287 = vpop.permute.xlu0 %11286
      %11290 = vset.pattern.permute.xlu0 0
      %11291 = vperm.xlu0 %11290, %v11253
      %v11292 = vpop.permute.xlu0 %11291
      %11295 = vset.pattern.permute.xlu0 0
      %11296 = vperm.xlu0 %11295, %v11254
      %v11297 = vpop.permute.xlu0 %11296
      %11300 = vset.pattern.permute.xlu0 0
      %11301 = vperm.xlu0 %11300, %v11255
      %v11302 = vpop.permute.xlu0 %11301
      %11305 = vset.pattern.permute.xlu0 0
      %11306 = vperm.xlu0 %11305, %v11256
      %v11307 = vpop.permute.xlu0 %11306
      %11310 = vset.pattern.permute.xlu0 0
      %11311 = vperm.xlu0 %11310, %v11257
      %v11312 = vpop.permute.xlu0 %11311
      %11315 = vset.pattern.permute.xlu0 0
      %11316 = vperm.xlu0 %11315, %v11258
      %v11317 = vpop.permute.xlu0 %11316
      %11320 = vset.pattern.permute.xlu0 0
      %11321 = vperm.xlu0 %11320, %v11259
      %v11322 = vpop.permute.xlu0 %11321
      %11325 = vset.pattern.permute.xlu0 0
      %11326 = vperm.xlu0 %11325, %v11260
      %v11327 = vpop.permute.xlu0 %11326
      %11330 = vset.pattern.permute.xlu0 0
      %11331 = vperm.xlu0 %11330, %v11261
      %v11332 = vpop.permute.xlu0 %11331
      %11335 = vset.pattern.permute.xlu0 0
      %11336 = vperm.xlu0 %11335, %v11262
      %v11337 = vpop.permute.xlu0 %11336
      %11340 = vset.pattern.permute.xlu0 0
      %11341 = vperm.xlu0 %11340, %v11263
      %v11342 = vpop.permute.xlu0 %11341
      %11345 = vset.pattern.permute.xlu0 0
      %11346 = vperm.xlu0 %11345, %v11264
      %v11347 = vpop.permute.xlu0 %11346
      %11350 = vset.pattern.permute.xlu0 0
      %11351 = vperm.xlu0 %11350, %v11265
      %v11352 = vpop.permute.xlu0 %11351
      %11355 = vset.pattern.permute.xlu0 0
      %11356 = vperm.xlu0 %11355, %v11266
      %v11357 = vpop.permute.xlu0 %11356
      %11360 = vset.pattern.permute.xlu0 0
      %11361 = vperm.xlu0 %11360, %v11267
      %v11362 = vpop.permute.xlu0 %11361
      %11365 = vset.pattern.permute.xlu0 0
      %11366 = vperm.xlu0 %11365, %v11268
      %v11367 = vpop.permute.xlu0 %11366
      %11370 = vset.pattern.permute.xlu0 0
      %11371 = vperm.xlu0 %11370, %v11269
      %v11372 = vpop.permute.xlu0 %11371
      %11375 = vset.pattern.permute.xlu0 0
      %11376 = vperm.xlu0 %11375, %v11270
      %v11377 = vpop.permute.xlu0 %11376
      %11380 = vset.pattern.permute.xlu0 0
      %11381 = vperm.xlu0 %11380, %v11271
      %v11382 = vpop.permute.xlu0 %11381
      %11385 = vset.pattern.permute.xlu0 0
      %11386 = vperm.xlu0 %11385, %v11272
      %v11387 = vpop.permute.xlu0 %11386
      %11390 = vset.pattern.permute.xlu0 0
      %11391 = vperm.xlu0 %11390, %v11273
      %v11392 = vpop.permute.xlu0 %11391
      %11395 = vset.pattern.permute.xlu0 0
      %11396 = vperm.xlu0 %11395, %v11274
      %v11397 = vpop.permute.xlu0 %11396
      %11400 = vset.pattern.permute.xlu0 0
      %11401 = vperm.xlu0 %11400, %v11275
      %v11402 = vpop.permute.xlu0 %11401
      %11405 = vset.pattern.permute.xlu0 0
      %11406 = vperm.xlu0 %11405, %v11276
      %v11407 = vpop.permute.xlu0 %11406
      %11410 = vset.pattern.permute.xlu0 0
      %11411 = vperm.xlu0 %11410, %v11277
      %v11412 = vpop.permute.xlu0 %11411
      %11415 = vset.pattern.permute.xlu0 0
      %11416 = vperm.xlu0 %11415, %v11278
      %v11417 = vpop.permute.xlu0 %11416
      %11420 = vset.pattern.permute.xlu0 0
      %11421 = vperm.xlu0 %11420, %v11279
      %v11422 = vpop.permute.xlu0 %11421
      %11425 = vset.pattern.permute.xlu0 0
      %11426 = vperm.xlu0 %11425, %v11280
      %v11427 = vpop.permute.xlu0 %11426
      %11430 = vset.pattern.permute.xlu0 0
      %11431 = vperm.xlu0 %11430, %v11281
      %v11432 = vpop.permute.xlu0 %11431
      %11435 = vset.pattern.permute.xlu0 0
      %11436 = vperm.xlu0 %11435, %v11282
      %v11437 = vpop.permute.xlu0 %11436
      %11440 = vset.pattern.permute.xlu0 0
      %11441 = vperm.xlu0 %11440, %v11283
      %v11442 = vpop.permute.xlu0 %11441
      %v11444 = vadd.f32 %v11220, %v11287
      %v11445 = vadd.f32 %v11221, %v11292
      %v11446 = vadd.f32 %v11222, %v11297
      %v11447 = vadd.f32 %v11223, %v11302
      %v11448 = vadd.f32 %v11224, %v11307
      %v11449 = vadd.f32 %v11225, %v11312
      %v11450 = vadd.f32 %v11226, %v11317
      %v11451 = vadd.f32 %v11227, %v11322
      %v11452 = vadd.f32 %v11228, %v11327
      %v11453 = vadd.f32 %v11229, %v11332
      %v11454 = vadd.f32 %v11230, %v11337
      %v11455 = vadd.f32 %v11231, %v11342
      %v11456 = vadd.f32 %v11232, %v11347
      %v11457 = vadd.f32 %v11233, %v11352
      %v11458 = vadd.f32 %v11234, %v11357
      %v11459 = vadd.f32 %v11235, %v11362
      %v11460 = vadd.f32 %v11236, %v11367
      %v11461 = vadd.f32 %v11237, %v11372
      %v11462 = vadd.f32 %v11238, %v11377
      %v11463 = vadd.f32 %v11239, %v11382
      %v11464 = vadd.f32 %v11240, %v11387
      %v11465 = vadd.f32 %v11241, %v11392
      %v11466 = vadd.f32 %v11242, %v11397
      %v11467 = vadd.f32 %v11243, %v11402
      %v11468 = vadd.f32 %v11244, %v11407
      %v11469 = vadd.f32 %v11245, %v11412
      %v11470 = vadd.f32 %v11246, %v11417
      %v11471 = vadd.f32 %v11247, %v11422
      %v11472 = vadd.f32 %v11248, %v11427
      %v11473 = vadd.f32 %v11249, %v11432
      %v11474 = vadd.f32 %v11250, %v11437
      %v11475 = vadd.f32 %v11251, %v11442
      %vm11476 = vcmp.ge.f32.partialorder %v11444, 0.0
      %vm11477 = vcmp.ge.f32.partialorder %v11445, 0.0
      %vm11478 = vcmp.ge.f32.partialorder %v11446, 0.0
      %vm11479 = vcmp.ge.f32.partialorder %v11447, 0.0
      %vm11480 = vcmp.ge.f32.partialorder %v11448, 0.0
      %vm11481 = vcmp.ge.f32.partialorder %v11449, 0.0
      %vm11482 = vcmp.ge.f32.partialorder %v11450, 0.0
      %vm11483 = vcmp.ge.f32.partialorder %v11451, 0.0
      %vm11484 = vcmp.ge.f32.partialorder %v11452, 0.0
      %vm11485 = vcmp.ge.f32.partialorder %v11453, 0.0
      %vm11486 = vcmp.ge.f32.partialorder %v11454, 0.0
      %vm11487 = vcmp.ge.f32.partialorder %v11455, 0.0
      %vm11488 = vcmp.ge.f32.partialorder %v11456, 0.0
      %vm11489 = vcmp.ge.f32.partialorder %v11457, 0.0
      %vm11490 = vcmp.ge.f32.partialorder %v11458, 0.0
      %vm11491 = vcmp.ge.f32.partialorder %v11459, 0.0
      %vm11492 = vcmp.ge.f32.partialorder %v11460, 0.0
      %vm11493 = vcmp.ge.f32.partialorder %v11461, 0.0
      %vm11494 = vcmp.ge.f32.partialorder %v11462, 0.0
      %vm11495 = vcmp.ge.f32.partialorder %v11463, 0.0
      %vm11496 = vcmp.ge.f32.partialorder %v11464, 0.0
      %vm11497 = vcmp.ge.f32.partialorder %v11465, 0.0
      %vm11498 = vcmp.ge.f32.partialorder %v11466, 0.0
      %vm11499 = vcmp.ge.f32.partialorder %v11467, 0.0
      %vm11500 = vcmp.ge.f32.partialorder %v11468, 0.0
      %vm11501 = vcmp.ge.f32.partialorder %v11469, 0.0
      %vm11502 = vcmp.ge.f32.partialorder %v11470, 0.0
      %vm11503 = vcmp.ge.f32.partialorder %v11471, 0.0
      %vm11504 = vcmp.ge.f32.partialorder %v11472, 0.0
      %vm11505 = vcmp.ge.f32.partialorder %v11473, 0.0
      %vm11506 = vcmp.ge.f32.partialorder %v11474, 0.0
      %vm11507 = vcmp.ge.f32.partialorder %v11475, 0.0
      %v11508 = vmul.f32 %v11444, 0.2
      %v11509 = vmul.f32 %v11445, 0.2
      %v11510 = vmul.f32 %v11446, 0.2
      %v11511 = vmul.f32 %v11447, 0.2
      %v11512 = vmul.f32 %v11448, 0.2
      %v11513 = vmul.f32 %v11449, 0.2
      %v11514 = vmul.f32 %v11450, 0.2
      %v11515 = vmul.f32 %v11451, 0.2
      %v11516 = vmul.f32 %v11452, 0.2
      %v11517 = vmul.f32 %v11453, 0.2
      %v11518 = vmul.f32 %v11454, 0.2
      %v11519 = vmul.f32 %v11455, 0.2
      %v11520 = vmul.f32 %v11456, 0.2
      %v11521 = vmul.f32 %v11457, 0.2
      %v11522 = vmul.f32 %v11458, 0.2
      %v11523 = vmul.f32 %v11459, 0.2
      %v11524 = vmul.f32 %v11460, 0.2
      %v11525 = vmul.f32 %v11461, 0.2
      %v11526 = vmul.f32 %v11462, 0.2
      %v11527 = vmul.f32 %v11463, 0.2
      %v11528 = vmul.f32 %v11464, 0.2
      %v11529 = vmul.f32 %v11465, 0.2
      %v11530 = vmul.f32 %v11466, 0.2
      %v11531 = vmul.f32 %v11467, 0.2
      %v11532 = vmul.f32 %v11468, 0.2
      %v11533 = vmul.f32 %v11469, 0.2
      %v11534 = vmul.f32 %v11470, 0.2
      %v11535 = vmul.f32 %v11471, 0.2
      %v11536 = vmul.f32 %v11472, 0.2
      %v11537 = vmul.f32 %v11473, 0.2
      %v11538 = vmul.f32 %v11474, 0.2
      %v11539 = vmul.f32 %v11475, 0.2
      %v11540 = vsel %vm11476, %v11444, %v11508
      %v11541 = vsel %vm11477, %v11445, %v11509
      %v11542 = vsel %vm11478, %v11446, %v11510
      %v11543 = vsel %vm11479, %v11447, %v11511
      %v11544 = vsel %vm11480, %v11448, %v11512
      %v11545 = vsel %vm11481, %v11449, %v11513
      %v11546 = vsel %vm11482, %v11450, %v11514
      %v11547 = vsel %vm11483, %v11451, %v11515
      %v11548 = vsel %vm11484, %v11452, %v11516
      %v11549 = vsel %vm11485, %v11453, %v11517
      %v11550 = vsel %vm11486, %v11454, %v11518
      %v11551 = vsel %vm11487, %v11455, %v11519
      %v11552 = vsel %vm11488, %v11456, %v11520
      %v11553 = vsel %vm11489, %v11457, %v11521
      %v11554 = vsel %vm11490, %v11458, %v11522
      %v11555 = vsel %vm11491, %v11459, %v11523
      %v11556 = vsel %vm11492, %v11460, %v11524
      %v11557 = vsel %vm11493, %v11461, %v11525
      %v11558 = vsel %vm11494, %v11462, %v11526
      %v11559 = vsel %vm11495, %v11463, %v11527
      %v11560 = vsel %vm11496, %v11464, %v11528
      %v11561 = vsel %vm11497, %v11465, %v11529
      %v11562 = vsel %vm11498, %v11466, %v11530
      %v11563 = vsel %vm11499, %v11467, %v11531
      %v11564 = vsel %vm11500, %v11468, %v11532
      %v11565 = vsel %vm11501, %v11469, %v11533
      %v11566 = vsel %vm11502, %v11470, %v11534
      %v11567 = vsel %vm11503, %v11471, %v11535
      %v11568 = vsel %vm11504, %v11472, %v11536
      %v11569 = vsel %vm11505, %v11473, %v11537
      %v11570 = vsel %vm11506, %v11474, %v11538
      %v11571 = vsel %vm11507, %v11475, %v11539
      %v11572 = vld [vmem:[%s9] sm:$0xf]
      %v11573 = vpack.c.bf16 %v11541, %v11540
      %v11574 = vpack.c.bf16 %v11543, %v11542
      %v11575 = vpack.c.bf16 %v11545, %v11544
      %v11576 = vpack.c.bf16 %v11547, %v11546
      %v11577 = vpack.c.bf16 %v11549, %v11548
      %v11578 = vpack.c.bf16 %v11551, %v11550
      %v11579 = vpack.c.bf16 %v11553, %v11552
      %v11580 = vpack.c.bf16 %v11555, %v11554
      %v11581 = vpack.c.bf16 %v11557, %v11556
      %v11582 = vpack.c.bf16 %v11559, %v11558
      %v11583 = vpack.c.bf16 %v11561, %v11560
      %v11584 = vpack.c.bf16 %v11563, %v11562
      %v11585 = vpack.c.bf16 %v11565, %v11564
      %v11586 = vpack.c.bf16 %v11567, %v11566
      %v11587 = vpack.c.bf16 %v11569, %v11568
      %v11588 = vpack.c.bf16 %v11571, %v11570
      %v11589 = vld [vmem:[%s10] sm:$0x7]
      %11591 = vset.pattern.permute.xlu0 0
      %11592 = vperm.xlu0 %11591, %v11589
      %v11593 = vpop.permute.xlu0 %11592
      %v11597 = vunpack.c.l.s4 1983009808
      %v11598 = vunpack.c.0.s8 %v11597
      %v11599 = vlaneseq
      %v11600 = vshrl.u32 %v11599, 7
      %v11601 = vsub.s32 %v11598, %v11600
      %v11602 = vrot.slane %v11572, %v11601
      %v11603 = vcombine.high %v11602, %v11602
      %11606 = vmatprep.subr.bf16.mxu0 0
      %11607 = vmatpush1.bf16.msra.mxu0 %v11580
      %11608 = vmatprep.subr.bf16.mxu0 0
      %11609 = vmatpush1.bf16.msra.mxu0 %v11579
      %11610 = vmatprep.subr.bf16.mxu0 0
      %11611 = vmatpush1.bf16.msra.mxu0 %v11578
      %11612 = vmatprep.subr.bf16.mxu0 0
      %11613 = vmatpush1.bf16.msra.mxu0 %v11577
      %11614 = vmatprep.subr.bf16.mxu0 0
      %11615 = vmatpush1.bf16.msra.mxu0 %v11576
      %11616 = vmatprep.subr.bf16.mxu0 0
      %11617 = vmatpush1.bf16.msra.mxu0 %v11575
      %11618 = vmatprep.subr.bf16.mxu0 0
      %11619 = vmatpush1.bf16.msra.mxu0 %v11574
      %11620 = vmatprep.subr.bf16.mxu0 0
      %11621 = vmatpush1.bf16.msra.mxu0 %v11573
      %11622 = vmatprep.subr.bf16.mxu0 0
      %11623 = vmatpush2.bf16.msra.mxu0 %v11588
      %11624 = vmatprep.subr.bf16.mxu0 0
      %11625 = vmatpush2.bf16.msra.mxu0 %v11587
      %11626 = vmatprep.subr.bf16.mxu0 0
      %11627 = vmatpush2.bf16.msra.mxu0 %v11586
      %11628 = vmatprep.subr.bf16.mxu0 0
      %11629 = vmatpush2.bf16.msra.mxu0 %v11585
      %11630 = vmatprep.subr.bf16.mxu0 0
      %11631 = vmatpush2.bf16.msra.mxu0 %v11584
      %11632 = vmatprep.subr.bf16.mxu0 0
      %11633 = vmatpush2.bf16.msra.mxu0 %v11583
      %11634 = vmatprep.subr.bf16.mxu0 0
      %11635 = vmatpush2.bf16.msra.mxu0 %v11582
      %11636 = vmatprep.subr.bf16.mxu0 0
      %11637 = vmatpush2.bf16.msra.mxu0 %v11581
      %11638 = vmatprep.mubr.bf16.mxu0 %v11603
      %11639 = vmatmul.mubr.bf16.gmra.mxu0 %v11602
      %v11640 = vpop.f32.mrf.mxu0
      %v11641 = vadd.f32 %v11593, %v11640
      %v11642 = vpop.f32.mrf.mxu0
      %v11643 = vpop.f32.mrf.mxu0
      %v11644 = vpop.f32.mrf.mxu0
      %11645 = vdwg.mxu0
      %v11646 = vtanh.pop %v11641
      %11647 = vst [vmem:[%s401] sm:$0x7] %v11646
      %p11648 = scmp.lt.s32.totalorder %s22, 1
      %s11649 = scalar_select %p11648, %s22, 1
      %s11650 = smul.addr %s11649, 4
      %s11651 = scalar_lea.vmem %s11, %s11650
      // Predicated region
      $region65: #{multishape_oa_decoder.1} parent=63 // pred_check
        %p11652 = pneg %p281
      $region66: #{multishape_oa_decoder.1} parent=63 // pred_check_branch
        %11654 = sbr.rel (%p11652) target = $region68
      $region67: #{multishape_oa_decoder.1} parent=63 // pred_region
        _
      $region68: #{multishape_oa_decoder.1} parent=63 // pred_fallthru
        _
    $region64: #{multishape_oa_decoder.1} parent=5 // pred_fallthru
      _
    %p11655 = scmp.le.s32.totalorder 2, %s17
    // Predicated region
    $region69: #{multishape_oa_decoder.1} parent=5 // pred_check
      %p11656 = pneg %p11655
    $region70: #{multishape_oa_decoder.1} parent=5 // pred_check_branch
      %11658 = sbr.rel (%p11656) target = $region72
    $region71: #{multishape_oa_decoder.1} parent=5 // pred_region
      %s11659 = ssub.s32 %s17, 2
      // Predicated region
      $region73: #{multishape_oa_decoder.1} parent=71 // pred_check
        %p11660 = pneg %p287
      $region74: #{multishape_oa_decoder.1} parent=71 // pred_check_branch
        %11662 = sbr.rel (%p11660) target = $region76
      $region75: #{multishape_oa_decoder.1} parent=71 // pred_region
        %p11663 = scmp.lt.s32.totalorder %s23, 1
        %s11664 = scalar_select %p11663, %s23, 1
        %s11665 = smul.addr %s11664, 4
        %s11666 = scalar_lea.vmem %s11, %s11665
      $region76: #{multishape_oa_decoder.1} parent=71 // pred_fallthru
        _
    $region72: #{multishape_oa_decoder.1} parent=5 // pred_fallthru
      _
  $region6: #{multishape_oa_decoder.1} parent=0 // loop_footer
    %s21 = sadd.s32 1, %s17
  $region7: #{multishape_oa_decoder.1} parent=0 // loop_footer_branch
    %16 = sbr.rel target = $region3
  $region8: #{multishape_oa_decoder.1} parent=0 // loop_exit
    _

</llo_original>
